<compile_context>
chip_gen: v6e
topology: v6e:2x2x1
jax: 0.10.0
libtpu: 0.0.40
codegen_flags: <defaults>
</compile_context>

<pallas_src>
import functools

import jax
import jax.numpy as jnp
from jax.experimental import pallas as pl
from jax.experimental.pallas import tpu as pltpu


LANE = 128  # TPU lane width; all channel axes are padded to this.

_COMPILER_PARAMS = pltpu.CompilerParams(
    dimension_semantics=("arbitrary",),
    vmem_limit_bytes=32 * 1024 * 1024,  # safe on v5e/v6e/v7x (>= budget, << physical)
)


def _round_up(x, m):
    return (x + m - 1) // m * m


# ----------------------------- Pallas kernels -----------------------------

def _conv_bn_relu_kernel(p_ref, w_ref, b_ref, g_ref, bt_ref, o_ref, *, inv_m, eps):
    # conv-as-matmul: bf16 x bf16 operands, f32 accumulation on the MXU, + bias.
    y = jnp.dot(p_ref[...], w_ref[...], preferred_element_type=jnp.float32) + b_ref[...]
    # Training-mode BatchNorm batch statistics over the M (= N*OH*OW) axis.
    mean = jnp.sum(y, axis=0, keepdims=True) * inv_m
    var = jnp.maximum(jnp.sum(y * y, axis=0, keepdims=True) * inv_m - mean * mean, 0.0)
    scale = g_ref[...] * jax.lax.rsqrt(var + eps)
    shift = bt_ref[...] - mean * scale
    o_ref[...] = jnp.maximum(y * scale + shift, 0.0)


def _conv_bn_res_relu_kernel(p_ref, w_ref, b_ref, g_ref, bt_ref, r_ref, o_ref, *,
                             inv_m, eps):
    y = jnp.dot(p_ref[...], w_ref[...], preferred_element_type=jnp.float32) + b_ref[...]
    mean = jnp.sum(y, axis=0, keepdims=True) * inv_m
    var = jnp.maximum(jnp.sum(y * y, axis=0, keepdims=True) * inv_m - mean * mean, 0.0)
    scale = g_ref[...] * jax.lax.rsqrt(var + eps)
    shift = bt_ref[...] - mean * scale
    o_ref[...] = jnp.maximum(y * scale + shift + r_ref[...], 0.0)


def _dense_kernel(x_ref, w_ref, b_ref, o_ref):
    o_ref[...] = (
        jnp.dot(x_ref[...], w_ref[...], preferred_element_type=jnp.float32)
        + b_ref[...]
    )


# ------------------------------- layer glue --------------------------------

def _im2col(x, stride):
    """x: NHWC (real channels) -> (N*OH*OW, 9*C) patch matrix, 3x3, padding=1."""
    n, h, w, c = x.shape
    xp = jnp.pad(x, ((0, 0), (1, 1), (1, 1), (0, 0)))
    oh = (h + 2 - 3) // stride + 1
    ow = (w + 2 - 3) // stride + 1
    cols = []
    for kh in range(3):
        for kw in range(3):
            cols.append(
                xp[:, kh:kh + stride * (oh - 1) + 1:stride,
                      kw:kw + stride * (ow - 1) + 1:stride, :]
            )
    patches = jnp.concatenate(cols, axis=-1)  # (N, OH, OW, 9*C)
    return patches.reshape(n * oh * ow, 9 * c), oh, ow


def fused_layer(act, layer, *, c_in, stride, residual=None, eps=1e-5):
    """One fused pallas_call: conv(3x3,pad=1,bias) -> BN(batch stats) [-> +res] -> ReLU.

    act:      (N, H, W, C_any) f32, only the first c_in channels are real.
    layer:    prepped params {"w": (Kpad,128) bf16, "b"/"g"/"beta": (1,128) f32}.
    residual: optional (N, OH, OW, 128) f32.
    returns:  (N, OH, OW, 128) f32 (channels >= real Cout are exactly zero).
    """
    n = act.shape[0]
    x_real = act[..., :c_in]
    patches, oh, ow = _im2col(x_real, stride)          # (m, 9*c_in) f32
    m, k = patches.shape
    k_pad = layer["w"].shape[0]
    if k_pad != k:
        patches = jnp.pad(patches, ((0, 0), (0, k_pad - k)))
    patches = patches.astype(jnp.bfloat16)

    vec_spec = pl.BlockSpec((1, LANE), lambda i: (0, 0))
    in_specs = [
        pl.BlockSpec((m, k_pad), lambda i: (0, 0)),
        pl.BlockSpec((k_pad, LANE), lambda i: (0, 0)),
        vec_spec, vec_spec, vec_spec,
    ]
    inputs = [patches, layer["w"], layer["b"], layer["g"], layer["beta"]]
    if residual is None:
        kern = functools.partial(_conv_bn_relu_kernel, inv_m=1.0 / m, eps=eps)
    else:
        kern = functools.partial(_conv_bn_res_relu_kernel, inv_m=1.0 / m, eps=eps)
        in_specs.append(pl.BlockSpec((m, LANE), lambda i: (0, 0)))
        inputs.append(residual.reshape(m, LANE))

    out = pl.pallas_call(
        kern,
        out_shape=jax.ShapeDtypeStruct((m, LANE), jnp.float32),
        grid=(1,),
        in_specs=in_specs,
        out_specs=pl.BlockSpec((m, LANE), lambda i: (0, 0)),
        compiler_params=_COMPILER_PARAMS,
    )(*inputs)
    return out.reshape(n, oh, ow, LANE)


def _res_block(x, blk, *, c):
    out = fused_layer(x, blk[0], c_in=c, stride=1)
    out = fused_layer(out, blk[1], c_in=c, stride=1, residual=x)
    return out


def _dense(feat, w, b):
    n, d = feat.shape
    return pl.pallas_call(
        _dense_kernel,
        out_shape=jax.ShapeDtypeStruct((n, LANE), jnp.float32),
        grid=(1,),
        in_specs=[
            pl.BlockSpec((n, d), lambda i: (0, 0)),
            pl.BlockSpec((d, LANE), lambda i: (0, 0)),
            pl.BlockSpec((1, LANE), lambda i: (0, 0)),
        ],
        out_specs=pl.BlockSpec((n, LANE), lambda i: (0, 0)),
        compiler_params=_COMPILER_PARAMS,
    )(feat, w, b)


# ------------------------------- forward -----------------------------------

def residual_net(x_nchw, p, *, classes):
    # External interface is NCHW (PyTorch); NHWC with 128-padded channels inside.
    x = jnp.transpose(x_nchw, (0, 2, 3, 1)).astype(jnp.float32)
    x = fused_layer(x, p["stem1"], c_in=x.shape[-1], stride=1)
    x = _res_block(x, p["res1"], c=16)
    x = fused_layer(x, p["stem2"], c_in=16, stride=2)
    x = _res_block(x, p["res2"], c=32)
    x = fused_layer(x, p["stem3"], c_in=32, stride=2)
    for blk in p["later"]:
        x = _res_block(x, blk, c=64)
    n, oh, ow, _ = x.shape
    # The dense weight was pre-permuted from PyTorch's NCHW view(-1, D) order to
    # the NHWC channel-padded flatten order, so this reshape is a free view.
    feat = x.reshape(n, oh * ow * LANE).astype(jnp.bfloat16)
    logits = _dense(feat, p["dense_w"], p["dense_b"])
    return logits[:, :classes]


# ------------------------ parameter init / prep -----------------------------

def init_params(key, input_planes, height, width, number_of_blocks, classes):
    if number_of_blocks < 2:
        raise ValueError("The residual net needs at least two blocks.")
    keys = iter(jax.random.split(key, 64))

    def conv_p(cin, cout):
        w = 0.1 * jax.random.normal(next(keys), (3, 3, cin, cout), jnp.float32)
        b = 0.1 * jax.random.normal(next(keys), (cout,), jnp.float32)
        return w, b

    def bn_p(c):
        g = 1.0 + 0.1 * jax.random.normal(next(keys), (c,), jnp.float32)
        b = 0.1 * jax.random.normal(next(keys), (c,), jnp.float32)
        return g, b

    def block_p(c):
        w1, b1 = conv_p(c, c)
        g1, be1 = bn_p(c)
        w2, b2 = conv_p(c, c)
        g2, be2 = bn_p(c)
        return dict(conv1_w=w1, conv1_b=b1, bn1_g=g1, bn1_b=be1,
                    conv2_w=w2, conv2_b=b2, bn2_g=g2, bn2_b=be2)

    p = {}
    p["conv1_w"], p["conv1_b"] = conv_p(input_planes, 16)
    p["bn1_g"], p["bn1_b"] = bn_p(16)
    p["res1"] = block_p(16)
    p["conv2_w"], p["conv2_b"] = conv_p(16, 32)
    p["bn2_g"], p["bn2_b"] = bn_p(32)
    p["res2"] = block_p(32)
    p["conv3_w"], p["conv3_b"] = conv_p(32, 64)
    p["bn3_g"], p["bn3_b"] = bn_p(64)
    p["later_blocks"] = [block_p(64) for _ in range(number_of_blocks - 2)]
    d = height * width * 4
    # dense stored as (D, classes) with D in PyTorch NCHW-flatten order.
    p["dense_w"] = 0.02 * jax.random.normal(next(keys), (d, classes), jnp.float32)
    p["dense_b"] = 0.02 * jax.random.normal(next(keys), (classes,), jnp.float32)
    return p


def _prep_layer(w, b, g, beta):
    cin, cout = w.shape[2], w.shape[3]
    k = 9 * cin
    k_pad = _round_up(k, 128)
    w2 = jnp.pad(w.reshape(k, cout), ((0, k_pad - k), (0, LANE - cout)))

    def vec(v):
        return jnp.pad(v, (0, LANE - cout)).reshape(1, LANE).astype(jnp.float32)

    return {"w": w2.astype(jnp.bfloat16), "b": vec(b), "g": vec(g), "beta": vec(beta)}


def _prep_block(bp):
    return [
        _prep_layer(bp["conv1_w"], bp["conv1_b"], bp["bn1_g"], bp["bn1_b"]),
        _prep_layer(bp["conv2_w"], bp["conv2_b"], bp["bn2_g"], bp["bn2_b"]),
    ]


def prepare_params(params, height, width):
    """Pad / cast / permute raw params once (outside jit) into kernel-ready form."""
    p = {
        "stem1": _prep_layer(params["conv1_w"], params["conv1_b"],
                             params["bn1_g"], params["bn1_b"]),
        "res1": _prep_block(params["res1"]),
        "stem2": _prep_layer(params["conv2_w"], params["conv2_b"],
                             params["bn2_g"], params["bn2_b"]),
        "res2": _prep_block(params["res2"]),
        "stem3": _prep_layer(params["conv3_w"], params["conv3_b"],
                             params["bn3_g"], params["bn3_b"]),
        "later": [_prep_block(bp) for bp in params["later_blocks"]],
    }
    # Final spatial size after the two stride-2 convs.
    oh = (height + 2 - 3) // 2 + 1
    ow = (width + 2 - 3) // 2 + 1
    oh = (oh + 2 - 3) // 2 + 1
    ow = (ow + 2 - 3) // 2 + 1
    c_final = params["conv3_w"].shape[3]
    d, classes = params["dense_w"].shape
    assert d == c_final * oh * ow
    assert classes <= LANE and c_final <= LANE
    # Permute NCHW-flatten rows -> NHWC channel-padded flatten rows, pad classes.
    wd = params["dense_w"].reshape(c_final, oh, ow, classes)
    wd = jnp.transpose(wd, (1, 2, 0, 3))                              # (h, w, c, cls)
    wd = jnp.pad(wd, ((0, 0), (0, 0), (0, LANE - c_final), (0, LANE - classes)))
    p["dense_w"] = wd.reshape(oh * ow * LANE, LANE).astype(jnp.bfloat16)
    p["dense_b"] = (jnp.pad(params["dense_b"], (0, LANE - classes))
                    .reshape(1, LANE).astype(jnp.float32))
    return p, classes


# --------------------------------- main -------------------------------------

if __name__ == "__main__":
    batch = 2
    input_planes = 4
    height = width = 16
    number_of_blocks = 3
    classes = 10

    key = jax.random.PRNGKey(0)
    k_x, k_p = jax.random.split(key)
    x = jax.random.normal(k_x, (batch, input_planes, height, width), jnp.float32)
    params = init_params(k_p, input_planes, height, width, number_of_blocks, classes)
    prepped, n_classes = prepare_params(params, height, width)

    fwd = jax.jit(functools.partial(residual_net, classes=n_classes))
    out = jax.block_until_ready(fwd(x, prepped))

    assert out.shape == (batch, classes), out.shape
    assert bool(jnp.all(jnp.isfinite(out)))
    print("KERNEL_OK")
</pallas_src>

<mosaic_0001>
module attributes {stable_mosaic.version = 11 : i64} {
  func.func @_conv_bn_relu_kernel(%arg0: i32, %arg1: memref<512x128xbf16, #tpu.memory_space<vmem>>, %arg2: memref<128x128xbf16, #tpu.memory_space<vmem>>, %arg3: memref<1x128xf32, #tpu.memory_space<vmem>>, %arg4: memref<1x128xf32, #tpu.memory_space<vmem>>, %arg5: memref<1x128xf32, #tpu.memory_space<vmem>>, %arg6: memref<512x128xf32, #tpu.memory_space<vmem>>) attributes {dimension_semantics = [#tpu.dimension_semantics<arbitrary>], iteration_bounds = array<i64: 1>, scalar_prefetch = 0 : i64, scratch_operands = 0 : i64, tpu.core_type = #tpu.core_type<tc>, window_params = [{pipeline_mode = #tpu.pipeline_mode<synchronous>, transform_indices = @transform_0, window_bounds = array<i64: 512, 128>}, {pipeline_mode = #tpu.pipeline_mode<synchronous>, transform_indices = @transform_1, window_bounds = array<i64: 128, 128>}, {pipeline_mode = #tpu.pipeline_mode<synchronous>, transform_indices = @transform_2, window_bounds = array<i64: 1, 128>}, {pipeline_mode = #tpu.pipeline_mode<synchronous>, transform_indices = @transform_3, window_bounds = array<i64: 1, 128>}, {pipeline_mode = #tpu.pipeline_mode<synchronous>, transform_indices = @transform_4, window_bounds = array<i64: 1, 128>}, {pipeline_mode = #tpu.pipeline_mode<synchronous>, transform_indices = @transform_5, window_bounds = array<i64: 512, 128>}]} {
    %c0 = arith.constant 0 : index
    %c0_0 = arith.constant 0 : index
    %0 = vector.load %arg1[%c0, %c0_0] : memref<512x128xbf16, #tpu.memory_space<vmem>>, vector<512x128xbf16>
    %c0_1 = arith.constant 0 : index
    %c0_2 = arith.constant 0 : index
    %1 = vector.load %arg2[%c0_1, %c0_2] : memref<128x128xbf16, #tpu.memory_space<vmem>>, vector<128x128xbf16>
    %cst = arith.constant dense<0.000000e+00> : vector<512x128xf32>
    %2 = tpu.matmul %0, %1, %cst {dimension_numbers = #tpu.dot_dimension_numbers<[1], [0], [0], [1], [0, 0, 1, 1], [], []>} : vector<512x128xbf16>, vector<128x128xbf16>, vector<512x128xf32> -> vector<512x128xf32>
    %c0_3 = arith.constant 0 : index
    %c0_4 = arith.constant 0 : index
    %3 = vector.load %arg3[%c0_3, %c0_4] : memref<1x128xf32, #tpu.memory_space<vmem>>, vector<1x128xf32>
    %4 = vector.broadcast %3 : vector<1x128xf32> to vector<512x128xf32>
    %5 = arith.addf %2, %4 : vector<512x128xf32>
    %cst_5 = arith.constant dense<0.000000e+00> : vector<128xf32>
    %6 = vector.multi_reduction <add>, %5, %cst_5 [0] : vector<512x128xf32> to vector<128xf32>
    %7 = vector.shape_cast %6 : vector<128xf32> to vector<1x128xf32>
    %cst_6 = arith.constant 0.001953125 : f32
    %8 = vector.broadcast %cst_6 : f32 to vector<1x128xf32>
    %9 = arith.mulf %7, %8 : vector<1x128xf32>
    %10 = arith.mulf %5, %5 : vector<512x128xf32>
    %cst_7 = arith.constant dense<0.000000e+00> : vector<128xf32>
    %11 = vector.multi_reduction <add>, %10, %cst_7 [0] : vector<512x128xf32> to vector<128xf32>
    %12 = vector.shape_cast %11 : vector<128xf32> to vector<1x128xf32>
    %cst_8 = arith.constant 0.001953125 : f32
    %13 = vector.broadcast %cst_8 : f32 to vector<1x128xf32>
    %14 = arith.mulf %12, %13 : vector<1x128xf32>
    %15 = arith.mulf %9, %9 : vector<1x128xf32>
    %16 = arith.subf %14, %15 : vector<1x128xf32>
    %cst_9 = arith.constant 0.000000e+00 : f32
    %17 = vector.broadcast %cst_9 : f32 to vector<1x128xf32>
    %18 = arith.maximumf %16, %17 : vector<1x128xf32>
    %c0_10 = arith.constant 0 : index
    %c0_11 = arith.constant 0 : index
    %19 = vector.load %arg4[%c0_10, %c0_11] : memref<1x128xf32, #tpu.memory_space<vmem>>, vector<1x128xf32>
    %cst_12 = arith.constant 9.99999974E-6 : f32
    %20 = vector.broadcast %cst_12 : f32 to vector<1x128xf32>
    %21 = arith.addf %18, %20 : vector<1x128xf32>
    %22 = math.rsqrt %21 : vector<1x128xf32>
    %23 = arith.mulf %19, %22 : vector<1x128xf32>
    %c0_13 = arith.constant 0 : index
    %c0_14 = arith.constant 0 : index
    %24 = vector.load %arg5[%c0_13, %c0_14] : memref<1x128xf32, #tpu.memory_space<vmem>>, vector<1x128xf32>
    %25 = arith.mulf %9, %23 : vector<1x128xf32>
    %26 = arith.subf %24, %25 : vector<1x128xf32>
    %27 = vector.broadcast %23 : vector<1x128xf32> to vector<512x128xf32>
    %28 = arith.mulf %5, %27 : vector<512x128xf32>
    %29 = vector.broadcast %26 : vector<1x128xf32> to vector<512x128xf32>
    %30 = arith.addf %28, %29 : vector<512x128xf32>
    %cst_15 = arith.constant 0.000000e+00 : f32
    %31 = vector.broadcast %cst_15 : f32 to vector<512x128xf32>
    %32 = arith.maximumf %30, %31 : vector<512x128xf32>
    %c0_16 = arith.constant 0 : index
    %c0_17 = arith.constant 0 : index
    %33 = vector.load %arg6[%c0_16, %c0_17] : memref<512x128xf32, #tpu.memory_space<vmem>>, vector<512x128xf32>
    tpu.vector_store %arg6[%c0_16, %c0_17], %32 {strides = array<i32>} : memref<512x128xf32, #tpu.memory_space<vmem>>, vector<512x128xf32>,
    return
  }
  func.func @transform_0(%arg0: i32) -> (i32, i32) {
    %c0_i32 = arith.constant 0 : i32
    %c0_i32_0 = arith.constant 0 : i32
    %c0_i32_1 = arith.constant 0 : i32
    return %c0_i32, %c0_i32_0 : i32, i32
  }
  func.func @transform_1(%arg0: i32) -> (i32, i32) {
    %c0_i32 = arith.constant 0 : i32
    %c0_i32_0 = arith.constant 0 : i32
    %c0_i32_1 = arith.constant 0 : i32
    return %c0_i32, %c0_i32_0 : i32, i32
  }
  func.func @transform_2(%arg0: i32) -> (i32, i32) {
    %c0_i32 = arith.constant 0 : i32
    %c0_i32_0 = arith.constant 0 : i32
    %c0_i32_1 = arith.constant 0 : i32
    return %c0_i32, %c0_i32_0 : i32, i32
  }
  func.func @transform_3(%arg0: i32) -> (i32, i32) {
    %c0_i32 = arith.constant 0 : i32
    %c0_i32_0 = arith.constant 0 : i32
    %c0_i32_1 = arith.constant 0 : i32
    return %c0_i32, %c0_i32_0 : i32, i32
  }
  func.func @transform_4(%arg0: i32) -> (i32, i32) {
    %c0_i32 = arith.constant 0 : i32
    %c0_i32_0 = arith.constant 0 : i32
    %c0_i32_1 = arith.constant 0 : i32
    return %c0_i32, %c0_i32_0 : i32, i32
  }
  func.func @transform_5(%arg0: i32) -> (i32, i32) {
    %c0_i32 = arith.constant 0 : i32
    %c0_i32_0 = arith.constant 0 : i32
    %c0_i32_1 = arith.constant 0 : i32
    return %c0_i32, %c0_i32_0 : i32, i32
  }
}

module attributes {stable_mosaic.version = 11 : i64} {
  func.func @_conv_bn_relu_kernel(%arg0: i32, %arg1: memref<512x256xbf16, #tpu.memory_space<vmem>>, %arg2: memref<256x128xbf16, #tpu.memory_space<vmem>>, %arg3: memref<1x128xf32, #tpu.memory_space<vmem>>, %arg4: memref<1x128xf32, #tpu.memory_space<vmem>>, %arg5: memref<1x128xf32, #tpu.memory_space<vmem>>, %arg6: memref<512x128xf32, #tpu.memory_space<vmem>>) attributes {dimension_semantics = [#tpu.dimension_semantics<arbitrary>], iteration_bounds = array<i64: 1>, scalar_prefetch = 0 : i64, scratch_operands = 0 : i64, tpu.core_type = #tpu.core_type<tc>, window_params = [{pipeline_mode = #tpu.pipeline_mode<synchronous>, transform_indices = @transform_0, window_bounds = array<i64: 512, 256>}, {pipeline_mode = #tpu.pipeline_mode<synchronous>, transform_indices = @transform_1, window_bounds = array<i64: 256, 128>}, {pipeline_mode = #tpu.pipeline_mode<synchronous>, transform_indices = @transform_2, window_bounds = array<i64: 1, 128>}, {pipeline_mode = #tpu.pipeline_mode<synchronous>, transform_indices = @transform_3, window_bounds = array<i64: 1, 128>}, {pipeline_mode = #tpu.pipeline_mode<synchronous>, transform_indices = @transform_4, window_bounds = array<i64: 1, 128>}, {pipeline_mode = #tpu.pipeline_mode<synchronous>, transform_indices = @transform_5, window_bounds = array<i64: 512, 128>}]} {
    %c0 = arith.constant 0 : index
    %c0_0 = arith.constant 0 : index
    %0 = vector.load %arg1[%c0, %c0_0] : memref<512x256xbf16, #tpu.memory_space<vmem>>, vector<512x256xbf16>
    %c0_1 = arith.constant 0 : index
    %c0_2 = arith.constant 0 : index
    %1 = vector.load %arg2[%c0_1, %c0_2] : memref<256x128xbf16, #tpu.memory_space<vmem>>, vector<256x128xbf16>
    %cst = arith.constant dense<0.000000e+00> : vector<512x128xf32>
    %2 = tpu.matmul %0, %1, %cst {dimension_numbers = #tpu.dot_dimension_numbers<[1], [0], [0], [1], [0, 0, 1, 1], [], []>} : vector<512x256xbf16>, vector<256x128xbf16>, vector<512x128xf32> -> vector<512x128xf32>
    %c0_3 = arith.constant 0 : index
    %c0_4 = arith.constant 0 : index
    %3 = vector.load %arg3[%c0_3, %c0_4] : memref<1x128xf32, #tpu.memory_space<vmem>>, vector<1x128xf32>
    %4 = vector.broadcast %3 : vector<1x128xf32> to vector<512x128xf32>
    %5 = arith.addf %2, %4 : vector<512x128xf32>
    %cst_5 = arith.constant dense<0.000000e+00> : vector<128xf32>
    %6 = vector.multi_reduction <add>, %5, %cst_5 [0] : vector<512x128xf32> to vector<128xf32>
    %7 = vector.shape_cast %6 : vector<128xf32> to vector<1x128xf32>
    %cst_6 = arith.constant 0.001953125 : f32
    %8 = vector.broadcast %cst_6 : f32 to vector<1x128xf32>
    %9 = arith.mulf %7, %8 : vector<1x128xf32>
    %10 = arith.mulf %5, %5 : vector<512x128xf32>
    %cst_7 = arith.constant dense<0.000000e+00> : vector<128xf32>
    %11 = vector.multi_reduction <add>, %10, %cst_7 [0] : vector<512x128xf32> to vector<128xf32>
    %12 = vector.shape_cast %11 : vector<128xf32> to vector<1x128xf32>
    %cst_8 = arith.constant 0.001953125 : f32
    %13 = vector.broadcast %cst_8 : f32 to vector<1x128xf32>
    %14 = arith.mulf %12, %13 : vector<1x128xf32>
    %15 = arith.mulf %9, %9 : vector<1x128xf32>
    %16 = arith.subf %14, %15 : vector<1x128xf32>
    %cst_9 = arith.constant 0.000000e+00 : f32
    %17 = vector.broadcast %cst_9 : f32 to vector<1x128xf32>
    %18 = arith.maximumf %16, %17 : vector<1x128xf32>
    %c0_10 = arith.constant 0 : index
    %c0_11 = arith.constant 0 : index
    %19 = vector.load %arg4[%c0_10, %c0_11] : memref<1x128xf32, #tpu.memory_space<vmem>>, vector<1x128xf32>
    %cst_12 = arith.constant 9.99999974E-6 : f32
    %20 = vector.broadcast %cst_12 : f32 to vector<1x128xf32>
    %21 = arith.addf %18, %20 : vector<1x128xf32>
    %22 = math.rsqrt %21 : vector<1x128xf32>
    %23 = arith.mulf %19, %22 : vector<1x128xf32>
    %c0_13 = arith.constant 0 : index
    %c0_14 = arith.constant 0 : index
    %24 = vector.load %arg5[%c0_13, %c0_14] : memref<1x128xf32, #tpu.memory_space<vmem>>, vector<1x128xf32>
    %25 = arith.mulf %9, %23 : vector<1x128xf32>
    %26 = arith.subf %24, %25 : vector<1x128xf32>
    %27 = vector.broadcast %23 : vector<1x128xf32> to vector<512x128xf32>
    %28 = arith.mulf %5, %27 : vector<512x128xf32>
    %29 = vector.broadcast %26 : vector<1x128xf32> to vector<512x128xf32>
    %30 = arith.addf %28, %29 : vector<512x128xf32>
    %cst_15 = arith.constant 0.000000e+00 : f32
    %31 = vector.broadcast %cst_15 : f32 to vector<512x128xf32>
    %32 = arith.maximumf %30, %31 : vector<512x128xf32>
    %c0_16 = arith.constant 0 : index
    %c0_17 = arith.constant 0 : index
    %33 = vector.load %arg6[%c0_16, %c0_17] : memref<512x128xf32, #tpu.memory_space<vmem>>, vector<512x128xf32>
    tpu.vector_store %arg6[%c0_16, %c0_17], %32 {strides = array<i32>} : memref<512x128xf32, #tpu.memory_space<vmem>>, vector<512x128xf32>,
    return
  }
  func.func @transform_0(%arg0: i32) -> (i32, i32) {
    %c0_i32 = arith.constant 0 : i32
    %c0_i32_0 = arith.constant 0 : i32
    %c0_i32_1 = arith.constant 0 : i32
    return %c0_i32, %c0_i32_0 : i32, i32
  }
  func.func @transform_1(%arg0: i32) -> (i32, i32) {
    %c0_i32 = arith.constant 0 : i32
    %c0_i32_0 = arith.constant 0 : i32
    %c0_i32_1 = arith.constant 0 : i32
    return %c0_i32, %c0_i32_0 : i32, i32
  }
  func.func @transform_2(%arg0: i32) -> (i32, i32) {
    %c0_i32 = arith.constant 0 : i32
    %c0_i32_0 = arith.constant 0 : i32
    %c0_i32_1 = arith.constant 0 : i32
    return %c0_i32, %c0_i32_0 : i32, i32
  }
  func.func @transform_3(%arg0: i32) -> (i32, i32) {
    %c0_i32 = arith.constant 0 : i32
    %c0_i32_0 = arith.constant 0 : i32
    %c0_i32_1 = arith.constant 0 : i32
    return %c0_i32, %c0_i32_0 : i32, i32
  }
  func.func @transform_4(%arg0: i32) -> (i32, i32) {
    %c0_i32 = arith.constant 0 : i32
    %c0_i32_0 = arith.constant 0 : i32
    %c0_i32_1 = arith.constant 0 : i32
    return %c0_i32, %c0_i32_0 : i32, i32
  }
  func.func @transform_5(%arg0: i32) -> (i32, i32) {
    %c0_i32 = arith.constant 0 : i32
    %c0_i32_0 = arith.constant 0 : i32
    %c0_i32_1 = arith.constant 0 : i32
    return %c0_i32, %c0_i32_0 : i32, i32
  }
}

module attributes {stable_mosaic.version = 11 : i64} {
  func.func @_conv_bn_res_relu_kernel(%arg0: i32, %arg1: memref<512x256xbf16, #tpu.memory_space<vmem>>, %arg2: memref<256x128xbf16, #tpu.memory_space<vmem>>, %arg3: memref<1x128xf32, #tpu.memory_space<vmem>>, %arg4: memref<1x128xf32, #tpu.memory_space<vmem>>, %arg5: memref<1x128xf32, #tpu.memory_space<vmem>>, %arg6: memref<512x128xf32, #tpu.memory_space<vmem>>, %arg7: memref<512x128xf32, #tpu.memory_space<vmem>>) attributes {dimension_semantics = [#tpu.dimension_semantics<arbitrary>], iteration_bounds = array<i64: 1>, scalar_prefetch = 0 : i64, scratch_operands = 0 : i64, tpu.core_type = #tpu.core_type<tc>, window_params = [{pipeline_mode = #tpu.pipeline_mode<synchronous>, transform_indices = @transform_0, window_bounds = array<i64: 512, 256>}, {pipeline_mode = #tpu.pipeline_mode<synchronous>, transform_indices = @transform_1, window_bounds = array<i64: 256, 128>}, {pipeline_mode = #tpu.pipeline_mode<synchronous>, transform_indices = @transform_2, window_bounds = array<i64: 1, 128>}, {pipeline_mode = #tpu.pipeline_mode<synchronous>, transform_indices = @transform_3, window_bounds = array<i64: 1, 128>}, {pipeline_mode = #tpu.pipeline_mode<synchronous>, transform_indices = @transform_4, window_bounds = array<i64: 1, 128>}, {pipeline_mode = #tpu.pipeline_mode<synchronous>, transform_indices = @transform_5, window_bounds = array<i64: 512, 128>}, {pipeline_mode = #tpu.pipeline_mode<synchronous>, transform_indices = @transform_6, window_bounds = array<i64: 512, 128>}]} {
    %c0 = arith.constant 0 : index
    %c0_0 = arith.constant 0 : index
    %0 = vector.load %arg1[%c0, %c0_0] : memref<512x256xbf16, #tpu.memory_space<vmem>>, vector<512x256xbf16>
    %c0_1 = arith.constant 0 : index
    %c0_2 = arith.constant 0 : index
    %1 = vector.load %arg2[%c0_1, %c0_2] : memref<256x128xbf16, #tpu.memory_space<vmem>>, vector<256x128xbf16>
    %cst = arith.constant dense<0.000000e+00> : vector<512x128xf32>
    %2 = tpu.matmul %0, %1, %cst {dimension_numbers = #tpu.dot_dimension_numbers<[1], [0], [0], [1], [0, 0, 1, 1], [], []>} : vector<512x256xbf16>, vector<256x128xbf16>, vector<512x128xf32> -> vector<512x128xf32>
    %c0_3 = arith.constant 0 : index
    %c0_4 = arith.constant 0 : index
    %3 = vector.load %arg3[%c0_3, %c0_4] : memref<1x128xf32, #tpu.memory_space<vmem>>, vector<1x128xf32>
    %4 = vector.broadcast %3 : vector<1x128xf32> to vector<512x128xf32>
    %5 = arith.addf %2, %4 : vector<512x128xf32>
    %cst_5 = arith.constant dense<0.000000e+00> : vector<128xf32>
    %6 = vector.multi_reduction <add>, %5, %cst_5 [0] : vector<512x128xf32> to vector<128xf32>
    %7 = vector.shape_cast %6 : vector<128xf32> to vector<1x128xf32>
    %cst_6 = arith.constant 0.001953125 : f32
    %8 = vector.broadcast %cst_6 : f32 to vector<1x128xf32>
    %9 = arith.mulf %7, %8 : vector<1x128xf32>
    %10 = arith.mulf %5, %5 : vector<512x128xf32>
    %cst_7 = arith.constant dense<0.000000e+00> : vector<128xf32>
    %11 = vector.multi_reduction <add>, %10, %cst_7 [0] : vector<512x128xf32> to vector<128xf32>
    %12 = vector.shape_cast %11 : vector<128xf32> to vector<1x128xf32>
    %cst_8 = arith.constant 0.001953125 : f32
    %13 = vector.broadcast %cst_8 : f32 to vector<1x128xf32>
    %14 = arith.mulf %12, %13 : vector<1x128xf32>
    %15 = arith.mulf %9, %9 : vector<1x128xf32>
    %16 = arith.subf %14, %15 : vector<1x128xf32>
    %cst_9 = arith.constant 0.000000e+00 : f32
    %17 = vector.broadcast %cst_9 : f32 to vector<1x128xf32>
    %18 = arith.maximumf %16, %17 : vector<1x128xf32>
    %c0_10 = arith.constant 0 : index
    %c0_11 = arith.constant 0 : index
    %19 = vector.load %arg4[%c0_10, %c0_11] : memref<1x128xf32, #tpu.memory_space<vmem>>, vector<1x128xf32>
    %cst_12 = arith.constant 9.99999974E-6 : f32
    %20 = vector.broadcast %cst_12 : f32 to vector<1x128xf32>
    %21 = arith.addf %18, %20 : vector<1x128xf32>
    %22 = math.rsqrt %21 : vector<1x128xf32>
    %23 = arith.mulf %19, %22 : vector<1x128xf32>
    %c0_13 = arith.constant 0 : index
    %c0_14 = arith.constant 0 : index
    %24 = vector.load %arg5[%c0_13, %c0_14] : memref<1x128xf32, #tpu.memory_space<vmem>>, vector<1x128xf32>
    %25 = arith.mulf %9, %23 : vector<1x128xf32>
    %26 = arith.subf %24, %25 : vector<1x128xf32>
    %27 = vector.broadcast %23 : vector<1x128xf32> to vector<512x128xf32>
    %28 = arith.mulf %5, %27 : vector<512x128xf32>
    %29 = vector.broadcast %26 : vector<1x128xf32> to vector<512x128xf32>
    %30 = arith.addf %28, %29 : vector<512x128xf32>
    %c0_15 = arith.constant 0 : index
    %c0_16 = arith.constant 0 : index
    %31 = vector.load %arg6[%c0_15, %c0_16] : memref<512x128xf32, #tpu.memory_space<vmem>>, vector<512x128xf32>
    %32 = arith.addf %30, %31 : vector<512x128xf32>
    %cst_17 = arith.constant 0.000000e+00 : f32
    %33 = vector.broadcast %cst_17 : f32 to vector<512x128xf32>
    %34 = arith.maximumf %32, %33 : vector<512x128xf32>
    %c0_18 = arith.constant 0 : index
    %c0_19 = arith.constant 0 : index
    %35 = vector.load %arg7[%c0_18, %c0_19] : memref<512x128xf32, #tpu.memory_space<vmem>>, vector<512x128xf32>
    tpu.vector_store %arg7[%c0_18, %c0_19], %34 {strides = array<i32>} : memref<512x128xf32, #tpu.memory_space<vmem>>, vector<512x128xf32>,
    return
  }
  func.func @transform_0(%arg0: i32) -> (i32, i32) {
    %c0_i32 = arith.constant 0 : i32
    %c0_i32_0 = arith.constant 0 : i32
    %c0_i32_1 = arith.constant 0 : i32
    return %c0_i32, %c0_i32_0 : i32, i32
  }
  func.func @transform_1(%arg0: i32) -> (i32, i32) {
    %c0_i32 = arith.constant 0 : i32
    %c0_i32_0 = arith.constant 0 : i32
    %c0_i32_1 = arith.constant 0 : i32
    return %c0_i32, %c0_i32_0 : i32, i32
  }
  func.func @transform_2(%arg0: i32) -> (i32, i32) {
    %c0_i32 = arith.constant 0 : i32
    %c0_i32_0 = arith.constant 0 : i32
    %c0_i32_1 = arith.constant 0 : i32
    return %c0_i32, %c0_i32_0 : i32, i32
  }
  func.func @transform_3(%arg0: i32) -> (i32, i32) {
    %c0_i32 = arith.constant 0 : i32
    %c0_i32_0 = arith.constant 0 : i32
    %c0_i32_1 = arith.constant 0 : i32
    return %c0_i32, %c0_i32_0 : i32, i32
  }
  func.func @transform_4(%arg0: i32) -> (i32, i32) {
    %c0_i32 = arith.constant 0 : i32
    %c0_i32_0 = arith.constant 0 : i32
    %c0_i32_1 = arith.constant 0 : i32
    return %c0_i32, %c0_i32_0 : i32, i32
  }
  func.func @transform_5(%arg0: i32) -> (i32, i32) {
    %c0_i32 = arith.constant 0 : i32
    %c0_i32_0 = arith.constant 0 : i32
    %c0_i32_1 = arith.constant 0 : i32
    return %c0_i32, %c0_i32_0 : i32, i32
  }
  func.func @transform_6(%arg0: i32) -> (i32, i32) {
    %c0_i32 = arith.constant 0 : i32
    %c0_i32_0 = arith.constant 0 : i32
    %c0_i32_1 = arith.constant 0 : i32
    return %c0_i32, %c0_i32_0 : i32, i32
  }
}

module attributes {stable_mosaic.version = 11 : i64} {
  func.func @_conv_bn_relu_kernel(%arg0: i32, %arg1: memref<128x256xbf16, #tpu.memory_space<vmem>>, %arg2: memref<256x128xbf16, #tpu.memory_space<vmem>>, %arg3: memref<1x128xf32, #tpu.memory_space<vmem>>, %arg4: memref<1x128xf32, #tpu.memory_space<vmem>>, %arg5: memref<1x128xf32, #tpu.memory_space<vmem>>, %arg6: memref<128x128xf32, #tpu.memory_space<vmem>>) attributes {dimension_semantics = [#tpu.dimension_semantics<arbitrary>], iteration_bounds = array<i64: 1>, scalar_prefetch = 0 : i64, scratch_operands = 0 : i64, tpu.core_type = #tpu.core_type<tc>, window_params = [{pipeline_mode = #tpu.pipeline_mode<synchronous>, transform_indices = @transform_0, window_bounds = array<i64: 128, 256>}, {pipeline_mode = #tpu.pipeline_mode<synchronous>, transform_indices = @transform_1, window_bounds = array<i64: 256, 128>}, {pipeline_mode = #tpu.pipeline_mode<synchronous>, transform_indices = @transform_2, window_bounds = array<i64: 1, 128>}, {pipeline_mode = #tpu.pipeline_mode<synchronous>, transform_indices = @transform_3, window_bounds = array<i64: 1, 128>}, {pipeline_mode = #tpu.pipeline_mode<synchronous>, transform_indices = @transform_4, window_bounds = array<i64: 1, 128>}, {pipeline_mode = #tpu.pipeline_mode<synchronous>, transform_indices = @transform_5, window_bounds = array<i64: 128, 128>}]} {
    %c0 = arith.constant 0 : index
    %c0_0 = arith.constant 0 : index
    %0 = vector.load %arg1[%c0, %c0_0] : memref<128x256xbf16, #tpu.memory_space<vmem>>, vector<128x256xbf16>
    %c0_1 = arith.constant 0 : index
    %c0_2 = arith.constant 0 : index
    %1 = vector.load %arg2[%c0_1, %c0_2] : memref<256x128xbf16, #tpu.memory_space<vmem>>, vector<256x128xbf16>
    %cst = arith.constant dense<0.000000e+00> : vector<128x128xf32>
    %2 = tpu.matmul %0, %1, %cst {dimension_numbers = #tpu.dot_dimension_numbers<[1], [0], [0], [1], [0, 0, 1, 1], [], []>} : vector<128x256xbf16>, vector<256x128xbf16>, vector<128x128xf32> -> vector<128x128xf32>
    %c0_3 = arith.constant 0 : index
    %c0_4 = arith.constant 0 : index
    %3 = vector.load %arg3[%c0_3, %c0_4] : memref<1x128xf32, #tpu.memory_space<vmem>>, vector<1x128xf32>
    %4 = vector.broadcast %3 : vector<1x128xf32> to vector<128x128xf32>
    %5 = arith.addf %2, %4 : vector<128x128xf32>
    %cst_5 = arith.constant dense<0.000000e+00> : vector<128xf32>
    %6 = vector.multi_reduction <add>, %5, %cst_5 [0] : vector<128x128xf32> to vector<128xf32>
    %7 = vector.shape_cast %6 : vector<128xf32> to vector<1x128xf32>
    %cst_6 = arith.constant 7.812500e-03 : f32
    %8 = vector.broadcast %cst_6 : f32 to vector<1x128xf32>
    %9 = arith.mulf %7, %8 : vector<1x128xf32>
    %10 = arith.mulf %5, %5 : vector<128x128xf32>
    %cst_7 = arith.constant dense<0.000000e+00> : vector<128xf32>
    %11 = vector.multi_reduction <add>, %10, %cst_7 [0] : vector<128x128xf32> to vector<128xf32>
    %12 = vector.shape_cast %11 : vector<128xf32> to vector<1x128xf32>
    %cst_8 = arith.constant 7.812500e-03 : f32
    %13 = vector.broadcast %cst_8 : f32 to vector<1x128xf32>
    %14 = arith.mulf %12, %13 : vector<1x128xf32>
    %15 = arith.mulf %9, %9 : vector<1x128xf32>
    %16 = arith.subf %14, %15 : vector<1x128xf32>
    %cst_9 = arith.constant 0.000000e+00 : f32
    %17 = vector.broadcast %cst_9 : f32 to vector<1x128xf32>
    %18 = arith.maximumf %16, %17 : vector<1x128xf32>
    %c0_10 = arith.constant 0 : index
    %c0_11 = arith.constant 0 : index
    %19 = vector.load %arg4[%c0_10, %c0_11] : memref<1x128xf32, #tpu.memory_space<vmem>>, vector<1x128xf32>
    %cst_12 = arith.constant 9.99999974E-6 : f32
    %20 = vector.broadcast %cst_12 : f32 to vector<1x128xf32>
    %21 = arith.addf %18, %20 : vector<1x128xf32>
    %22 = math.rsqrt %21 : vector<1x128xf32>
    %23 = arith.mulf %19, %22 : vector<1x128xf32>
    %c0_13 = arith.constant 0 : index
    %c0_14 = arith.constant 0 : index
    %24 = vector.load %arg5[%c0_13, %c0_14] : memref<1x128xf32, #tpu.memory_space<vmem>>, vector<1x128xf32>
    %25 = arith.mulf %9, %23 : vector<1x128xf32>
    %26 = arith.subf %24, %25 : vector<1x128xf32>
    %27 = vector.broadcast %23 : vector<1x128xf32> to vector<128x128xf32>
    %28 = arith.mulf %5, %27 : vector<128x128xf32>
    %29 = vector.broadcast %26 : vector<1x128xf32> to vector<128x128xf32>
    %30 = arith.addf %28, %29 : vector<128x128xf32>
    %cst_15 = arith.constant 0.000000e+00 : f32
    %31 = vector.broadcast %cst_15 : f32 to vector<128x128xf32>
    %32 = arith.maximumf %30, %31 : vector<128x128xf32>
    %c0_16 = arith.constant 0 : index
    %c0_17 = arith.constant 0 : index
    %33 = vector.load %arg6[%c0_16, %c0_17] : memref<128x128xf32, #tpu.memory_space<vmem>>, vector<128x128xf32>
    tpu.vector_store %arg6[%c0_16, %c0_17], %32 {strides = array<i32>} : memref<128x128xf32, #tpu.memory_space<vmem>>, vector<128x128xf32>,
    return
  }
  func.func @transform_0(%arg0: i32) -> (i32, i32) {
    %c0_i32 = arith.constant 0 : i32
    %c0_i32_0 = arith.constant 0 : i32
    %c0_i32_1 = arith.constant 0 : i32
    return %c0_i32, %c0_i32_0 : i32, i32
  }
  func.func @transform_1(%arg0: i32) -> (i32, i32) {
    %c0_i32 = arith.constant 0 : i32
    %c0_i32_0 = arith.constant 0 : i32
    %c0_i32_1 = arith.constant 0 : i32
    return %c0_i32, %c0_i32_0 : i32, i32
  }
  func.func @transform_2(%arg0: i32) -> (i32, i32) {
    %c0_i32 = arith.constant 0 : i32
    %c0_i32_0 = arith.constant 0 : i32
    %c0_i32_1 = arith.constant 0 : i32
    return %c0_i32, %c0_i32_0 : i32, i32
  }
  func.func @transform_3(%arg0: i32) -> (i32, i32) {
    %c0_i32 = arith.constant 0 : i32
    %c0_i32_0 = arith.constant 0 : i32
    %c0_i32_1 = arith.constant 0 : i32
    return %c0_i32, %c0_i32_0 : i32, i32
  }
  func.func @transform_4(%arg0: i32) -> (i32, i32) {
    %c0_i32 = arith.constant 0 : i32
    %c0_i32_0 = arith.constant 0 : i32
    %c0_i32_1 = arith.constant 0 : i32
    return %c0_i32, %c0_i32_0 : i32, i32
  }
  func.func @transform_5(%arg0: i32) -> (i32, i32) {
    %c0_i32 = arith.constant 0 : i32
    %c0_i32_0 = arith.constant 0 : i32
    %c0_i32_1 = arith.constant 0 : i32
    return %c0_i32, %c0_i32_0 : i32, i32
  }
}

module attributes {stable_mosaic.version = 11 : i64} {
  func.func @_conv_bn_relu_kernel(%arg0: i32, %arg1: memref<128x384xbf16, #tpu.memory_space<vmem>>, %arg2: memref<384x128xbf16, #tpu.memory_space<vmem>>, %arg3: memref<1x128xf32, #tpu.memory_space<vmem>>, %arg4: memref<1x128xf32, #tpu.memory_space<vmem>>, %arg5: memref<1x128xf32, #tpu.memory_space<vmem>>, %arg6: memref<128x128xf32, #tpu.memory_space<vmem>>) attributes {dimension_semantics = [#tpu.dimension_semantics<arbitrary>], iteration_bounds = array<i64: 1>, scalar_prefetch = 0 : i64, scratch_operands = 0 : i64, tpu.core_type = #tpu.core_type<tc>, window_params = [{pipeline_mode = #tpu.pipeline_mode<synchronous>, transform_indices = @transform_0, window_bounds = array<i64: 128, 384>}, {pipeline_mode = #tpu.pipeline_mode<synchronous>, transform_indices = @transform_1, window_bounds = array<i64: 384, 128>}, {pipeline_mode = #tpu.pipeline_mode<synchronous>, transform_indices = @transform_2, window_bounds = array<i64: 1, 128>}, {pipeline_mode = #tpu.pipeline_mode<synchronous>, transform_indices = @transform_3, window_bounds = array<i64: 1, 128>}, {pipeline_mode = #tpu.pipeline_mode<synchronous>, transform_indices = @transform_4, window_bounds = array<i64: 1, 128>}, {pipeline_mode = #tpu.pipeline_mode<synchronous>, transform_indices = @transform_5, window_bounds = array<i64: 128, 128>}]} {
    %c0 = arith.constant 0 : index
    %c0_0 = arith.constant 0 : index
    %0 = vector.load %arg1[%c0, %c0_0] : memref<128x384xbf16, #tpu.memory_space<vmem>>, vector<128x384xbf16>
    %c0_1 = arith.constant 0 : index
    %c0_2 = arith.constant 0 : index
    %1 = vector.load %arg2[%c0_1, %c0_2] : memref<384x128xbf16, #tpu.memory_space<vmem>>, vector<384x128xbf16>
    %cst = arith.constant dense<0.000000e+00> : vector<128x128xf32>
    %2 = tpu.matmul %0, %1, %cst {dimension_numbers = #tpu.dot_dimension_numbers<[1], [0], [0], [1], [0, 0, 1, 1], [], []>} : vector<128x384xbf16>, vector<384x128xbf16>, vector<128x128xf32> -> vector<128x128xf32>
    %c0_3 = arith.constant 0 : index
    %c0_4 = arith.constant 0 : index
    %3 = vector.load %arg3[%c0_3, %c0_4] : memref<1x128xf32, #tpu.memory_space<vmem>>, vector<1x128xf32>
    %4 = vector.broadcast %3 : vector<1x128xf32> to vector<128x128xf32>
    %5 = arith.addf %2, %4 : vector<128x128xf32>
    %cst_5 = arith.constant dense<0.000000e+00> : vector<128xf32>
    %6 = vector.multi_reduction <add>, %5, %cst_5 [0] : vector<128x128xf32> to vector<128xf32>
    %7 = vector.shape_cast %6 : vector<128xf32> to vector<1x128xf32>
    %cst_6 = arith.constant 7.812500e-03 : f32
    %8 = vector.broadcast %cst_6 : f32 to vector<1x128xf32>
    %9 = arith.mulf %7, %8 : vector<1x128xf32>
    %10 = arith.mulf %5, %5 : vector<128x128xf32>
    %cst_7 = arith.constant dense<0.000000e+00> : vector<128xf32>
    %11 = vector.multi_reduction <add>, %10, %cst_7 [0] : vector<128x128xf32> to vector<128xf32>
    %12 = vector.shape_cast %11 : vector<128xf32> to vector<1x128xf32>
    %cst_8 = arith.constant 7.812500e-03 : f32
    %13 = vector.broadcast %cst_8 : f32 to vector<1x128xf32>
    %14 = arith.mulf %12, %13 : vector<1x128xf32>
    %15 = arith.mulf %9, %9 : vector<1x128xf32>
    %16 = arith.subf %14, %15 : vector<1x128xf32>
    %cst_9 = arith.constant 0.000000e+00 : f32
    %17 = vector.broadcast %cst_9 : f32 to vector<1x128xf32>
    %18 = arith.maximumf %16, %17 : vector<1x128xf32>
    %c0_10 = arith.constant 0 : index
    %c0_11 = arith.constant 0 : index
    %19 = vector.load %arg4[%c0_10, %c0_11] : memref<1x128xf32, #tpu.memory_space<vmem>>, vector<1x128xf32>
    %cst_12 = arith.constant 9.99999974E-6 : f32
    %20 = vector.broadcast %cst_12 : f32 to vector<1x128xf32>
    %21 = arith.addf %18, %20 : vector<1x128xf32>
    %22 = math.rsqrt %21 : vector<1x128xf32>
    %23 = arith.mulf %19, %22 : vector<1x128xf32>
    %c0_13 = arith.constant 0 : index
    %c0_14 = arith.constant 0 : index
    %24 = vector.load %arg5[%c0_13, %c0_14] : memref<1x128xf32, #tpu.memory_space<vmem>>, vector<1x128xf32>
    %25 = arith.mulf %9, %23 : vector<1x128xf32>
    %26 = arith.subf %24, %25 : vector<1x128xf32>
    %27 = vector.broadcast %23 : vector<1x128xf32> to vector<128x128xf32>
    %28 = arith.mulf %5, %27 : vector<128x128xf32>
    %29 = vector.broadcast %26 : vector<1x128xf32> to vector<128x128xf32>
    %30 = arith.addf %28, %29 : vector<128x128xf32>
    %cst_15 = arith.constant 0.000000e+00 : f32
    %31 = vector.broadcast %cst_15 : f32 to vector<128x128xf32>
    %32 = arith.maximumf %30, %31 : vector<128x128xf32>
    %c0_16 = arith.constant 0 : index
    %c0_17 = arith.constant 0 : index
    %33 = vector.load %arg6[%c0_16, %c0_17] : memref<128x128xf32, #tpu.memory_space<vmem>>, vector<128x128xf32>
    tpu.vector_store %arg6[%c0_16, %c0_17], %32 {strides = array<i32>} : memref<128x128xf32, #tpu.memory_space<vmem>>, vector<128x128xf32>,
    return
  }
  func.func @transform_0(%arg0: i32) -> (i32, i32) {
    %c0_i32 = arith.constant 0 : i32
    %c0_i32_0 = arith.constant 0 : i32
    %c0_i32_1 = arith.constant 0 : i32
    return %c0_i32, %c0_i32_0 : i32, i32
  }
  func.func @transform_1(%arg0: i32) -> (i32, i32) {
    %c0_i32 = arith.constant 0 : i32
    %c0_i32_0 = arith.constant 0 : i32
    %c0_i32_1 = arith.constant 0 : i32
    return %c0_i32, %c0_i32_0 : i32, i32
  }
  func.func @transform_2(%arg0: i32) -> (i32, i32) {
    %c0_i32 = arith.constant 0 : i32
    %c0_i32_0 = arith.constant 0 : i32
    %c0_i32_1 = arith.constant 0 : i32
    return %c0_i32, %c0_i32_0 : i32, i32
  }
  func.func @transform_3(%arg0: i32) -> (i32, i32) {
    %c0_i32 = arith.constant 0 : i32
    %c0_i32_0 = arith.constant 0 : i32
    %c0_i32_1 = arith.constant 0 : i32
    return %c0_i32, %c0_i32_0 : i32, i32
  }
  func.func @transform_4(%arg0: i32) -> (i32, i32) {
    %c0_i32 = arith.constant 0 : i32
    %c0_i32_0 = arith.constant 0 : i32
    %c0_i32_1 = arith.constant 0 : i32
    return %c0_i32, %c0_i32_0 : i32, i32
  }
  func.func @transform_5(%arg0: i32) -> (i32, i32) {
    %c0_i32 = arith.constant 0 : i32
    %c0_i32_0 = arith.constant 0 : i32
    %c0_i32_1 = arith.constant 0 : i32
    return %c0_i32, %c0_i32_0 : i32, i32
  }
}

module attributes {stable_mosaic.version = 11 : i64} {
  func.func @_conv_bn_res_relu_kernel(%arg0: i32, %arg1: memref<128x384xbf16, #tpu.memory_space<vmem>>, %arg2: memref<384x128xbf16, #tpu.memory_space<vmem>>, %arg3: memref<1x128xf32, #tpu.memory_space<vmem>>, %arg4: memref<1x128xf32, #tpu.memory_space<vmem>>, %arg5: memref<1x128xf32, #tpu.memory_space<vmem>>, %arg6: memref<128x128xf32, #tpu.memory_space<vmem>>, %arg7: memref<128x128xf32, #tpu.memory_space<vmem>>) attributes {dimension_semantics = [#tpu.dimension_semantics<arbitrary>], iteration_bounds = array<i64: 1>, scalar_prefetch = 0 : i64, scratch_operands = 0 : i64, tpu.core_type = #tpu.core_type<tc>, window_params = [{pipeline_mode = #tpu.pipeline_mode<synchronous>, transform_indices = @transform_0, window_bounds = array<i64: 128, 384>}, {pipeline_mode = #tpu.pipeline_mode<synchronous>, transform_indices = @transform_1, window_bounds = array<i64: 384, 128>}, {pipeline_mode = #tpu.pipeline_mode<synchronous>, transform_indices = @transform_2, window_bounds = array<i64: 1, 128>}, {pipeline_mode = #tpu.pipeline_mode<synchronous>, transform_indices = @transform_3, window_bounds = array<i64: 1, 128>}, {pipeline_mode = #tpu.pipeline_mode<synchronous>, transform_indices = @transform_4, window_bounds = array<i64: 1, 128>}, {pipeline_mode = #tpu.pipeline_mode<synchronous>, transform_indices = @transform_5, window_bounds = array<i64: 128, 128>}, {pipeline_mode = #tpu.pipeline_mode<synchronous>, transform_indices = @transform_6, window_bounds = array<i64: 128, 128>}]} {
    %c0 = arith.constant 0 : index
    %c0_0 = arith.constant 0 : index
    %0 = vector.load %arg1[%c0, %c0_0] : memref<128x384xbf16, #tpu.memory_space<vmem>>, vector<128x384xbf16>
    %c0_1 = arith.constant 0 : index
    %c0_2 = arith.constant 0 : index
    %1 = vector.load %arg2[%c0_1, %c0_2] : memref<384x128xbf16, #tpu.memory_space<vmem>>, vector<384x128xbf16>
    %cst = arith.constant dense<0.000000e+00> : vector<128x128xf32>
    %2 = tpu.matmul %0, %1, %cst {dimension_numbers = #tpu.dot_dimension_numbers<[1], [0], [0], [1], [0, 0, 1, 1], [], []>} : vector<128x384xbf16>, vector<384x128xbf16>, vector<128x128xf32> -> vector<128x128xf32>
    %c0_3 = arith.constant 0 : index
    %c0_4 = arith.constant 0 : index
    %3 = vector.load %arg3[%c0_3, %c0_4] : memref<1x128xf32, #tpu.memory_space<vmem>>, vector<1x128xf32>
    %4 = vector.broadcast %3 : vector<1x128xf32> to vector<128x128xf32>
    %5 = arith.addf %2, %4 : vector<128x128xf32>
    %cst_5 = arith.constant dense<0.000000e+00> : vector<128xf32>
    %6 = vector.multi_reduction <add>, %5, %cst_5 [0] : vector<128x128xf32> to vector<128xf32>
    %7 = vector.shape_cast %6 : vector<128xf32> to vector<1x128xf32>
    %cst_6 = arith.constant 7.812500e-03 : f32
    %8 = vector.broadcast %cst_6 : f32 to vector<1x128xf32>
    %9 = arith.mulf %7, %8 : vector<1x128xf32>
    %10 = arith.mulf %5, %5 : vector<128x128xf32>
    %cst_7 = arith.constant dense<0.000000e+00> : vector<128xf32>
    %11 = vector.multi_reduction <add>, %10, %cst_7 [0] : vector<128x128xf32> to vector<128xf32>
    %12 = vector.shape_cast %11 : vector<128xf32> to vector<1x128xf32>
    %cst_8 = arith.constant 7.812500e-03 : f32
    %13 = vector.broadcast %cst_8 : f32 to vector<1x128xf32>
    %14 = arith.mulf %12, %13 : vector<1x128xf32>
    %15 = arith.mulf %9, %9 : vector<1x128xf32>
    %16 = arith.subf %14, %15 : vector<1x128xf32>
    %cst_9 = arith.constant 0.000000e+00 : f32
    %17 = vector.broadcast %cst_9 : f32 to vector<1x128xf32>
    %18 = arith.maximumf %16, %17 : vector<1x128xf32>
    %c0_10 = arith.constant 0 : index
    %c0_11 = arith.constant 0 : index
    %19 = vector.load %arg4[%c0_10, %c0_11] : memref<1x128xf32, #tpu.memory_space<vmem>>, vector<1x128xf32>
    %cst_12 = arith.constant 9.99999974E-6 : f32
    %20 = vector.broadcast %cst_12 : f32 to vector<1x128xf32>
    %21 = arith.addf %18, %20 : vector<1x128xf32>
    %22 = math.rsqrt %21 : vector<1x128xf32>
    %23 = arith.mulf %19, %22 : vector<1x128xf32>
    %c0_13 = arith.constant 0 : index
    %c0_14 = arith.constant 0 : index
    %24 = vector.load %arg5[%c0_13, %c0_14] : memref<1x128xf32, #tpu.memory_space<vmem>>, vector<1x128xf32>
    %25 = arith.mulf %9, %23 : vector<1x128xf32>
    %26 = arith.subf %24, %25 : vector<1x128xf32>
    %27 = vector.broadcast %23 : vector<1x128xf32> to vector<128x128xf32>
    %28 = arith.mulf %5, %27 : vector<128x128xf32>
    %29 = vector.broadcast %26 : vector<1x128xf32> to vector<128x128xf32>
    %30 = arith.addf %28, %29 : vector<128x128xf32>
    %c0_15 = arith.constant 0 : index
    %c0_16 = arith.constant 0 : index
    %31 = vector.load %arg6[%c0_15, %c0_16] : memref<128x128xf32, #tpu.memory_space<vmem>>, vector<128x128xf32>
    %32 = arith.addf %30, %31 : vector<128x128xf32>
    %cst_17 = arith.constant 0.000000e+00 : f32
    %33 = vector.broadcast %cst_17 : f32 to vector<128x128xf32>
    %34 = arith.maximumf %32, %33 : vector<128x128xf32>
    %c0_18 = arith.constant 0 : index
    %c0_19 = arith.constant 0 : index
    %35 = vector.load %arg7[%c0_18, %c0_19] : memref<128x128xf32, #tpu.memory_space<vmem>>, vector<128x128xf32>
    tpu.vector_store %arg7[%c0_18, %c0_19], %34 {strides = array<i32>} : memref<128x128xf32, #tpu.memory_space<vmem>>, vector<128x128xf32>,
    return
  }
  func.func @transform_0(%arg0: i32) -> (i32, i32) {
    %c0_i32 = arith.constant 0 : i32
    %c0_i32_0 = arith.constant 0 : i32
    %c0_i32_1 = arith.constant 0 : i32
    return %c0_i32, %c0_i32_0 : i32, i32
  }
  func.func @transform_1(%arg0: i32) -> (i32, i32) {
    %c0_i32 = arith.constant 0 : i32
    %c0_i32_0 = arith.constant 0 : i32
    %c0_i32_1 = arith.constant 0 : i32
    return %c0_i32, %c0_i32_0 : i32, i32
  }
  func.func @transform_2(%arg0: i32) -> (i32, i32) {
    %c0_i32 = arith.constant 0 : i32
    %c0_i32_0 = arith.constant 0 : i32
    %c0_i32_1 = arith.constant 0 : i32
    return %c0_i32, %c0_i32_0 : i32, i32
  }
  func.func @transform_3(%arg0: i32) -> (i32, i32) {
    %c0_i32 = arith.constant 0 : i32
    %c0_i32_0 = arith.constant 0 : i32
    %c0_i32_1 = arith.constant 0 : i32
    return %c0_i32, %c0_i32_0 : i32, i32
  }
  func.func @transform_4(%arg0: i32) -> (i32, i32) {
    %c0_i32 = arith.constant 0 : i32
    %c0_i32_0 = arith.constant 0 : i32
    %c0_i32_1 = arith.constant 0 : i32
    return %c0_i32, %c0_i32_0 : i32, i32
  }
  func.func @transform_5(%arg0: i32) -> (i32, i32) {
    %c0_i32 = arith.constant 0 : i32
    %c0_i32_0 = arith.constant 0 : i32
    %c0_i32_1 = arith.constant 0 : i32
    return %c0_i32, %c0_i32_0 : i32, i32
  }
  func.func @transform_6(%arg0: i32) -> (i32, i32) {
    %c0_i32 = arith.constant 0 : i32
    %c0_i32_0 = arith.constant 0 : i32
    %c0_i32_1 = arith.constant 0 : i32
    return %c0_i32, %c0_i32_0 : i32, i32
  }
}

module attributes {stable_mosaic.version = 11 : i64} {
  func.func @_conv_bn_relu_kernel(%arg0: i32, %arg1: memref<32x384xbf16, #tpu.memory_space<vmem>>, %arg2: memref<384x128xbf16, #tpu.memory_space<vmem>>, %arg3: memref<1x128xf32, #tpu.memory_space<vmem>>, %arg4: memref<1x128xf32, #tpu.memory_space<vmem>>, %arg5: memref<1x128xf32, #tpu.memory_space<vmem>>, %arg6: memref<32x128xf32, #tpu.memory_space<vmem>>) attributes {dimension_semantics = [#tpu.dimension_semantics<arbitrary>], iteration_bounds = array<i64: 1>, scalar_prefetch = 0 : i64, scratch_operands = 0 : i64, tpu.core_type = #tpu.core_type<tc>, window_params = [{pipeline_mode = #tpu.pipeline_mode<synchronous>, transform_indices = @transform_0, window_bounds = array<i64: 32, 384>}, {pipeline_mode = #tpu.pipeline_mode<synchronous>, transform_indices = @transform_1, window_bounds = array<i64: 384, 128>}, {pipeline_mode = #tpu.pipeline_mode<synchronous>, transform_indices = @transform_2, window_bounds = array<i64: 1, 128>}, {pipeline_mode = #tpu.pipeline_mode<synchronous>, transform_indices = @transform_3, window_bounds = array<i64: 1, 128>}, {pipeline_mode = #tpu.pipeline_mode<synchronous>, transform_indices = @transform_4, window_bounds = array<i64: 1, 128>}, {pipeline_mode = #tpu.pipeline_mode<synchronous>, transform_indices = @transform_5, window_bounds = array<i64: 32, 128>}]} {
    %c0 = arith.constant 0 : index
    %c0_0 = arith.constant 0 : index
    %0 = vector.load %arg1[%c0, %c0_0] : memref<32x384xbf16, #tpu.memory_space<vmem>>, vector<32x384xbf16>
    %c0_1 = arith.constant 0 : index
    %c0_2 = arith.constant 0 : index
    %1 = vector.load %arg2[%c0_1, %c0_2] : memref<384x128xbf16, #tpu.memory_space<vmem>>, vector<384x128xbf16>
    %cst = arith.constant dense<0.000000e+00> : vector<32x128xf32>
    %2 = tpu.matmul %0, %1, %cst {dimension_numbers = #tpu.dot_dimension_numbers<[1], [0], [0], [1], [0, 0, 1, 1], [], []>} : vector<32x384xbf16>, vector<384x128xbf16>, vector<32x128xf32> -> vector<32x128xf32>
    %c0_3 = arith.constant 0 : index
    %c0_4 = arith.constant 0 : index
    %3 = vector.load %arg3[%c0_3, %c0_4] : memref<1x128xf32, #tpu.memory_space<vmem>>, vector<1x128xf32>
    %4 = vector.broadcast %3 : vector<1x128xf32> to vector<32x128xf32>
    %5 = arith.addf %2, %4 : vector<32x128xf32>
    %cst_5 = arith.constant dense<0.000000e+00> : vector<128xf32>
    %6 = vector.multi_reduction <add>, %5, %cst_5 [0] : vector<32x128xf32> to vector<128xf32>
    %7 = vector.shape_cast %6 : vector<128xf32> to vector<1x128xf32>
    %cst_6 = arith.constant 3.125000e-02 : f32
    %8 = vector.broadcast %cst_6 : f32 to vector<1x128xf32>
    %9 = arith.mulf %7, %8 : vector<1x128xf32>
    %10 = arith.mulf %5, %5 : vector<32x128xf32>
    %cst_7 = arith.constant dense<0.000000e+00> : vector<128xf32>
    %11 = vector.multi_reduction <add>, %10, %cst_7 [0] : vector<32x128xf32> to vector<128xf32>
    %12 = vector.shape_cast %11 : vector<128xf32> to vector<1x128xf32>
    %cst_8 = arith.constant 3.125000e-02 : f32
    %13 = vector.broadcast %cst_8 : f32 to vector<1x128xf32>
    %14 = arith.mulf %12, %13 : vector<1x128xf32>
    %15 = arith.mulf %9, %9 : vector<1x128xf32>
    %16 = arith.subf %14, %15 : vector<1x128xf32>
    %cst_9 = arith.constant 0.000000e+00 : f32
    %17 = vector.broadcast %cst_9 : f32 to vector<1x128xf32>
    %18 = arith.maximumf %16, %17 : vector<1x128xf32>
    %c0_10 = arith.constant 0 : index
    %c0_11 = arith.constant 0 : index
    %19 = vector.load %arg4[%c0_10, %c0_11] : memref<1x128xf32, #tpu.memory_space<vmem>>, vector<1x128xf32>
    %cst_12 = arith.constant 9.99999974E-6 : f32
    %20 = vector.broadcast %cst_12 : f32 to vector<1x128xf32>
    %21 = arith.addf %18, %20 : vector<1x128xf32>
    %22 = math.rsqrt %21 : vector<1x128xf32>
    %23 = arith.mulf %19, %22 : vector<1x128xf32>
    %c0_13 = arith.constant 0 : index
    %c0_14 = arith.constant 0 : index
    %24 = vector.load %arg5[%c0_13, %c0_14] : memref<1x128xf32, #tpu.memory_space<vmem>>, vector<1x128xf32>
    %25 = arith.mulf %9, %23 : vector<1x128xf32>
    %26 = arith.subf %24, %25 : vector<1x128xf32>
    %27 = vector.broadcast %23 : vector<1x128xf32> to vector<32x128xf32>
    %28 = arith.mulf %5, %27 : vector<32x128xf32>
    %29 = vector.broadcast %26 : vector<1x128xf32> to vector<32x128xf32>
    %30 = arith.addf %28, %29 : vector<32x128xf32>
    %cst_15 = arith.constant 0.000000e+00 : f32
    %31 = vector.broadcast %cst_15 : f32 to vector<32x128xf32>
    %32 = arith.maximumf %30, %31 : vector<32x128xf32>
    %c0_16 = arith.constant 0 : index
    %c0_17 = arith.constant 0 : index
    %33 = vector.load %arg6[%c0_16, %c0_17] : memref<32x128xf32, #tpu.memory_space<vmem>>, vector<32x128xf32>
    tpu.vector_store %arg6[%c0_16, %c0_17], %32 {strides = array<i32>} : memref<32x128xf32, #tpu.memory_space<vmem>>, vector<32x128xf32>,
    return
  }
  func.func @transform_0(%arg0: i32) -> (i32, i32) {
    %c0_i32 = arith.constant 0 : i32
    %c0_i32_0 = arith.constant 0 : i32
    %c0_i32_1 = arith.constant 0 : i32
    return %c0_i32, %c0_i32_0 : i32, i32
  }
  func.func @transform_1(%arg0: i32) -> (i32, i32) {
    %c0_i32 = arith.constant 0 : i32
    %c0_i32_0 = arith.constant 0 : i32
    %c0_i32_1 = arith.constant 0 : i32
    return %c0_i32, %c0_i32_0 : i32, i32
  }
  func.func @transform_2(%arg0: i32) -> (i32, i32) {
    %c0_i32 = arith.constant 0 : i32
    %c0_i32_0 = arith.constant 0 : i32
    %c0_i32_1 = arith.constant 0 : i32
    return %c0_i32, %c0_i32_0 : i32, i32
  }
  func.func @transform_3(%arg0: i32) -> (i32, i32) {
    %c0_i32 = arith.constant 0 : i32
    %c0_i32_0 = arith.constant 0 : i32
    %c0_i32_1 = arith.constant 0 : i32
    return %c0_i32, %c0_i32_0 : i32, i32
  }
  func.func @transform_4(%arg0: i32) -> (i32, i32) {
    %c0_i32 = arith.constant 0 : i32
    %c0_i32_0 = arith.constant 0 : i32
    %c0_i32_1 = arith.constant 0 : i32
    return %c0_i32, %c0_i32_0 : i32, i32
  }
  func.func @transform_5(%arg0: i32) -> (i32, i32) {
    %c0_i32 = arith.constant 0 : i32
    %c0_i32_0 = arith.constant 0 : i32
    %c0_i32_1 = arith.constant 0 : i32
    return %c0_i32, %c0_i32_0 : i32, i32
  }
}

module attributes {stable_mosaic.version = 11 : i64} {
  func.func @_conv_bn_relu_kernel(%arg0: i32, %arg1: memref<32x640xbf16, #tpu.memory_space<vmem>>, %arg2: memref<640x128xbf16, #tpu.memory_space<vmem>>, %arg3: memref<1x128xf32, #tpu.memory_space<vmem>>, %arg4: memref<1x128xf32, #tpu.memory_space<vmem>>, %arg5: memref<1x128xf32, #tpu.memory_space<vmem>>, %arg6: memref<32x128xf32, #tpu.memory_space<vmem>>) attributes {dimension_semantics = [#tpu.dimension_semantics<arbitrary>], iteration_bounds = array<i64: 1>, scalar_prefetch = 0 : i64, scratch_operands = 0 : i64, tpu.core_type = #tpu.core_type<tc>, window_params = [{pipeline_mode = #tpu.pipeline_mode<synchronous>, transform_indices = @transform_0, window_bounds = array<i64: 32, 640>}, {pipeline_mode = #tpu.pipeline_mode<synchronous>, transform_indices = @transform_1, window_bounds = array<i64: 640, 128>}, {pipeline_mode = #tpu.pipeline_mode<synchronous>, transform_indices = @transform_2, window_bounds = array<i64: 1, 128>}, {pipeline_mode = #tpu.pipeline_mode<synchronous>, transform_indices = @transform_3, window_bounds = array<i64: 1, 128>}, {pipeline_mode = #tpu.pipeline_mode<synchronous>, transform_indices = @transform_4, window_bounds = array<i64: 1, 128>}, {pipeline_mode = #tpu.pipeline_mode<synchronous>, transform_indices = @transform_5, window_bounds = array<i64: 32, 128>}]} {
    %c0 = arith.constant 0 : index
    %c0_0 = arith.constant 0 : index
    %0 = vector.load %arg1[%c0, %c0_0] : memref<32x640xbf16, #tpu.memory_space<vmem>>, vector<32x640xbf16>
    %c0_1 = arith.constant 0 : index
    %c0_2 = arith.constant 0 : index
    %1 = vector.load %arg2[%c0_1, %c0_2] : memref<640x128xbf16, #tpu.memory_space<vmem>>, vector<640x128xbf16>
    %cst = arith.constant dense<0.000000e+00> : vector<32x128xf32>
    %2 = tpu.matmul %0, %1, %cst {dimension_numbers = #tpu.dot_dimension_numbers<[1], [0], [0], [1], [0, 0, 1, 1], [], []>} : vector<32x640xbf16>, vector<640x128xbf16>, vector<32x128xf32> -> vector<32x128xf32>
    %c0_3 = arith.constant 0 : index
    %c0_4 = arith.constant 0 : index
    %3 = vector.load %arg3[%c0_3, %c0_4] : memref<1x128xf32, #tpu.memory_space<vmem>>, vector<1x128xf32>
    %4 = vector.broadcast %3 : vector<1x128xf32> to vector<32x128xf32>
    %5 = arith.addf %2, %4 : vector<32x128xf32>
    %cst_5 = arith.constant dense<0.000000e+00> : vector<128xf32>
    %6 = vector.multi_reduction <add>, %5, %cst_5 [0] : vector<32x128xf32> to vector<128xf32>
    %7 = vector.shape_cast %6 : vector<128xf32> to vector<1x128xf32>
    %cst_6 = arith.constant 3.125000e-02 : f32
    %8 = vector.broadcast %cst_6 : f32 to vector<1x128xf32>
    %9 = arith.mulf %7, %8 : vector<1x128xf32>
    %10 = arith.mulf %5, %5 : vector<32x128xf32>
    %cst_7 = arith.constant dense<0.000000e+00> : vector<128xf32>
    %11 = vector.multi_reduction <add>, %10, %cst_7 [0] : vector<32x128xf32> to vector<128xf32>
    %12 = vector.shape_cast %11 : vector<128xf32> to vector<1x128xf32>
    %cst_8 = arith.constant 3.125000e-02 : f32
    %13 = vector.broadcast %cst_8 : f32 to vector<1x128xf32>
    %14 = arith.mulf %12, %13 : vector<1x128xf32>
    %15 = arith.mulf %9, %9 : vector<1x128xf32>
    %16 = arith.subf %14, %15 : vector<1x128xf32>
    %cst_9 = arith.constant 0.000000e+00 : f32
    %17 = vector.broadcast %cst_9 : f32 to vector<1x128xf32>
    %18 = arith.maximumf %16, %17 : vector<1x128xf32>
    %c0_10 = arith.constant 0 : index
    %c0_11 = arith.constant 0 : index
    %19 = vector.load %arg4[%c0_10, %c0_11] : memref<1x128xf32, #tpu.memory_space<vmem>>, vector<1x128xf32>
    %cst_12 = arith.constant 9.99999974E-6 : f32
    %20 = vector.broadcast %cst_12 : f32 to vector<1x128xf32>
    %21 = arith.addf %18, %20 : vector<1x128xf32>
    %22 = math.rsqrt %21 : vector<1x128xf32>
    %23 = arith.mulf %19, %22 : vector<1x128xf32>
    %c0_13 = arith.constant 0 : index
    %c0_14 = arith.constant 0 : index
    %24 = vector.load %arg5[%c0_13, %c0_14] : memref<1x128xf32, #tpu.memory_space<vmem>>, vector<1x128xf32>
    %25 = arith.mulf %9, %23 : vector<1x128xf32>
    %26 = arith.subf %24, %25 : vector<1x128xf32>
    %27 = vector.broadcast %23 : vector<1x128xf32> to vector<32x128xf32>
    %28 = arith.mulf %5, %27 : vector<32x128xf32>
    %29 = vector.broadcast %26 : vector<1x128xf32> to vector<32x128xf32>
    %30 = arith.addf %28, %29 : vector<32x128xf32>
    %cst_15 = arith.constant 0.000000e+00 : f32
    %31 = vector.broadcast %cst_15 : f32 to vector<32x128xf32>
    %32 = arith.maximumf %30, %31 : vector<32x128xf32>
    %c0_16 = arith.constant 0 : index
    %c0_17 = arith.constant 0 : index
    %33 = vector.load %arg6[%c0_16, %c0_17] : memref<32x128xf32, #tpu.memory_space<vmem>>, vector<32x128xf32>
    tpu.vector_store %arg6[%c0_16, %c0_17], %32 {strides = array<i32>} : memref<32x128xf32, #tpu.memory_space<vmem>>, vector<32x128xf32>,
    return
  }
  func.func @transform_0(%arg0: i32) -> (i32, i32) {
    %c0_i32 = arith.constant 0 : i32
    %c0_i32_0 = arith.constant 0 : i32
    %c0_i32_1 = arith.constant 0 : i32
    return %c0_i32, %c0_i32_0 : i32, i32
  }
  func.func @transform_1(%arg0: i32) -> (i32, i32) {
    %c0_i32 = arith.constant 0 : i32
    %c0_i32_0 = arith.constant 0 : i32
    %c0_i32_1 = arith.constant 0 : i32
    return %c0_i32, %c0_i32_0 : i32, i32
  }
  func.func @transform_2(%arg0: i32) -> (i32, i32) {
    %c0_i32 = arith.constant 0 : i32
    %c0_i32_0 = arith.constant 0 : i32
    %c0_i32_1 = arith.constant 0 : i32
    return %c0_i32, %c0_i32_0 : i32, i32
  }
  func.func @transform_3(%arg0: i32) -> (i32, i32) {
    %c0_i32 = arith.constant 0 : i32
    %c0_i32_0 = arith.constant 0 : i32
    %c0_i32_1 = arith.constant 0 : i32
    return %c0_i32, %c0_i32_0 : i32, i32
  }
  func.func @transform_4(%arg0: i32) -> (i32, i32) {
    %c0_i32 = arith.constant 0 : i32
    %c0_i32_0 = arith.constant 0 : i32
    %c0_i32_1 = arith.constant 0 : i32
    return %c0_i32, %c0_i32_0 : i32, i32
  }
  func.func @transform_5(%arg0: i32) -> (i32, i32) {
    %c0_i32 = arith.constant 0 : i32
    %c0_i32_0 = arith.constant 0 : i32
    %c0_i32_1 = arith.constant 0 : i32
    return %c0_i32, %c0_i32_0 : i32, i32
  }
}

module attributes {stable_mosaic.version = 11 : i64} {
  func.func @_conv_bn_res_relu_kernel(%arg0: i32, %arg1: memref<32x640xbf16, #tpu.memory_space<vmem>>, %arg2: memref<640x128xbf16, #tpu.memory_space<vmem>>, %arg3: memref<1x128xf32, #tpu.memory_space<vmem>>, %arg4: memref<1x128xf32, #tpu.memory_space<vmem>>, %arg5: memref<1x128xf32, #tpu.memory_space<vmem>>, %arg6: memref<32x128xf32, #tpu.memory_space<vmem>>, %arg7: memref<32x128xf32, #tpu.memory_space<vmem>>) attributes {dimension_semantics = [#tpu.dimension_semantics<arbitrary>], iteration_bounds = array<i64: 1>, scalar_prefetch = 0 : i64, scratch_operands = 0 : i64, tpu.core_type = #tpu.core_type<tc>, window_params = [{pipeline_mode = #tpu.pipeline_mode<synchronous>, transform_indices = @transform_0, window_bounds = array<i64: 32, 640>}, {pipeline_mode = #tpu.pipeline_mode<synchronous>, transform_indices = @transform_1, window_bounds = array<i64: 640, 128>}, {pipeline_mode = #tpu.pipeline_mode<synchronous>, transform_indices = @transform_2, window_bounds = array<i64: 1, 128>}, {pipeline_mode = #tpu.pipeline_mode<synchronous>, transform_indices = @transform_3, window_bounds = array<i64: 1, 128>}, {pipeline_mode = #tpu.pipeline_mode<synchronous>, transform_indices = @transform_4, window_bounds = array<i64: 1, 128>}, {pipeline_mode = #tpu.pipeline_mode<synchronous>, transform_indices = @transform_5, window_bounds = array<i64: 32, 128>}, {pipeline_mode = #tpu.pipeline_mode<synchronous>, transform_indices = @transform_6, window_bounds = array<i64: 32, 128>}]} {
    %c0 = arith.constant 0 : index
    %c0_0 = arith.constant 0 : index
    %0 = vector.load %arg1[%c0, %c0_0] : memref<32x640xbf16, #tpu.memory_space<vmem>>, vector<32x640xbf16>
    %c0_1 = arith.constant 0 : index
    %c0_2 = arith.constant 0 : index
    %1 = vector.load %arg2[%c0_1, %c0_2] : memref<640x128xbf16, #tpu.memory_space<vmem>>, vector<640x128xbf16>
    %cst = arith.constant dense<0.000000e+00> : vector<32x128xf32>
    %2 = tpu.matmul %0, %1, %cst {dimension_numbers = #tpu.dot_dimension_numbers<[1], [0], [0], [1], [0, 0, 1, 1], [], []>} : vector<32x640xbf16>, vector<640x128xbf16>, vector<32x128xf32> -> vector<32x128xf32>
    %c0_3 = arith.constant 0 : index
    %c0_4 = arith.constant 0 : index
    %3 = vector.load %arg3[%c0_3, %c0_4] : memref<1x128xf32, #tpu.memory_space<vmem>>, vector<1x128xf32>
    %4 = vector.broadcast %3 : vector<1x128xf32> to vector<32x128xf32>
    %5 = arith.addf %2, %4 : vector<32x128xf32>
    %cst_5 = arith.constant dense<0.000000e+00> : vector<128xf32>
    %6 = vector.multi_reduction <add>, %5, %cst_5 [0] : vector<32x128xf32> to vector<128xf32>
    %7 = vector.shape_cast %6 : vector<128xf32> to vector<1x128xf32>
    %cst_6 = arith.constant 3.125000e-02 : f32
    %8 = vector.broadcast %cst_6 : f32 to vector<1x128xf32>
    %9 = arith.mulf %7, %8 : vector<1x128xf32>
    %10 = arith.mulf %5, %5 : vector<32x128xf32>
    %cst_7 = arith.constant dense<0.000000e+00> : vector<128xf32>
    %11 = vector.multi_reduction <add>, %10, %cst_7 [0] : vector<32x128xf32> to vector<128xf32>
    %12 = vector.shape_cast %11 : vector<128xf32> to vector<1x128xf32>
    %cst_8 = arith.constant 3.125000e-02 : f32
    %13 = vector.broadcast %cst_8 : f32 to vector<1x128xf32>
    %14 = arith.mulf %12, %13 : vector<1x128xf32>
    %15 = arith.mulf %9, %9 : vector<1x128xf32>
    %16 = arith.subf %14, %15 : vector<1x128xf32>
    %cst_9 = arith.constant 0.000000e+00 : f32
    %17 = vector.broadcast %cst_9 : f32 to vector<1x128xf32>
    %18 = arith.maximumf %16, %17 : vector<1x128xf32>
    %c0_10 = arith.constant 0 : index
    %c0_11 = arith.constant 0 : index
    %19 = vector.load %arg4[%c0_10, %c0_11] : memref<1x128xf32, #tpu.memory_space<vmem>>, vector<1x128xf32>
    %cst_12 = arith.constant 9.99999974E-6 : f32
    %20 = vector.broadcast %cst_12 : f32 to vector<1x128xf32>
    %21 = arith.addf %18, %20 : vector<1x128xf32>
    %22 = math.rsqrt %21 : vector<1x128xf32>
    %23 = arith.mulf %19, %22 : vector<1x128xf32>
    %c0_13 = arith.constant 0 : index
    %c0_14 = arith.constant 0 : index
    %24 = vector.load %arg5[%c0_13, %c0_14] : memref<1x128xf32, #tpu.memory_space<vmem>>, vector<1x128xf32>
    %25 = arith.mulf %9, %23 : vector<1x128xf32>
    %26 = arith.subf %24, %25 : vector<1x128xf32>
    %27 = vector.broadcast %23 : vector<1x128xf32> to vector<32x128xf32>
    %28 = arith.mulf %5, %27 : vector<32x128xf32>
    %29 = vector.broadcast %26 : vector<1x128xf32> to vector<32x128xf32>
    %30 = arith.addf %28, %29 : vector<32x128xf32>
    %c0_15 = arith.constant 0 : index
    %c0_16 = arith.constant 0 : index
    %31 = vector.load %arg6[%c0_15, %c0_16] : memref<32x128xf32, #tpu.memory_space<vmem>>, vector<32x128xf32>
    %32 = arith.addf %30, %31 : vector<32x128xf32>
    %cst_17 = arith.constant 0.000000e+00 : f32
    %33 = vector.broadcast %cst_17 : f32 to vector<32x128xf32>
    %34 = arith.maximumf %32, %33 : vector<32x128xf32>
    %c0_18 = arith.constant 0 : index
    %c0_19 = arith.constant 0 : index
    %35 = vector.load %arg7[%c0_18, %c0_19] : memref<32x128xf32, #tpu.memory_space<vmem>>, vector<32x128xf32>
    tpu.vector_store %arg7[%c0_18, %c0_19], %34 {strides = array<i32>} : memref<32x128xf32, #tpu.memory_space<vmem>>, vector<32x128xf32>,
    return
  }
  func.func @transform_0(%arg0: i32) -> (i32, i32) {
    %c0_i32 = arith.constant 0 : i32
    %c0_i32_0 = arith.constant 0 : i32
    %c0_i32_1 = arith.constant 0 : i32
    return %c0_i32, %c0_i32_0 : i32, i32
  }
  func.func @transform_1(%arg0: i32) -> (i32, i32) {
    %c0_i32 = arith.constant 0 : i32
    %c0_i32_0 = arith.constant 0 : i32
    %c0_i32_1 = arith.constant 0 : i32
    return %c0_i32, %c0_i32_0 : i32, i32
  }
  func.func @transform_2(%arg0: i32) -> (i32, i32) {
    %c0_i32 = arith.constant 0 : i32
    %c0_i32_0 = arith.constant 0 : i32
    %c0_i32_1 = arith.constant 0 : i32
    return %c0_i32, %c0_i32_0 : i32, i32
  }
  func.func @transform_3(%arg0: i32) -> (i32, i32) {
    %c0_i32 = arith.constant 0 : i32
    %c0_i32_0 = arith.constant 0 : i32
    %c0_i32_1 = arith.constant 0 : i32
    return %c0_i32, %c0_i32_0 : i32, i32
  }
  func.func @transform_4(%arg0: i32) -> (i32, i32) {
    %c0_i32 = arith.constant 0 : i32
    %c0_i32_0 = arith.constant 0 : i32
    %c0_i32_1 = arith.constant 0 : i32
    return %c0_i32, %c0_i32_0 : i32, i32
  }
  func.func @transform_5(%arg0: i32) -> (i32, i32) {
    %c0_i32 = arith.constant 0 : i32
    %c0_i32_0 = arith.constant 0 : i32
    %c0_i32_1 = arith.constant 0 : i32
    return %c0_i32, %c0_i32_0 : i32, i32
  }
  func.func @transform_6(%arg0: i32) -> (i32, i32) {
    %c0_i32 = arith.constant 0 : i32
    %c0_i32_0 = arith.constant 0 : i32
    %c0_i32_1 = arith.constant 0 : i32
    return %c0_i32, %c0_i32_0 : i32, i32
  }
}

module attributes {stable_mosaic.version = 11 : i64} {
  func.func @_dense_kernel(%arg0: i32, %arg1: memref<2x2048xbf16, #tpu.memory_space<vmem>>, %arg2: memref<2048x128xbf16, #tpu.memory_space<vmem>>, %arg3: memref<1x128xf32, #tpu.memory_space<vmem>>, %arg4: memref<2x128xf32, #tpu.memory_space<vmem>>) attributes {dimension_semantics = [#tpu.dimension_semantics<arbitrary>], iteration_bounds = array<i64: 1>, scalar_prefetch = 0 : i64, scratch_operands = 0 : i64, tpu.core_type = #tpu.core_type<tc>, window_params = [{pipeline_mode = #tpu.pipeline_mode<synchronous>, transform_indices = @transform_0, window_bounds = array<i64: 2, 2048>}, {pipeline_mode = #tpu.pipeline_mode<synchronous>, transform_indices = @transform_1, window_bounds = array<i64: 2048, 128>}, {pipeline_mode = #tpu.pipeline_mode<synchronous>, transform_indices = @transform_2, window_bounds = array<i64: 1, 128>}, {pipeline_mode = #tpu.pipeline_mode<synchronous>, transform_indices = @transform_3, window_bounds = array<i64: 2, 128>}]} {
    %c0 = arith.constant 0 : index
    %c0_0 = arith.constant 0 : index
    %0 = vector.load %arg1[%c0, %c0_0] : memref<2x2048xbf16, #tpu.memory_space<vmem>>, vector<2x2048xbf16>
    %c0_1 = arith.constant 0 : index
    %c0_2 = arith.constant 0 : index
    %1 = vector.load %arg2[%c0_1, %c0_2] : memref<2048x128xbf16, #tpu.memory_space<vmem>>, vector<2048x128xbf16>
    %cst = arith.constant dense<0.000000e+00> : vector<2x128xf32>
    %2 = tpu.matmul %0, %1, %cst {dimension_numbers = #tpu.dot_dimension_numbers<[1], [0], [0], [1], [0, 0, 1, 1], [], []>} : vector<2x2048xbf16>, vector<2048x128xbf16>, vector<2x128xf32> -> vector<2x128xf32>
    %c0_3 = arith.constant 0 : index
    %c0_4 = arith.constant 0 : index
    %3 = vector.load %arg3[%c0_3, %c0_4] : memref<1x128xf32, #tpu.memory_space<vmem>>, vector<1x128xf32>
    %4 = vector.broadcast %3 : vector<1x128xf32> to vector<2x128xf32>
    %5 = arith.addf %2, %4 : vector<2x128xf32>
    %c0_5 = arith.constant 0 : index
    %c0_6 = arith.constant 0 : index
    %6 = vector.load %arg4[%c0_5, %c0_6] : memref<2x128xf32, #tpu.memory_space<vmem>>, vector<2x128xf32>
    tpu.vector_store %arg4[%c0_5, %c0_6], %5 {strides = array<i32>} : memref<2x128xf32, #tpu.memory_space<vmem>>, vector<2x128xf32>,
    return
  }
  func.func @transform_0(%arg0: i32) -> (i32, i32) {
    %c0_i32 = arith.constant 0 : i32
    %c0_i32_0 = arith.constant 0 : i32
    %c0_i32_1 = arith.constant 0 : i32
    return %c0_i32, %c0_i32_0 : i32, i32
  }
  func.func @transform_1(%arg0: i32) -> (i32, i32) {
    %c0_i32 = arith.constant 0 : i32
    %c0_i32_0 = arith.constant 0 : i32
    %c0_i32_1 = arith.constant 0 : i32
    return %c0_i32, %c0_i32_0 : i32, i32
  }
  func.func @transform_2(%arg0: i32) -> (i32, i32) {
    %c0_i32 = arith.constant 0 : i32
    %c0_i32_0 = arith.constant 0 : i32
    %c0_i32_1 = arith.constant 0 : i32
    return %c0_i32, %c0_i32_0 : i32, i32
  }
  func.func @transform_3(%arg0: i32) -> (i32, i32) {
    %c0_i32 = arith.constant 0 : i32
    %c0_i32_0 = arith.constant 0 : i32
    %c0_i32_1 = arith.constant 0 : i32
    return %c0_i32, %c0_i32_0 : i32, i32
  }
}

</mosaic_0001>

<llo_original>
// kernel: residual_net.10
$region0: #{residual_net.10}
  #allocation0 [shape = 'u32[]', space=smem, size = 0x4, offset = 0x4, fixed_abs, tag = 'smem constant byte address 0x4 - core index']
  #allocation1 [shape = 'u32[144,128]{1,0:T(1,128)}', space=vmem, size = 0x12000, scoped, tag = 'internal scratch']
  %s0 = inlined_call_operand.vmem [shape: bf16[512,128], index: 0, kind: input, shape index: {}]
  %s1 = inlined_call_operand.vmem [shape: bf16[128,128], index: 1, kind: input, shape index: {}]
  %s2 = inlined_call_operand.vmem [shape: f32[1,128], index: 2, kind: input, shape index: {}]
  %s3 = inlined_call_operand.vmem [shape: f32[1,128], index: 3, kind: input, shape index: {}]
  %s4 = inlined_call_operand.vmem [shape: f32[1,128], index: 4, kind: input, shape index: {}]
  %s5 = inlined_call_operand.vmem [shape: f32[512,128], index: 5, kind: output, shape index: {}]
  %s6 = sld [smem:[#allocation0]]
  $region30: #{residual_net.10} parent=0
    _
  %s8 = ssub.s32 1, %s6
  %s9 = scalar_select 0, %s8, %s6
  // Predicated region
  $region2: #{residual_net.10} parent=0 // pred_check
    _
  $region3: #{residual_net.10} parent=0 // pred_check_branch
    %11 = sbr.rel (0) target = $region5
  $region4: #{residual_net.10} parent=0 // pred_region
    _
  $region5: #{residual_net.10} parent=0 // pred_fallthru
    _
  // Predicated region
  $region6: #{residual_net.10} parent=0 // pred_check
    _
  $region7: #{residual_net.10} parent=0 // pred_check_branch
    %13 = sbr.rel (0) target = $region9
  $region8: #{residual_net.10} parent=0 // pred_region
    _
  $region9: #{residual_net.10} parent=0 // pred_fallthru
    _
  // Predicated region
  $region10: #{residual_net.10} parent=0 // pred_check
    _
  $region11: #{residual_net.10} parent=0 // pred_check_branch
    %15 = sbr.rel (0) target = $region13
  $region12: #{residual_net.10} parent=0 // pred_region
    _
  $region13: #{residual_net.10} parent=0 // pred_fallthru
    _
  // Predicated region
  $region14: #{residual_net.10} parent=0 // pred_check
    _
  $region15: #{residual_net.10} parent=0 // pred_check_branch
    %17 = sbr.rel (0) target = $region17
  $region16: #{residual_net.10} parent=0 // pred_region
    _
  $region17: #{residual_net.10} parent=0 // pred_fallthru
    _
  // Predicated region
  $region18: #{residual_net.10} parent=0 // pred_check
    _
  $region19: #{residual_net.10} parent=0 // pred_check_branch
    %19 = sbr.rel (0) target = $region21
  $region20: #{residual_net.10} parent=0 // pred_region
    _
  $region21: #{residual_net.10} parent=0 // pred_fallthru
    _
  %v21 = vld [vmem:[%s0] sm:$0xf]
  %v22 = vld [vmem:[%s0 + $0x4] sm:$0xf]
  %v23 = vld [vmem:[%s0 + $0x8] sm:$0xf]
  %v24 = vld [vmem:[%s0 + $0xc] sm:$0xf]
  %v25 = vld [vmem:[%s0 + $0x10] sm:$0xf]
  %v26 = vld [vmem:[%s0 + $0x14] sm:$0xf]
  %v27 = vld [vmem:[%s0 + $0x18] sm:$0xf]
  %v28 = vld [vmem:[%s0 + $0x1c] sm:$0xf]
  %v29 = vld [vmem:[%s0 + $0x20] sm:$0xf]
  %v30 = vld [vmem:[%s0 + $0x24] sm:$0xf]
  %v31 = vld [vmem:[%s0 + $0x28] sm:$0xf]
  %v32 = vld [vmem:[%s0 + $0x2c] sm:$0xf]
  %v33 = vld [vmem:[%s0 + $0x30] sm:$0xf]
  %v34 = vld [vmem:[%s0 + $0x34] sm:$0xf]
  %v35 = vld [vmem:[%s0 + $0x38] sm:$0xf]
  %v36 = vld [vmem:[%s0 + $0x3c] sm:$0xf]
  %v37 = vld [vmem:[%s0 + $0x40] sm:$0xf]
  %v38 = vld [vmem:[%s0 + $0x44] sm:$0xf]
  %v39 = vld [vmem:[%s0 + $0x48] sm:$0xf]
  %v40 = vld [vmem:[%s0 + $0x4c] sm:$0xf]
  %v41 = vld [vmem:[%s0 + $0x50] sm:$0xf]
  %v42 = vld [vmem:[%s0 + $0x54] sm:$0xf]
  %v43 = vld [vmem:[%s0 + $0x58] sm:$0xf]
  %v44 = vld [vmem:[%s0 + $0x5c] sm:$0xf]
  %v45 = vld [vmem:[%s0 + $0x60] sm:$0xf]
  %v46 = vld [vmem:[%s0 + $0x64] sm:$0xf]
  %v47 = vld [vmem:[%s0 + $0x68] sm:$0xf]
  %v48 = vld [vmem:[%s0 + $0x6c] sm:$0xf]
  %v49 = vld [vmem:[%s0 + $0x70] sm:$0xf]
  %v50 = vld [vmem:[%s0 + $0x74] sm:$0xf]
  %v51 = vld [vmem:[%s0 + $0x78] sm:$0xf]
  %v52 = vld [vmem:[%s0 + $0x7c] sm:$0xf]
  %v53 = vld [vmem:[%s0 + $0x80] sm:$0xf]
  %v54 = vld [vmem:[%s0 + $0x84] sm:$0xf]
  %v55 = vld [vmem:[%s0 + $0x88] sm:$0xf]
  %v56 = vld [vmem:[%s0 + $0x8c] sm:$0xf]
  %v57 = vld [vmem:[%s0 + $0x90] sm:$0xf]
  %v58 = vld [vmem:[%s0 + $0x94] sm:$0xf]
  %v59 = vld [vmem:[%s0 + $0x98] sm:$0xf]
  %v60 = vld [vmem:[%s0 + $0x9c] sm:$0xf]
  %v61 = vld [vmem:[%s0 + $0xa0] sm:$0xf]
  %v62 = vld [vmem:[%s0 + $0xa4] sm:$0xf]
  %v63 = vld [vmem:[%s0 + $0xa8] sm:$0xf]
  %v64 = vld [vmem:[%s0 + $0xac] sm:$0xf]
  %v65 = vld [vmem:[%s0 + $0xb0] sm:$0xf]
  %v66 = vld [vmem:[%s0 + $0xb4] sm:$0xf]
  %v67 = vld [vmem:[%s0 + $0xb8] sm:$0xf]
  %v68 = vld [vmem:[%s0 + $0xbc] sm:$0xf]
  %v69 = vld [vmem:[%s0 + $0xc0] sm:$0xf]
  %v70 = vld [vmem:[%s0 + $0xc4] sm:$0xf]
  %v71 = vld [vmem:[%s0 + $0xc8] sm:$0xf]
  %v72 = vld [vmem:[%s0 + $0xcc] sm:$0xf]
  %v73 = vld [vmem:[%s0 + $0xd0] sm:$0xf]
  %v74 = vld [vmem:[%s0 + $0xd4] sm:$0xf]
  %v75 = vld [vmem:[%s0 + $0xd8] sm:$0xf]
  %v76 = vld [vmem:[%s0 + $0xdc] sm:$0xf]
  %v77 = vld [vmem:[%s0 + $0xe0] sm:$0xf]
  %v78 = vld [vmem:[%s0 + $0xe4] sm:$0xf]
  %v79 = vld [vmem:[%s0 + $0xe8] sm:$0xf]
  %v80 = vld [vmem:[%s0 + $0xec] sm:$0xf]
  %v81 = vld [vmem:[%s0 + $0xf0] sm:$0xf]
  %v82 = vld [vmem:[%s0 + $0xf4] sm:$0xf]
  %v83 = vld [vmem:[%s0 + $0xf8] sm:$0xf]
  %v84 = vld [vmem:[%s0 + $0xfc] sm:$0xf]
  %v85 = vld [vmem:[%s1] sm:$0xf]
  %v86 = vld [vmem:[%s1 + $0x4] sm:$0xf]
  %v87 = vld [vmem:[%s1 + $0x8] sm:$0xf]
  %v88 = vld [vmem:[%s1 + $0xc] sm:$0xf]
  %v89 = vld [vmem:[%s1 + $0x10] sm:$0xf]
  %v90 = vld [vmem:[%s1 + $0x14] sm:$0xf]
  %v91 = vld [vmem:[%s1 + $0x18] sm:$0xf]
  %v92 = vld [vmem:[%s1 + $0x1c] sm:$0xf]
  %v93 = vld [vmem:[%s1 + $0x20] sm:$0xf]
  %v94 = vld [vmem:[%s1 + $0x24] sm:$0xf]
  %v95 = vld [vmem:[%s1 + $0x28] sm:$0xf]
  %v96 = vld [vmem:[%s1 + $0x2c] sm:$0xf]
  %v97 = vld [vmem:[%s1 + $0x30] sm:$0xf]
  %v98 = vld [vmem:[%s1 + $0x34] sm:$0xf]
  %v99 = vld [vmem:[%s1 + $0x38] sm:$0xf]
  %v100 = vld [vmem:[%s1 + $0x3c] sm:$0xf]
  %v101 = vld [vmem:[%s2] sm:$0x1]
  %v103 = vlaneseq
  %v104 = vshrl.u32 %v103, 7
  %v105 = vsub.s32 0, %v104
  %v106 = vrot.slane %v101, %v105
  %v172 = vunpack.c.l.b16 %v21
  %v173 = vunpack.c.l.b16 %v22
  %v174 = vunpack.c.l.b16 %v23
  %v175 = vunpack.c.l.b16 %v24
  %v176 = vunpack.c.l.b16 %v25
  %v177 = vunpack.c.l.b16 %v26
  %v178 = vunpack.c.l.b16 %v27
  %v179 = vunpack.c.l.b16 %v28
  %v180 = vunpack.c.l.b16 %v29
  %v181 = vunpack.c.l.b16 %v30
  %v182 = vunpack.c.l.b16 %v31
  %v183 = vunpack.c.l.b16 %v32
  %v184 = vunpack.c.l.b16 %v33
  %v185 = vunpack.c.l.b16 %v34
  %v186 = vunpack.c.l.b16 %v35
  %v187 = vunpack.c.l.b16 %v36
  %v188 = vunpack.c.l.b16 %v37
  %v189 = vunpack.c.l.b16 %v38
  %v190 = vunpack.c.l.b16 %v39
  %v191 = vunpack.c.l.b16 %v40
  %v192 = vunpack.c.l.b16 %v41
  %v193 = vunpack.c.l.b16 %v42
  %v194 = vunpack.c.l.b16 %v43
  %v195 = vunpack.c.l.b16 %v44
  %v196 = vunpack.c.l.b16 %v45
  %v197 = vunpack.c.l.b16 %v46
  %v198 = vunpack.c.l.b16 %v47
  %v199 = vunpack.c.l.b16 %v48
  %v200 = vunpack.c.l.b16 %v49
  %v201 = vunpack.c.l.b16 %v50
  %v202 = vunpack.c.l.b16 %v51
  %v203 = vunpack.c.l.b16 %v52
  %v204 = vunpack.c.l.b16 %v53
  %v205 = vunpack.c.l.b16 %v54
  %v206 = vunpack.c.l.b16 %v55
  %v207 = vunpack.c.l.b16 %v56
  %v208 = vunpack.c.l.b16 %v57
  %v209 = vunpack.c.l.b16 %v58
  %v210 = vunpack.c.l.b16 %v59
  %v211 = vunpack.c.l.b16 %v60
  %v212 = vunpack.c.l.b16 %v61
  %v213 = vunpack.c.l.b16 %v62
  %v214 = vunpack.c.l.b16 %v63
  %v215 = vunpack.c.l.b16 %v64
  %v216 = vunpack.c.l.b16 %v65
  %v217 = vunpack.c.l.b16 %v66
  %v218 = vunpack.c.l.b16 %v67
  %v219 = vunpack.c.l.b16 %v68
  %v220 = vunpack.c.l.b16 %v69
  %v221 = vunpack.c.l.b16 %v70
  %v222 = vunpack.c.l.b16 %v71
  %v223 = vunpack.c.l.b16 %v72
  %v224 = vunpack.c.l.b16 %v73
  %v225 = vunpack.c.l.b16 %v74
  %v226 = vunpack.c.l.b16 %v75
  %v227 = vunpack.c.l.b16 %v76
  %v228 = vunpack.c.l.b16 %v77
  %v229 = vunpack.c.l.b16 %v78
  %v230 = vunpack.c.l.b16 %v79
  %v231 = vunpack.c.l.b16 %v80
  %v232 = vunpack.c.l.b16 %v81
  %v233 = vunpack.c.l.b16 %v82
  %v234 = vunpack.c.l.b16 %v83
  %v235 = vunpack.c.l.b16 %v84
  %v236 = vpack.c.b16 %v173, %v172
  %v237 = vpack.c.b16 %v175, %v174
  %v238 = vpack.c.b16 %v177, %v176
  %v239 = vpack.c.b16 %v179, %v178
  %v240 = vpack.c.b16 %v181, %v180
  %v241 = vpack.c.b16 %v183, %v182
  %v242 = vpack.c.b16 %v185, %v184
  %v243 = vpack.c.b16 %v187, %v186
  %v244 = vpack.c.b16 %v189, %v188
  %v245 = vpack.c.b16 %v191, %v190
  %v246 = vpack.c.b16 %v193, %v192
  %v247 = vpack.c.b16 %v195, %v194
  %v248 = vpack.c.b16 %v197, %v196
  %v249 = vpack.c.b16 %v199, %v198
  %v250 = vpack.c.b16 %v201, %v200
  %v251 = vpack.c.b16 %v203, %v202
  %v252 = vpack.c.b16 %v205, %v204
  %v253 = vpack.c.b16 %v207, %v206
  %v254 = vpack.c.b16 %v209, %v208
  %v255 = vpack.c.b16 %v211, %v210
  %v256 = vpack.c.b16 %v213, %v212
  %v257 = vpack.c.b16 %v215, %v214
  %v258 = vpack.c.b16 %v217, %v216
  %v259 = vpack.c.b16 %v219, %v218
  %v260 = vpack.c.b16 %v221, %v220
  %v261 = vpack.c.b16 %v223, %v222
  %v262 = vpack.c.b16 %v225, %v224
  %v263 = vpack.c.b16 %v227, %v226
  %v264 = vpack.c.b16 %v229, %v228
  %v265 = vpack.c.b16 %v231, %v230
  %v266 = vpack.c.b16 %v233, %v232
  %v267 = vpack.c.b16 %v235, %v234
  %v316 = vunpack.c.l.b16 %v85
  %v317 = vunpack.c.l.b16 %v86
  %v318 = vunpack.c.l.b16 %v87
  %v319 = vunpack.c.l.b16 %v88
  %v320 = vunpack.c.l.b16 %v89
  %v321 = vunpack.c.l.b16 %v90
  %v322 = vunpack.c.l.b16 %v91
  %v323 = vunpack.c.l.b16 %v92
  %v324 = vunpack.c.l.b16 %v93
  %v325 = vunpack.c.l.b16 %v94
  %v326 = vunpack.c.l.b16 %v95
  %v327 = vunpack.c.l.b16 %v96
  %v328 = vunpack.c.l.b16 %v97
  %v329 = vunpack.c.l.b16 %v98
  %v330 = vunpack.c.l.b16 %v99
  %v331 = vunpack.c.l.b16 %v100
  %v332 = vpack.c.b16 %v317, %v316
  %v333 = vpack.c.b16 %v319, %v318
  %v334 = vpack.c.b16 %v321, %v320
  %v335 = vpack.c.b16 %v323, %v322
  %v336 = vpack.c.b16 %v325, %v324
  %v337 = vpack.c.b16 %v327, %v326
  %v338 = vpack.c.b16 %v329, %v328
  %v339 = vpack.c.b16 %v331, %v330
  %348 = vmatprep.subr.bf16.mxu0 0
  %349 = vmatpush1.bf16.msra.mxu0 %v339
  %350 = vmatprep.subr.bf16.mxu0 0
  %351 = vmatpush1.bf16.msra.mxu0 %v338
  %352 = vmatprep.subr.bf16.mxu0 0
  %353 = vmatpush1.bf16.msra.mxu0 %v337
  %354 = vmatprep.subr.bf16.mxu0 0
  %355 = vmatpush1.bf16.msra.mxu0 %v336
  %356 = vmatprep.subr.bf16.mxu0 0
  %357 = vmatpush1.bf16.msra.mxu0 %v335
  %358 = vmatprep.subr.bf16.mxu0 0
  %359 = vmatpush1.bf16.msra.mxu0 %v334
  %360 = vmatprep.subr.bf16.mxu0 0
  %361 = vmatpush1.bf16.msra.mxu0 %v333
  %362 = vmatprep.subr.bf16.mxu0 0
  %363 = vmatpush1.bf16.msra.mxu0 %v332
  %364 = vmatprep.subr.bf16.mxu0 0
  %365 = vmatpush2.bf16.msra.mxu0 0
  %366 = vmatprep.subr.bf16.mxu0 0
  %367 = vmatpush2.bf16.msra.mxu0 0
  %368 = vmatprep.subr.bf16.mxu0 0
  %369 = vmatpush2.bf16.msra.mxu0 0
  %370 = vmatprep.subr.bf16.mxu0 0
  %371 = vmatpush2.bf16.msra.mxu0 0
  %372 = vmatprep.subr.bf16.mxu0 0
  %373 = vmatpush2.bf16.msra.mxu0 0
  %374 = vmatprep.subr.bf16.mxu0 0
  %375 = vmatpush2.bf16.msra.mxu0 0
  %376 = vmatprep.subr.bf16.mxu0 0
  %377 = vmatpush2.bf16.msra.mxu0 0
  %378 = vmatprep.subr.bf16.mxu0 0
  %379 = vmatpush2.bf16.msra.mxu0 0
  %380 = vmatprep.mubr.bf16.mxu0 0
  %381 = vmatmul.mubr.bf16.gmra.mxu0 %v236
  %v382 = vpop.f32.mrf.mxu0
  %v383 = vadd.f32 %v106, %v382
  %v384 = vpop.f32.mrf.mxu0
  %v385 = vpop.f32.mrf.mxu0
  %v386 = vadd.f32 %v106, %v385
  %v387 = vpop.f32.mrf.mxu0
  %388 = vmatprep.mubr.bf16.mxu0 0
  %389 = vmatmul.mubr.bf16.gmra.mxu0 %v237
  %v390 = vpop.f32.mrf.mxu0
  %v391 = vadd.f32 %v106, %v390
  %v392 = vpop.f32.mrf.mxu0
  %v393 = vpop.f32.mrf.mxu0
  %v394 = vadd.f32 %v106, %v393
  %v395 = vpop.f32.mrf.mxu0
  %396 = vmatprep.mubr.bf16.mxu0 0
  %397 = vmatmul.mubr.bf16.gmra.mxu0 %v238
  %v398 = vpop.f32.mrf.mxu0
  %v399 = vadd.f32 %v106, %v398
  %v400 = vpop.f32.mrf.mxu0
  %v401 = vpop.f32.mrf.mxu0
  %v402 = vadd.f32 %v106, %v401
  %v403 = vpop.f32.mrf.mxu0
  %404 = vmatprep.mubr.bf16.mxu0 0
  %405 = vmatmul.mubr.bf16.gmra.mxu0 %v239
  %v406 = vpop.f32.mrf.mxu0
  %v407 = vadd.f32 %v106, %v406
  %v408 = vpop.f32.mrf.mxu0
  %v409 = vpop.f32.mrf.mxu0
  %v410 = vadd.f32 %v106, %v409
  %v411 = vpop.f32.mrf.mxu0
  %412 = vmatprep.mubr.bf16.mxu0 0
  %413 = vmatmul.mubr.bf16.gmra.mxu0 %v240
  %v414 = vpop.f32.mrf.mxu0
  %v415 = vadd.f32 %v106, %v414
  %v416 = vpop.f32.mrf.mxu0
  %v417 = vpop.f32.mrf.mxu0
  %v418 = vadd.f32 %v106, %v417
  %v419 = vpop.f32.mrf.mxu0
  %420 = vmatprep.mubr.bf16.mxu0 0
  %421 = vmatmul.mubr.bf16.gmra.mxu0 %v241
  %v422 = vpop.f32.mrf.mxu0
  %v423 = vadd.f32 %v106, %v422
  %v424 = vpop.f32.mrf.mxu0
  %v425 = vpop.f32.mrf.mxu0
  %v426 = vadd.f32 %v106, %v425
  %v427 = vpop.f32.mrf.mxu0
  %428 = vmatprep.mubr.bf16.mxu0 0
  %429 = vmatmul.mubr.bf16.gmra.mxu0 %v242
  %v430 = vpop.f32.mrf.mxu0
  %v431 = vadd.f32 %v106, %v430
  %v432 = vpop.f32.mrf.mxu0
  %v433 = vpop.f32.mrf.mxu0
  %v434 = vadd.f32 %v106, %v433
  %v435 = vpop.f32.mrf.mxu0
  %436 = vmatprep.mubr.bf16.mxu0 0
  %437 = vmatmul.mubr.bf16.gmra.mxu0 %v243
  %v438 = vpop.f32.mrf.mxu0
  %v439 = vadd.f32 %v106, %v438
  %v440 = vpop.f32.mrf.mxu0
  %v441 = vpop.f32.mrf.mxu0
  %v442 = vadd.f32 %v106, %v441
  %v443 = vpop.f32.mrf.mxu0
  %444 = vmatprep.mubr.bf16.mxu0 0
  %445 = vmatmul.mubr.bf16.gmra.mxu0 %v244
  %v446 = vpop.f32.mrf.mxu0
  %v447 = vadd.f32 %v106, %v446
  %v448 = vpop.f32.mrf.mxu0
  %v449 = vpop.f32.mrf.mxu0
  %v450 = vadd.f32 %v106, %v449
  %v451 = vpop.f32.mrf.mxu0
  %452 = vmatprep.mubr.bf16.mxu0 0
  %453 = vmatmul.mubr.bf16.gmra.mxu0 %v245
  %v454 = vpop.f32.mrf.mxu0
  %v455 = vadd.f32 %v106, %v454
  %v456 = vpop.f32.mrf.mxu0
  %v457 = vpop.f32.mrf.mxu0
  %v458 = vadd.f32 %v106, %v457
  %v459 = vpop.f32.mrf.mxu0
  %460 = vmatprep.mubr.bf16.mxu0 0
  %461 = vmatmul.mubr.bf16.gmra.mxu0 %v246
  %v462 = vpop.f32.mrf.mxu0
  %v463 = vadd.f32 %v106, %v462
  %v464 = vpop.f32.mrf.mxu0
  %v465 = vpop.f32.mrf.mxu0
  %v466 = vadd.f32 %v106, %v465
  %v467 = vpop.f32.mrf.mxu0
  %468 = vmatprep.mubr.bf16.mxu0 0
  %469 = vmatmul.mubr.bf16.gmra.mxu0 %v247
  %v470 = vpop.f32.mrf.mxu0
  %v471 = vadd.f32 %v106, %v470
  %v472 = vpop.f32.mrf.mxu0
  %v473 = vpop.f32.mrf.mxu0
  %v474 = vadd.f32 %v106, %v473
  %v475 = vpop.f32.mrf.mxu0
  %476 = vmatprep.mubr.bf16.mxu0 0
  %477 = vmatmul.mubr.bf16.gmra.mxu0 %v248
  %v478 = vpop.f32.mrf.mxu0
  %v479 = vadd.f32 %v106, %v478
  %v480 = vpop.f32.mrf.mxu0
  %v481 = vpop.f32.mrf.mxu0
  %v482 = vadd.f32 %v106, %v481
  %v483 = vpop.f32.mrf.mxu0
  %484 = vmatprep.mubr.bf16.mxu0 0
  %485 = vmatmul.mubr.bf16.gmra.mxu0 %v249
  %v486 = vpop.f32.mrf.mxu0
  %v487 = vadd.f32 %v106, %v486
  %v488 = vpop.f32.mrf.mxu0
  %v489 = vpop.f32.mrf.mxu0
  %v490 = vadd.f32 %v106, %v489
  %v491 = vpop.f32.mrf.mxu0
  %492 = vmatprep.mubr.bf16.mxu0 0
  %493 = vmatmul.mubr.bf16.gmra.mxu0 %v250
  %v494 = vpop.f32.mrf.mxu0
  %v495 = vadd.f32 %v106, %v494
  %v496 = vpop.f32.mrf.mxu0
  %v497 = vpop.f32.mrf.mxu0
  %v498 = vadd.f32 %v106, %v497
  %v499 = vpop.f32.mrf.mxu0
  %500 = vmatprep.mubr.bf16.mxu0 0
  %501 = vmatmul.mubr.bf16.gmra.mxu0 %v251
  %v502 = vpop.f32.mrf.mxu0
  %v503 = vadd.f32 %v106, %v502
  %v504 = vpop.f32.mrf.mxu0
  %v505 = vpop.f32.mrf.mxu0
  %v506 = vadd.f32 %v106, %v505
  %v507 = vpop.f32.mrf.mxu0
  %508 = vmatprep.mubr.bf16.mxu0 0
  %509 = vmatmul.mubr.bf16.gmra.mxu0 %v252
  %v510 = vpop.f32.mrf.mxu0
  %v511 = vadd.f32 %v106, %v510
  %v512 = vpop.f32.mrf.mxu0
  %v513 = vpop.f32.mrf.mxu0
  %v514 = vadd.f32 %v106, %v513
  %v515 = vpop.f32.mrf.mxu0
  %516 = vmatprep.mubr.bf16.mxu0 0
  %517 = vmatmul.mubr.bf16.gmra.mxu0 %v253
  %v518 = vpop.f32.mrf.mxu0
  %v519 = vadd.f32 %v106, %v518
  %v520 = vpop.f32.mrf.mxu0
  %v521 = vpop.f32.mrf.mxu0
  %v522 = vadd.f32 %v106, %v521
  %v523 = vpop.f32.mrf.mxu0
  %524 = vmatprep.mubr.bf16.mxu0 0
  %525 = vmatmul.mubr.bf16.gmra.mxu0 %v254
  %v526 = vpop.f32.mrf.mxu0
  %v527 = vadd.f32 %v106, %v526
  %v528 = vpop.f32.mrf.mxu0
  %v529 = vpop.f32.mrf.mxu0
  %v530 = vadd.f32 %v106, %v529
  %v531 = vpop.f32.mrf.mxu0
  %532 = vmatprep.mubr.bf16.mxu0 0
  %533 = vmatmul.mubr.bf16.gmra.mxu0 %v255
  %v534 = vpop.f32.mrf.mxu0
  %v535 = vadd.f32 %v106, %v534
  %v536 = vpop.f32.mrf.mxu0
  %v537 = vpop.f32.mrf.mxu0
  %v538 = vadd.f32 %v106, %v537
  %v539 = vpop.f32.mrf.mxu0
  %540 = vmatprep.mubr.bf16.mxu0 0
  %541 = vmatmul.mubr.bf16.gmra.mxu0 %v256
  %v542 = vpop.f32.mrf.mxu0
  %v543 = vadd.f32 %v106, %v542
  %v544 = vpop.f32.mrf.mxu0
  %v545 = vpop.f32.mrf.mxu0
  %v546 = vadd.f32 %v106, %v545
  %v547 = vpop.f32.mrf.mxu0
  %548 = vmatprep.mubr.bf16.mxu0 0
  %549 = vmatmul.mubr.bf16.gmra.mxu0 %v257
  %v550 = vpop.f32.mrf.mxu0
  %v551 = vadd.f32 %v106, %v550
  %v552 = vpop.f32.mrf.mxu0
  %v553 = vpop.f32.mrf.mxu0
  %v554 = vadd.f32 %v106, %v553
  %v555 = vpop.f32.mrf.mxu0
  %556 = vmatprep.mubr.bf16.mxu0 0
  %557 = vmatmul.mubr.bf16.gmra.mxu0 %v258
  %v558 = vpop.f32.mrf.mxu0
  %v559 = vadd.f32 %v106, %v558
  %v560 = vpop.f32.mrf.mxu0
  %v561 = vpop.f32.mrf.mxu0
  %v562 = vadd.f32 %v106, %v561
  %v563 = vpop.f32.mrf.mxu0
  %564 = vmatprep.mubr.bf16.mxu0 0
  %565 = vmatmul.mubr.bf16.gmra.mxu0 %v259
  %v566 = vpop.f32.mrf.mxu0
  %v567 = vadd.f32 %v106, %v566
  %v568 = vpop.f32.mrf.mxu0
  %v569 = vpop.f32.mrf.mxu0
  %v570 = vadd.f32 %v106, %v569
  %v571 = vpop.f32.mrf.mxu0
  %572 = vmatprep.mubr.bf16.mxu0 0
  %573 = vmatmul.mubr.bf16.gmra.mxu0 %v260
  %v574 = vpop.f32.mrf.mxu0
  %v575 = vadd.f32 %v106, %v574
  %v576 = vpop.f32.mrf.mxu0
  %v577 = vpop.f32.mrf.mxu0
  %v578 = vadd.f32 %v106, %v577
  %v579 = vpop.f32.mrf.mxu0
  %580 = vmatprep.mubr.bf16.mxu0 0
  %581 = vmatmul.mubr.bf16.gmra.mxu0 %v261
  %v582 = vpop.f32.mrf.mxu0
  %v583 = vadd.f32 %v106, %v582
  %v584 = vpop.f32.mrf.mxu0
  %v585 = vpop.f32.mrf.mxu0
  %v586 = vadd.f32 %v106, %v585
  %v587 = vpop.f32.mrf.mxu0
  %588 = vmatprep.mubr.bf16.mxu0 0
  %589 = vmatmul.mubr.bf16.gmra.mxu0 %v262
  %v590 = vpop.f32.mrf.mxu0
  %v591 = vadd.f32 %v106, %v590
  %v592 = vpop.f32.mrf.mxu0
  %v593 = vpop.f32.mrf.mxu0
  %v594 = vadd.f32 %v106, %v593
  %v595 = vpop.f32.mrf.mxu0
  %596 = vmatprep.mubr.bf16.mxu0 0
  %597 = vmatmul.mubr.bf16.gmra.mxu0 %v263
  %v598 = vpop.f32.mrf.mxu0
  %v599 = vadd.f32 %v106, %v598
  %v600 = vpop.f32.mrf.mxu0
  %v601 = vpop.f32.mrf.mxu0
  %v602 = vadd.f32 %v106, %v601
  %v603 = vpop.f32.mrf.mxu0
  %604 = vmatprep.mubr.bf16.mxu0 0
  %605 = vmatmul.mubr.bf16.gmra.mxu0 %v264
  %v606 = vpop.f32.mrf.mxu0
  %v607 = vadd.f32 %v106, %v606
  %v608 = vpop.f32.mrf.mxu0
  %v609 = vpop.f32.mrf.mxu0
  %v610 = vadd.f32 %v106, %v609
  %v611 = vpop.f32.mrf.mxu0
  %612 = vmatprep.mubr.bf16.mxu0 0
  %613 = vmatmul.mubr.bf16.gmra.mxu0 %v265
  %v614 = vpop.f32.mrf.mxu0
  %v615 = vadd.f32 %v106, %v614
  %v616 = vpop.f32.mrf.mxu0
  %v617 = vpop.f32.mrf.mxu0
  %v618 = vadd.f32 %v106, %v617
  %v619 = vpop.f32.mrf.mxu0
  %620 = vmatprep.mubr.bf16.mxu0 0
  %621 = vmatmul.mubr.bf16.gmra.mxu0 %v266
  %v622 = vpop.f32.mrf.mxu0
  %v623 = vadd.f32 %v106, %v622
  %v624 = vpop.f32.mrf.mxu0
  %v625 = vpop.f32.mrf.mxu0
  %v626 = vadd.f32 %v106, %v625
  %v627 = vpop.f32.mrf.mxu0
  %628 = vmatprep.mubr.bf16.mxu0 0
  %629 = vmatmul.mubr.bf16.gmra.mxu0 %v267
  %v630 = vpop.f32.mrf.mxu0
  %v631 = vadd.f32 %v106, %v630
  %v632 = vpop.f32.mrf.mxu0
  %v633 = vpop.f32.mrf.mxu0
  %v634 = vadd.f32 %v106, %v633
  %v635 = vpop.f32.mrf.mxu0
  %636 = vdwg.mxu0
  %v637 = vadd.f32 %v383, %v386
  %v638 = vadd.f32 %v637, %v391
  %v639 = vadd.f32 %v638, %v394
  %v640 = vadd.f32 %v639, %v399
  %v641 = vadd.f32 %v640, %v402
  %v642 = vadd.f32 %v641, %v407
  %v643 = vadd.f32 %v642, %v410
  %v644 = vadd.f32 %v643, %v415
  %v645 = vadd.f32 %v644, %v418
  %v646 = vadd.f32 %v645, %v423
  %v647 = vadd.f32 %v646, %v426
  %v648 = vadd.f32 %v647, %v431
  %v649 = vadd.f32 %v648, %v434
  %v650 = vadd.f32 %v649, %v439
  %v651 = vadd.f32 %v650, %v442
  %v652 = vadd.f32 %v651, %v447
  %v653 = vadd.f32 %v652, %v450
  %v654 = vadd.f32 %v653, %v455
  %v655 = vadd.f32 %v654, %v458
  %v656 = vadd.f32 %v655, %v463
  %v657 = vadd.f32 %v656, %v466
  %v658 = vadd.f32 %v657, %v471
  %v659 = vadd.f32 %v658, %v474
  %v660 = vadd.f32 %v659, %v479
  %v661 = vadd.f32 %v660, %v482
  %v662 = vadd.f32 %v661, %v487
  %v663 = vadd.f32 %v662, %v490
  %v664 = vadd.f32 %v663, %v495
  %v665 = vadd.f32 %v664, %v498
  %v666 = vadd.f32 %v665, %v503
  %v667 = vadd.f32 %v666, %v506
  %v668 = vadd.f32 %v667, %v511
  %v669 = vadd.f32 %v668, %v514
  %v670 = vadd.f32 %v669, %v519
  %v671 = vadd.f32 %v670, %v522
  %v672 = vadd.f32 %v671, %v527
  %v673 = vadd.f32 %v672, %v530
  %v674 = vadd.f32 %v673, %v535
  %v675 = vadd.f32 %v674, %v538
  %v676 = vadd.f32 %v675, %v543
  %v677 = vadd.f32 %v676, %v546
  %v678 = vadd.f32 %v677, %v551
  %v679 = vadd.f32 %v678, %v554
  %v680 = vadd.f32 %v679, %v559
  %v681 = vadd.f32 %v680, %v562
  %v682 = vadd.f32 %v681, %v567
  %v683 = vadd.f32 %v682, %v570
  %v684 = vadd.f32 %v683, %v575
  %v685 = vadd.f32 %v684, %v578
  %v686 = vadd.f32 %v685, %v583
  %v687 = vadd.f32 %v686, %v586
  %v688 = vadd.f32 %v687, %v591
  %v689 = vadd.f32 %v688, %v594
  %v690 = vadd.f32 %v689, %v599
  %v691 = vadd.f32 %v690, %v602
  %v692 = vadd.f32 %v691, %v607
  %v693 = vadd.f32 %v692, %v610
  %v694 = vadd.f32 %v693, %v615
  %v695 = vadd.f32 %v694, %v618
  %v696 = vadd.f32 %v695, %v623
  %v697 = vadd.f32 %v696, %v626
  %v698 = vadd.f32 %v697, %v631
  %v699 = vadd.f32 %v698, %v634
  %v700 = vrot.slane %v699, 4
  %v701 = vadd.f32 %v699, %v700
  %v702 = vrot.slane %v701, 2
  %v703 = vadd.f32 %v701, %v702
  %v704 = vrot.slane %v703, 1
  %v705 = vadd.f32 %v703, %v704
  %v706 = vmul.f32 %v705, 0.001953125
  %v707 = vmul.f32 %v383, %v383
  %v708 = vmul.f32 %v386, %v386
  %v709 = vmul.f32 %v391, %v391
  %v710 = vmul.f32 %v394, %v394
  %v711 = vmul.f32 %v399, %v399
  %v712 = vmul.f32 %v402, %v402
  %v713 = vmul.f32 %v407, %v407
  %v714 = vmul.f32 %v410, %v410
  %v715 = vmul.f32 %v415, %v415
  %v716 = vmul.f32 %v418, %v418
  %v717 = vmul.f32 %v423, %v423
  %v718 = vmul.f32 %v426, %v426
  %v719 = vmul.f32 %v431, %v431
  %v720 = vmul.f32 %v434, %v434
  %v721 = vmul.f32 %v439, %v439
  %v722 = vmul.f32 %v442, %v442
  %v723 = vmul.f32 %v447, %v447
  %v724 = vmul.f32 %v450, %v450
  %v725 = vmul.f32 %v455, %v455
  %v726 = vmul.f32 %v458, %v458
  %v727 = vmul.f32 %v463, %v463
  %v728 = vmul.f32 %v466, %v466
  %v729 = vmul.f32 %v471, %v471
  %v730 = vmul.f32 %v474, %v474
  %v731 = vmul.f32 %v479, %v479
  %v732 = vmul.f32 %v482, %v482
  %v733 = vmul.f32 %v487, %v487
  %v734 = vmul.f32 %v490, %v490
  %v735 = vmul.f32 %v495, %v495
  %v736 = vmul.f32 %v498, %v498
  %v737 = vmul.f32 %v503, %v503
  %v738 = vmul.f32 %v506, %v506
  %v739 = vmul.f32 %v511, %v511
  %v740 = vmul.f32 %v514, %v514
  %v741 = vmul.f32 %v519, %v519
  %v742 = vmul.f32 %v522, %v522
  %v743 = vmul.f32 %v527, %v527
  %v744 = vmul.f32 %v530, %v530
  %v745 = vmul.f32 %v535, %v535
  %v746 = vmul.f32 %v538, %v538
  %v747 = vmul.f32 %v543, %v543
  %v748 = vmul.f32 %v546, %v546
  %v749 = vmul.f32 %v551, %v551
  %v750 = vmul.f32 %v554, %v554
  %v751 = vmul.f32 %v559, %v559
  %v752 = vmul.f32 %v562, %v562
  %v753 = vmul.f32 %v567, %v567
  %v754 = vmul.f32 %v570, %v570
  %v755 = vmul.f32 %v575, %v575
  %v756 = vmul.f32 %v578, %v578
  %v757 = vmul.f32 %v583, %v583
  %v758 = vmul.f32 %v586, %v586
  %v759 = vmul.f32 %v591, %v591
  %v760 = vmul.f32 %v594, %v594
  %v761 = vmul.f32 %v599, %v599
  %v762 = vmul.f32 %v602, %v602
  %v763 = vmul.f32 %v607, %v607
  %v764 = vmul.f32 %v610, %v610
  %v765 = vmul.f32 %v615, %v615
  %v766 = vmul.f32 %v618, %v618
  %v767 = vmul.f32 %v623, %v623
  %v768 = vmul.f32 %v626, %v626
  %v769 = vmul.f32 %v631, %v631
  %v770 = vmul.f32 %v634, %v634
  %v771 = vadd.f32 %v707, %v708
  %v772 = vadd.f32 %v771, %v709
  %v773 = vadd.f32 %v772, %v710
  %v774 = vadd.f32 %v773, %v711
  %v775 = vadd.f32 %v774, %v712
  %v776 = vadd.f32 %v775, %v713
  %v777 = vadd.f32 %v776, %v714
  %v778 = vadd.f32 %v777, %v715
  %v779 = vadd.f32 %v778, %v716
  %v780 = vadd.f32 %v779, %v717
  %v781 = vadd.f32 %v780, %v718
  %v782 = vadd.f32 %v781, %v719
  %v783 = vadd.f32 %v782, %v720
  %v784 = vadd.f32 %v783, %v721
  %v785 = vadd.f32 %v784, %v722
  %v786 = vadd.f32 %v785, %v723
  %v787 = vadd.f32 %v786, %v724
  %v788 = vadd.f32 %v787, %v725
  %v789 = vadd.f32 %v788, %v726
  %v790 = vadd.f32 %v789, %v727
  %v791 = vadd.f32 %v790, %v728
  %v792 = vadd.f32 %v791, %v729
  %v793 = vadd.f32 %v792, %v730
  %v794 = vadd.f32 %v793, %v731
  %v795 = vadd.f32 %v794, %v732
  %v796 = vadd.f32 %v795, %v733
  %v797 = vadd.f32 %v796, %v734
  %v798 = vadd.f32 %v797, %v735
  %v799 = vadd.f32 %v798, %v736
  %v800 = vadd.f32 %v799, %v737
  %v801 = vadd.f32 %v800, %v738
  %v802 = vadd.f32 %v801, %v739
  %v803 = vadd.f32 %v802, %v740
  %v804 = vadd.f32 %v803, %v741
  %v805 = vadd.f32 %v804, %v742
  %v806 = vadd.f32 %v805, %v743
  %v807 = vadd.f32 %v806, %v744
  %v808 = vadd.f32 %v807, %v745
  %v809 = vadd.f32 %v808, %v746
  %v810 = vadd.f32 %v809, %v747
  %v811 = vadd.f32 %v810, %v748
  %v812 = vadd.f32 %v811, %v749
  %v813 = vadd.f32 %v812, %v750
  %v814 = vadd.f32 %v813, %v751
  %v815 = vadd.f32 %v814, %v752
  %v816 = vadd.f32 %v815, %v753
  %v817 = vadd.f32 %v816, %v754
  %v818 = vadd.f32 %v817, %v755
  %v819 = vadd.f32 %v818, %v756
  %v820 = vadd.f32 %v819, %v757
  %v821 = vadd.f32 %v820, %v758
  %v822 = vadd.f32 %v821, %v759
  %v823 = vadd.f32 %v822, %v760
  %v824 = vadd.f32 %v823, %v761
  %v825 = vadd.f32 %v824, %v762
  %v826 = vadd.f32 %v825, %v763
  %v827 = vadd.f32 %v826, %v764
  %v828 = vadd.f32 %v827, %v765
  %v829 = vadd.f32 %v828, %v766
  %v830 = vadd.f32 %v829, %v767
  %v831 = vadd.f32 %v830, %v768
  %v832 = vadd.f32 %v831, %v769
  %v833 = vadd.f32 %v832, %v770
  %v834 = vrot.slane %v833, 4
  %v835 = vadd.f32 %v833, %v834
  %v836 = vrot.slane %v835, 2
  %v837 = vadd.f32 %v835, %v836
  %v838 = vrot.slane %v837, 1
  %v839 = vadd.f32 %v837, %v838
  %v840 = vmul.f32 %v839, 0.001953125
  %v841 = vmul.f32 %v706, %v706
  %v842 = vsub.f32 %v840, %v841
  %v843 = vmax.f32 %v842, 0.0
  %v844 = vld [vmem:[%s3] sm:$0x1]
  %v845 = vadd.f32 %v843, 1e-05
  %v846 = vrsqrt.pop %v845
  %v847 = vmul.f32 %v844, %v846
  %v848 = vld [vmem:[%s4] sm:$0x1]
  %v849 = vmul.f32 %v706, %v847
  %v850 = vsub.f32 %v848, %v849
  %v852 = vlaneseq
  %v853 = vshrl.u32 %v852, 7
  %v854 = vsub.s32 0, %v853
  %v855 = vrot.slane %v847, %v854
  %v857 = vmul.f32 %v383, %v855
  %v858 = vmul.f32 %v386, %v855
  %v859 = vmul.f32 %v391, %v855
  %v860 = vmul.f32 %v394, %v855
  %v861 = vmul.f32 %v399, %v855
  %v862 = vmul.f32 %v402, %v855
  %v863 = vmul.f32 %v407, %v855
  %v864 = vmul.f32 %v410, %v855
  %v865 = vmul.f32 %v415, %v855
  %v866 = vmul.f32 %v418, %v855
  %v867 = vmul.f32 %v423, %v855
  %v868 = vmul.f32 %v426, %v855
  %v869 = vmul.f32 %v431, %v855
  %v870 = vmul.f32 %v434, %v855
  %v871 = vmul.f32 %v439, %v855
  %v872 = vmul.f32 %v442, %v855
  %v873 = vmul.f32 %v447, %v855
  %v874 = vmul.f32 %v450, %v855
  %v875 = vmul.f32 %v455, %v855
  %v876 = vmul.f32 %v458, %v855
  %v877 = vmul.f32 %v463, %v855
  %v878 = vmul.f32 %v466, %v855
  %v879 = vmul.f32 %v471, %v855
  %v880 = vmul.f32 %v474, %v855
  %v881 = vmul.f32 %v479, %v855
  %v882 = vmul.f32 %v482, %v855
  %v883 = vmul.f32 %v487, %v855
  %v884 = vmul.f32 %v490, %v855
  %v885 = vmul.f32 %v495, %v855
  %v886 = vmul.f32 %v498, %v855
  %v887 = vmul.f32 %v503, %v855
  %v888 = vmul.f32 %v506, %v855
  %v889 = vmul.f32 %v511, %v855
  %v890 = vmul.f32 %v514, %v855
  %v891 = vmul.f32 %v519, %v855
  %v892 = vmul.f32 %v522, %v855
  %v893 = vmul.f32 %v527, %v855
  %v894 = vmul.f32 %v530, %v855
  %v895 = vmul.f32 %v535, %v855
  %v896 = vmul.f32 %v538, %v855
  %v897 = vmul.f32 %v543, %v855
  %v898 = vmul.f32 %v546, %v855
  %v899 = vmul.f32 %v551, %v855
  %v900 = vmul.f32 %v554, %v855
  %v901 = vmul.f32 %v559, %v855
  %v902 = vmul.f32 %v562, %v855
  %v903 = vmul.f32 %v567, %v855
  %v904 = vmul.f32 %v570, %v855
  %v905 = vmul.f32 %v575, %v855
  %v906 = vmul.f32 %v578, %v855
  %v907 = vmul.f32 %v583, %v855
  %v908 = vmul.f32 %v586, %v855
  %v909 = vmul.f32 %v591, %v855
  %v910 = vmul.f32 %v594, %v855
  %v911 = vmul.f32 %v599, %v855
  %v912 = vmul.f32 %v602, %v855
  %v913 = vmul.f32 %v607, %v855
  %v914 = vmul.f32 %v610, %v855
  %v915 = vmul.f32 %v615, %v855
  %v916 = vmul.f32 %v618, %v855
  %v917 = vmul.f32 %v623, %v855
  %v918 = vmul.f32 %v626, %v855
  %v919 = vmul.f32 %v631, %v855
  %v920 = vmul.f32 %v634, %v855
  %v922 = vlaneseq
  %v923 = vshrl.u32 %v922, 7
  %v924 = vsub.s32 0, %v923
  %v925 = vrot.slane %v850, %v924
  %v927 = vadd.f32 %v857, %v925
  %v928 = vadd.f32 %v858, %v925
  %v929 = vadd.f32 %v859, %v925
  %v930 = vadd.f32 %v860, %v925
  %v931 = vadd.f32 %v861, %v925
  %v932 = vadd.f32 %v862, %v925
  %v933 = vadd.f32 %v863, %v925
  %v934 = vadd.f32 %v864, %v925
  %v935 = vadd.f32 %v865, %v925
  %v936 = vadd.f32 %v866, %v925
  %v937 = vadd.f32 %v867, %v925
  %v938 = vadd.f32 %v868, %v925
  %v939 = vadd.f32 %v869, %v925
  %v940 = vadd.f32 %v870, %v925
  %v941 = vadd.f32 %v871, %v925
  %v942 = vadd.f32 %v872, %v925
  %v943 = vadd.f32 %v873, %v925
  %v944 = vadd.f32 %v874, %v925
  %v945 = vadd.f32 %v875, %v925
  %v946 = vadd.f32 %v876, %v925
  %v947 = vadd.f32 %v877, %v925
  %v948 = vadd.f32 %v878, %v925
  %v949 = vadd.f32 %v879, %v925
  %v950 = vadd.f32 %v880, %v925
  %v951 = vadd.f32 %v881, %v925
  %v952 = vadd.f32 %v882, %v925
  %v953 = vadd.f32 %v883, %v925
  %v954 = vadd.f32 %v884, %v925
  %v955 = vadd.f32 %v885, %v925
  %v956 = vadd.f32 %v886, %v925
  %v957 = vadd.f32 %v887, %v925
  %v958 = vadd.f32 %v888, %v925
  %v959 = vadd.f32 %v889, %v925
  %v960 = vadd.f32 %v890, %v925
  %v961 = vadd.f32 %v891, %v925
  %v962 = vadd.f32 %v892, %v925
  %v963 = vadd.f32 %v893, %v925
  %v964 = vadd.f32 %v894, %v925
  %v965 = vadd.f32 %v895, %v925
  %v966 = vadd.f32 %v896, %v925
  %v967 = vadd.f32 %v897, %v925
  %v968 = vadd.f32 %v898, %v925
  %v969 = vadd.f32 %v899, %v925
  %v970 = vadd.f32 %v900, %v925
  %v971 = vadd.f32 %v901, %v925
  %v972 = vadd.f32 %v902, %v925
  %v973 = vadd.f32 %v903, %v925
  %v974 = vadd.f32 %v904, %v925
  %v975 = vadd.f32 %v905, %v925
  %v976 = vadd.f32 %v906, %v925
  %v977 = vadd.f32 %v907, %v925
  %v978 = vadd.f32 %v908, %v925
  %v979 = vadd.f32 %v909, %v925
  %v980 = vadd.f32 %v910, %v925
  %v981 = vadd.f32 %v911, %v925
  %v982 = vadd.f32 %v912, %v925
  %v983 = vadd.f32 %v913, %v925
  %v984 = vadd.f32 %v914, %v925
  %v985 = vadd.f32 %v915, %v925
  %v986 = vadd.f32 %v916, %v925
  %v987 = vadd.f32 %v917, %v925
  %v988 = vadd.f32 %v918, %v925
  %v989 = vadd.f32 %v919, %v925
  %v990 = vadd.f32 %v920, %v925
  %v991 = vmax.f32 %v927, 0.0
  %v992 = vmax.f32 %v928, 0.0
  %v993 = vmax.f32 %v929, 0.0
  %v994 = vmax.f32 %v930, 0.0
  %v995 = vmax.f32 %v931, 0.0
  %v996 = vmax.f32 %v932, 0.0
  %v997 = vmax.f32 %v933, 0.0
  %v998 = vmax.f32 %v934, 0.0
  %v999 = vmax.f32 %v935, 0.0
  %v1000 = vmax.f32 %v936, 0.0
  %v1001 = vmax.f32 %v937, 0.0
  %v1002 = vmax.f32 %v938, 0.0
  %v1003 = vmax.f32 %v939, 0.0
  %v1004 = vmax.f32 %v940, 0.0
  %v1005 = vmax.f32 %v941, 0.0
  %v1006 = vmax.f32 %v942, 0.0
  %v1007 = vmax.f32 %v943, 0.0
  %v1008 = vmax.f32 %v944, 0.0
  %v1009 = vmax.f32 %v945, 0.0
  %v1010 = vmax.f32 %v946, 0.0
  %v1011 = vmax.f32 %v947, 0.0
  %v1012 = vmax.f32 %v948, 0.0
  %v1013 = vmax.f32 %v949, 0.0
  %v1014 = vmax.f32 %v950, 0.0
  %v1015 = vmax.f32 %v951, 0.0
  %v1016 = vmax.f32 %v952, 0.0
  %v1017 = vmax.f32 %v953, 0.0
  %v1018 = vmax.f32 %v954, 0.0
  %v1019 = vmax.f32 %v955, 0.0
  %v1020 = vmax.f32 %v956, 0.0
  %v1021 = vmax.f32 %v957, 0.0
  %v1022 = vmax.f32 %v958, 0.0
  %v1023 = vmax.f32 %v959, 0.0
  %v1024 = vmax.f32 %v960, 0.0
  %v1025 = vmax.f32 %v961, 0.0
  %v1026 = vmax.f32 %v962, 0.0
  %v1027 = vmax.f32 %v963, 0.0
  %v1028 = vmax.f32 %v964, 0.0
  %v1029 = vmax.f32 %v965, 0.0
  %v1030 = vmax.f32 %v966, 0.0
  %v1031 = vmax.f32 %v967, 0.0
  %v1032 = vmax.f32 %v968, 0.0
  %v1033 = vmax.f32 %v969, 0.0
  %v1034 = vmax.f32 %v970, 0.0
  %v1035 = vmax.f32 %v971, 0.0
  %v1036 = vmax.f32 %v972, 0.0
  %v1037 = vmax.f32 %v973, 0.0
  %v1038 = vmax.f32 %v974, 0.0
  %v1039 = vmax.f32 %v975, 0.0
  %v1040 = vmax.f32 %v976, 0.0
  %v1041 = vmax.f32 %v977, 0.0
  %v1042 = vmax.f32 %v978, 0.0
  %v1043 = vmax.f32 %v979, 0.0
  %v1044 = vmax.f32 %v980, 0.0
  %v1045 = vmax.f32 %v981, 0.0
  %v1046 = vmax.f32 %v982, 0.0
  %v1047 = vmax.f32 %v983, 0.0
  %v1048 = vmax.f32 %v984, 0.0
  %v1049 = vmax.f32 %v985, 0.0
  %v1050 = vmax.f32 %v986, 0.0
  %v1051 = vmax.f32 %v987, 0.0
  %v1052 = vmax.f32 %v988, 0.0
  %v1053 = vmax.f32 %v989, 0.0
  %v1054 = vmax.f32 %v990, 0.0
  %1055 = vst [vmem:[%s5] sm:$0xff] %v991
  %1056 = vst [vmem:[%s5 + $0x8] sm:$0xff] %v992
  %1057 = vst [vmem:[%s5 + $0x10] sm:$0xff] %v993
  %1058 = vst [vmem:[%s5 + $0x18] sm:$0xff] %v994
  %1059 = vst [vmem:[%s5 + $0x20] sm:$0xff] %v995
  %1060 = vst [vmem:[%s5 + $0x28] sm:$0xff] %v996
  %1061 = vst [vmem:[%s5 + $0x30] sm:$0xff] %v997
  %1062 = vst [vmem:[%s5 + $0x38] sm:$0xff] %v998
  %1063 = vst [vmem:[%s5 + $0x40] sm:$0xff] %v999
  %1064 = vst [vmem:[%s5 + $0x48] sm:$0xff] %v1000
  %1065 = vst [vmem:[%s5 + $0x50] sm:$0xff] %v1001
  %1066 = vst [vmem:[%s5 + $0x58] sm:$0xff] %v1002
  %1067 = vst [vmem:[%s5 + $0x60] sm:$0xff] %v1003
  %1068 = vst [vmem:[%s5 + $0x68] sm:$0xff] %v1004
  %1069 = vst [vmem:[%s5 + $0x70] sm:$0xff] %v1005
  %1070 = vst [vmem:[%s5 + $0x78] sm:$0xff] %v1006
  %1071 = vst [vmem:[%s5 + $0x80] sm:$0xff] %v1007
  %1072 = vst [vmem:[%s5 + $0x88] sm:$0xff] %v1008
  %1073 = vst [vmem:[%s5 + $0x90] sm:$0xff] %v1009
  %1074 = vst [vmem:[%s5 + $0x98] sm:$0xff] %v1010
  %1075 = vst [vmem:[%s5 + $0xa0] sm:$0xff] %v1011
  %1076 = vst [vmem:[%s5 + $0xa8] sm:$0xff] %v1012
  %1077 = vst [vmem:[%s5 + $0xb0] sm:$0xff] %v1013
  %1078 = vst [vmem:[%s5 + $0xb8] sm:$0xff] %v1014
  %1079 = vst [vmem:[%s5 + $0xc0] sm:$0xff] %v1015
  %1080 = vst [vmem:[%s5 + $0xc8] sm:$0xff] %v1016
  %1081 = vst [vmem:[%s5 + $0xd0] sm:$0xff] %v1017
  %1082 = vst [vmem:[%s5 + $0xd8] sm:$0xff] %v1018
  %1083 = vst [vmem:[%s5 + $0xe0] sm:$0xff] %v1019
  %1084 = vst [vmem:[%s5 + $0xe8] sm:$0xff] %v1020
  %1085 = vst [vmem:[%s5 + $0xf0] sm:$0xff] %v1021
  %1086 = vst [vmem:[%s5 + $0xf8] sm:$0xff] %v1022
  %1087 = vst [vmem:[%s5 + $0x100] sm:$0xff] %v1023
  %1088 = vst [vmem:[%s5 + $0x108] sm:$0xff] %v1024
  %1089 = vst [vmem:[%s5 + $0x110] sm:$0xff] %v1025
  %1090 = vst [vmem:[%s5 + $0x118] sm:$0xff] %v1026
  %1091 = vst [vmem:[%s5 + $0x120] sm:$0xff] %v1027
  %1092 = vst [vmem:[%s5 + $0x128] sm:$0xff] %v1028
  %1093 = vst [vmem:[%s5 + $0x130] sm:$0xff] %v1029
  %1094 = vst [vmem:[%s5 + $0x138] sm:$0xff] %v1030
  %1095 = vst [vmem:[%s5 + $0x140] sm:$0xff] %v1031
  %1096 = vst [vmem:[%s5 + $0x148] sm:$0xff] %v1032
  %1097 = vst [vmem:[%s5 + $0x150] sm:$0xff] %v1033
  %1098 = vst [vmem:[%s5 + $0x158] sm:$0xff] %v1034
  %1099 = vst [vmem:[%s5 + $0x160] sm:$0xff] %v1035
  %1100 = vst [vmem:[%s5 + $0x168] sm:$0xff] %v1036
  %1101 = vst [vmem:[%s5 + $0x170] sm:$0xff] %v1037
  %1102 = vst [vmem:[%s5 + $0x178] sm:$0xff] %v1038
  %1103 = vst [vmem:[%s5 + $0x180] sm:$0xff] %v1039
  %1104 = vst [vmem:[%s5 + $0x188] sm:$0xff] %v1040
  %1105 = vst [vmem:[%s5 + $0x190] sm:$0xff] %v1041
  %1106 = vst [vmem:[%s5 + $0x198] sm:$0xff] %v1042
  %1107 = vst [vmem:[%s5 + $0x1a0] sm:$0xff] %v1043
  %1108 = vst [vmem:[%s5 + $0x1a8] sm:$0xff] %v1044
  %1109 = vst [vmem:[%s5 + $0x1b0] sm:$0xff] %v1045
  %1110 = vst [vmem:[%s5 + $0x1b8] sm:$0xff] %v1046
  %1111 = vst [vmem:[%s5 + $0x1c0] sm:$0xff] %v1047
  %1112 = vst [vmem:[%s5 + $0x1c8] sm:$0xff] %v1048
  %1113 = vst [vmem:[%s5 + $0x1d0] sm:$0xff] %v1049
  %1114 = vst [vmem:[%s5 + $0x1d8] sm:$0xff] %v1050
  %1115 = vst [vmem:[%s5 + $0x1e0] sm:$0xff] %v1051
  %1116 = vst [vmem:[%s5 + $0x1e8] sm:$0xff] %v1052
  %1117 = vst [vmem:[%s5 + $0x1f0] sm:$0xff] %v1053
  %1118 = vst [vmem:[%s5 + $0x1f8] sm:$0xff] %v1054
  // Predicated region
  $region22: #{residual_net.10} parent=0 // pred_check
    _
  $region23: #{residual_net.10} parent=0 // pred_check_branch
    %1120 = sbr.rel (0) target = $region25
  $region24: #{residual_net.10} parent=0 // pred_region
    _
  $region25: #{residual_net.10} parent=0 // pred_fallthru
    _
  // Predicated region
  $region26: #{residual_net.10} parent=0 // pred_check
    _
  $region27: #{residual_net.10} parent=0 // pred_check_branch
    %1122 = sbr.rel (0) target = $region29
  $region28: #{residual_net.10} parent=0 // pred_region
    _
  $region29: #{residual_net.10} parent=0 // pred_fallthru
    _

// kernel: residual_net.11
$region0: #{residual_net.11}
  #allocation0 [shape = 'u32[]', space=smem, size = 0x4, offset = 0x4, fixed_abs, tag = 'smem constant byte address 0x4 - core index']
  #allocation1 [shape = 'u32[144,128]{1,0:T(1,128)}', space=vmem, size = 0x12000, scoped, tag = 'internal scratch']
  %s0 = inlined_call_operand.vmem [shape: bf16[512,256], index: 0, kind: input, shape index: {}]
  %s1 = inlined_call_operand.vmem [shape: bf16[256,128], index: 1, kind: input, shape index: {}]
  %s2 = inlined_call_operand.vmem [shape: f32[1,128], index: 2, kind: input, shape index: {}]
  %s3 = inlined_call_operand.vmem [shape: f32[1,128], index: 3, kind: input, shape index: {}]
  %s4 = inlined_call_operand.vmem [shape: f32[1,128], index: 4, kind: input, shape index: {}]
  %s5 = inlined_call_operand.vmem [shape: f32[512,128], index: 5, kind: output, shape index: {}]
  %s6 = sld [smem:[#allocation0]]
  $region30: #{residual_net.11} parent=0
    _
  %s8 = ssub.s32 1, %s6
  %s9 = scalar_select 0, %s8, %s6
  // Predicated region
  $region2: #{residual_net.11} parent=0 // pred_check
    _
  $region3: #{residual_net.11} parent=0 // pred_check_branch
    %11 = sbr.rel (0) target = $region5
  $region4: #{residual_net.11} parent=0 // pred_region
    _
  $region5: #{residual_net.11} parent=0 // pred_fallthru
    _
  // Predicated region
  $region6: #{residual_net.11} parent=0 // pred_check
    _
  $region7: #{residual_net.11} parent=0 // pred_check_branch
    %13 = sbr.rel (0) target = $region9
  $region8: #{residual_net.11} parent=0 // pred_region
    _
  $region9: #{residual_net.11} parent=0 // pred_fallthru
    _
  // Predicated region
  $region10: #{residual_net.11} parent=0 // pred_check
    _
  $region11: #{residual_net.11} parent=0 // pred_check_branch
    %15 = sbr.rel (0) target = $region13
  $region12: #{residual_net.11} parent=0 // pred_region
    _
  $region13: #{residual_net.11} parent=0 // pred_fallthru
    _
  // Predicated region
  $region14: #{residual_net.11} parent=0 // pred_check
    _
  $region15: #{residual_net.11} parent=0 // pred_check_branch
    %17 = sbr.rel (0) target = $region17
  $region16: #{residual_net.11} parent=0 // pred_region
    _
  $region17: #{residual_net.11} parent=0 // pred_fallthru
    _
  // Predicated region
  $region18: #{residual_net.11} parent=0 // pred_check
    _
  $region19: #{residual_net.11} parent=0 // pred_check_branch
    %19 = sbr.rel (0) target = $region21
  $region20: #{residual_net.11} parent=0 // pred_region
    _
  $region21: #{residual_net.11} parent=0 // pred_fallthru
    _
  %v21 = vld [vmem:[%s0] sm:$0xff]
  %v22 = vld [vmem:[%s0 + $0x8] sm:$0xff]
  %v23 = vld [vmem:[%s0 + $0x10] sm:$0xff]
  %v24 = vld [vmem:[%s0 + $0x18] sm:$0xff]
  %v25 = vld [vmem:[%s0 + $0x20] sm:$0xff]
  %v26 = vld [vmem:[%s0 + $0x28] sm:$0xff]
  %v27 = vld [vmem:[%s0 + $0x30] sm:$0xff]
  %v28 = vld [vmem:[%s0 + $0x38] sm:$0xff]
  %v29 = vld [vmem:[%s0 + $0x40] sm:$0xff]
  %v30 = vld [vmem:[%s0 + $0x48] sm:$0xff]
  %v31 = vld [vmem:[%s0 + $0x50] sm:$0xff]
  %v32 = vld [vmem:[%s0 + $0x58] sm:$0xff]
  %v33 = vld [vmem:[%s0 + $0x60] sm:$0xff]
  %v34 = vld [vmem:[%s0 + $0x68] sm:$0xff]
  %v35 = vld [vmem:[%s0 + $0x70] sm:$0xff]
  %v36 = vld [vmem:[%s0 + $0x78] sm:$0xff]
  %v37 = vld [vmem:[%s0 + $0x80] sm:$0xff]
  %v38 = vld [vmem:[%s0 + $0x88] sm:$0xff]
  %v39 = vld [vmem:[%s0 + $0x90] sm:$0xff]
  %v40 = vld [vmem:[%s0 + $0x98] sm:$0xff]
  %v41 = vld [vmem:[%s0 + $0xa0] sm:$0xff]
  %v42 = vld [vmem:[%s0 + $0xa8] sm:$0xff]
  %v43 = vld [vmem:[%s0 + $0xb0] sm:$0xff]
  %v44 = vld [vmem:[%s0 + $0xb8] sm:$0xff]
  %v45 = vld [vmem:[%s0 + $0xc0] sm:$0xff]
  %v46 = vld [vmem:[%s0 + $0xc8] sm:$0xff]
  %v47 = vld [vmem:[%s0 + $0xd0] sm:$0xff]
  %v48 = vld [vmem:[%s0 + $0xd8] sm:$0xff]
  %v49 = vld [vmem:[%s0 + $0xe0] sm:$0xff]
  %v50 = vld [vmem:[%s0 + $0xe8] sm:$0xff]
  %v51 = vld [vmem:[%s0 + $0xf0] sm:$0xff]
  %v52 = vld [vmem:[%s0 + $0xf8] sm:$0xff]
  %v53 = vld [vmem:[%s0 + $0x100] sm:$0xff]
  %v54 = vld [vmem:[%s0 + $0x108] sm:$0xff]
  %v55 = vld [vmem:[%s0 + $0x110] sm:$0xff]
  %v56 = vld [vmem:[%s0 + $0x118] sm:$0xff]
  %v57 = vld [vmem:[%s0 + $0x120] sm:$0xff]
  %v58 = vld [vmem:[%s0 + $0x128] sm:$0xff]
  %v59 = vld [vmem:[%s0 + $0x130] sm:$0xff]
  %v60 = vld [vmem:[%s0 + $0x138] sm:$0xff]
  %v61 = vld [vmem:[%s0 + $0x140] sm:$0xff]
  %v62 = vld [vmem:[%s0 + $0x148] sm:$0xff]
  %v63 = vld [vmem:[%s0 + $0x150] sm:$0xff]
  %v64 = vld [vmem:[%s0 + $0x158] sm:$0xff]
  %v65 = vld [vmem:[%s0 + $0x160] sm:$0xff]
  %v66 = vld [vmem:[%s0 + $0x168] sm:$0xff]
  %v67 = vld [vmem:[%s0 + $0x170] sm:$0xff]
  %v68 = vld [vmem:[%s0 + $0x178] sm:$0xff]
  %v69 = vld [vmem:[%s0 + $0x180] sm:$0xff]
  %v70 = vld [vmem:[%s0 + $0x188] sm:$0xff]
  %v71 = vld [vmem:[%s0 + $0x190] sm:$0xff]
  %v72 = vld [vmem:[%s0 + $0x198] sm:$0xff]
  %v73 = vld [vmem:[%s0 + $0x1a0] sm:$0xff]
  %v74 = vld [vmem:[%s0 + $0x1a8] sm:$0xff]
  %v75 = vld [vmem:[%s0 + $0x1b0] sm:$0xff]
  %v76 = vld [vmem:[%s0 + $0x1b8] sm:$0xff]
  %v77 = vld [vmem:[%s0 + $0x1c0] sm:$0xff]
  %v78 = vld [vmem:[%s0 + $0x1c8] sm:$0xff]
  %v79 = vld [vmem:[%s0 + $0x1d0] sm:$0xff]
  %v80 = vld [vmem:[%s0 + $0x1d8] sm:$0xff]
  %v81 = vld [vmem:[%s0 + $0x1e0] sm:$0xff]
  %v82 = vld [vmem:[%s0 + $0x1e8] sm:$0xff]
  %v83 = vld [vmem:[%s0 + $0x1f0] sm:$0xff]
  %v84 = vld [vmem:[%s0 + $0x1f8] sm:$0xff]
  %v85 = vld [vmem:[%s1] sm:$0xf]
  %v86 = vld [vmem:[%s1 + $0x4] sm:$0xf]
  %v87 = vld [vmem:[%s1 + $0x8] sm:$0xf]
  %v88 = vld [vmem:[%s1 + $0xc] sm:$0xf]
  %v89 = vld [vmem:[%s1 + $0x10] sm:$0xf]
  %v90 = vld [vmem:[%s1 + $0x14] sm:$0xf]
  %v91 = vld [vmem:[%s1 + $0x18] sm:$0xf]
  %v92 = vld [vmem:[%s1 + $0x1c] sm:$0xf]
  %v93 = vld [vmem:[%s1 + $0x20] sm:$0xf]
  %v94 = vld [vmem:[%s1 + $0x24] sm:$0xf]
  %v95 = vld [vmem:[%s1 + $0x28] sm:$0xf]
  %v96 = vld [vmem:[%s1 + $0x2c] sm:$0xf]
  %v97 = vld [vmem:[%s1 + $0x30] sm:$0xf]
  %v98 = vld [vmem:[%s1 + $0x34] sm:$0xf]
  %v99 = vld [vmem:[%s1 + $0x38] sm:$0xf]
  %v100 = vld [vmem:[%s1 + $0x3c] sm:$0xf]
  %v101 = vld [vmem:[%s1 + $0x40] sm:$0xf]
  %v102 = vld [vmem:[%s1 + $0x44] sm:$0xf]
  %v103 = vld [vmem:[%s1 + $0x48] sm:$0xf]
  %v104 = vld [vmem:[%s1 + $0x4c] sm:$0xf]
  %v105 = vld [vmem:[%s1 + $0x50] sm:$0xf]
  %v106 = vld [vmem:[%s1 + $0x54] sm:$0xf]
  %v107 = vld [vmem:[%s1 + $0x58] sm:$0xf]
  %v108 = vld [vmem:[%s1 + $0x5c] sm:$0xf]
  %v109 = vld [vmem:[%s1 + $0x60] sm:$0xf]
  %v110 = vld [vmem:[%s1 + $0x64] sm:$0xf]
  %v111 = vld [vmem:[%s1 + $0x68] sm:$0xf]
  %v112 = vld [vmem:[%s1 + $0x6c] sm:$0xf]
  %v113 = vld [vmem:[%s1 + $0x70] sm:$0xf]
  %v114 = vld [vmem:[%s1 + $0x74] sm:$0xf]
  %v115 = vld [vmem:[%s1 + $0x78] sm:$0xf]
  %v116 = vld [vmem:[%s1 + $0x7c] sm:$0xf]
  %v117 = vld [vmem:[%s2] sm:$0x1]
  %v119 = vlaneseq
  %v120 = vshrl.u32 %v119, 7
  %v121 = vsub.s32 0, %v120
  %v122 = vrot.slane %v117, %v121
  %v188 = vunpack.c.l.b16 %v21
  %v189 = vunpack.c.h.b16 %v21
  %v190 = vunpack.c.l.b16 %v22
  %v191 = vunpack.c.h.b16 %v22
  %v192 = vunpack.c.l.b16 %v23
  %v193 = vunpack.c.h.b16 %v23
  %v194 = vunpack.c.l.b16 %v24
  %v195 = vunpack.c.h.b16 %v24
  %v196 = vunpack.c.l.b16 %v25
  %v197 = vunpack.c.h.b16 %v25
  %v198 = vunpack.c.l.b16 %v26
  %v199 = vunpack.c.h.b16 %v26
  %v200 = vunpack.c.l.b16 %v27
  %v201 = vunpack.c.h.b16 %v27
  %v202 = vunpack.c.l.b16 %v28
  %v203 = vunpack.c.h.b16 %v28
  %v204 = vunpack.c.l.b16 %v29
  %v205 = vunpack.c.h.b16 %v29
  %v206 = vunpack.c.l.b16 %v30
  %v207 = vunpack.c.h.b16 %v30
  %v208 = vunpack.c.l.b16 %v31
  %v209 = vunpack.c.h.b16 %v31
  %v210 = vunpack.c.l.b16 %v32
  %v211 = vunpack.c.h.b16 %v32
  %v212 = vunpack.c.l.b16 %v33
  %v213 = vunpack.c.h.b16 %v33
  %v214 = vunpack.c.l.b16 %v34
  %v215 = vunpack.c.h.b16 %v34
  %v216 = vunpack.c.l.b16 %v35
  %v217 = vunpack.c.h.b16 %v35
  %v218 = vunpack.c.l.b16 %v36
  %v219 = vunpack.c.h.b16 %v36
  %v220 = vunpack.c.l.b16 %v37
  %v221 = vunpack.c.h.b16 %v37
  %v222 = vunpack.c.l.b16 %v38
  %v223 = vunpack.c.h.b16 %v38
  %v224 = vunpack.c.l.b16 %v39
  %v225 = vunpack.c.h.b16 %v39
  %v226 = vunpack.c.l.b16 %v40
  %v227 = vunpack.c.h.b16 %v40
  %v228 = vunpack.c.l.b16 %v41
  %v229 = vunpack.c.h.b16 %v41
  %v230 = vunpack.c.l.b16 %v42
  %v231 = vunpack.c.h.b16 %v42
  %v232 = vunpack.c.l.b16 %v43
  %v233 = vunpack.c.h.b16 %v43
  %v234 = vunpack.c.l.b16 %v44
  %v235 = vunpack.c.h.b16 %v44
  %v236 = vunpack.c.l.b16 %v45
  %v237 = vunpack.c.h.b16 %v45
  %v238 = vunpack.c.l.b16 %v46
  %v239 = vunpack.c.h.b16 %v46
  %v240 = vunpack.c.l.b16 %v47
  %v241 = vunpack.c.h.b16 %v47
  %v242 = vunpack.c.l.b16 %v48
  %v243 = vunpack.c.h.b16 %v48
  %v244 = vunpack.c.l.b16 %v49
  %v245 = vunpack.c.h.b16 %v49
  %v246 = vunpack.c.l.b16 %v50
  %v247 = vunpack.c.h.b16 %v50
  %v248 = vunpack.c.l.b16 %v51
  %v249 = vunpack.c.h.b16 %v51
  %v250 = vunpack.c.l.b16 %v52
  %v251 = vunpack.c.h.b16 %v52
  %v252 = vunpack.c.l.b16 %v53
  %v253 = vunpack.c.h.b16 %v53
  %v254 = vunpack.c.l.b16 %v54
  %v255 = vunpack.c.h.b16 %v54
  %v256 = vunpack.c.l.b16 %v55
  %v257 = vunpack.c.h.b16 %v55
  %v258 = vunpack.c.l.b16 %v56
  %v259 = vunpack.c.h.b16 %v56
  %v260 = vunpack.c.l.b16 %v57
  %v261 = vunpack.c.h.b16 %v57
  %v262 = vunpack.c.l.b16 %v58
  %v263 = vunpack.c.h.b16 %v58
  %v264 = vunpack.c.l.b16 %v59
  %v265 = vunpack.c.h.b16 %v59
  %v266 = vunpack.c.l.b16 %v60
  %v267 = vunpack.c.h.b16 %v60
  %v268 = vunpack.c.l.b16 %v61
  %v269 = vunpack.c.h.b16 %v61
  %v270 = vunpack.c.l.b16 %v62
  %v271 = vunpack.c.h.b16 %v62
  %v272 = vunpack.c.l.b16 %v63
  %v273 = vunpack.c.h.b16 %v63
  %v274 = vunpack.c.l.b16 %v64
  %v275 = vunpack.c.h.b16 %v64
  %v276 = vunpack.c.l.b16 %v65
  %v277 = vunpack.c.h.b16 %v65
  %v278 = vunpack.c.l.b16 %v66
  %v279 = vunpack.c.h.b16 %v66
  %v280 = vunpack.c.l.b16 %v67
  %v281 = vunpack.c.h.b16 %v67
  %v282 = vunpack.c.l.b16 %v68
  %v283 = vunpack.c.h.b16 %v68
  %v284 = vunpack.c.l.b16 %v69
  %v285 = vunpack.c.h.b16 %v69
  %v286 = vunpack.c.l.b16 %v70
  %v287 = vunpack.c.h.b16 %v70
  %v288 = vunpack.c.l.b16 %v71
  %v289 = vunpack.c.h.b16 %v71
  %v290 = vunpack.c.l.b16 %v72
  %v291 = vunpack.c.h.b16 %v72
  %v292 = vunpack.c.l.b16 %v73
  %v293 = vunpack.c.h.b16 %v73
  %v294 = vunpack.c.l.b16 %v74
  %v295 = vunpack.c.h.b16 %v74
  %v296 = vunpack.c.l.b16 %v75
  %v297 = vunpack.c.h.b16 %v75
  %v298 = vunpack.c.l.b16 %v76
  %v299 = vunpack.c.h.b16 %v76
  %v300 = vunpack.c.l.b16 %v77
  %v301 = vunpack.c.h.b16 %v77
  %v302 = vunpack.c.l.b16 %v78
  %v303 = vunpack.c.h.b16 %v78
  %v304 = vunpack.c.l.b16 %v79
  %v305 = vunpack.c.h.b16 %v79
  %v306 = vunpack.c.l.b16 %v80
  %v307 = vunpack.c.h.b16 %v80
  %v308 = vunpack.c.l.b16 %v81
  %v309 = vunpack.c.h.b16 %v81
  %v310 = vunpack.c.l.b16 %v82
  %v311 = vunpack.c.h.b16 %v82
  %v312 = vunpack.c.l.b16 %v83
  %v313 = vunpack.c.h.b16 %v83
  %v314 = vunpack.c.l.b16 %v84
  %v315 = vunpack.c.h.b16 %v84
  %v316 = vpack.c.b16 %v190, %v188
  %v317 = vpack.c.b16 %v191, %v189
  %v318 = vpack.c.b16 %v194, %v192
  %v319 = vpack.c.b16 %v195, %v193
  %v320 = vpack.c.b16 %v198, %v196
  %v321 = vpack.c.b16 %v199, %v197
  %v322 = vpack.c.b16 %v202, %v200
  %v323 = vpack.c.b16 %v203, %v201
  %v324 = vpack.c.b16 %v206, %v204
  %v325 = vpack.c.b16 %v207, %v205
  %v326 = vpack.c.b16 %v210, %v208
  %v327 = vpack.c.b16 %v211, %v209
  %v328 = vpack.c.b16 %v214, %v212
  %v329 = vpack.c.b16 %v215, %v213
  %v330 = vpack.c.b16 %v218, %v216
  %v331 = vpack.c.b16 %v219, %v217
  %v332 = vpack.c.b16 %v222, %v220
  %v333 = vpack.c.b16 %v223, %v221
  %v334 = vpack.c.b16 %v226, %v224
  %v335 = vpack.c.b16 %v227, %v225
  %v336 = vpack.c.b16 %v230, %v228
  %v337 = vpack.c.b16 %v231, %v229
  %v338 = vpack.c.b16 %v234, %v232
  %v339 = vpack.c.b16 %v235, %v233
  %v340 = vpack.c.b16 %v238, %v236
  %v341 = vpack.c.b16 %v239, %v237
  %v342 = vpack.c.b16 %v242, %v240
  %v343 = vpack.c.b16 %v243, %v241
  %v344 = vpack.c.b16 %v246, %v244
  %v345 = vpack.c.b16 %v247, %v245
  %v346 = vpack.c.b16 %v250, %v248
  %v347 = vpack.c.b16 %v251, %v249
  %v348 = vpack.c.b16 %v254, %v252
  %v349 = vpack.c.b16 %v255, %v253
  %v350 = vpack.c.b16 %v258, %v256
  %v351 = vpack.c.b16 %v259, %v257
  %v352 = vpack.c.b16 %v262, %v260
  %v353 = vpack.c.b16 %v263, %v261
  %v354 = vpack.c.b16 %v266, %v264
  %v355 = vpack.c.b16 %v267, %v265
  %v356 = vpack.c.b16 %v270, %v268
  %v357 = vpack.c.b16 %v271, %v269
  %v358 = vpack.c.b16 %v274, %v272
  %v359 = vpack.c.b16 %v275, %v273
  %v360 = vpack.c.b16 %v278, %v276
  %v361 = vpack.c.b16 %v279, %v277
  %v362 = vpack.c.b16 %v282, %v280
  %v363 = vpack.c.b16 %v283, %v281
  %v364 = vpack.c.b16 %v286, %v284
  %v365 = vpack.c.b16 %v287, %v285
  %v366 = vpack.c.b16 %v290, %v288
  %v367 = vpack.c.b16 %v291, %v289
  %v368 = vpack.c.b16 %v294, %v292
  %v369 = vpack.c.b16 %v295, %v293
  %v370 = vpack.c.b16 %v298, %v296
  %v371 = vpack.c.b16 %v299, %v297
  %v372 = vpack.c.b16 %v302, %v300
  %v373 = vpack.c.b16 %v303, %v301
  %v374 = vpack.c.b16 %v306, %v304
  %v375 = vpack.c.b16 %v307, %v305
  %v376 = vpack.c.b16 %v310, %v308
  %v377 = vpack.c.b16 %v311, %v309
  %v378 = vpack.c.b16 %v314, %v312
  %v379 = vpack.c.b16 %v315, %v313
  %v476 = vunpack.c.l.b16 %v85
  %v477 = vunpack.c.l.b16 %v86
  %v478 = vunpack.c.l.b16 %v87
  %v479 = vunpack.c.l.b16 %v88
  %v480 = vunpack.c.l.b16 %v89
  %v481 = vunpack.c.l.b16 %v90
  %v482 = vunpack.c.l.b16 %v91
  %v483 = vunpack.c.l.b16 %v92
  %v484 = vunpack.c.l.b16 %v93
  %v485 = vunpack.c.l.b16 %v94
  %v486 = vunpack.c.l.b16 %v95
  %v487 = vunpack.c.l.b16 %v96
  %v488 = vunpack.c.l.b16 %v97
  %v489 = vunpack.c.l.b16 %v98
  %v490 = vunpack.c.l.b16 %v99
  %v491 = vunpack.c.l.b16 %v100
  %v492 = vunpack.c.l.b16 %v101
  %v493 = vunpack.c.l.b16 %v102
  %v494 = vunpack.c.l.b16 %v103
  %v495 = vunpack.c.l.b16 %v104
  %v496 = vunpack.c.l.b16 %v105
  %v497 = vunpack.c.l.b16 %v106
  %v498 = vunpack.c.l.b16 %v107
  %v499 = vunpack.c.l.b16 %v108
  %v500 = vunpack.c.l.b16 %v109
  %v501 = vunpack.c.l.b16 %v110
  %v502 = vunpack.c.l.b16 %v111
  %v503 = vunpack.c.l.b16 %v112
  %v504 = vunpack.c.l.b16 %v113
  %v505 = vunpack.c.l.b16 %v114
  %v506 = vunpack.c.l.b16 %v115
  %v507 = vunpack.c.l.b16 %v116
  %v508 = vpack.c.b16 %v477, %v476
  %v509 = vpack.c.b16 %v479, %v478
  %v510 = vpack.c.b16 %v481, %v480
  %v511 = vpack.c.b16 %v483, %v482
  %v512 = vpack.c.b16 %v485, %v484
  %v513 = vpack.c.b16 %v487, %v486
  %v514 = vpack.c.b16 %v489, %v488
  %v515 = vpack.c.b16 %v491, %v490
  %v516 = vpack.c.b16 %v493, %v492
  %v517 = vpack.c.b16 %v495, %v494
  %v518 = vpack.c.b16 %v497, %v496
  %v519 = vpack.c.b16 %v499, %v498
  %v520 = vpack.c.b16 %v501, %v500
  %v521 = vpack.c.b16 %v503, %v502
  %v522 = vpack.c.b16 %v505, %v504
  %v523 = vpack.c.b16 %v507, %v506
  %540 = vmatprep.subr.bf16.mxu0 0
  %541 = vmatpush1.bf16.msra.mxu0 %v515
  %542 = vmatprep.subr.bf16.mxu0 0
  %543 = vmatpush1.bf16.msra.mxu0 %v514
  %544 = vmatprep.subr.bf16.mxu0 0
  %545 = vmatpush1.bf16.msra.mxu0 %v513
  %546 = vmatprep.subr.bf16.mxu0 0
  %547 = vmatpush1.bf16.msra.mxu0 %v512
  %548 = vmatprep.subr.bf16.mxu0 0
  %549 = vmatpush1.bf16.msra.mxu0 %v511
  %550 = vmatprep.subr.bf16.mxu0 0
  %551 = vmatpush1.bf16.msra.mxu0 %v510
  %552 = vmatprep.subr.bf16.mxu0 0
  %553 = vmatpush1.bf16.msra.mxu0 %v509
  %554 = vmatprep.subr.bf16.mxu0 0
  %555 = vmatpush1.bf16.msra.mxu0 %v508
  %556 = vmatprep.subr.bf16.mxu0 0
  %557 = vmatpush2.bf16.msra.mxu0 %v523
  %558 = vmatprep.subr.bf16.mxu0 0
  %559 = vmatpush2.bf16.msra.mxu0 %v522
  %560 = vmatprep.subr.bf16.mxu0 0
  %561 = vmatpush2.bf16.msra.mxu0 %v521
  %562 = vmatprep.subr.bf16.mxu0 0
  %563 = vmatpush2.bf16.msra.mxu0 %v520
  %564 = vmatprep.subr.bf16.mxu0 0
  %565 = vmatpush2.bf16.msra.mxu0 %v519
  %566 = vmatprep.subr.bf16.mxu0 0
  %567 = vmatpush2.bf16.msra.mxu0 %v518
  %568 = vmatprep.subr.bf16.mxu0 0
  %569 = vmatpush2.bf16.msra.mxu0 %v517
  %570 = vmatprep.subr.bf16.mxu0 0
  %571 = vmatpush2.bf16.msra.mxu0 %v516
  %572 = vmatprep.mubr.bf16.mxu0 %v317
  %573 = vmatmul.mubr.bf16.gmra.mxu0 %v316
  %v574 = vpop.f32.mrf.mxu0
  %v575 = vadd.f32 %v122, %v574
  %v576 = vpop.f32.mrf.mxu0
  %v577 = vpop.f32.mrf.mxu0
  %v578 = vadd.f32 %v122, %v577
  %v579 = vpop.f32.mrf.mxu0
  %580 = vmatprep.mubr.bf16.mxu0 %v319
  %581 = vmatmul.mubr.bf16.gmra.mxu0 %v318
  %v582 = vpop.f32.mrf.mxu0
  %v583 = vadd.f32 %v122, %v582
  %v584 = vpop.f32.mrf.mxu0
  %v585 = vpop.f32.mrf.mxu0
  %v586 = vadd.f32 %v122, %v585
  %v587 = vpop.f32.mrf.mxu0
  %588 = vmatprep.mubr.bf16.mxu0 %v321
  %589 = vmatmul.mubr.bf16.gmra.mxu0 %v320
  %v590 = vpop.f32.mrf.mxu0
  %v591 = vadd.f32 %v122, %v590
  %v592 = vpop.f32.mrf.mxu0
  %v593 = vpop.f32.mrf.mxu0
  %v594 = vadd.f32 %v122, %v593
  %v595 = vpop.f32.mrf.mxu0
  %596 = vmatprep.mubr.bf16.mxu0 %v323
  %597 = vmatmul.mubr.bf16.gmra.mxu0 %v322
  %v598 = vpop.f32.mrf.mxu0
  %v599 = vadd.f32 %v122, %v598
  %v600 = vpop.f32.mrf.mxu0
  %v601 = vpop.f32.mrf.mxu0
  %v602 = vadd.f32 %v122, %v601
  %v603 = vpop.f32.mrf.mxu0
  %604 = vmatprep.mubr.bf16.mxu0 %v325
  %605 = vmatmul.mubr.bf16.gmra.mxu0 %v324
  %v606 = vpop.f32.mrf.mxu0
  %v607 = vadd.f32 %v122, %v606
  %v608 = vpop.f32.mrf.mxu0
  %v609 = vpop.f32.mrf.mxu0
  %v610 = vadd.f32 %v122, %v609
  %v611 = vpop.f32.mrf.mxu0
  %612 = vmatprep.mubr.bf16.mxu0 %v327
  %613 = vmatmul.mubr.bf16.gmra.mxu0 %v326
  %v614 = vpop.f32.mrf.mxu0
  %v615 = vadd.f32 %v122, %v614
  %v616 = vpop.f32.mrf.mxu0
  %v617 = vpop.f32.mrf.mxu0
  %v618 = vadd.f32 %v122, %v617
  %v619 = vpop.f32.mrf.mxu0
  %620 = vmatprep.mubr.bf16.mxu0 %v329
  %621 = vmatmul.mubr.bf16.gmra.mxu0 %v328
  %v622 = vpop.f32.mrf.mxu0
  %v623 = vadd.f32 %v122, %v622
  %v624 = vpop.f32.mrf.mxu0
  %v625 = vpop.f32.mrf.mxu0
  %v626 = vadd.f32 %v122, %v625
  %v627 = vpop.f32.mrf.mxu0
  %628 = vmatprep.mubr.bf16.mxu0 %v331
  %629 = vmatmul.mubr.bf16.gmra.mxu0 %v330
  %v630 = vpop.f32.mrf.mxu0
  %v631 = vadd.f32 %v122, %v630
  %v632 = vpop.f32.mrf.mxu0
  %v633 = vpop.f32.mrf.mxu0
  %v634 = vadd.f32 %v122, %v633
  %v635 = vpop.f32.mrf.mxu0
  %636 = vmatprep.mubr.bf16.mxu0 %v333
  %637 = vmatmul.mubr.bf16.gmra.mxu0 %v332
  %v638 = vpop.f32.mrf.mxu0
  %v639 = vadd.f32 %v122, %v638
  %v640 = vpop.f32.mrf.mxu0
  %v641 = vpop.f32.mrf.mxu0
  %v642 = vadd.f32 %v122, %v641
  %v643 = vpop.f32.mrf.mxu0
  %644 = vmatprep.mubr.bf16.mxu0 %v335
  %645 = vmatmul.mubr.bf16.gmra.mxu0 %v334
  %v646 = vpop.f32.mrf.mxu0
  %v647 = vadd.f32 %v122, %v646
  %v648 = vpop.f32.mrf.mxu0
  %v649 = vpop.f32.mrf.mxu0
  %v650 = vadd.f32 %v122, %v649
  %v651 = vpop.f32.mrf.mxu0
  %652 = vmatprep.mubr.bf16.mxu0 %v337
  %653 = vmatmul.mubr.bf16.gmra.mxu0 %v336
  %v654 = vpop.f32.mrf.mxu0
  %v655 = vadd.f32 %v122, %v654
  %v656 = vpop.f32.mrf.mxu0
  %v657 = vpop.f32.mrf.mxu0
  %v658 = vadd.f32 %v122, %v657
  %v659 = vpop.f32.mrf.mxu0
  %660 = vmatprep.mubr.bf16.mxu0 %v339
  %661 = vmatmul.mubr.bf16.gmra.mxu0 %v338
  %v662 = vpop.f32.mrf.mxu0
  %v663 = vadd.f32 %v122, %v662
  %v664 = vpop.f32.mrf.mxu0
  %v665 = vpop.f32.mrf.mxu0
  %v666 = vadd.f32 %v122, %v665
  %v667 = vpop.f32.mrf.mxu0
  %668 = vmatprep.mubr.bf16.mxu0 %v341
  %669 = vmatmul.mubr.bf16.gmra.mxu0 %v340
  %v670 = vpop.f32.mrf.mxu0
  %v671 = vadd.f32 %v122, %v670
  %v672 = vpop.f32.mrf.mxu0
  %v673 = vpop.f32.mrf.mxu0
  %v674 = vadd.f32 %v122, %v673
  %v675 = vpop.f32.mrf.mxu0
  %676 = vmatprep.mubr.bf16.mxu0 %v343
  %677 = vmatmul.mubr.bf16.gmra.mxu0 %v342
  %v678 = vpop.f32.mrf.mxu0
  %v679 = vadd.f32 %v122, %v678
  %v680 = vpop.f32.mrf.mxu0
  %v681 = vpop.f32.mrf.mxu0
  %v682 = vadd.f32 %v122, %v681
  %v683 = vpop.f32.mrf.mxu0
  %684 = vmatprep.mubr.bf16.mxu0 %v345
  %685 = vmatmul.mubr.bf16.gmra.mxu0 %v344
  %v686 = vpop.f32.mrf.mxu0
  %v687 = vadd.f32 %v122, %v686
  %v688 = vpop.f32.mrf.mxu0
  %v689 = vpop.f32.mrf.mxu0
  %v690 = vadd.f32 %v122, %v689
  %v691 = vpop.f32.mrf.mxu0
  %692 = vmatprep.mubr.bf16.mxu0 %v347
  %693 = vmatmul.mubr.bf16.gmra.mxu0 %v346
  %v694 = vpop.f32.mrf.mxu0
  %v695 = vadd.f32 %v122, %v694
  %v696 = vpop.f32.mrf.mxu0
  %v697 = vpop.f32.mrf.mxu0
  %v698 = vadd.f32 %v122, %v697
  %v699 = vpop.f32.mrf.mxu0
  %700 = vmatprep.mubr.bf16.mxu0 %v349
  %701 = vmatmul.mubr.bf16.gmra.mxu0 %v348
  %v702 = vpop.f32.mrf.mxu0
  %v703 = vadd.f32 %v122, %v702
  %v704 = vpop.f32.mrf.mxu0
  %v705 = vpop.f32.mrf.mxu0
  %v706 = vadd.f32 %v122, %v705
  %v707 = vpop.f32.mrf.mxu0
  %708 = vmatprep.mubr.bf16.mxu0 %v351
  %709 = vmatmul.mubr.bf16.gmra.mxu0 %v350
  %v710 = vpop.f32.mrf.mxu0
  %v711 = vadd.f32 %v122, %v710
  %v712 = vpop.f32.mrf.mxu0
  %v713 = vpop.f32.mrf.mxu0
  %v714 = vadd.f32 %v122, %v713
  %v715 = vpop.f32.mrf.mxu0
  %716 = vmatprep.mubr.bf16.mxu0 %v353
  %717 = vmatmul.mubr.bf16.gmra.mxu0 %v352
  %v718 = vpop.f32.mrf.mxu0
  %v719 = vadd.f32 %v122, %v718
  %v720 = vpop.f32.mrf.mxu0
  %v721 = vpop.f32.mrf.mxu0
  %v722 = vadd.f32 %v122, %v721
  %v723 = vpop.f32.mrf.mxu0
  %724 = vmatprep.mubr.bf16.mxu0 %v355
  %725 = vmatmul.mubr.bf16.gmra.mxu0 %v354
  %v726 = vpop.f32.mrf.mxu0
  %v727 = vadd.f32 %v122, %v726
  %v728 = vpop.f32.mrf.mxu0
  %v729 = vpop.f32.mrf.mxu0
  %v730 = vadd.f32 %v122, %v729
  %v731 = vpop.f32.mrf.mxu0
  %732 = vmatprep.mubr.bf16.mxu0 %v357
  %733 = vmatmul.mubr.bf16.gmra.mxu0 %v356
  %v734 = vpop.f32.mrf.mxu0
  %v735 = vadd.f32 %v122, %v734
  %v736 = vpop.f32.mrf.mxu0
  %v737 = vpop.f32.mrf.mxu0
  %v738 = vadd.f32 %v122, %v737
  %v739 = vpop.f32.mrf.mxu0
  %740 = vmatprep.mubr.bf16.mxu0 %v359
  %741 = vmatmul.mubr.bf16.gmra.mxu0 %v358
  %v742 = vpop.f32.mrf.mxu0
  %v743 = vadd.f32 %v122, %v742
  %v744 = vpop.f32.mrf.mxu0
  %v745 = vpop.f32.mrf.mxu0
  %v746 = vadd.f32 %v122, %v745
  %v747 = vpop.f32.mrf.mxu0
  %748 = vmatprep.mubr.bf16.mxu0 %v361
  %749 = vmatmul.mubr.bf16.gmra.mxu0 %v360
  %v750 = vpop.f32.mrf.mxu0
  %v751 = vadd.f32 %v122, %v750
  %v752 = vpop.f32.mrf.mxu0
  %v753 = vpop.f32.mrf.mxu0
  %v754 = vadd.f32 %v122, %v753
  %v755 = vpop.f32.mrf.mxu0
  %756 = vmatprep.mubr.bf16.mxu0 %v363
  %757 = vmatmul.mubr.bf16.gmra.mxu0 %v362
  %v758 = vpop.f32.mrf.mxu0
  %v759 = vadd.f32 %v122, %v758
  %v760 = vpop.f32.mrf.mxu0
  %v761 = vpop.f32.mrf.mxu0
  %v762 = vadd.f32 %v122, %v761
  %v763 = vpop.f32.mrf.mxu0
  %764 = vmatprep.mubr.bf16.mxu0 %v365
  %765 = vmatmul.mubr.bf16.gmra.mxu0 %v364
  %v766 = vpop.f32.mrf.mxu0
  %v767 = vadd.f32 %v122, %v766
  %v768 = vpop.f32.mrf.mxu0
  %v769 = vpop.f32.mrf.mxu0
  %v770 = vadd.f32 %v122, %v769
  %v771 = vpop.f32.mrf.mxu0
  %772 = vmatprep.mubr.bf16.mxu0 %v367
  %773 = vmatmul.mubr.bf16.gmra.mxu0 %v366
  %v774 = vpop.f32.mrf.mxu0
  %v775 = vadd.f32 %v122, %v774
  %v776 = vpop.f32.mrf.mxu0
  %v777 = vpop.f32.mrf.mxu0
  %v778 = vadd.f32 %v122, %v777
  %v779 = vpop.f32.mrf.mxu0
  %780 = vmatprep.mubr.bf16.mxu0 %v369
  %781 = vmatmul.mubr.bf16.gmra.mxu0 %v368
  %v782 = vpop.f32.mrf.mxu0
  %v783 = vadd.f32 %v122, %v782
  %v784 = vpop.f32.mrf.mxu0
  %v785 = vpop.f32.mrf.mxu0
  %v786 = vadd.f32 %v122, %v785
  %v787 = vpop.f32.mrf.mxu0
  %788 = vmatprep.mubr.bf16.mxu0 %v371
  %789 = vmatmul.mubr.bf16.gmra.mxu0 %v370
  %v790 = vpop.f32.mrf.mxu0
  %v791 = vadd.f32 %v122, %v790
  %v792 = vpop.f32.mrf.mxu0
  %v793 = vpop.f32.mrf.mxu0
  %v794 = vadd.f32 %v122, %v793
  %v795 = vpop.f32.mrf.mxu0
  %796 = vmatprep.mubr.bf16.mxu0 %v373
  %797 = vmatmul.mubr.bf16.gmra.mxu0 %v372
  %v798 = vpop.f32.mrf.mxu0
  %v799 = vadd.f32 %v122, %v798
  %v800 = vpop.f32.mrf.mxu0
  %v801 = vpop.f32.mrf.mxu0
  %v802 = vadd.f32 %v122, %v801
  %v803 = vpop.f32.mrf.mxu0
  %804 = vmatprep.mubr.bf16.mxu0 %v375
  %805 = vmatmul.mubr.bf16.gmra.mxu0 %v374
  %v806 = vpop.f32.mrf.mxu0
  %v807 = vadd.f32 %v122, %v806
  %v808 = vpop.f32.mrf.mxu0
  %v809 = vpop.f32.mrf.mxu0
  %v810 = vadd.f32 %v122, %v809
  %v811 = vpop.f32.mrf.mxu0
  %812 = vmatprep.mubr.bf16.mxu0 %v377
  %813 = vmatmul.mubr.bf16.gmra.mxu0 %v376
  %v814 = vpop.f32.mrf.mxu0
  %v815 = vadd.f32 %v122, %v814
  %v816 = vpop.f32.mrf.mxu0
  %v817 = vpop.f32.mrf.mxu0
  %v818 = vadd.f32 %v122, %v817
  %v819 = vpop.f32.mrf.mxu0
  %820 = vmatprep.mubr.bf16.mxu0 %v379
  %821 = vmatmul.mubr.bf16.gmra.mxu0 %v378
  %v822 = vpop.f32.mrf.mxu0
  %v823 = vadd.f32 %v122, %v822
  %v824 = vpop.f32.mrf.mxu0
  %v825 = vpop.f32.mrf.mxu0
  %v826 = vadd.f32 %v122, %v825
  %v827 = vpop.f32.mrf.mxu0
  %828 = vdwg.mxu0
  %v829 = vadd.f32 %v575, %v578
  %v830 = vadd.f32 %v829, %v583
  %v831 = vadd.f32 %v830, %v586
  %v832 = vadd.f32 %v831, %v591
  %v833 = vadd.f32 %v832, %v594
  %v834 = vadd.f32 %v833, %v599
  %v835 = vadd.f32 %v834, %v602
  %v836 = vadd.f32 %v835, %v607
  %v837 = vadd.f32 %v836, %v610
  %v838 = vadd.f32 %v837, %v615
  %v839 = vadd.f32 %v838, %v618
  %v840 = vadd.f32 %v839, %v623
  %v841 = vadd.f32 %v840, %v626
  %v842 = vadd.f32 %v841, %v631
  %v843 = vadd.f32 %v842, %v634
  %v844 = vadd.f32 %v843, %v639
  %v845 = vadd.f32 %v844, %v642
  %v846 = vadd.f32 %v845, %v647
  %v847 = vadd.f32 %v846, %v650
  %v848 = vadd.f32 %v847, %v655
  %v849 = vadd.f32 %v848, %v658
  %v850 = vadd.f32 %v849, %v663
  %v851 = vadd.f32 %v850, %v666
  %v852 = vadd.f32 %v851, %v671
  %v853 = vadd.f32 %v852, %v674
  %v854 = vadd.f32 %v853, %v679
  %v855 = vadd.f32 %v854, %v682
  %v856 = vadd.f32 %v855, %v687
  %v857 = vadd.f32 %v856, %v690
  %v858 = vadd.f32 %v857, %v695
  %v859 = vadd.f32 %v858, %v698
  %v860 = vadd.f32 %v859, %v703
  %v861 = vadd.f32 %v860, %v706
  %v862 = vadd.f32 %v861, %v711
  %v863 = vadd.f32 %v862, %v714
  %v864 = vadd.f32 %v863, %v719
  %v865 = vadd.f32 %v864, %v722
  %v866 = vadd.f32 %v865, %v727
  %v867 = vadd.f32 %v866, %v730
  %v868 = vadd.f32 %v867, %v735
  %v869 = vadd.f32 %v868, %v738
  %v870 = vadd.f32 %v869, %v743
  %v871 = vadd.f32 %v870, %v746
  %v872 = vadd.f32 %v871, %v751
  %v873 = vadd.f32 %v872, %v754
  %v874 = vadd.f32 %v873, %v759
  %v875 = vadd.f32 %v874, %v762
  %v876 = vadd.f32 %v875, %v767
  %v877 = vadd.f32 %v876, %v770
  %v878 = vadd.f32 %v877, %v775
  %v879 = vadd.f32 %v878, %v778
  %v880 = vadd.f32 %v879, %v783
  %v881 = vadd.f32 %v880, %v786
  %v882 = vadd.f32 %v881, %v791
  %v883 = vadd.f32 %v882, %v794
  %v884 = vadd.f32 %v883, %v799
  %v885 = vadd.f32 %v884, %v802
  %v886 = vadd.f32 %v885, %v807
  %v887 = vadd.f32 %v886, %v810
  %v888 = vadd.f32 %v887, %v815
  %v889 = vadd.f32 %v888, %v818
  %v890 = vadd.f32 %v889, %v823
  %v891 = vadd.f32 %v890, %v826
  %v892 = vrot.slane %v891, 4
  %v893 = vadd.f32 %v891, %v892
  %v894 = vrot.slane %v893, 2
  %v895 = vadd.f32 %v893, %v894
  %v896 = vrot.slane %v895, 1
  %v897 = vadd.f32 %v895, %v896
  %v898 = vmul.f32 %v897, 0.001953125
  %v899 = vmul.f32 %v575, %v575
  %v900 = vmul.f32 %v578, %v578
  %v901 = vmul.f32 %v583, %v583
  %v902 = vmul.f32 %v586, %v586
  %v903 = vmul.f32 %v591, %v591
  %v904 = vmul.f32 %v594, %v594
  %v905 = vmul.f32 %v599, %v599
  %v906 = vmul.f32 %v602, %v602
  %v907 = vmul.f32 %v607, %v607
  %v908 = vmul.f32 %v610, %v610
  %v909 = vmul.f32 %v615, %v615
  %v910 = vmul.f32 %v618, %v618
  %v911 = vmul.f32 %v623, %v623
  %v912 = vmul.f32 %v626, %v626
  %v913 = vmul.f32 %v631, %v631
  %v914 = vmul.f32 %v634, %v634
  %v915 = vmul.f32 %v639, %v639
  %v916 = vmul.f32 %v642, %v642
  %v917 = vmul.f32 %v647, %v647
  %v918 = vmul.f32 %v650, %v650
  %v919 = vmul.f32 %v655, %v655
  %v920 = vmul.f32 %v658, %v658
  %v921 = vmul.f32 %v663, %v663
  %v922 = vmul.f32 %v666, %v666
  %v923 = vmul.f32 %v671, %v671
  %v924 = vmul.f32 %v674, %v674
  %v925 = vmul.f32 %v679, %v679
  %v926 = vmul.f32 %v682, %v682
  %v927 = vmul.f32 %v687, %v687
  %v928 = vmul.f32 %v690, %v690
  %v929 = vmul.f32 %v695, %v695
  %v930 = vmul.f32 %v698, %v698
  %v931 = vmul.f32 %v703, %v703
  %v932 = vmul.f32 %v706, %v706
  %v933 = vmul.f32 %v711, %v711
  %v934 = vmul.f32 %v714, %v714
  %v935 = vmul.f32 %v719, %v719
  %v936 = vmul.f32 %v722, %v722
  %v937 = vmul.f32 %v727, %v727
  %v938 = vmul.f32 %v730, %v730
  %v939 = vmul.f32 %v735, %v735
  %v940 = vmul.f32 %v738, %v738
  %v941 = vmul.f32 %v743, %v743
  %v942 = vmul.f32 %v746, %v746
  %v943 = vmul.f32 %v751, %v751
  %v944 = vmul.f32 %v754, %v754
  %v945 = vmul.f32 %v759, %v759
  %v946 = vmul.f32 %v762, %v762
  %v947 = vmul.f32 %v767, %v767
  %v948 = vmul.f32 %v770, %v770
  %v949 = vmul.f32 %v775, %v775
  %v950 = vmul.f32 %v778, %v778
  %v951 = vmul.f32 %v783, %v783
  %v952 = vmul.f32 %v786, %v786
  %v953 = vmul.f32 %v791, %v791
  %v954 = vmul.f32 %v794, %v794
  %v955 = vmul.f32 %v799, %v799
  %v956 = vmul.f32 %v802, %v802
  %v957 = vmul.f32 %v807, %v807
  %v958 = vmul.f32 %v810, %v810
  %v959 = vmul.f32 %v815, %v815
  %v960 = vmul.f32 %v818, %v818
  %v961 = vmul.f32 %v823, %v823
  %v962 = vmul.f32 %v826, %v826
  %v963 = vadd.f32 %v899, %v900
  %v964 = vadd.f32 %v963, %v901
  %v965 = vadd.f32 %v964, %v902
  %v966 = vadd.f32 %v965, %v903
  %v967 = vadd.f32 %v966, %v904
  %v968 = vadd.f32 %v967, %v905
  %v969 = vadd.f32 %v968, %v906
  %v970 = vadd.f32 %v969, %v907
  %v971 = vadd.f32 %v970, %v908
  %v972 = vadd.f32 %v971, %v909
  %v973 = vadd.f32 %v972, %v910
  %v974 = vadd.f32 %v973, %v911
  %v975 = vadd.f32 %v974, %v912
  %v976 = vadd.f32 %v975, %v913
  %v977 = vadd.f32 %v976, %v914
  %v978 = vadd.f32 %v977, %v915
  %v979 = vadd.f32 %v978, %v916
  %v980 = vadd.f32 %v979, %v917
  %v981 = vadd.f32 %v980, %v918
  %v982 = vadd.f32 %v981, %v919
  %v983 = vadd.f32 %v982, %v920
  %v984 = vadd.f32 %v983, %v921
  %v985 = vadd.f32 %v984, %v922
  %v986 = vadd.f32 %v985, %v923
  %v987 = vadd.f32 %v986, %v924
  %v988 = vadd.f32 %v987, %v925
  %v989 = vadd.f32 %v988, %v926
  %v990 = vadd.f32 %v989, %v927
  %v991 = vadd.f32 %v990, %v928
  %v992 = vadd.f32 %v991, %v929
  %v993 = vadd.f32 %v992, %v930
  %v994 = vadd.f32 %v993, %v931
  %v995 = vadd.f32 %v994, %v932
  %v996 = vadd.f32 %v995, %v933
  %v997 = vadd.f32 %v996, %v934
  %v998 = vadd.f32 %v997, %v935
  %v999 = vadd.f32 %v998, %v936
  %v1000 = vadd.f32 %v999, %v937
  %v1001 = vadd.f32 %v1000, %v938
  %v1002 = vadd.f32 %v1001, %v939
  %v1003 = vadd.f32 %v1002, %v940
  %v1004 = vadd.f32 %v1003, %v941
  %v1005 = vadd.f32 %v1004, %v942
  %v1006 = vadd.f32 %v1005, %v943
  %v1007 = vadd.f32 %v1006, %v944
  %v1008 = vadd.f32 %v1007, %v945
  %v1009 = vadd.f32 %v1008, %v946
  %v1010 = vadd.f32 %v1009, %v947
  %v1011 = vadd.f32 %v1010, %v948
  %v1012 = vadd.f32 %v1011, %v949
  %v1013 = vadd.f32 %v1012, %v950
  %v1014 = vadd.f32 %v1013, %v951
  %v1015 = vadd.f32 %v1014, %v952
  %v1016 = vadd.f32 %v1015, %v953
  %v1017 = vadd.f32 %v1016, %v954
  %v1018 = vadd.f32 %v1017, %v955
  %v1019 = vadd.f32 %v1018, %v956
  %v1020 = vadd.f32 %v1019, %v957
  %v1021 = vadd.f32 %v1020, %v958
  %v1022 = vadd.f32 %v1021, %v959
  %v1023 = vadd.f32 %v1022, %v960
  %v1024 = vadd.f32 %v1023, %v961
  %v1025 = vadd.f32 %v1024, %v962
  %v1026 = vrot.slane %v1025, 4
  %v1027 = vadd.f32 %v1025, %v1026
  %v1028 = vrot.slane %v1027, 2
  %v1029 = vadd.f32 %v1027, %v1028
  %v1030 = vrot.slane %v1029, 1
  %v1031 = vadd.f32 %v1029, %v1030
  %v1032 = vmul.f32 %v1031, 0.001953125
  %v1033 = vmul.f32 %v898, %v898
  %v1034 = vsub.f32 %v1032, %v1033
  %v1035 = vmax.f32 %v1034, 0.0
  %v1036 = vld [vmem:[%s3] sm:$0x1]
  %v1037 = vadd.f32 %v1035, 1e-05
  %v1038 = vrsqrt.pop %v1037
  %v1039 = vmul.f32 %v1036, %v1038
  %v1040 = vld [vmem:[%s4] sm:$0x1]
  %v1041 = vmul.f32 %v898, %v1039
  %v1042 = vsub.f32 %v1040, %v1041
  %v1044 = vlaneseq
  %v1045 = vshrl.u32 %v1044, 7
  %v1046 = vsub.s32 0, %v1045
  %v1047 = vrot.slane %v1039, %v1046
  %v1049 = vmul.f32 %v575, %v1047
  %v1050 = vmul.f32 %v578, %v1047
  %v1051 = vmul.f32 %v583, %v1047
  %v1052 = vmul.f32 %v586, %v1047
  %v1053 = vmul.f32 %v591, %v1047
  %v1054 = vmul.f32 %v594, %v1047
  %v1055 = vmul.f32 %v599, %v1047
  %v1056 = vmul.f32 %v602, %v1047
  %v1057 = vmul.f32 %v607, %v1047
  %v1058 = vmul.f32 %v610, %v1047
  %v1059 = vmul.f32 %v615, %v1047
  %v1060 = vmul.f32 %v618, %v1047
  %v1061 = vmul.f32 %v623, %v1047
  %v1062 = vmul.f32 %v626, %v1047
  %v1063 = vmul.f32 %v631, %v1047
  %v1064 = vmul.f32 %v634, %v1047
  %v1065 = vmul.f32 %v639, %v1047
  %v1066 = vmul.f32 %v642, %v1047
  %v1067 = vmul.f32 %v647, %v1047
  %v1068 = vmul.f32 %v650, %v1047
  %v1069 = vmul.f32 %v655, %v1047
  %v1070 = vmul.f32 %v658, %v1047
  %v1071 = vmul.f32 %v663, %v1047
  %v1072 = vmul.f32 %v666, %v1047
  %v1073 = vmul.f32 %v671, %v1047
  %v1074 = vmul.f32 %v674, %v1047
  %v1075 = vmul.f32 %v679, %v1047
  %v1076 = vmul.f32 %v682, %v1047
  %v1077 = vmul.f32 %v687, %v1047
  %v1078 = vmul.f32 %v690, %v1047
  %v1079 = vmul.f32 %v695, %v1047
  %v1080 = vmul.f32 %v698, %v1047
  %v1081 = vmul.f32 %v703, %v1047
  %v1082 = vmul.f32 %v706, %v1047
  %v1083 = vmul.f32 %v711, %v1047
  %v1084 = vmul.f32 %v714, %v1047
  %v1085 = vmul.f32 %v719, %v1047
  %v1086 = vmul.f32 %v722, %v1047
  %v1087 = vmul.f32 %v727, %v1047
  %v1088 = vmul.f32 %v730, %v1047
  %v1089 = vmul.f32 %v735, %v1047
  %v1090 = vmul.f32 %v738, %v1047
  %v1091 = vmul.f32 %v743, %v1047
  %v1092 = vmul.f32 %v746, %v1047
  %v1093 = vmul.f32 %v751, %v1047
  %v1094 = vmul.f32 %v754, %v1047
  %v1095 = vmul.f32 %v759, %v1047
  %v1096 = vmul.f32 %v762, %v1047
  %v1097 = vmul.f32 %v767, %v1047
  %v1098 = vmul.f32 %v770, %v1047
  %v1099 = vmul.f32 %v775, %v1047
  %v1100 = vmul.f32 %v778, %v1047
  %v1101 = vmul.f32 %v783, %v1047
  %v1102 = vmul.f32 %v786, %v1047
  %v1103 = vmul.f32 %v791, %v1047
  %v1104 = vmul.f32 %v794, %v1047
  %v1105 = vmul.f32 %v799, %v1047
  %v1106 = vmul.f32 %v802, %v1047
  %v1107 = vmul.f32 %v807, %v1047
  %v1108 = vmul.f32 %v810, %v1047
  %v1109 = vmul.f32 %v815, %v1047
  %v1110 = vmul.f32 %v818, %v1047
  %v1111 = vmul.f32 %v823, %v1047
  %v1112 = vmul.f32 %v826, %v1047
  %v1114 = vlaneseq
  %v1115 = vshrl.u32 %v1114, 7
  %v1116 = vsub.s32 0, %v1115
  %v1117 = vrot.slane %v1042, %v1116
  %v1119 = vadd.f32 %v1049, %v1117
  %v1120 = vadd.f32 %v1050, %v1117
  %v1121 = vadd.f32 %v1051, %v1117
  %v1122 = vadd.f32 %v1052, %v1117
  %v1123 = vadd.f32 %v1053, %v1117
  %v1124 = vadd.f32 %v1054, %v1117
  %v1125 = vadd.f32 %v1055, %v1117
  %v1126 = vadd.f32 %v1056, %v1117
  %v1127 = vadd.f32 %v1057, %v1117
  %v1128 = vadd.f32 %v1058, %v1117
  %v1129 = vadd.f32 %v1059, %v1117
  %v1130 = vadd.f32 %v1060, %v1117
  %v1131 = vadd.f32 %v1061, %v1117
  %v1132 = vadd.f32 %v1062, %v1117
  %v1133 = vadd.f32 %v1063, %v1117
  %v1134 = vadd.f32 %v1064, %v1117
  %v1135 = vadd.f32 %v1065, %v1117
  %v1136 = vadd.f32 %v1066, %v1117
  %v1137 = vadd.f32 %v1067, %v1117
  %v1138 = vadd.f32 %v1068, %v1117
  %v1139 = vadd.f32 %v1069, %v1117
  %v1140 = vadd.f32 %v1070, %v1117
  %v1141 = vadd.f32 %v1071, %v1117
  %v1142 = vadd.f32 %v1072, %v1117
  %v1143 = vadd.f32 %v1073, %v1117
  %v1144 = vadd.f32 %v1074, %v1117
  %v1145 = vadd.f32 %v1075, %v1117
  %v1146 = vadd.f32 %v1076, %v1117
  %v1147 = vadd.f32 %v1077, %v1117
  %v1148 = vadd.f32 %v1078, %v1117
  %v1149 = vadd.f32 %v1079, %v1117
  %v1150 = vadd.f32 %v1080, %v1117
  %v1151 = vadd.f32 %v1081, %v1117
  %v1152 = vadd.f32 %v1082, %v1117
  %v1153 = vadd.f32 %v1083, %v1117
  %v1154 = vadd.f32 %v1084, %v1117
  %v1155 = vadd.f32 %v1085, %v1117
  %v1156 = vadd.f32 %v1086, %v1117
  %v1157 = vadd.f32 %v1087, %v1117
  %v1158 = vadd.f32 %v1088, %v1117
  %v1159 = vadd.f32 %v1089, %v1117
  %v1160 = vadd.f32 %v1090, %v1117
  %v1161 = vadd.f32 %v1091, %v1117
  %v1162 = vadd.f32 %v1092, %v1117
  %v1163 = vadd.f32 %v1093, %v1117
  %v1164 = vadd.f32 %v1094, %v1117
  %v1165 = vadd.f32 %v1095, %v1117
  %v1166 = vadd.f32 %v1096, %v1117
  %v1167 = vadd.f32 %v1097, %v1117
  %v1168 = vadd.f32 %v1098, %v1117
  %v1169 = vadd.f32 %v1099, %v1117
  %v1170 = vadd.f32 %v1100, %v1117
  %v1171 = vadd.f32 %v1101, %v1117
  %v1172 = vadd.f32 %v1102, %v1117
  %v1173 = vadd.f32 %v1103, %v1117
  %v1174 = vadd.f32 %v1104, %v1117
  %v1175 = vadd.f32 %v1105, %v1117
  %v1176 = vadd.f32 %v1106, %v1117
  %v1177 = vadd.f32 %v1107, %v1117
  %v1178 = vadd.f32 %v1108, %v1117
  %v1179 = vadd.f32 %v1109, %v1117
  %v1180 = vadd.f32 %v1110, %v1117
  %v1181 = vadd.f32 %v1111, %v1117
  %v1182 = vadd.f32 %v1112, %v1117
  %v1183 = vmax.f32 %v1119, 0.0
  %v1184 = vmax.f32 %v1120, 0.0
  %v1185 = vmax.f32 %v1121, 0.0
  %v1186 = vmax.f32 %v1122, 0.0
  %v1187 = vmax.f32 %v1123, 0.0
  %v1188 = vmax.f32 %v1124, 0.0
  %v1189 = vmax.f32 %v1125, 0.0
  %v1190 = vmax.f32 %v1126, 0.0
  %v1191 = vmax.f32 %v1127, 0.0
  %v1192 = vmax.f32 %v1128, 0.0
  %v1193 = vmax.f32 %v1129, 0.0
  %v1194 = vmax.f32 %v1130, 0.0
  %v1195 = vmax.f32 %v1131, 0.0
  %v1196 = vmax.f32 %v1132, 0.0
  %v1197 = vmax.f32 %v1133, 0.0
  %v1198 = vmax.f32 %v1134, 0.0
  %v1199 = vmax.f32 %v1135, 0.0
  %v1200 = vmax.f32 %v1136, 0.0
  %v1201 = vmax.f32 %v1137, 0.0
  %v1202 = vmax.f32 %v1138, 0.0
  %v1203 = vmax.f32 %v1139, 0.0
  %v1204 = vmax.f32 %v1140, 0.0
  %v1205 = vmax.f32 %v1141, 0.0
  %v1206 = vmax.f32 %v1142, 0.0
  %v1207 = vmax.f32 %v1143, 0.0
  %v1208 = vmax.f32 %v1144, 0.0
  %v1209 = vmax.f32 %v1145, 0.0
  %v1210 = vmax.f32 %v1146, 0.0
  %v1211 = vmax.f32 %v1147, 0.0
  %v1212 = vmax.f32 %v1148, 0.0
  %v1213 = vmax.f32 %v1149, 0.0
  %v1214 = vmax.f32 %v1150, 0.0
  %v1215 = vmax.f32 %v1151, 0.0
  %v1216 = vmax.f32 %v1152, 0.0
  %v1217 = vmax.f32 %v1153, 0.0
  %v1218 = vmax.f32 %v1154, 0.0
  %v1219 = vmax.f32 %v1155, 0.0
  %v1220 = vmax.f32 %v1156, 0.0
  %v1221 = vmax.f32 %v1157, 0.0
  %v1222 = vmax.f32 %v1158, 0.0
  %v1223 = vmax.f32 %v1159, 0.0
  %v1224 = vmax.f32 %v1160, 0.0
  %v1225 = vmax.f32 %v1161, 0.0
  %v1226 = vmax.f32 %v1162, 0.0
  %v1227 = vmax.f32 %v1163, 0.0
  %v1228 = vmax.f32 %v1164, 0.0
  %v1229 = vmax.f32 %v1165, 0.0
  %v1230 = vmax.f32 %v1166, 0.0
  %v1231 = vmax.f32 %v1167, 0.0
  %v1232 = vmax.f32 %v1168, 0.0
  %v1233 = vmax.f32 %v1169, 0.0
  %v1234 = vmax.f32 %v1170, 0.0
  %v1235 = vmax.f32 %v1171, 0.0
  %v1236 = vmax.f32 %v1172, 0.0
  %v1237 = vmax.f32 %v1173, 0.0
  %v1238 = vmax.f32 %v1174, 0.0
  %v1239 = vmax.f32 %v1175, 0.0
  %v1240 = vmax.f32 %v1176, 0.0
  %v1241 = vmax.f32 %v1177, 0.0
  %v1242 = vmax.f32 %v1178, 0.0
  %v1243 = vmax.f32 %v1179, 0.0
  %v1244 = vmax.f32 %v1180, 0.0
  %v1245 = vmax.f32 %v1181, 0.0
  %v1246 = vmax.f32 %v1182, 0.0
  %1247 = vst [vmem:[%s5] sm:$0xff] %v1183
  %1248 = vst [vmem:[%s5 + $0x8] sm:$0xff] %v1184
  %1249 = vst [vmem:[%s5 + $0x10] sm:$0xff] %v1185
  %1250 = vst [vmem:[%s5 + $0x18] sm:$0xff] %v1186
  %1251 = vst [vmem:[%s5 + $0x20] sm:$0xff] %v1187
  %1252 = vst [vmem:[%s5 + $0x28] sm:$0xff] %v1188
  %1253 = vst [vmem:[%s5 + $0x30] sm:$0xff] %v1189
  %1254 = vst [vmem:[%s5 + $0x38] sm:$0xff] %v1190
  %1255 = vst [vmem:[%s5 + $0x40] sm:$0xff] %v1191
  %1256 = vst [vmem:[%s5 + $0x48] sm:$0xff] %v1192
  %1257 = vst [vmem:[%s5 + $0x50] sm:$0xff] %v1193
  %1258 = vst [vmem:[%s5 + $0x58] sm:$0xff] %v1194
  %1259 = vst [vmem:[%s5 + $0x60] sm:$0xff] %v1195
  %1260 = vst [vmem:[%s5 + $0x68] sm:$0xff] %v1196
  %1261 = vst [vmem:[%s5 + $0x70] sm:$0xff] %v1197
  %1262 = vst [vmem:[%s5 + $0x78] sm:$0xff] %v1198
  %1263 = vst [vmem:[%s5 + $0x80] sm:$0xff] %v1199
  %1264 = vst [vmem:[%s5 + $0x88] sm:$0xff] %v1200
  %1265 = vst [vmem:[%s5 + $0x90] sm:$0xff] %v1201
  %1266 = vst [vmem:[%s5 + $0x98] sm:$0xff] %v1202
  %1267 = vst [vmem:[%s5 + $0xa0] sm:$0xff] %v1203
  %1268 = vst [vmem:[%s5 + $0xa8] sm:$0xff] %v1204
  %1269 = vst [vmem:[%s5 + $0xb0] sm:$0xff] %v1205
  %1270 = vst [vmem:[%s5 + $0xb8] sm:$0xff] %v1206
  %1271 = vst [vmem:[%s5 + $0xc0] sm:$0xff] %v1207
  %1272 = vst [vmem:[%s5 + $0xc8] sm:$0xff] %v1208
  %1273 = vst [vmem:[%s5 + $0xd0] sm:$0xff] %v1209
  %1274 = vst [vmem:[%s5 + $0xd8] sm:$0xff] %v1210
  %1275 = vst [vmem:[%s5 + $0xe0] sm:$0xff] %v1211
  %1276 = vst [vmem:[%s5 + $0xe8] sm:$0xff] %v1212
  %1277 = vst [vmem:[%s5 + $0xf0] sm:$0xff] %v1213
  %1278 = vst [vmem:[%s5 + $0xf8] sm:$0xff] %v1214
  %1279 = vst [vmem:[%s5 + $0x100] sm:$0xff] %v1215
  %1280 = vst [vmem:[%s5 + $0x108] sm:$0xff] %v1216
  %1281 = vst [vmem:[%s5 + $0x110] sm:$0xff] %v1217
  %1282 = vst [vmem:[%s5 + $0x118] sm:$0xff] %v1218
  %1283 = vst [vmem:[%s5 + $0x120] sm:$0xff] %v1219
  %1284 = vst [vmem:[%s5 + $0x128] sm:$0xff] %v1220
  %1285 = vst [vmem:[%s5 + $0x130] sm:$0xff] %v1221
  %1286 = vst [vmem:[%s5 + $0x138] sm:$0xff] %v1222
  %1287 = vst [vmem:[%s5 + $0x140] sm:$0xff] %v1223
  %1288 = vst [vmem:[%s5 + $0x148] sm:$0xff] %v1224
  %1289 = vst [vmem:[%s5 + $0x150] sm:$0xff] %v1225
  %1290 = vst [vmem:[%s5 + $0x158] sm:$0xff] %v1226
  %1291 = vst [vmem:[%s5 + $0x160] sm:$0xff] %v1227
  %1292 = vst [vmem:[%s5 + $0x168] sm:$0xff] %v1228
  %1293 = vst [vmem:[%s5 + $0x170] sm:$0xff] %v1229
  %1294 = vst [vmem:[%s5 + $0x178] sm:$0xff] %v1230
  %1295 = vst [vmem:[%s5 + $0x180] sm:$0xff] %v1231
  %1296 = vst [vmem:[%s5 + $0x188] sm:$0xff] %v1232
  %1297 = vst [vmem:[%s5 + $0x190] sm:$0xff] %v1233
  %1298 = vst [vmem:[%s5 + $0x198] sm:$0xff] %v1234
  %1299 = vst [vmem:[%s5 + $0x1a0] sm:$0xff] %v1235
  %1300 = vst [vmem:[%s5 + $0x1a8] sm:$0xff] %v1236
  %1301 = vst [vmem:[%s5 + $0x1b0] sm:$0xff] %v1237
  %1302 = vst [vmem:[%s5 + $0x1b8] sm:$0xff] %v1238
  %1303 = vst [vmem:[%s5 + $0x1c0] sm:$0xff] %v1239
  %1304 = vst [vmem:[%s5 + $0x1c8] sm:$0xff] %v1240
  %1305 = vst [vmem:[%s5 + $0x1d0] sm:$0xff] %v1241
  %1306 = vst [vmem:[%s5 + $0x1d8] sm:$0xff] %v1242
  %1307 = vst [vmem:[%s5 + $0x1e0] sm:$0xff] %v1243
  %1308 = vst [vmem:[%s5 + $0x1e8] sm:$0xff] %v1244
  %1309 = vst [vmem:[%s5 + $0x1f0] sm:$0xff] %v1245
  %1310 = vst [vmem:[%s5 + $0x1f8] sm:$0xff] %v1246
  // Predicated region
  $region22: #{residual_net.11} parent=0 // pred_check
    _
  $region23: #{residual_net.11} parent=0 // pred_check_branch
    %1312 = sbr.rel (0) target = $region25
  $region24: #{residual_net.11} parent=0 // pred_region
    _
  $region25: #{residual_net.11} parent=0 // pred_fallthru
    _
  // Predicated region
  $region26: #{residual_net.11} parent=0 // pred_check
    _
  $region27: #{residual_net.11} parent=0 // pred_check_branch
    %1314 = sbr.rel (0) target = $region29
  $region28: #{residual_net.11} parent=0 // pred_region
    _
  $region29: #{residual_net.11} parent=0 // pred_fallthru
    _

// kernel: residual_net.12
$region0: #{residual_net.12}
  #allocation0 [shape = 'u32[]', space=smem, size = 0x4, offset = 0x4, fixed_abs, tag = 'smem constant byte address 0x4 - core index']
  #allocation1 [shape = 'u32[144,128]{1,0:T(1,128)}', space=vmem, size = 0x12000, scoped, tag = 'internal scratch']
  %s0 = inlined_call_operand.vmem [shape: bf16[512,256], index: 0, kind: input, shape index: {}]
  %s1 = inlined_call_operand.vmem [shape: bf16[256,128], index: 1, kind: input, shape index: {}]
  %s2 = inlined_call_operand.vmem [shape: f32[1,128], index: 2, kind: input, shape index: {}]
  %s3 = inlined_call_operand.vmem [shape: f32[1,128], index: 3, kind: input, shape index: {}]
  %s4 = inlined_call_operand.vmem [shape: f32[1,128], index: 4, kind: input, shape index: {}]
  %s5 = inlined_call_operand.vmem [shape: f32[512,128], index: 5, kind: input, shape index: {}]
  %s6 = inlined_call_operand.vmem [shape: f32[512,128], index: 6, kind: output, shape index: {}]
  %s7 = sld [smem:[#allocation0]]
  $region34: #{residual_net.12} parent=0
    _
  %s9 = ssub.s32 1, %s7
  %s10 = scalar_select 0, %s9, %s7
  // Predicated region
  $region2: #{residual_net.12} parent=0 // pred_check
    _
  $region3: #{residual_net.12} parent=0 // pred_check_branch
    %12 = sbr.rel (0) target = $region5
  $region4: #{residual_net.12} parent=0 // pred_region
    _
  $region5: #{residual_net.12} parent=0 // pred_fallthru
    _
  // Predicated region
  $region6: #{residual_net.12} parent=0 // pred_check
    _
  $region7: #{residual_net.12} parent=0 // pred_check_branch
    %14 = sbr.rel (0) target = $region9
  $region8: #{residual_net.12} parent=0 // pred_region
    _
  $region9: #{residual_net.12} parent=0 // pred_fallthru
    _
  // Predicated region
  $region10: #{residual_net.12} parent=0 // pred_check
    _
  $region11: #{residual_net.12} parent=0 // pred_check_branch
    %16 = sbr.rel (0) target = $region13
  $region12: #{residual_net.12} parent=0 // pred_region
    _
  $region13: #{residual_net.12} parent=0 // pred_fallthru
    _
  // Predicated region
  $region14: #{residual_net.12} parent=0 // pred_check
    _
  $region15: #{residual_net.12} parent=0 // pred_check_branch
    %18 = sbr.rel (0) target = $region17
  $region16: #{residual_net.12} parent=0 // pred_region
    _
  $region17: #{residual_net.12} parent=0 // pred_fallthru
    _
  // Predicated region
  $region18: #{residual_net.12} parent=0 // pred_check
    _
  $region19: #{residual_net.12} parent=0 // pred_check_branch
    %20 = sbr.rel (0) target = $region21
  $region20: #{residual_net.12} parent=0 // pred_region
    _
  $region21: #{residual_net.12} parent=0 // pred_fallthru
    _
  // Predicated region
  $region22: #{residual_net.12} parent=0 // pred_check
    _
  $region23: #{residual_net.12} parent=0 // pred_check_branch
    %22 = sbr.rel (0) target = $region25
  $region24: #{residual_net.12} parent=0 // pred_region
    _
  $region25: #{residual_net.12} parent=0 // pred_fallthru
    _
  %v24 = vld [vmem:[%s0] sm:$0xff]
  %v25 = vld [vmem:[%s0 + $0x8] sm:$0xff]
  %v26 = vld [vmem:[%s0 + $0x10] sm:$0xff]
  %v27 = vld [vmem:[%s0 + $0x18] sm:$0xff]
  %v28 = vld [vmem:[%s0 + $0x20] sm:$0xff]
  %v29 = vld [vmem:[%s0 + $0x28] sm:$0xff]
  %v30 = vld [vmem:[%s0 + $0x30] sm:$0xff]
  %v31 = vld [vmem:[%s0 + $0x38] sm:$0xff]
  %v32 = vld [vmem:[%s0 + $0x40] sm:$0xff]
  %v33 = vld [vmem:[%s0 + $0x48] sm:$0xff]
  %v34 = vld [vmem:[%s0 + $0x50] sm:$0xff]
  %v35 = vld [vmem:[%s0 + $0x58] sm:$0xff]
  %v36 = vld [vmem:[%s0 + $0x60] sm:$0xff]
  %v37 = vld [vmem:[%s0 + $0x68] sm:$0xff]
  %v38 = vld [vmem:[%s0 + $0x70] sm:$0xff]
  %v39 = vld [vmem:[%s0 + $0x78] sm:$0xff]
  %v40 = vld [vmem:[%s0 + $0x80] sm:$0xff]
  %v41 = vld [vmem:[%s0 + $0x88] sm:$0xff]
  %v42 = vld [vmem:[%s0 + $0x90] sm:$0xff]
  %v43 = vld [vmem:[%s0 + $0x98] sm:$0xff]
  %v44 = vld [vmem:[%s0 + $0xa0] sm:$0xff]
  %v45 = vld [vmem:[%s0 + $0xa8] sm:$0xff]
  %v46 = vld [vmem:[%s0 + $0xb0] sm:$0xff]
  %v47 = vld [vmem:[%s0 + $0xb8] sm:$0xff]
  %v48 = vld [vmem:[%s0 + $0xc0] sm:$0xff]
  %v49 = vld [vmem:[%s0 + $0xc8] sm:$0xff]
  %v50 = vld [vmem:[%s0 + $0xd0] sm:$0xff]
  %v51 = vld [vmem:[%s0 + $0xd8] sm:$0xff]
  %v52 = vld [vmem:[%s0 + $0xe0] sm:$0xff]
  %v53 = vld [vmem:[%s0 + $0xe8] sm:$0xff]
  %v54 = vld [vmem:[%s0 + $0xf0] sm:$0xff]
  %v55 = vld [vmem:[%s0 + $0xf8] sm:$0xff]
  %v56 = vld [vmem:[%s0 + $0x100] sm:$0xff]
  %v57 = vld [vmem:[%s0 + $0x108] sm:$0xff]
  %v58 = vld [vmem:[%s0 + $0x110] sm:$0xff]
  %v59 = vld [vmem:[%s0 + $0x118] sm:$0xff]
  %v60 = vld [vmem:[%s0 + $0x120] sm:$0xff]
  %v61 = vld [vmem:[%s0 + $0x128] sm:$0xff]
  %v62 = vld [vmem:[%s0 + $0x130] sm:$0xff]
  %v63 = vld [vmem:[%s0 + $0x138] sm:$0xff]
  %v64 = vld [vmem:[%s0 + $0x140] sm:$0xff]
  %v65 = vld [vmem:[%s0 + $0x148] sm:$0xff]
  %v66 = vld [vmem:[%s0 + $0x150] sm:$0xff]
  %v67 = vld [vmem:[%s0 + $0x158] sm:$0xff]
  %v68 = vld [vmem:[%s0 + $0x160] sm:$0xff]
  %v69 = vld [vmem:[%s0 + $0x168] sm:$0xff]
  %v70 = vld [vmem:[%s0 + $0x170] sm:$0xff]
  %v71 = vld [vmem:[%s0 + $0x178] sm:$0xff]
  %v72 = vld [vmem:[%s0 + $0x180] sm:$0xff]
  %v73 = vld [vmem:[%s0 + $0x188] sm:$0xff]
  %v74 = vld [vmem:[%s0 + $0x190] sm:$0xff]
  %v75 = vld [vmem:[%s0 + $0x198] sm:$0xff]
  %v76 = vld [vmem:[%s0 + $0x1a0] sm:$0xff]
  %v77 = vld [vmem:[%s0 + $0x1a8] sm:$0xff]
  %v78 = vld [vmem:[%s0 + $0x1b0] sm:$0xff]
  %v79 = vld [vmem:[%s0 + $0x1b8] sm:$0xff]
  %v80 = vld [vmem:[%s0 + $0x1c0] sm:$0xff]
  %v81 = vld [vmem:[%s0 + $0x1c8] sm:$0xff]
  %v82 = vld [vmem:[%s0 + $0x1d0] sm:$0xff]
  %v83 = vld [vmem:[%s0 + $0x1d8] sm:$0xff]
  %v84 = vld [vmem:[%s0 + $0x1e0] sm:$0xff]
  %v85 = vld [vmem:[%s0 + $0x1e8] sm:$0xff]
  %v86 = vld [vmem:[%s0 + $0x1f0] sm:$0xff]
  %v87 = vld [vmem:[%s0 + $0x1f8] sm:$0xff]
  %v88 = vld [vmem:[%s1] sm:$0xf]
  %v89 = vld [vmem:[%s1 + $0x4] sm:$0xf]
  %v90 = vld [vmem:[%s1 + $0x8] sm:$0xf]
  %v91 = vld [vmem:[%s1 + $0xc] sm:$0xf]
  %v92 = vld [vmem:[%s1 + $0x10] sm:$0xf]
  %v93 = vld [vmem:[%s1 + $0x14] sm:$0xf]
  %v94 = vld [vmem:[%s1 + $0x18] sm:$0xf]
  %v95 = vld [vmem:[%s1 + $0x1c] sm:$0xf]
  %v96 = vld [vmem:[%s1 + $0x20] sm:$0xf]
  %v97 = vld [vmem:[%s1 + $0x24] sm:$0xf]
  %v98 = vld [vmem:[%s1 + $0x28] sm:$0xf]
  %v99 = vld [vmem:[%s1 + $0x2c] sm:$0xf]
  %v100 = vld [vmem:[%s1 + $0x30] sm:$0xf]
  %v101 = vld [vmem:[%s1 + $0x34] sm:$0xf]
  %v102 = vld [vmem:[%s1 + $0x38] sm:$0xf]
  %v103 = vld [vmem:[%s1 + $0x3c] sm:$0xf]
  %v104 = vld [vmem:[%s1 + $0x40] sm:$0xf]
  %v105 = vld [vmem:[%s1 + $0x44] sm:$0xf]
  %v106 = vld [vmem:[%s1 + $0x48] sm:$0xf]
  %v107 = vld [vmem:[%s1 + $0x4c] sm:$0xf]
  %v108 = vld [vmem:[%s1 + $0x50] sm:$0xf]
  %v109 = vld [vmem:[%s1 + $0x54] sm:$0xf]
  %v110 = vld [vmem:[%s1 + $0x58] sm:$0xf]
  %v111 = vld [vmem:[%s1 + $0x5c] sm:$0xf]
  %v112 = vld [vmem:[%s1 + $0x60] sm:$0xf]
  %v113 = vld [vmem:[%s1 + $0x64] sm:$0xf]
  %v114 = vld [vmem:[%s1 + $0x68] sm:$0xf]
  %v115 = vld [vmem:[%s1 + $0x6c] sm:$0xf]
  %v116 = vld [vmem:[%s1 + $0x70] sm:$0xf]
  %v117 = vld [vmem:[%s1 + $0x74] sm:$0xf]
  %v118 = vld [vmem:[%s1 + $0x78] sm:$0xf]
  %v119 = vld [vmem:[%s1 + $0x7c] sm:$0xf]
  %v120 = vld [vmem:[%s2] sm:$0x1]
  %v122 = vlaneseq
  %v123 = vshrl.u32 %v122, 7
  %v124 = vsub.s32 0, %v123
  %v125 = vrot.slane %v120, %v124
  %v191 = vunpack.c.l.b16 %v24
  %v192 = vunpack.c.h.b16 %v24
  %v193 = vunpack.c.l.b16 %v25
  %v194 = vunpack.c.h.b16 %v25
  %v195 = vunpack.c.l.b16 %v26
  %v196 = vunpack.c.h.b16 %v26
  %v197 = vunpack.c.l.b16 %v27
  %v198 = vunpack.c.h.b16 %v27
  %v199 = vunpack.c.l.b16 %v28
  %v200 = vunpack.c.h.b16 %v28
  %v201 = vunpack.c.l.b16 %v29
  %v202 = vunpack.c.h.b16 %v29
  %v203 = vunpack.c.l.b16 %v30
  %v204 = vunpack.c.h.b16 %v30
  %v205 = vunpack.c.l.b16 %v31
  %v206 = vunpack.c.h.b16 %v31
  %v207 = vunpack.c.l.b16 %v32
  %v208 = vunpack.c.h.b16 %v32
  %v209 = vunpack.c.l.b16 %v33
  %v210 = vunpack.c.h.b16 %v33
  %v211 = vunpack.c.l.b16 %v34
  %v212 = vunpack.c.h.b16 %v34
  %v213 = vunpack.c.l.b16 %v35
  %v214 = vunpack.c.h.b16 %v35
  %v215 = vunpack.c.l.b16 %v36
  %v216 = vunpack.c.h.b16 %v36
  %v217 = vunpack.c.l.b16 %v37
  %v218 = vunpack.c.h.b16 %v37
  %v219 = vunpack.c.l.b16 %v38
  %v220 = vunpack.c.h.b16 %v38
  %v221 = vunpack.c.l.b16 %v39
  %v222 = vunpack.c.h.b16 %v39
  %v223 = vunpack.c.l.b16 %v40
  %v224 = vunpack.c.h.b16 %v40
  %v225 = vunpack.c.l.b16 %v41
  %v226 = vunpack.c.h.b16 %v41
  %v227 = vunpack.c.l.b16 %v42
  %v228 = vunpack.c.h.b16 %v42
  %v229 = vunpack.c.l.b16 %v43
  %v230 = vunpack.c.h.b16 %v43
  %v231 = vunpack.c.l.b16 %v44
  %v232 = vunpack.c.h.b16 %v44
  %v233 = vunpack.c.l.b16 %v45
  %v234 = vunpack.c.h.b16 %v45
  %v235 = vunpack.c.l.b16 %v46
  %v236 = vunpack.c.h.b16 %v46
  %v237 = vunpack.c.l.b16 %v47
  %v238 = vunpack.c.h.b16 %v47
  %v239 = vunpack.c.l.b16 %v48
  %v240 = vunpack.c.h.b16 %v48
  %v241 = vunpack.c.l.b16 %v49
  %v242 = vunpack.c.h.b16 %v49
  %v243 = vunpack.c.l.b16 %v50
  %v244 = vunpack.c.h.b16 %v50
  %v245 = vunpack.c.l.b16 %v51
  %v246 = vunpack.c.h.b16 %v51
  %v247 = vunpack.c.l.b16 %v52
  %v248 = vunpack.c.h.b16 %v52
  %v249 = vunpack.c.l.b16 %v53
  %v250 = vunpack.c.h.b16 %v53
  %v251 = vunpack.c.l.b16 %v54
  %v252 = vunpack.c.h.b16 %v54
  %v253 = vunpack.c.l.b16 %v55
  %v254 = vunpack.c.h.b16 %v55
  %v255 = vunpack.c.l.b16 %v56
  %v256 = vunpack.c.h.b16 %v56
  %v257 = vunpack.c.l.b16 %v57
  %v258 = vunpack.c.h.b16 %v57
  %v259 = vunpack.c.l.b16 %v58
  %v260 = vunpack.c.h.b16 %v58
  %v261 = vunpack.c.l.b16 %v59
  %v262 = vunpack.c.h.b16 %v59
  %v263 = vunpack.c.l.b16 %v60
  %v264 = vunpack.c.h.b16 %v60
  %v265 = vunpack.c.l.b16 %v61
  %v266 = vunpack.c.h.b16 %v61
  %v267 = vunpack.c.l.b16 %v62
  %v268 = vunpack.c.h.b16 %v62
  %v269 = vunpack.c.l.b16 %v63
  %v270 = vunpack.c.h.b16 %v63
  %v271 = vunpack.c.l.b16 %v64
  %v272 = vunpack.c.h.b16 %v64
  %v273 = vunpack.c.l.b16 %v65
  %v274 = vunpack.c.h.b16 %v65
  %v275 = vunpack.c.l.b16 %v66
  %v276 = vunpack.c.h.b16 %v66
  %v277 = vunpack.c.l.b16 %v67
  %v278 = vunpack.c.h.b16 %v67
  %v279 = vunpack.c.l.b16 %v68
  %v280 = vunpack.c.h.b16 %v68
  %v281 = vunpack.c.l.b16 %v69
  %v282 = vunpack.c.h.b16 %v69
  %v283 = vunpack.c.l.b16 %v70
  %v284 = vunpack.c.h.b16 %v70
  %v285 = vunpack.c.l.b16 %v71
  %v286 = vunpack.c.h.b16 %v71
  %v287 = vunpack.c.l.b16 %v72
  %v288 = vunpack.c.h.b16 %v72
  %v289 = vunpack.c.l.b16 %v73
  %v290 = vunpack.c.h.b16 %v73
  %v291 = vunpack.c.l.b16 %v74
  %v292 = vunpack.c.h.b16 %v74
  %v293 = vunpack.c.l.b16 %v75
  %v294 = vunpack.c.h.b16 %v75
  %v295 = vunpack.c.l.b16 %v76
  %v296 = vunpack.c.h.b16 %v76
  %v297 = vunpack.c.l.b16 %v77
  %v298 = vunpack.c.h.b16 %v77
  %v299 = vunpack.c.l.b16 %v78
  %v300 = vunpack.c.h.b16 %v78
  %v301 = vunpack.c.l.b16 %v79
  %v302 = vunpack.c.h.b16 %v79
  %v303 = vunpack.c.l.b16 %v80
  %v304 = vunpack.c.h.b16 %v80
  %v305 = vunpack.c.l.b16 %v81
  %v306 = vunpack.c.h.b16 %v81
  %v307 = vunpack.c.l.b16 %v82
  %v308 = vunpack.c.h.b16 %v82
  %v309 = vunpack.c.l.b16 %v83
  %v310 = vunpack.c.h.b16 %v83
  %v311 = vunpack.c.l.b16 %v84
  %v312 = vunpack.c.h.b16 %v84
  %v313 = vunpack.c.l.b16 %v85
  %v314 = vunpack.c.h.b16 %v85
  %v315 = vunpack.c.l.b16 %v86
  %v316 = vunpack.c.h.b16 %v86
  %v317 = vunpack.c.l.b16 %v87
  %v318 = vunpack.c.h.b16 %v87
  %v319 = vpack.c.b16 %v193, %v191
  %v320 = vpack.c.b16 %v194, %v192
  %v321 = vpack.c.b16 %v197, %v195
  %v322 = vpack.c.b16 %v198, %v196
  %v323 = vpack.c.b16 %v201, %v199
  %v324 = vpack.c.b16 %v202, %v200
  %v325 = vpack.c.b16 %v205, %v203
  %v326 = vpack.c.b16 %v206, %v204
  %v327 = vpack.c.b16 %v209, %v207
  %v328 = vpack.c.b16 %v210, %v208
  %v329 = vpack.c.b16 %v213, %v211
  %v330 = vpack.c.b16 %v214, %v212
  %v331 = vpack.c.b16 %v217, %v215
  %v332 = vpack.c.b16 %v218, %v216
  %v333 = vpack.c.b16 %v221, %v219
  %v334 = vpack.c.b16 %v222, %v220
  %v335 = vpack.c.b16 %v225, %v223
  %v336 = vpack.c.b16 %v226, %v224
  %v337 = vpack.c.b16 %v229, %v227
  %v338 = vpack.c.b16 %v230, %v228
  %v339 = vpack.c.b16 %v233, %v231
  %v340 = vpack.c.b16 %v234, %v232
  %v341 = vpack.c.b16 %v237, %v235
  %v342 = vpack.c.b16 %v238, %v236
  %v343 = vpack.c.b16 %v241, %v239
  %v344 = vpack.c.b16 %v242, %v240
  %v345 = vpack.c.b16 %v245, %v243
  %v346 = vpack.c.b16 %v246, %v244
  %v347 = vpack.c.b16 %v249, %v247
  %v348 = vpack.c.b16 %v250, %v248
  %v349 = vpack.c.b16 %v253, %v251
  %v350 = vpack.c.b16 %v254, %v252
  %v351 = vpack.c.b16 %v257, %v255
  %v352 = vpack.c.b16 %v258, %v256
  %v353 = vpack.c.b16 %v261, %v259
  %v354 = vpack.c.b16 %v262, %v260
  %v355 = vpack.c.b16 %v265, %v263
  %v356 = vpack.c.b16 %v266, %v264
  %v357 = vpack.c.b16 %v269, %v267
  %v358 = vpack.c.b16 %v270, %v268
  %v359 = vpack.c.b16 %v273, %v271
  %v360 = vpack.c.b16 %v274, %v272
  %v361 = vpack.c.b16 %v277, %v275
  %v362 = vpack.c.b16 %v278, %v276
  %v363 = vpack.c.b16 %v281, %v279
  %v364 = vpack.c.b16 %v282, %v280
  %v365 = vpack.c.b16 %v285, %v283
  %v366 = vpack.c.b16 %v286, %v284
  %v367 = vpack.c.b16 %v289, %v287
  %v368 = vpack.c.b16 %v290, %v288
  %v369 = vpack.c.b16 %v293, %v291
  %v370 = vpack.c.b16 %v294, %v292
  %v371 = vpack.c.b16 %v297, %v295
  %v372 = vpack.c.b16 %v298, %v296
  %v373 = vpack.c.b16 %v301, %v299
  %v374 = vpack.c.b16 %v302, %v300
  %v375 = vpack.c.b16 %v305, %v303
  %v376 = vpack.c.b16 %v306, %v304
  %v377 = vpack.c.b16 %v309, %v307
  %v378 = vpack.c.b16 %v310, %v308
  %v379 = vpack.c.b16 %v313, %v311
  %v380 = vpack.c.b16 %v314, %v312
  %v381 = vpack.c.b16 %v317, %v315
  %v382 = vpack.c.b16 %v318, %v316
  %v479 = vunpack.c.l.b16 %v88
  %v480 = vunpack.c.l.b16 %v89
  %v481 = vunpack.c.l.b16 %v90
  %v482 = vunpack.c.l.b16 %v91
  %v483 = vunpack.c.l.b16 %v92
  %v484 = vunpack.c.l.b16 %v93
  %v485 = vunpack.c.l.b16 %v94
  %v486 = vunpack.c.l.b16 %v95
  %v487 = vunpack.c.l.b16 %v96
  %v488 = vunpack.c.l.b16 %v97
  %v489 = vunpack.c.l.b16 %v98
  %v490 = vunpack.c.l.b16 %v99
  %v491 = vunpack.c.l.b16 %v100
  %v492 = vunpack.c.l.b16 %v101
  %v493 = vunpack.c.l.b16 %v102
  %v494 = vunpack.c.l.b16 %v103
  %v495 = vunpack.c.l.b16 %v104
  %v496 = vunpack.c.l.b16 %v105
  %v497 = vunpack.c.l.b16 %v106
  %v498 = vunpack.c.l.b16 %v107
  %v499 = vunpack.c.l.b16 %v108
  %v500 = vunpack.c.l.b16 %v109
  %v501 = vunpack.c.l.b16 %v110
  %v502 = vunpack.c.l.b16 %v111
  %v503 = vunpack.c.l.b16 %v112
  %v504 = vunpack.c.l.b16 %v113
  %v505 = vunpack.c.l.b16 %v114
  %v506 = vunpack.c.l.b16 %v115
  %v507 = vunpack.c.l.b16 %v116
  %v508 = vunpack.c.l.b16 %v117
  %v509 = vunpack.c.l.b16 %v118
  %v510 = vunpack.c.l.b16 %v119
  %v511 = vpack.c.b16 %v480, %v479
  %v512 = vpack.c.b16 %v482, %v481
  %v513 = vpack.c.b16 %v484, %v483
  %v514 = vpack.c.b16 %v486, %v485
  %v515 = vpack.c.b16 %v488, %v487
  %v516 = vpack.c.b16 %v490, %v489
  %v517 = vpack.c.b16 %v492, %v491
  %v518 = vpack.c.b16 %v494, %v493
  %v519 = vpack.c.b16 %v496, %v495
  %v520 = vpack.c.b16 %v498, %v497
  %v521 = vpack.c.b16 %v500, %v499
  %v522 = vpack.c.b16 %v502, %v501
  %v523 = vpack.c.b16 %v504, %v503
  %v524 = vpack.c.b16 %v506, %v505
  %v525 = vpack.c.b16 %v508, %v507
  %v526 = vpack.c.b16 %v510, %v509
  %543 = vmatprep.subr.bf16.mxu0 0
  %544 = vmatpush1.bf16.msra.mxu0 %v518
  %545 = vmatprep.subr.bf16.mxu0 0
  %546 = vmatpush1.bf16.msra.mxu0 %v517
  %547 = vmatprep.subr.bf16.mxu0 0
  %548 = vmatpush1.bf16.msra.mxu0 %v516
  %549 = vmatprep.subr.bf16.mxu0 0
  %550 = vmatpush1.bf16.msra.mxu0 %v515
  %551 = vmatprep.subr.bf16.mxu0 0
  %552 = vmatpush1.bf16.msra.mxu0 %v514
  %553 = vmatprep.subr.bf16.mxu0 0
  %554 = vmatpush1.bf16.msra.mxu0 %v513
  %555 = vmatprep.subr.bf16.mxu0 0
  %556 = vmatpush1.bf16.msra.mxu0 %v512
  %557 = vmatprep.subr.bf16.mxu0 0
  %558 = vmatpush1.bf16.msra.mxu0 %v511
  %559 = vmatprep.subr.bf16.mxu0 0
  %560 = vmatpush2.bf16.msra.mxu0 %v526
  %561 = vmatprep.subr.bf16.mxu0 0
  %562 = vmatpush2.bf16.msra.mxu0 %v525
  %563 = vmatprep.subr.bf16.mxu0 0
  %564 = vmatpush2.bf16.msra.mxu0 %v524
  %565 = vmatprep.subr.bf16.mxu0 0
  %566 = vmatpush2.bf16.msra.mxu0 %v523
  %567 = vmatprep.subr.bf16.mxu0 0
  %568 = vmatpush2.bf16.msra.mxu0 %v522
  %569 = vmatprep.subr.bf16.mxu0 0
  %570 = vmatpush2.bf16.msra.mxu0 %v521
  %571 = vmatprep.subr.bf16.mxu0 0
  %572 = vmatpush2.bf16.msra.mxu0 %v520
  %573 = vmatprep.subr.bf16.mxu0 0
  %574 = vmatpush2.bf16.msra.mxu0 %v519
  %575 = vmatprep.mubr.bf16.mxu0 %v320
  %576 = vmatmul.mubr.bf16.gmra.mxu0 %v319
  %v577 = vpop.f32.mrf.mxu0
  %v578 = vadd.f32 %v125, %v577
  %v579 = vpop.f32.mrf.mxu0
  %v580 = vpop.f32.mrf.mxu0
  %v581 = vadd.f32 %v125, %v580
  %v582 = vpop.f32.mrf.mxu0
  %583 = vmatprep.mubr.bf16.mxu0 %v322
  %584 = vmatmul.mubr.bf16.gmra.mxu0 %v321
  %v585 = vpop.f32.mrf.mxu0
  %v586 = vadd.f32 %v125, %v585
  %v587 = vpop.f32.mrf.mxu0
  %v588 = vpop.f32.mrf.mxu0
  %v589 = vadd.f32 %v125, %v588
  %v590 = vpop.f32.mrf.mxu0
  %591 = vmatprep.mubr.bf16.mxu0 %v324
  %592 = vmatmul.mubr.bf16.gmra.mxu0 %v323
  %v593 = vpop.f32.mrf.mxu0
  %v594 = vadd.f32 %v125, %v593
  %v595 = vpop.f32.mrf.mxu0
  %v596 = vpop.f32.mrf.mxu0
  %v597 = vadd.f32 %v125, %v596
  %v598 = vpop.f32.mrf.mxu0
  %599 = vmatprep.mubr.bf16.mxu0 %v326
  %600 = vmatmul.mubr.bf16.gmra.mxu0 %v325
  %v601 = vpop.f32.mrf.mxu0
  %v602 = vadd.f32 %v125, %v601
  %v603 = vpop.f32.mrf.mxu0
  %v604 = vpop.f32.mrf.mxu0
  %v605 = vadd.f32 %v125, %v604
  %v606 = vpop.f32.mrf.mxu0
  %607 = vmatprep.mubr.bf16.mxu0 %v328
  %608 = vmatmul.mubr.bf16.gmra.mxu0 %v327
  %v609 = vpop.f32.mrf.mxu0
  %v610 = vadd.f32 %v125, %v609
  %v611 = vpop.f32.mrf.mxu0
  %v612 = vpop.f32.mrf.mxu0
  %v613 = vadd.f32 %v125, %v612
  %v614 = vpop.f32.mrf.mxu0
  %615 = vmatprep.mubr.bf16.mxu0 %v330
  %616 = vmatmul.mubr.bf16.gmra.mxu0 %v329
  %v617 = vpop.f32.mrf.mxu0
  %v618 = vadd.f32 %v125, %v617
  %v619 = vpop.f32.mrf.mxu0
  %v620 = vpop.f32.mrf.mxu0
  %v621 = vadd.f32 %v125, %v620
  %v622 = vpop.f32.mrf.mxu0
  %623 = vmatprep.mubr.bf16.mxu0 %v332
  %624 = vmatmul.mubr.bf16.gmra.mxu0 %v331
  %v625 = vpop.f32.mrf.mxu0
  %v626 = vadd.f32 %v125, %v625
  %v627 = vpop.f32.mrf.mxu0
  %v628 = vpop.f32.mrf.mxu0
  %v629 = vadd.f32 %v125, %v628
  %v630 = vpop.f32.mrf.mxu0
  %631 = vmatprep.mubr.bf16.mxu0 %v334
  %632 = vmatmul.mubr.bf16.gmra.mxu0 %v333
  %v633 = vpop.f32.mrf.mxu0
  %v634 = vadd.f32 %v125, %v633
  %v635 = vpop.f32.mrf.mxu0
  %v636 = vpop.f32.mrf.mxu0
  %v637 = vadd.f32 %v125, %v636
  %v638 = vpop.f32.mrf.mxu0
  %639 = vmatprep.mubr.bf16.mxu0 %v336
  %640 = vmatmul.mubr.bf16.gmra.mxu0 %v335
  %v641 = vpop.f32.mrf.mxu0
  %v642 = vadd.f32 %v125, %v641
  %v643 = vpop.f32.mrf.mxu0
  %v644 = vpop.f32.mrf.mxu0
  %v645 = vadd.f32 %v125, %v644
  %v646 = vpop.f32.mrf.mxu0
  %647 = vmatprep.mubr.bf16.mxu0 %v338
  %648 = vmatmul.mubr.bf16.gmra.mxu0 %v337
  %v649 = vpop.f32.mrf.mxu0
  %v650 = vadd.f32 %v125, %v649
  %v651 = vpop.f32.mrf.mxu0
  %v652 = vpop.f32.mrf.mxu0
  %v653 = vadd.f32 %v125, %v652
  %v654 = vpop.f32.mrf.mxu0
  %655 = vmatprep.mubr.bf16.mxu0 %v340
  %656 = vmatmul.mubr.bf16.gmra.mxu0 %v339
  %v657 = vpop.f32.mrf.mxu0
  %v658 = vadd.f32 %v125, %v657
  %v659 = vpop.f32.mrf.mxu0
  %v660 = vpop.f32.mrf.mxu0
  %v661 = vadd.f32 %v125, %v660
  %v662 = vpop.f32.mrf.mxu0
  %663 = vmatprep.mubr.bf16.mxu0 %v342
  %664 = vmatmul.mubr.bf16.gmra.mxu0 %v341
  %v665 = vpop.f32.mrf.mxu0
  %v666 = vadd.f32 %v125, %v665
  %v667 = vpop.f32.mrf.mxu0
  %v668 = vpop.f32.mrf.mxu0
  %v669 = vadd.f32 %v125, %v668
  %v670 = vpop.f32.mrf.mxu0
  %671 = vmatprep.mubr.bf16.mxu0 %v344
  %672 = vmatmul.mubr.bf16.gmra.mxu0 %v343
  %v673 = vpop.f32.mrf.mxu0
  %v674 = vadd.f32 %v125, %v673
  %v675 = vpop.f32.mrf.mxu0
  %v676 = vpop.f32.mrf.mxu0
  %v677 = vadd.f32 %v125, %v676
  %v678 = vpop.f32.mrf.mxu0
  %679 = vmatprep.mubr.bf16.mxu0 %v346
  %680 = vmatmul.mubr.bf16.gmra.mxu0 %v345
  %v681 = vpop.f32.mrf.mxu0
  %v682 = vadd.f32 %v125, %v681
  %v683 = vpop.f32.mrf.mxu0
  %v684 = vpop.f32.mrf.mxu0
  %v685 = vadd.f32 %v125, %v684
  %v686 = vpop.f32.mrf.mxu0
  %687 = vmatprep.mubr.bf16.mxu0 %v348
  %688 = vmatmul.mubr.bf16.gmra.mxu0 %v347
  %v689 = vpop.f32.mrf.mxu0
  %v690 = vadd.f32 %v125, %v689
  %v691 = vpop.f32.mrf.mxu0
  %v692 = vpop.f32.mrf.mxu0
  %v693 = vadd.f32 %v125, %v692
  %v694 = vpop.f32.mrf.mxu0
  %695 = vmatprep.mubr.bf16.mxu0 %v350
  %696 = vmatmul.mubr.bf16.gmra.mxu0 %v349
  %v697 = vpop.f32.mrf.mxu0
  %v698 = vadd.f32 %v125, %v697
  %v699 = vpop.f32.mrf.mxu0
  %v700 = vpop.f32.mrf.mxu0
  %v701 = vadd.f32 %v125, %v700
  %v702 = vpop.f32.mrf.mxu0
  %703 = vmatprep.mubr.bf16.mxu0 %v352
  %704 = vmatmul.mubr.bf16.gmra.mxu0 %v351
  %v705 = vpop.f32.mrf.mxu0
  %v706 = vadd.f32 %v125, %v705
  %v707 = vpop.f32.mrf.mxu0
  %v708 = vpop.f32.mrf.mxu0
  %v709 = vadd.f32 %v125, %v708
  %v710 = vpop.f32.mrf.mxu0
  %711 = vmatprep.mubr.bf16.mxu0 %v354
  %712 = vmatmul.mubr.bf16.gmra.mxu0 %v353
  %v713 = vpop.f32.mrf.mxu0
  %v714 = vadd.f32 %v125, %v713
  %v715 = vpop.f32.mrf.mxu0
  %v716 = vpop.f32.mrf.mxu0
  %v717 = vadd.f32 %v125, %v716
  %v718 = vpop.f32.mrf.mxu0
  %719 = vmatprep.mubr.bf16.mxu0 %v356
  %720 = vmatmul.mubr.bf16.gmra.mxu0 %v355
  %v721 = vpop.f32.mrf.mxu0
  %v722 = vadd.f32 %v125, %v721
  %v723 = vpop.f32.mrf.mxu0
  %v724 = vpop.f32.mrf.mxu0
  %v725 = vadd.f32 %v125, %v724
  %v726 = vpop.f32.mrf.mxu0
  %727 = vmatprep.mubr.bf16.mxu0 %v358
  %728 = vmatmul.mubr.bf16.gmra.mxu0 %v357
  %v729 = vpop.f32.mrf.mxu0
  %v730 = vadd.f32 %v125, %v729
  %v731 = vpop.f32.mrf.mxu0
  %v732 = vpop.f32.mrf.mxu0
  %v733 = vadd.f32 %v125, %v732
  %v734 = vpop.f32.mrf.mxu0
  %735 = vmatprep.mubr.bf16.mxu0 %v360
  %736 = vmatmul.mubr.bf16.gmra.mxu0 %v359
  %v737 = vpop.f32.mrf.mxu0
  %v738 = vadd.f32 %v125, %v737
  %v739 = vpop.f32.mrf.mxu0
  %v740 = vpop.f32.mrf.mxu0
  %v741 = vadd.f32 %v125, %v740
  %v742 = vpop.f32.mrf.mxu0
  %743 = vmatprep.mubr.bf16.mxu0 %v362
  %744 = vmatmul.mubr.bf16.gmra.mxu0 %v361
  %v745 = vpop.f32.mrf.mxu0
  %v746 = vadd.f32 %v125, %v745
  %v747 = vpop.f32.mrf.mxu0
  %v748 = vpop.f32.mrf.mxu0
  %v749 = vadd.f32 %v125, %v748
  %v750 = vpop.f32.mrf.mxu0
  %751 = vmatprep.mubr.bf16.mxu0 %v364
  %752 = vmatmul.mubr.bf16.gmra.mxu0 %v363
  %v753 = vpop.f32.mrf.mxu0
  %v754 = vadd.f32 %v125, %v753
  %v755 = vpop.f32.mrf.mxu0
  %v756 = vpop.f32.mrf.mxu0
  %v757 = vadd.f32 %v125, %v756
  %v758 = vpop.f32.mrf.mxu0
  %759 = vmatprep.mubr.bf16.mxu0 %v366
  %760 = vmatmul.mubr.bf16.gmra.mxu0 %v365
  %v761 = vpop.f32.mrf.mxu0
  %v762 = vadd.f32 %v125, %v761
  %v763 = vpop.f32.mrf.mxu0
  %v764 = vpop.f32.mrf.mxu0
  %v765 = vadd.f32 %v125, %v764
  %v766 = vpop.f32.mrf.mxu0
  %767 = vmatprep.mubr.bf16.mxu0 %v368
  %768 = vmatmul.mubr.bf16.gmra.mxu0 %v367
  %v769 = vpop.f32.mrf.mxu0
  %v770 = vadd.f32 %v125, %v769
  %v771 = vpop.f32.mrf.mxu0
  %v772 = vpop.f32.mrf.mxu0
  %v773 = vadd.f32 %v125, %v772
  %v774 = vpop.f32.mrf.mxu0
  %775 = vmatprep.mubr.bf16.mxu0 %v370
  %776 = vmatmul.mubr.bf16.gmra.mxu0 %v369
  %v777 = vpop.f32.mrf.mxu0
  %v778 = vadd.f32 %v125, %v777
  %v779 = vpop.f32.mrf.mxu0
  %v780 = vpop.f32.mrf.mxu0
  %v781 = vadd.f32 %v125, %v780
  %v782 = vpop.f32.mrf.mxu0
  %783 = vmatprep.mubr.bf16.mxu0 %v372
  %784 = vmatmul.mubr.bf16.gmra.mxu0 %v371
  %v785 = vpop.f32.mrf.mxu0
  %v786 = vadd.f32 %v125, %v785
  %v787 = vpop.f32.mrf.mxu0
  %v788 = vpop.f32.mrf.mxu0
  %v789 = vadd.f32 %v125, %v788
  %v790 = vpop.f32.mrf.mxu0
  %791 = vmatprep.mubr.bf16.mxu0 %v374
  %792 = vmatmul.mubr.bf16.gmra.mxu0 %v373
  %v793 = vpop.f32.mrf.mxu0
  %v794 = vadd.f32 %v125, %v793
  %v795 = vpop.f32.mrf.mxu0
  %v796 = vpop.f32.mrf.mxu0
  %v797 = vadd.f32 %v125, %v796
  %v798 = vpop.f32.mrf.mxu0
  %799 = vmatprep.mubr.bf16.mxu0 %v376
  %800 = vmatmul.mubr.bf16.gmra.mxu0 %v375
  %v801 = vpop.f32.mrf.mxu0
  %v802 = vadd.f32 %v125, %v801
  %v803 = vpop.f32.mrf.mxu0
  %v804 = vpop.f32.mrf.mxu0
  %v805 = vadd.f32 %v125, %v804
  %v806 = vpop.f32.mrf.mxu0
  %807 = vmatprep.mubr.bf16.mxu0 %v378
  %808 = vmatmul.mubr.bf16.gmra.mxu0 %v377
  %v809 = vpop.f32.mrf.mxu0
  %v810 = vadd.f32 %v125, %v809
  %v811 = vpop.f32.mrf.mxu0
  %v812 = vpop.f32.mrf.mxu0
  %v813 = vadd.f32 %v125, %v812
  %v814 = vpop.f32.mrf.mxu0
  %815 = vmatprep.mubr.bf16.mxu0 %v380
  %816 = vmatmul.mubr.bf16.gmra.mxu0 %v379
  %v817 = vpop.f32.mrf.mxu0
  %v818 = vadd.f32 %v125, %v817
  %v819 = vpop.f32.mrf.mxu0
  %v820 = vpop.f32.mrf.mxu0
  %v821 = vadd.f32 %v125, %v820
  %v822 = vpop.f32.mrf.mxu0
  %823 = vmatprep.mubr.bf16.mxu0 %v382
  %824 = vmatmul.mubr.bf16.gmra.mxu0 %v381
  %v825 = vpop.f32.mrf.mxu0
  %v826 = vadd.f32 %v125, %v825
  %v827 = vpop.f32.mrf.mxu0
  %v828 = vpop.f32.mrf.mxu0
  %v829 = vadd.f32 %v125, %v828
  %v830 = vpop.f32.mrf.mxu0
  %831 = vdwg.mxu0
  %v832 = vadd.f32 %v578, %v581
  %v833 = vadd.f32 %v832, %v586
  %v834 = vadd.f32 %v833, %v589
  %v835 = vadd.f32 %v834, %v594
  %v836 = vadd.f32 %v835, %v597
  %v837 = vadd.f32 %v836, %v602
  %v838 = vadd.f32 %v837, %v605
  %v839 = vadd.f32 %v838, %v610
  %v840 = vadd.f32 %v839, %v613
  %v841 = vadd.f32 %v840, %v618
  %v842 = vadd.f32 %v841, %v621
  %v843 = vadd.f32 %v842, %v626
  %v844 = vadd.f32 %v843, %v629
  %v845 = vadd.f32 %v844, %v634
  %v846 = vadd.f32 %v845, %v637
  %v847 = vadd.f32 %v846, %v642
  %v848 = vadd.f32 %v847, %v645
  %v849 = vadd.f32 %v848, %v650
  %v850 = vadd.f32 %v849, %v653
  %v851 = vadd.f32 %v850, %v658
  %v852 = vadd.f32 %v851, %v661
  %v853 = vadd.f32 %v852, %v666
  %v854 = vadd.f32 %v853, %v669
  %v855 = vadd.f32 %v854, %v674
  %v856 = vadd.f32 %v855, %v677
  %v857 = vadd.f32 %v856, %v682
  %v858 = vadd.f32 %v857, %v685
  %v859 = vadd.f32 %v858, %v690
  %v860 = vadd.f32 %v859, %v693
  %v861 = vadd.f32 %v860, %v698
  %v862 = vadd.f32 %v861, %v701
  %v863 = vadd.f32 %v862, %v706
  %v864 = vadd.f32 %v863, %v709
  %v865 = vadd.f32 %v864, %v714
  %v866 = vadd.f32 %v865, %v717
  %v867 = vadd.f32 %v866, %v722
  %v868 = vadd.f32 %v867, %v725
  %v869 = vadd.f32 %v868, %v730
  %v870 = vadd.f32 %v869, %v733
  %v871 = vadd.f32 %v870, %v738
  %v872 = vadd.f32 %v871, %v741
  %v873 = vadd.f32 %v872, %v746
  %v874 = vadd.f32 %v873, %v749
  %v875 = vadd.f32 %v874, %v754
  %v876 = vadd.f32 %v875, %v757
  %v877 = vadd.f32 %v876, %v762
  %v878 = vadd.f32 %v877, %v765
  %v879 = vadd.f32 %v878, %v770
  %v880 = vadd.f32 %v879, %v773
  %v881 = vadd.f32 %v880, %v778
  %v882 = vadd.f32 %v881, %v781
  %v883 = vadd.f32 %v882, %v786
  %v884 = vadd.f32 %v883, %v789
  %v885 = vadd.f32 %v884, %v794
  %v886 = vadd.f32 %v885, %v797
  %v887 = vadd.f32 %v886, %v802
  %v888 = vadd.f32 %v887, %v805
  %v889 = vadd.f32 %v888, %v810
  %v890 = vadd.f32 %v889, %v813
  %v891 = vadd.f32 %v890, %v818
  %v892 = vadd.f32 %v891, %v821
  %v893 = vadd.f32 %v892, %v826
  %v894 = vadd.f32 %v893, %v829
  %v895 = vrot.slane %v894, 4
  %v896 = vadd.f32 %v894, %v895
  %v897 = vrot.slane %v896, 2
  %v898 = vadd.f32 %v896, %v897
  %v899 = vrot.slane %v898, 1
  %v900 = vadd.f32 %v898, %v899
  %v901 = vmul.f32 %v900, 0.001953125
  %v902 = vmul.f32 %v578, %v578
  %v903 = vmul.f32 %v581, %v581
  %v904 = vmul.f32 %v586, %v586
  %v905 = vmul.f32 %v589, %v589
  %v906 = vmul.f32 %v594, %v594
  %v907 = vmul.f32 %v597, %v597
  %v908 = vmul.f32 %v602, %v602
  %v909 = vmul.f32 %v605, %v605
  %v910 = vmul.f32 %v610, %v610
  %v911 = vmul.f32 %v613, %v613
  %v912 = vmul.f32 %v618, %v618
  %v913 = vmul.f32 %v621, %v621
  %v914 = vmul.f32 %v626, %v626
  %v915 = vmul.f32 %v629, %v629
  %v916 = vmul.f32 %v634, %v634
  %v917 = vmul.f32 %v637, %v637
  %v918 = vmul.f32 %v642, %v642
  %v919 = vmul.f32 %v645, %v645
  %v920 = vmul.f32 %v650, %v650
  %v921 = vmul.f32 %v653, %v653
  %v922 = vmul.f32 %v658, %v658
  %v923 = vmul.f32 %v661, %v661
  %v924 = vmul.f32 %v666, %v666
  %v925 = vmul.f32 %v669, %v669
  %v926 = vmul.f32 %v674, %v674
  %v927 = vmul.f32 %v677, %v677
  %v928 = vmul.f32 %v682, %v682
  %v929 = vmul.f32 %v685, %v685
  %v930 = vmul.f32 %v690, %v690
  %v931 = vmul.f32 %v693, %v693
  %v932 = vmul.f32 %v698, %v698
  %v933 = vmul.f32 %v701, %v701
  %v934 = vmul.f32 %v706, %v706
  %v935 = vmul.f32 %v709, %v709
  %v936 = vmul.f32 %v714, %v714
  %v937 = vmul.f32 %v717, %v717
  %v938 = vmul.f32 %v722, %v722
  %v939 = vmul.f32 %v725, %v725
  %v940 = vmul.f32 %v730, %v730
  %v941 = vmul.f32 %v733, %v733
  %v942 = vmul.f32 %v738, %v738
  %v943 = vmul.f32 %v741, %v741
  %v944 = vmul.f32 %v746, %v746
  %v945 = vmul.f32 %v749, %v749
  %v946 = vmul.f32 %v754, %v754
  %v947 = vmul.f32 %v757, %v757
  %v948 = vmul.f32 %v762, %v762
  %v949 = vmul.f32 %v765, %v765
  %v950 = vmul.f32 %v770, %v770
  %v951 = vmul.f32 %v773, %v773
  %v952 = vmul.f32 %v778, %v778
  %v953 = vmul.f32 %v781, %v781
  %v954 = vmul.f32 %v786, %v786
  %v955 = vmul.f32 %v789, %v789
  %v956 = vmul.f32 %v794, %v794
  %v957 = vmul.f32 %v797, %v797
  %v958 = vmul.f32 %v802, %v802
  %v959 = vmul.f32 %v805, %v805
  %v960 = vmul.f32 %v810, %v810
  %v961 = vmul.f32 %v813, %v813
  %v962 = vmul.f32 %v818, %v818
  %v963 = vmul.f32 %v821, %v821
  %v964 = vmul.f32 %v826, %v826
  %v965 = vmul.f32 %v829, %v829
  %v966 = vadd.f32 %v902, %v903
  %v967 = vadd.f32 %v966, %v904
  %v968 = vadd.f32 %v967, %v905
  %v969 = vadd.f32 %v968, %v906
  %v970 = vadd.f32 %v969, %v907
  %v971 = vadd.f32 %v970, %v908
  %v972 = vadd.f32 %v971, %v909
  %v973 = vadd.f32 %v972, %v910
  %v974 = vadd.f32 %v973, %v911
  %v975 = vadd.f32 %v974, %v912
  %v976 = vadd.f32 %v975, %v913
  %v977 = vadd.f32 %v976, %v914
  %v978 = vadd.f32 %v977, %v915
  %v979 = vadd.f32 %v978, %v916
  %v980 = vadd.f32 %v979, %v917
  %v981 = vadd.f32 %v980, %v918
  %v982 = vadd.f32 %v981, %v919
  %v983 = vadd.f32 %v982, %v920
  %v984 = vadd.f32 %v983, %v921
  %v985 = vadd.f32 %v984, %v922
  %v986 = vadd.f32 %v985, %v923
  %v987 = vadd.f32 %v986, %v924
  %v988 = vadd.f32 %v987, %v925
  %v989 = vadd.f32 %v988, %v926
  %v990 = vadd.f32 %v989, %v927
  %v991 = vadd.f32 %v990, %v928
  %v992 = vadd.f32 %v991, %v929
  %v993 = vadd.f32 %v992, %v930
  %v994 = vadd.f32 %v993, %v931
  %v995 = vadd.f32 %v994, %v932
  %v996 = vadd.f32 %v995, %v933
  %v997 = vadd.f32 %v996, %v934
  %v998 = vadd.f32 %v997, %v935
  %v999 = vadd.f32 %v998, %v936
  %v1000 = vadd.f32 %v999, %v937
  %v1001 = vadd.f32 %v1000, %v938
  %v1002 = vadd.f32 %v1001, %v939
  %v1003 = vadd.f32 %v1002, %v940
  %v1004 = vadd.f32 %v1003, %v941
  %v1005 = vadd.f32 %v1004, %v942
  %v1006 = vadd.f32 %v1005, %v943
  %v1007 = vadd.f32 %v1006, %v944
  %v1008 = vadd.f32 %v1007, %v945
  %v1009 = vadd.f32 %v1008, %v946
  %v1010 = vadd.f32 %v1009, %v947
  %v1011 = vadd.f32 %v1010, %v948
  %v1012 = vadd.f32 %v1011, %v949
  %v1013 = vadd.f32 %v1012, %v950
  %v1014 = vadd.f32 %v1013, %v951
  %v1015 = vadd.f32 %v1014, %v952
  %v1016 = vadd.f32 %v1015, %v953
  %v1017 = vadd.f32 %v1016, %v954
  %v1018 = vadd.f32 %v1017, %v955
  %v1019 = vadd.f32 %v1018, %v956
  %v1020 = vadd.f32 %v1019, %v957
  %v1021 = vadd.f32 %v1020, %v958
  %v1022 = vadd.f32 %v1021, %v959
  %v1023 = vadd.f32 %v1022, %v960
  %v1024 = vadd.f32 %v1023, %v961
  %v1025 = vadd.f32 %v1024, %v962
  %v1026 = vadd.f32 %v1025, %v963
  %v1027 = vadd.f32 %v1026, %v964
  %v1028 = vadd.f32 %v1027, %v965
  %v1029 = vrot.slane %v1028, 4
  %v1030 = vadd.f32 %v1028, %v1029
  %v1031 = vrot.slane %v1030, 2
  %v1032 = vadd.f32 %v1030, %v1031
  %v1033 = vrot.slane %v1032, 1
  %v1034 = vadd.f32 %v1032, %v1033
  %v1035 = vmul.f32 %v1034, 0.001953125
  %v1036 = vmul.f32 %v901, %v901
  %v1037 = vsub.f32 %v1035, %v1036
  %v1038 = vmax.f32 %v1037, 0.0
  %v1039 = vld [vmem:[%s3] sm:$0x1]
  %v1040 = vadd.f32 %v1038, 1e-05
  %v1041 = vrsqrt.pop %v1040
  %v1042 = vmul.f32 %v1039, %v1041
  %v1043 = vld [vmem:[%s4] sm:$0x1]
  %v1044 = vmul.f32 %v901, %v1042
  %v1045 = vsub.f32 %v1043, %v1044
  %v1047 = vlaneseq
  %v1048 = vshrl.u32 %v1047, 7
  %v1049 = vsub.s32 0, %v1048
  %v1050 = vrot.slane %v1042, %v1049
  %v1052 = vmul.f32 %v578, %v1050
  %v1053 = vmul.f32 %v581, %v1050
  %v1054 = vmul.f32 %v586, %v1050
  %v1055 = vmul.f32 %v589, %v1050
  %v1056 = vmul.f32 %v594, %v1050
  %v1057 = vmul.f32 %v597, %v1050
  %v1058 = vmul.f32 %v602, %v1050
  %v1059 = vmul.f32 %v605, %v1050
  %v1060 = vmul.f32 %v610, %v1050
  %v1061 = vmul.f32 %v613, %v1050
  %v1062 = vmul.f32 %v618, %v1050
  %v1063 = vmul.f32 %v621, %v1050
  %v1064 = vmul.f32 %v626, %v1050
  %v1065 = vmul.f32 %v629, %v1050
  %v1066 = vmul.f32 %v634, %v1050
  %v1067 = vmul.f32 %v637, %v1050
  %v1068 = vmul.f32 %v642, %v1050
  %v1069 = vmul.f32 %v645, %v1050
  %v1070 = vmul.f32 %v650, %v1050
  %v1071 = vmul.f32 %v653, %v1050
  %v1072 = vmul.f32 %v658, %v1050
  %v1073 = vmul.f32 %v661, %v1050
  %v1074 = vmul.f32 %v666, %v1050
  %v1075 = vmul.f32 %v669, %v1050
  %v1076 = vmul.f32 %v674, %v1050
  %v1077 = vmul.f32 %v677, %v1050
  %v1078 = vmul.f32 %v682, %v1050
  %v1079 = vmul.f32 %v685, %v1050
  %v1080 = vmul.f32 %v690, %v1050
  %v1081 = vmul.f32 %v693, %v1050
  %v1082 = vmul.f32 %v698, %v1050
  %v1083 = vmul.f32 %v701, %v1050
  %v1084 = vmul.f32 %v706, %v1050
  %v1085 = vmul.f32 %v709, %v1050
  %v1086 = vmul.f32 %v714, %v1050
  %v1087 = vmul.f32 %v717, %v1050
  %v1088 = vmul.f32 %v722, %v1050
  %v1089 = vmul.f32 %v725, %v1050
  %v1090 = vmul.f32 %v730, %v1050
  %v1091 = vmul.f32 %v733, %v1050
  %v1092 = vmul.f32 %v738, %v1050
  %v1093 = vmul.f32 %v741, %v1050
  %v1094 = vmul.f32 %v746, %v1050
  %v1095 = vmul.f32 %v749, %v1050
  %v1096 = vmul.f32 %v754, %v1050
  %v1097 = vmul.f32 %v757, %v1050
  %v1098 = vmul.f32 %v762, %v1050
  %v1099 = vmul.f32 %v765, %v1050
  %v1100 = vmul.f32 %v770, %v1050
  %v1101 = vmul.f32 %v773, %v1050
  %v1102 = vmul.f32 %v778, %v1050
  %v1103 = vmul.f32 %v781, %v1050
  %v1104 = vmul.f32 %v786, %v1050
  %v1105 = vmul.f32 %v789, %v1050
  %v1106 = vmul.f32 %v794, %v1050
  %v1107 = vmul.f32 %v797, %v1050
  %v1108 = vmul.f32 %v802, %v1050
  %v1109 = vmul.f32 %v805, %v1050
  %v1110 = vmul.f32 %v810, %v1050
  %v1111 = vmul.f32 %v813, %v1050
  %v1112 = vmul.f32 %v818, %v1050
  %v1113 = vmul.f32 %v821, %v1050
  %v1114 = vmul.f32 %v826, %v1050
  %v1115 = vmul.f32 %v829, %v1050
  %v1117 = vlaneseq
  %v1118 = vshrl.u32 %v1117, 7
  %v1119 = vsub.s32 0, %v1118
  %v1120 = vrot.slane %v1045, %v1119
  %v1122 = vadd.f32 %v1052, %v1120
  %v1123 = vadd.f32 %v1053, %v1120
  %v1124 = vadd.f32 %v1054, %v1120
  %v1125 = vadd.f32 %v1055, %v1120
  %v1126 = vadd.f32 %v1056, %v1120
  %v1127 = vadd.f32 %v1057, %v1120
  %v1128 = vadd.f32 %v1058, %v1120
  %v1129 = vadd.f32 %v1059, %v1120
  %v1130 = vadd.f32 %v1060, %v1120
  %v1131 = vadd.f32 %v1061, %v1120
  %v1132 = vadd.f32 %v1062, %v1120
  %v1133 = vadd.f32 %v1063, %v1120
  %v1134 = vadd.f32 %v1064, %v1120
  %v1135 = vadd.f32 %v1065, %v1120
  %v1136 = vadd.f32 %v1066, %v1120
  %v1137 = vadd.f32 %v1067, %v1120
  %v1138 = vadd.f32 %v1068, %v1120
  %v1139 = vadd.f32 %v1069, %v1120
  %v1140 = vadd.f32 %v1070, %v1120
  %v1141 = vadd.f32 %v1071, %v1120
  %v1142 = vadd.f32 %v1072, %v1120
  %v1143 = vadd.f32 %v1073, %v1120
  %v1144 = vadd.f32 %v1074, %v1120
  %v1145 = vadd.f32 %v1075, %v1120
  %v1146 = vadd.f32 %v1076, %v1120
  %v1147 = vadd.f32 %v1077, %v1120
  %v1148 = vadd.f32 %v1078, %v1120
  %v1149 = vadd.f32 %v1079, %v1120
  %v1150 = vadd.f32 %v1080, %v1120
  %v1151 = vadd.f32 %v1081, %v1120
  %v1152 = vadd.f32 %v1082, %v1120
  %v1153 = vadd.f32 %v1083, %v1120
  %v1154 = vadd.f32 %v1084, %v1120
  %v1155 = vadd.f32 %v1085, %v1120
  %v1156 = vadd.f32 %v1086, %v1120
  %v1157 = vadd.f32 %v1087, %v1120
  %v1158 = vadd.f32 %v1088, %v1120
  %v1159 = vadd.f32 %v1089, %v1120
  %v1160 = vadd.f32 %v1090, %v1120
  %v1161 = vadd.f32 %v1091, %v1120
  %v1162 = vadd.f32 %v1092, %v1120
  %v1163 = vadd.f32 %v1093, %v1120
  %v1164 = vadd.f32 %v1094, %v1120
  %v1165 = vadd.f32 %v1095, %v1120
  %v1166 = vadd.f32 %v1096, %v1120
  %v1167 = vadd.f32 %v1097, %v1120
  %v1168 = vadd.f32 %v1098, %v1120
  %v1169 = vadd.f32 %v1099, %v1120
  %v1170 = vadd.f32 %v1100, %v1120
  %v1171 = vadd.f32 %v1101, %v1120
  %v1172 = vadd.f32 %v1102, %v1120
  %v1173 = vadd.f32 %v1103, %v1120
  %v1174 = vadd.f32 %v1104, %v1120
  %v1175 = vadd.f32 %v1105, %v1120
  %v1176 = vadd.f32 %v1106, %v1120
  %v1177 = vadd.f32 %v1107, %v1120
  %v1178 = vadd.f32 %v1108, %v1120
  %v1179 = vadd.f32 %v1109, %v1120
  %v1180 = vadd.f32 %v1110, %v1120
  %v1181 = vadd.f32 %v1111, %v1120
  %v1182 = vadd.f32 %v1112, %v1120
  %v1183 = vadd.f32 %v1113, %v1120
  %v1184 = vadd.f32 %v1114, %v1120
  %v1185 = vadd.f32 %v1115, %v1120
  %v1186 = vld [vmem:[%s5] sm:$0xff]
  %v1187 = vld [vmem:[%s5 + $0x8] sm:$0xff]
  %v1188 = vld [vmem:[%s5 + $0x10] sm:$0xff]
  %v1189 = vld [vmem:[%s5 + $0x18] sm:$0xff]
  %v1190 = vld [vmem:[%s5 + $0x20] sm:$0xff]
  %v1191 = vld [vmem:[%s5 + $0x28] sm:$0xff]
  %v1192 = vld [vmem:[%s5 + $0x30] sm:$0xff]
  %v1193 = vld [vmem:[%s5 + $0x38] sm:$0xff]
  %v1194 = vld [vmem:[%s5 + $0x40] sm:$0xff]
  %v1195 = vld [vmem:[%s5 + $0x48] sm:$0xff]
  %v1196 = vld [vmem:[%s5 + $0x50] sm:$0xff]
  %v1197 = vld [vmem:[%s5 + $0x58] sm:$0xff]
  %v1198 = vld [vmem:[%s5 + $0x60] sm:$0xff]
  %v1199 = vld [vmem:[%s5 + $0x68] sm:$0xff]
  %v1200 = vld [vmem:[%s5 + $0x70] sm:$0xff]
  %v1201 = vld [vmem:[%s5 + $0x78] sm:$0xff]
  %v1202 = vld [vmem:[%s5 + $0x80] sm:$0xff]
  %v1203 = vld [vmem:[%s5 + $0x88] sm:$0xff]
  %v1204 = vld [vmem:[%s5 + $0x90] sm:$0xff]
  %v1205 = vld [vmem:[%s5 + $0x98] sm:$0xff]
  %v1206 = vld [vmem:[%s5 + $0xa0] sm:$0xff]
  %v1207 = vld [vmem:[%s5 + $0xa8] sm:$0xff]
  %v1208 = vld [vmem:[%s5 + $0xb0] sm:$0xff]
  %v1209 = vld [vmem:[%s5 + $0xb8] sm:$0xff]
  %v1210 = vld [vmem:[%s5 + $0xc0] sm:$0xff]
  %v1211 = vld [vmem:[%s5 + $0xc8] sm:$0xff]
  %v1212 = vld [vmem:[%s5 + $0xd0] sm:$0xff]
  %v1213 = vld [vmem:[%s5 + $0xd8] sm:$0xff]
  %v1214 = vld [vmem:[%s5 + $0xe0] sm:$0xff]
  %v1215 = vld [vmem:[%s5 + $0xe8] sm:$0xff]
  %v1216 = vld [vmem:[%s5 + $0xf0] sm:$0xff]
  %v1217 = vld [vmem:[%s5 + $0xf8] sm:$0xff]
  %v1218 = vld [vmem:[%s5 + $0x100] sm:$0xff]
  %v1219 = vld [vmem:[%s5 + $0x108] sm:$0xff]
  %v1220 = vld [vmem:[%s5 + $0x110] sm:$0xff]
  %v1221 = vld [vmem:[%s5 + $0x118] sm:$0xff]
  %v1222 = vld [vmem:[%s5 + $0x120] sm:$0xff]
  %v1223 = vld [vmem:[%s5 + $0x128] sm:$0xff]
  %v1224 = vld [vmem:[%s5 + $0x130] sm:$0xff]
  %v1225 = vld [vmem:[%s5 + $0x138] sm:$0xff]
  %v1226 = vld [vmem:[%s5 + $0x140] sm:$0xff]
  %v1227 = vld [vmem:[%s5 + $0x148] sm:$0xff]
  %v1228 = vld [vmem:[%s5 + $0x150] sm:$0xff]
  %v1229 = vld [vmem:[%s5 + $0x158] sm:$0xff]
  %v1230 = vld [vmem:[%s5 + $0x160] sm:$0xff]
  %v1231 = vld [vmem:[%s5 + $0x168] sm:$0xff]
  %v1232 = vld [vmem:[%s5 + $0x170] sm:$0xff]
  %v1233 = vld [vmem:[%s5 + $0x178] sm:$0xff]
  %v1234 = vld [vmem:[%s5 + $0x180] sm:$0xff]
  %v1235 = vld [vmem:[%s5 + $0x188] sm:$0xff]
  %v1236 = vld [vmem:[%s5 + $0x190] sm:$0xff]
  %v1237 = vld [vmem:[%s5 + $0x198] sm:$0xff]
  %v1238 = vld [vmem:[%s5 + $0x1a0] sm:$0xff]
  %v1239 = vld [vmem:[%s5 + $0x1a8] sm:$0xff]
  %v1240 = vld [vmem:[%s5 + $0x1b0] sm:$0xff]
  %v1241 = vld [vmem:[%s5 + $0x1b8] sm:$0xff]
  %v1242 = vld [vmem:[%s5 + $0x1c0] sm:$0xff]
  %v1243 = vld [vmem:[%s5 + $0x1c8] sm:$0xff]
  %v1244 = vld [vmem:[%s5 + $0x1d0] sm:$0xff]
  %v1245 = vld [vmem:[%s5 + $0x1d8] sm:$0xff]
  %v1246 = vld [vmem:[%s5 + $0x1e0] sm:$0xff]
  %v1247 = vld [vmem:[%s5 + $0x1e8] sm:$0xff]
  %v1248 = vld [vmem:[%s5 + $0x1f0] sm:$0xff]
  %v1249 = vld [vmem:[%s5 + $0x1f8] sm:$0xff]
  %v1250 = vadd.f32 %v1122, %v1186
  %v1251 = vadd.f32 %v1123, %v1187
  %v1252 = vadd.f32 %v1124, %v1188
  %v1253 = vadd.f32 %v1125, %v1189
  %v1254 = vadd.f32 %v1126, %v1190
  %v1255 = vadd.f32 %v1127, %v1191
  %v1256 = vadd.f32 %v1128, %v1192
  %v1257 = vadd.f32 %v1129, %v1193
  %v1258 = vadd.f32 %v1130, %v1194
  %v1259 = vadd.f32 %v1131, %v1195
  %v1260 = vadd.f32 %v1132, %v1196
  %v1261 = vadd.f32 %v1133, %v1197
  %v1262 = vadd.f32 %v1134, %v1198
  %v1263 = vadd.f32 %v1135, %v1199
  %v1264 = vadd.f32 %v1136, %v1200
  %v1265 = vadd.f32 %v1137, %v1201
  %v1266 = vadd.f32 %v1138, %v1202
  %v1267 = vadd.f32 %v1139, %v1203
  %v1268 = vadd.f32 %v1140, %v1204
  %v1269 = vadd.f32 %v1141, %v1205
  %v1270 = vadd.f32 %v1142, %v1206
  %v1271 = vadd.f32 %v1143, %v1207
  %v1272 = vadd.f32 %v1144, %v1208
  %v1273 = vadd.f32 %v1145, %v1209
  %v1274 = vadd.f32 %v1146, %v1210
  %v1275 = vadd.f32 %v1147, %v1211
  %v1276 = vadd.f32 %v1148, %v1212
  %v1277 = vadd.f32 %v1149, %v1213
  %v1278 = vadd.f32 %v1150, %v1214
  %v1279 = vadd.f32 %v1151, %v1215
  %v1280 = vadd.f32 %v1152, %v1216
  %v1281 = vadd.f32 %v1153, %v1217
  %v1282 = vadd.f32 %v1154, %v1218
  %v1283 = vadd.f32 %v1155, %v1219
  %v1284 = vadd.f32 %v1156, %v1220
  %v1285 = vadd.f32 %v1157, %v1221
  %v1286 = vadd.f32 %v1158, %v1222
  %v1287 = vadd.f32 %v1159, %v1223
  %v1288 = vadd.f32 %v1160, %v1224
  %v1289 = vadd.f32 %v1161, %v1225
  %v1290 = vadd.f32 %v1162, %v1226
  %v1291 = vadd.f32 %v1163, %v1227
  %v1292 = vadd.f32 %v1164, %v1228
  %v1293 = vadd.f32 %v1165, %v1229
  %v1294 = vadd.f32 %v1166, %v1230
  %v1295 = vadd.f32 %v1167, %v1231
  %v1296 = vadd.f32 %v1168, %v1232
  %v1297 = vadd.f32 %v1169, %v1233
  %v1298 = vadd.f32 %v1170, %v1234
  %v1299 = vadd.f32 %v1171, %v1235
  %v1300 = vadd.f32 %v1172, %v1236
  %v1301 = vadd.f32 %v1173, %v1237
  %v1302 = vadd.f32 %v1174, %v1238
  %v1303 = vadd.f32 %v1175, %v1239
  %v1304 = vadd.f32 %v1176, %v1240
  %v1305 = vadd.f32 %v1177, %v1241
  %v1306 = vadd.f32 %v1178, %v1242
  %v1307 = vadd.f32 %v1179, %v1243
  %v1308 = vadd.f32 %v1180, %v1244
  %v1309 = vadd.f32 %v1181, %v1245
  %v1310 = vadd.f32 %v1182, %v1246
  %v1311 = vadd.f32 %v1183, %v1247
  %v1312 = vadd.f32 %v1184, %v1248
  %v1313 = vadd.f32 %v1185, %v1249
  %v1314 = vmax.f32 %v1250, 0.0
  %v1315 = vmax.f32 %v1251, 0.0
  %v1316 = vmax.f32 %v1252, 0.0
  %v1317 = vmax.f32 %v1253, 0.0
  %v1318 = vmax.f32 %v1254, 0.0
  %v1319 = vmax.f32 %v1255, 0.0
  %v1320 = vmax.f32 %v1256, 0.0
  %v1321 = vmax.f32 %v1257, 0.0
  %v1322 = vmax.f32 %v1258, 0.0
  %v1323 = vmax.f32 %v1259, 0.0
  %v1324 = vmax.f32 %v1260, 0.0
  %v1325 = vmax.f32 %v1261, 0.0
  %v1326 = vmax.f32 %v1262, 0.0
  %v1327 = vmax.f32 %v1263, 0.0
  %v1328 = vmax.f32 %v1264, 0.0
  %v1329 = vmax.f32 %v1265, 0.0
  %v1330 = vmax.f32 %v1266, 0.0
  %v1331 = vmax.f32 %v1267, 0.0
  %v1332 = vmax.f32 %v1268, 0.0
  %v1333 = vmax.f32 %v1269, 0.0
  %v1334 = vmax.f32 %v1270, 0.0
  %v1335 = vmax.f32 %v1271, 0.0
  %v1336 = vmax.f32 %v1272, 0.0
  %v1337 = vmax.f32 %v1273, 0.0
  %v1338 = vmax.f32 %v1274, 0.0
  %v1339 = vmax.f32 %v1275, 0.0
  %v1340 = vmax.f32 %v1276, 0.0
  %v1341 = vmax.f32 %v1277, 0.0
  %v1342 = vmax.f32 %v1278, 0.0
  %v1343 = vmax.f32 %v1279, 0.0
  %v1344 = vmax.f32 %v1280, 0.0
  %v1345 = vmax.f32 %v1281, 0.0
  %v1346 = vmax.f32 %v1282, 0.0
  %v1347 = vmax.f32 %v1283, 0.0
  %v1348 = vmax.f32 %v1284, 0.0
  %v1349 = vmax.f32 %v1285, 0.0
  %v1350 = vmax.f32 %v1286, 0.0
  %v1351 = vmax.f32 %v1287, 0.0
  %v1352 = vmax.f32 %v1288, 0.0
  %v1353 = vmax.f32 %v1289, 0.0
  %v1354 = vmax.f32 %v1290, 0.0
  %v1355 = vmax.f32 %v1291, 0.0
  %v1356 = vmax.f32 %v1292, 0.0
  %v1357 = vmax.f32 %v1293, 0.0
  %v1358 = vmax.f32 %v1294, 0.0
  %v1359 = vmax.f32 %v1295, 0.0
  %v1360 = vmax.f32 %v1296, 0.0
  %v1361 = vmax.f32 %v1297, 0.0
  %v1362 = vmax.f32 %v1298, 0.0
  %v1363 = vmax.f32 %v1299, 0.0
  %v1364 = vmax.f32 %v1300, 0.0
  %v1365 = vmax.f32 %v1301, 0.0
  %v1366 = vmax.f32 %v1302, 0.0
  %v1367 = vmax.f32 %v1303, 0.0
  %v1368 = vmax.f32 %v1304, 0.0
  %v1369 = vmax.f32 %v1305, 0.0
  %v1370 = vmax.f32 %v1306, 0.0
  %v1371 = vmax.f32 %v1307, 0.0
  %v1372 = vmax.f32 %v1308, 0.0
  %v1373 = vmax.f32 %v1309, 0.0
  %v1374 = vmax.f32 %v1310, 0.0
  %v1375 = vmax.f32 %v1311, 0.0
  %v1376 = vmax.f32 %v1312, 0.0
  %v1377 = vmax.f32 %v1313, 0.0
  %1378 = vst [vmem:[%s6] sm:$0xff] %v1314
  %1379 = vst [vmem:[%s6 + $0x8] sm:$0xff] %v1315
  %1380 = vst [vmem:[%s6 + $0x10] sm:$0xff] %v1316
  %1381 = vst [vmem:[%s6 + $0x18] sm:$0xff] %v1317
  %1382 = vst [vmem:[%s6 + $0x20] sm:$0xff] %v1318
  %1383 = vst [vmem:[%s6 + $0x28] sm:$0xff] %v1319
  %1384 = vst [vmem:[%s6 + $0x30] sm:$0xff] %v1320
  %1385 = vst [vmem:[%s6 + $0x38] sm:$0xff] %v1321
  %1386 = vst [vmem:[%s6 + $0x40] sm:$0xff] %v1322
  %1387 = vst [vmem:[%s6 + $0x48] sm:$0xff] %v1323
  %1388 = vst [vmem:[%s6 + $0x50] sm:$0xff] %v1324
  %1389 = vst [vmem:[%s6 + $0x58] sm:$0xff] %v1325
  %1390 = vst [vmem:[%s6 + $0x60] sm:$0xff] %v1326
  %1391 = vst [vmem:[%s6 + $0x68] sm:$0xff] %v1327
  %1392 = vst [vmem:[%s6 + $0x70] sm:$0xff] %v1328
  %1393 = vst [vmem:[%s6 + $0x78] sm:$0xff] %v1329
  %1394 = vst [vmem:[%s6 + $0x80] sm:$0xff] %v1330
  %1395 = vst [vmem:[%s6 + $0x88] sm:$0xff] %v1331
  %1396 = vst [vmem:[%s6 + $0x90] sm:$0xff] %v1332
  %1397 = vst [vmem:[%s6 + $0x98] sm:$0xff] %v1333
  %1398 = vst [vmem:[%s6 + $0xa0] sm:$0xff] %v1334
  %1399 = vst [vmem:[%s6 + $0xa8] sm:$0xff] %v1335
  %1400 = vst [vmem:[%s6 + $0xb0] sm:$0xff] %v1336
  %1401 = vst [vmem:[%s6 + $0xb8] sm:$0xff] %v1337
  %1402 = vst [vmem:[%s6 + $0xc0] sm:$0xff] %v1338
  %1403 = vst [vmem:[%s6 + $0xc8] sm:$0xff] %v1339
  %1404 = vst [vmem:[%s6 + $0xd0] sm:$0xff] %v1340
  %1405 = vst [vmem:[%s6 + $0xd8] sm:$0xff] %v1341
  %1406 = vst [vmem:[%s6 + $0xe0] sm:$0xff] %v1342
  %1407 = vst [vmem:[%s6 + $0xe8] sm:$0xff] %v1343
  %1408 = vst [vmem:[%s6 + $0xf0] sm:$0xff] %v1344
  %1409 = vst [vmem:[%s6 + $0xf8] sm:$0xff] %v1345
  %1410 = vst [vmem:[%s6 + $0x100] sm:$0xff] %v1346
  %1411 = vst [vmem:[%s6 + $0x108] sm:$0xff] %v1347
  %1412 = vst [vmem:[%s6 + $0x110] sm:$0xff] %v1348
  %1413 = vst [vmem:[%s6 + $0x118] sm:$0xff] %v1349
  %1414 = vst [vmem:[%s6 + $0x120] sm:$0xff] %v1350
  %1415 = vst [vmem:[%s6 + $0x128] sm:$0xff] %v1351
  %1416 = vst [vmem:[%s6 + $0x130] sm:$0xff] %v1352
  %1417 = vst [vmem:[%s6 + $0x138] sm:$0xff] %v1353
  %1418 = vst [vmem:[%s6 + $0x140] sm:$0xff] %v1354
  %1419 = vst [vmem:[%s6 + $0x148] sm:$0xff] %v1355
  %1420 = vst [vmem:[%s6 + $0x150] sm:$0xff] %v1356
  %1421 = vst [vmem:[%s6 + $0x158] sm:$0xff] %v1357
  %1422 = vst [vmem:[%s6 + $0x160] sm:$0xff] %v1358
  %1423 = vst [vmem:[%s6 + $0x168] sm:$0xff] %v1359
  %1424 = vst [vmem:[%s6 + $0x170] sm:$0xff] %v1360
  %1425 = vst [vmem:[%s6 + $0x178] sm:$0xff] %v1361
  %1426 = vst [vmem:[%s6 + $0x180] sm:$0xff] %v1362
  %1427 = vst [vmem:[%s6 + $0x188] sm:$0xff] %v1363
  %1428 = vst [vmem:[%s6 + $0x190] sm:$0xff] %v1364
  %1429 = vst [vmem:[%s6 + $0x198] sm:$0xff] %v1365
  %1430 = vst [vmem:[%s6 + $0x1a0] sm:$0xff] %v1366
  %1431 = vst [vmem:[%s6 + $0x1a8] sm:$0xff] %v1367
  %1432 = vst [vmem:[%s6 + $0x1b0] sm:$0xff] %v1368
  %1433 = vst [vmem:[%s6 + $0x1b8] sm:$0xff] %v1369
  %1434 = vst [vmem:[%s6 + $0x1c0] sm:$0xff] %v1370
  %1435 = vst [vmem:[%s6 + $0x1c8] sm:$0xff] %v1371
  %1436 = vst [vmem:[%s6 + $0x1d0] sm:$0xff] %v1372
  %1437 = vst [vmem:[%s6 + $0x1d8] sm:$0xff] %v1373
  %1438 = vst [vmem:[%s6 + $0x1e0] sm:$0xff] %v1374
  %1439 = vst [vmem:[%s6 + $0x1e8] sm:$0xff] %v1375
  %1440 = vst [vmem:[%s6 + $0x1f0] sm:$0xff] %v1376
  %1441 = vst [vmem:[%s6 + $0x1f8] sm:$0xff] %v1377
  // Predicated region
  $region26: #{residual_net.12} parent=0 // pred_check
    _
  $region27: #{residual_net.12} parent=0 // pred_check_branch
    %1443 = sbr.rel (0) target = $region29
  $region28: #{residual_net.12} parent=0 // pred_region
    _
  $region29: #{residual_net.12} parent=0 // pred_fallthru
    _
  // Predicated region
  $region30: #{residual_net.12} parent=0 // pred_check
    _
  $region31: #{residual_net.12} parent=0 // pred_check_branch
    %1445 = sbr.rel (0) target = $region33
  $region32: #{residual_net.12} parent=0 // pred_region
    _
  $region33: #{residual_net.12} parent=0 // pred_fallthru
    _

// kernel: residual_net.13
$region0: #{residual_net.13}
  #allocation0 [shape = 'u32[]', space=smem, size = 0x4, offset = 0x4, fixed_abs, tag = 'smem constant byte address 0x4 - core index']
  #allocation1 [shape = 'u32[144,128]{1,0:T(1,128)}', space=vmem, size = 0x12000, scoped, tag = 'internal scratch']
  %s0 = inlined_call_operand.vmem [shape: bf16[128,256], index: 0, kind: input, shape index: {}]
  %s1 = inlined_call_operand.vmem [shape: bf16[256,128], index: 1, kind: input, shape index: {}]
  %s2 = inlined_call_operand.vmem [shape: f32[1,128], index: 2, kind: input, shape index: {}]
  %s3 = inlined_call_operand.vmem [shape: f32[1,128], index: 3, kind: input, shape index: {}]
  %s4 = inlined_call_operand.vmem [shape: f32[1,128], index: 4, kind: input, shape index: {}]
  %s5 = inlined_call_operand.vmem [shape: f32[128,128], index: 5, kind: output, shape index: {}]
  %s6 = sld [smem:[#allocation0]]
  $region30: #{residual_net.13} parent=0
    _
  %s8 = ssub.s32 1, %s6
  %s9 = scalar_select 0, %s8, %s6
  // Predicated region
  $region2: #{residual_net.13} parent=0 // pred_check
    _
  $region3: #{residual_net.13} parent=0 // pred_check_branch
    %11 = sbr.rel (0) target = $region5
  $region4: #{residual_net.13} parent=0 // pred_region
    _
  $region5: #{residual_net.13} parent=0 // pred_fallthru
    _
  // Predicated region
  $region6: #{residual_net.13} parent=0 // pred_check
    _
  $region7: #{residual_net.13} parent=0 // pred_check_branch
    %13 = sbr.rel (0) target = $region9
  $region8: #{residual_net.13} parent=0 // pred_region
    _
  $region9: #{residual_net.13} parent=0 // pred_fallthru
    _
  // Predicated region
  $region10: #{residual_net.13} parent=0 // pred_check
    _
  $region11: #{residual_net.13} parent=0 // pred_check_branch
    %15 = sbr.rel (0) target = $region13
  $region12: #{residual_net.13} parent=0 // pred_region
    _
  $region13: #{residual_net.13} parent=0 // pred_fallthru
    _
  // Predicated region
  $region14: #{residual_net.13} parent=0 // pred_check
    _
  $region15: #{residual_net.13} parent=0 // pred_check_branch
    %17 = sbr.rel (0) target = $region17
  $region16: #{residual_net.13} parent=0 // pred_region
    _
  $region17: #{residual_net.13} parent=0 // pred_fallthru
    _
  // Predicated region
  $region18: #{residual_net.13} parent=0 // pred_check
    _
  $region19: #{residual_net.13} parent=0 // pred_check_branch
    %19 = sbr.rel (0) target = $region21
  $region20: #{residual_net.13} parent=0 // pred_region
    _
  $region21: #{residual_net.13} parent=0 // pred_fallthru
    _
  %v21 = vld [vmem:[%s0] sm:$0xff]
  %v22 = vld [vmem:[%s0 + $0x8] sm:$0xff]
  %v23 = vld [vmem:[%s0 + $0x10] sm:$0xff]
  %v24 = vld [vmem:[%s0 + $0x18] sm:$0xff]
  %v25 = vld [vmem:[%s0 + $0x20] sm:$0xff]
  %v26 = vld [vmem:[%s0 + $0x28] sm:$0xff]
  %v27 = vld [vmem:[%s0 + $0x30] sm:$0xff]
  %v28 = vld [vmem:[%s0 + $0x38] sm:$0xff]
  %v29 = vld [vmem:[%s0 + $0x40] sm:$0xff]
  %v30 = vld [vmem:[%s0 + $0x48] sm:$0xff]
  %v31 = vld [vmem:[%s0 + $0x50] sm:$0xff]
  %v32 = vld [vmem:[%s0 + $0x58] sm:$0xff]
  %v33 = vld [vmem:[%s0 + $0x60] sm:$0xff]
  %v34 = vld [vmem:[%s0 + $0x68] sm:$0xff]
  %v35 = vld [vmem:[%s0 + $0x70] sm:$0xff]
  %v36 = vld [vmem:[%s0 + $0x78] sm:$0xff]
  %v37 = vld [vmem:[%s1] sm:$0xf]
  %v38 = vld [vmem:[%s1 + $0x4] sm:$0xf]
  %v39 = vld [vmem:[%s1 + $0x8] sm:$0xf]
  %v40 = vld [vmem:[%s1 + $0xc] sm:$0xf]
  %v41 = vld [vmem:[%s1 + $0x10] sm:$0xf]
  %v42 = vld [vmem:[%s1 + $0x14] sm:$0xf]
  %v43 = vld [vmem:[%s1 + $0x18] sm:$0xf]
  %v44 = vld [vmem:[%s1 + $0x1c] sm:$0xf]
  %v45 = vld [vmem:[%s1 + $0x20] sm:$0xf]
  %v46 = vld [vmem:[%s1 + $0x24] sm:$0xf]
  %v47 = vld [vmem:[%s1 + $0x28] sm:$0xf]
  %v48 = vld [vmem:[%s1 + $0x2c] sm:$0xf]
  %v49 = vld [vmem:[%s1 + $0x30] sm:$0xf]
  %v50 = vld [vmem:[%s1 + $0x34] sm:$0xf]
  %v51 = vld [vmem:[%s1 + $0x38] sm:$0xf]
  %v52 = vld [vmem:[%s1 + $0x3c] sm:$0xf]
  %v53 = vld [vmem:[%s1 + $0x40] sm:$0xf]
  %v54 = vld [vmem:[%s1 + $0x44] sm:$0xf]
  %v55 = vld [vmem:[%s1 + $0x48] sm:$0xf]
  %v56 = vld [vmem:[%s1 + $0x4c] sm:$0xf]
  %v57 = vld [vmem:[%s1 + $0x50] sm:$0xf]
  %v58 = vld [vmem:[%s1 + $0x54] sm:$0xf]
  %v59 = vld [vmem:[%s1 + $0x58] sm:$0xf]
  %v60 = vld [vmem:[%s1 + $0x5c] sm:$0xf]
  %v61 = vld [vmem:[%s1 + $0x60] sm:$0xf]
  %v62 = vld [vmem:[%s1 + $0x64] sm:$0xf]
  %v63 = vld [vmem:[%s1 + $0x68] sm:$0xf]
  %v64 = vld [vmem:[%s1 + $0x6c] sm:$0xf]
  %v65 = vld [vmem:[%s1 + $0x70] sm:$0xf]
  %v66 = vld [vmem:[%s1 + $0x74] sm:$0xf]
  %v67 = vld [vmem:[%s1 + $0x78] sm:$0xf]
  %v68 = vld [vmem:[%s1 + $0x7c] sm:$0xf]
  %v69 = vld [vmem:[%s2] sm:$0x1]
  %v71 = vlaneseq
  %v72 = vshrl.u32 %v71, 7
  %v73 = vsub.s32 0, %v72
  %v74 = vrot.slane %v69, %v73
  %v92 = vunpack.c.l.b16 %v21
  %v93 = vunpack.c.h.b16 %v21
  %v94 = vunpack.c.l.b16 %v22
  %v95 = vunpack.c.h.b16 %v22
  %v96 = vunpack.c.l.b16 %v23
  %v97 = vunpack.c.h.b16 %v23
  %v98 = vunpack.c.l.b16 %v24
  %v99 = vunpack.c.h.b16 %v24
  %v100 = vunpack.c.l.b16 %v25
  %v101 = vunpack.c.h.b16 %v25
  %v102 = vunpack.c.l.b16 %v26
  %v103 = vunpack.c.h.b16 %v26
  %v104 = vunpack.c.l.b16 %v27
  %v105 = vunpack.c.h.b16 %v27
  %v106 = vunpack.c.l.b16 %v28
  %v107 = vunpack.c.h.b16 %v28
  %v108 = vunpack.c.l.b16 %v29
  %v109 = vunpack.c.h.b16 %v29
  %v110 = vunpack.c.l.b16 %v30
  %v111 = vunpack.c.h.b16 %v30
  %v112 = vunpack.c.l.b16 %v31
  %v113 = vunpack.c.h.b16 %v31
  %v114 = vunpack.c.l.b16 %v32
  %v115 = vunpack.c.h.b16 %v32
  %v116 = vunpack.c.l.b16 %v33
  %v117 = vunpack.c.h.b16 %v33
  %v118 = vunpack.c.l.b16 %v34
  %v119 = vunpack.c.h.b16 %v34
  %v120 = vunpack.c.l.b16 %v35
  %v121 = vunpack.c.h.b16 %v35
  %v122 = vunpack.c.l.b16 %v36
  %v123 = vunpack.c.h.b16 %v36
  %v124 = vpack.c.b16 %v94, %v92
  %v125 = vpack.c.b16 %v95, %v93
  %v126 = vpack.c.b16 %v98, %v96
  %v127 = vpack.c.b16 %v99, %v97
  %v128 = vpack.c.b16 %v102, %v100
  %v129 = vpack.c.b16 %v103, %v101
  %v130 = vpack.c.b16 %v106, %v104
  %v131 = vpack.c.b16 %v107, %v105
  %v132 = vpack.c.b16 %v110, %v108
  %v133 = vpack.c.b16 %v111, %v109
  %v134 = vpack.c.b16 %v114, %v112
  %v135 = vpack.c.b16 %v115, %v113
  %v136 = vpack.c.b16 %v118, %v116
  %v137 = vpack.c.b16 %v119, %v117
  %v138 = vpack.c.b16 %v122, %v120
  %v139 = vpack.c.b16 %v123, %v121
  %v188 = vunpack.c.l.b16 %v37
  %v189 = vunpack.c.l.b16 %v38
  %v190 = vunpack.c.l.b16 %v39
  %v191 = vunpack.c.l.b16 %v40
  %v192 = vunpack.c.l.b16 %v41
  %v193 = vunpack.c.l.b16 %v42
  %v194 = vunpack.c.l.b16 %v43
  %v195 = vunpack.c.l.b16 %v44
  %v196 = vunpack.c.l.b16 %v45
  %v197 = vunpack.c.l.b16 %v46
  %v198 = vunpack.c.l.b16 %v47
  %v199 = vunpack.c.l.b16 %v48
  %v200 = vunpack.c.l.b16 %v49
  %v201 = vunpack.c.l.b16 %v50
  %v202 = vunpack.c.l.b16 %v51
  %v203 = vunpack.c.l.b16 %v52
  %v204 = vunpack.c.l.b16 %v53
  %v205 = vunpack.c.l.b16 %v54
  %v206 = vunpack.c.l.b16 %v55
  %v207 = vunpack.c.l.b16 %v56
  %v208 = vunpack.c.l.b16 %v57
  %v209 = vunpack.c.l.b16 %v58
  %v210 = vunpack.c.l.b16 %v59
  %v211 = vunpack.c.l.b16 %v60
  %v212 = vunpack.c.l.b16 %v61
  %v213 = vunpack.c.l.b16 %v62
  %v214 = vunpack.c.l.b16 %v63
  %v215 = vunpack.c.l.b16 %v64
  %v216 = vunpack.c.l.b16 %v65
  %v217 = vunpack.c.l.b16 %v66
  %v218 = vunpack.c.l.b16 %v67
  %v219 = vunpack.c.l.b16 %v68
  %v220 = vpack.c.b16 %v189, %v188
  %v221 = vpack.c.b16 %v191, %v190
  %v222 = vpack.c.b16 %v193, %v192
  %v223 = vpack.c.b16 %v195, %v194
  %v224 = vpack.c.b16 %v197, %v196
  %v225 = vpack.c.b16 %v199, %v198
  %v226 = vpack.c.b16 %v201, %v200
  %v227 = vpack.c.b16 %v203, %v202
  %v228 = vpack.c.b16 %v205, %v204
  %v229 = vpack.c.b16 %v207, %v206
  %v230 = vpack.c.b16 %v209, %v208
  %v231 = vpack.c.b16 %v211, %v210
  %v232 = vpack.c.b16 %v213, %v212
  %v233 = vpack.c.b16 %v215, %v214
  %v234 = vpack.c.b16 %v217, %v216
  %v235 = vpack.c.b16 %v219, %v218
  %252 = vmatprep.subr.bf16.mxu0 0
  %253 = vmatpush1.bf16.msra.mxu0 %v227
  %254 = vmatprep.subr.bf16.mxu0 0
  %255 = vmatpush1.bf16.msra.mxu0 %v226
  %256 = vmatprep.subr.bf16.mxu0 0
  %257 = vmatpush1.bf16.msra.mxu0 %v225
  %258 = vmatprep.subr.bf16.mxu0 0
  %259 = vmatpush1.bf16.msra.mxu0 %v224
  %260 = vmatprep.subr.bf16.mxu0 0
  %261 = vmatpush1.bf16.msra.mxu0 %v223
  %262 = vmatprep.subr.bf16.mxu0 0
  %263 = vmatpush1.bf16.msra.mxu0 %v222
  %264 = vmatprep.subr.bf16.mxu0 0
  %265 = vmatpush1.bf16.msra.mxu0 %v221
  %266 = vmatprep.subr.bf16.mxu0 0
  %267 = vmatpush1.bf16.msra.mxu0 %v220
  %268 = vmatprep.subr.bf16.mxu0 0
  %269 = vmatpush2.bf16.msra.mxu0 %v235
  %270 = vmatprep.subr.bf16.mxu0 0
  %271 = vmatpush2.bf16.msra.mxu0 %v234
  %272 = vmatprep.subr.bf16.mxu0 0
  %273 = vmatpush2.bf16.msra.mxu0 %v233
  %274 = vmatprep.subr.bf16.mxu0 0
  %275 = vmatpush2.bf16.msra.mxu0 %v232
  %276 = vmatprep.subr.bf16.mxu0 0
  %277 = vmatpush2.bf16.msra.mxu0 %v231
  %278 = vmatprep.subr.bf16.mxu0 0
  %279 = vmatpush2.bf16.msra.mxu0 %v230
  %280 = vmatprep.subr.bf16.mxu0 0
  %281 = vmatpush2.bf16.msra.mxu0 %v229
  %282 = vmatprep.subr.bf16.mxu0 0
  %283 = vmatpush2.bf16.msra.mxu0 %v228
  %284 = vmatprep.mubr.bf16.mxu0 %v125
  %285 = vmatmul.mubr.bf16.gmra.mxu0 %v124
  %v286 = vpop.f32.mrf.mxu0
  %v287 = vadd.f32 %v74, %v286
  %v288 = vpop.f32.mrf.mxu0
  %v289 = vpop.f32.mrf.mxu0
  %v290 = vadd.f32 %v74, %v289
  %v291 = vpop.f32.mrf.mxu0
  %292 = vmatprep.mubr.bf16.mxu0 %v127
  %293 = vmatmul.mubr.bf16.gmra.mxu0 %v126
  %v294 = vpop.f32.mrf.mxu0
  %v295 = vadd.f32 %v74, %v294
  %v296 = vpop.f32.mrf.mxu0
  %v297 = vpop.f32.mrf.mxu0
  %v298 = vadd.f32 %v74, %v297
  %v299 = vpop.f32.mrf.mxu0
  %300 = vmatprep.mubr.bf16.mxu0 %v129
  %301 = vmatmul.mubr.bf16.gmra.mxu0 %v128
  %v302 = vpop.f32.mrf.mxu0
  %v303 = vadd.f32 %v74, %v302
  %v304 = vpop.f32.mrf.mxu0
  %v305 = vpop.f32.mrf.mxu0
  %v306 = vadd.f32 %v74, %v305
  %v307 = vpop.f32.mrf.mxu0
  %308 = vmatprep.mubr.bf16.mxu0 %v131
  %309 = vmatmul.mubr.bf16.gmra.mxu0 %v130
  %v310 = vpop.f32.mrf.mxu0
  %v311 = vadd.f32 %v74, %v310
  %v312 = vpop.f32.mrf.mxu0
  %v313 = vpop.f32.mrf.mxu0
  %v314 = vadd.f32 %v74, %v313
  %v315 = vpop.f32.mrf.mxu0
  %316 = vmatprep.mubr.bf16.mxu0 %v133
  %317 = vmatmul.mubr.bf16.gmra.mxu0 %v132
  %v318 = vpop.f32.mrf.mxu0
  %v319 = vadd.f32 %v74, %v318
  %v320 = vpop.f32.mrf.mxu0
  %v321 = vpop.f32.mrf.mxu0
  %v322 = vadd.f32 %v74, %v321
  %v323 = vpop.f32.mrf.mxu0
  %324 = vmatprep.mubr.bf16.mxu0 %v135
  %325 = vmatmul.mubr.bf16.gmra.mxu0 %v134
  %v326 = vpop.f32.mrf.mxu0
  %v327 = vadd.f32 %v74, %v326
  %v328 = vpop.f32.mrf.mxu0
  %v329 = vpop.f32.mrf.mxu0
  %v330 = vadd.f32 %v74, %v329
  %v331 = vpop.f32.mrf.mxu0
  %332 = vmatprep.mubr.bf16.mxu0 %v137
  %333 = vmatmul.mubr.bf16.gmra.mxu0 %v136
  %v334 = vpop.f32.mrf.mxu0
  %v335 = vadd.f32 %v74, %v334
  %v336 = vpop.f32.mrf.mxu0
  %v337 = vpop.f32.mrf.mxu0
  %v338 = vadd.f32 %v74, %v337
  %v339 = vpop.f32.mrf.mxu0
  %340 = vmatprep.mubr.bf16.mxu0 %v139
  %341 = vmatmul.mubr.bf16.gmra.mxu0 %v138
  %v342 = vpop.f32.mrf.mxu0
  %v343 = vadd.f32 %v74, %v342
  %v344 = vpop.f32.mrf.mxu0
  %v345 = vpop.f32.mrf.mxu0
  %v346 = vadd.f32 %v74, %v345
  %v347 = vpop.f32.mrf.mxu0
  %348 = vdwg.mxu0
  %v349 = vadd.f32 %v287, %v290
  %v350 = vadd.f32 %v349, %v295
  %v351 = vadd.f32 %v350, %v298
  %v352 = vadd.f32 %v351, %v303
  %v353 = vadd.f32 %v352, %v306
  %v354 = vadd.f32 %v353, %v311
  %v355 = vadd.f32 %v354, %v314
  %v356 = vadd.f32 %v355, %v319
  %v357 = vadd.f32 %v356, %v322
  %v358 = vadd.f32 %v357, %v327
  %v359 = vadd.f32 %v358, %v330
  %v360 = vadd.f32 %v359, %v335
  %v361 = vadd.f32 %v360, %v338
  %v362 = vadd.f32 %v361, %v343
  %v363 = vadd.f32 %v362, %v346
  %v364 = vrot.slane %v363, 4
  %v365 = vadd.f32 %v363, %v364
  %v366 = vrot.slane %v365, 2
  %v367 = vadd.f32 %v365, %v366
  %v368 = vrot.slane %v367, 1
  %v369 = vadd.f32 %v367, %v368
  %v370 = vmul.f32 %v369, 0.0078125
  %v371 = vmul.f32 %v287, %v287
  %v372 = vmul.f32 %v290, %v290
  %v373 = vmul.f32 %v295, %v295
  %v374 = vmul.f32 %v298, %v298
  %v375 = vmul.f32 %v303, %v303
  %v376 = vmul.f32 %v306, %v306
  %v377 = vmul.f32 %v311, %v311
  %v378 = vmul.f32 %v314, %v314
  %v379 = vmul.f32 %v319, %v319
  %v380 = vmul.f32 %v322, %v322
  %v381 = vmul.f32 %v327, %v327
  %v382 = vmul.f32 %v330, %v330
  %v383 = vmul.f32 %v335, %v335
  %v384 = vmul.f32 %v338, %v338
  %v385 = vmul.f32 %v343, %v343
  %v386 = vmul.f32 %v346, %v346
  %v387 = vadd.f32 %v371, %v372
  %v388 = vadd.f32 %v387, %v373
  %v389 = vadd.f32 %v388, %v374
  %v390 = vadd.f32 %v389, %v375
  %v391 = vadd.f32 %v390, %v376
  %v392 = vadd.f32 %v391, %v377
  %v393 = vadd.f32 %v392, %v378
  %v394 = vadd.f32 %v393, %v379
  %v395 = vadd.f32 %v394, %v380
  %v396 = vadd.f32 %v395, %v381
  %v397 = vadd.f32 %v396, %v382
  %v398 = vadd.f32 %v397, %v383
  %v399 = vadd.f32 %v398, %v384
  %v400 = vadd.f32 %v399, %v385
  %v401 = vadd.f32 %v400, %v386
  %v402 = vrot.slane %v401, 4
  %v403 = vadd.f32 %v401, %v402
  %v404 = vrot.slane %v403, 2
  %v405 = vadd.f32 %v403, %v404
  %v406 = vrot.slane %v405, 1
  %v407 = vadd.f32 %v405, %v406
  %v408 = vmul.f32 %v407, 0.0078125
  %v409 = vmul.f32 %v370, %v370
  %v410 = vsub.f32 %v408, %v409
  %v411 = vmax.f32 %v410, 0.0
  %v412 = vld [vmem:[%s3] sm:$0x1]
  %v413 = vadd.f32 %v411, 1e-05
  %v414 = vrsqrt.pop %v413
  %v415 = vmul.f32 %v412, %v414
  %v416 = vld [vmem:[%s4] sm:$0x1]
  %v417 = vmul.f32 %v370, %v415
  %v418 = vsub.f32 %v416, %v417
  %v420 = vlaneseq
  %v421 = vshrl.u32 %v420, 7
  %v422 = vsub.s32 0, %v421
  %v423 = vrot.slane %v415, %v422
  %v425 = vmul.f32 %v287, %v423
  %v426 = vmul.f32 %v290, %v423
  %v427 = vmul.f32 %v295, %v423
  %v428 = vmul.f32 %v298, %v423
  %v429 = vmul.f32 %v303, %v423
  %v430 = vmul.f32 %v306, %v423
  %v431 = vmul.f32 %v311, %v423
  %v432 = vmul.f32 %v314, %v423
  %v433 = vmul.f32 %v319, %v423
  %v434 = vmul.f32 %v322, %v423
  %v435 = vmul.f32 %v327, %v423
  %v436 = vmul.f32 %v330, %v423
  %v437 = vmul.f32 %v335, %v423
  %v438 = vmul.f32 %v338, %v423
  %v439 = vmul.f32 %v343, %v423
  %v440 = vmul.f32 %v346, %v423
  %v442 = vlaneseq
  %v443 = vshrl.u32 %v442, 7
  %v444 = vsub.s32 0, %v443
  %v445 = vrot.slane %v418, %v444
  %v447 = vadd.f32 %v425, %v445
  %v448 = vadd.f32 %v426, %v445
  %v449 = vadd.f32 %v427, %v445
  %v450 = vadd.f32 %v428, %v445
  %v451 = vadd.f32 %v429, %v445
  %v452 = vadd.f32 %v430, %v445
  %v453 = vadd.f32 %v431, %v445
  %v454 = vadd.f32 %v432, %v445
  %v455 = vadd.f32 %v433, %v445
  %v456 = vadd.f32 %v434, %v445
  %v457 = vadd.f32 %v435, %v445
  %v458 = vadd.f32 %v436, %v445
  %v459 = vadd.f32 %v437, %v445
  %v460 = vadd.f32 %v438, %v445
  %v461 = vadd.f32 %v439, %v445
  %v462 = vadd.f32 %v440, %v445
  %v463 = vmax.f32 %v447, 0.0
  %v464 = vmax.f32 %v448, 0.0
  %v465 = vmax.f32 %v449, 0.0
  %v466 = vmax.f32 %v450, 0.0
  %v467 = vmax.f32 %v451, 0.0
  %v468 = vmax.f32 %v452, 0.0
  %v469 = vmax.f32 %v453, 0.0
  %v470 = vmax.f32 %v454, 0.0
  %v471 = vmax.f32 %v455, 0.0
  %v472 = vmax.f32 %v456, 0.0
  %v473 = vmax.f32 %v457, 0.0
  %v474 = vmax.f32 %v458, 0.0
  %v475 = vmax.f32 %v459, 0.0
  %v476 = vmax.f32 %v460, 0.0
  %v477 = vmax.f32 %v461, 0.0
  %v478 = vmax.f32 %v462, 0.0
  %479 = vst [vmem:[%s5] sm:$0xff] %v463
  %480 = vst [vmem:[%s5 + $0x8] sm:$0xff] %v464
  %481 = vst [vmem:[%s5 + $0x10] sm:$0xff] %v465
  %482 = vst [vmem:[%s5 + $0x18] sm:$0xff] %v466
  %483 = vst [vmem:[%s5 + $0x20] sm:$0xff] %v467
  %484 = vst [vmem:[%s5 + $0x28] sm:$0xff] %v468
  %485 = vst [vmem:[%s5 + $0x30] sm:$0xff] %v469
  %486 = vst [vmem:[%s5 + $0x38] sm:$0xff] %v470
  %487 = vst [vmem:[%s5 + $0x40] sm:$0xff] %v471
  %488 = vst [vmem:[%s5 + $0x48] sm:$0xff] %v472
  %489 = vst [vmem:[%s5 + $0x50] sm:$0xff] %v473
  %490 = vst [vmem:[%s5 + $0x58] sm:$0xff] %v474
  %491 = vst [vmem:[%s5 + $0x60] sm:$0xff] %v475
  %492 = vst [vmem:[%s5 + $0x68] sm:$0xff] %v476
  %493 = vst [vmem:[%s5 + $0x70] sm:$0xff] %v477
  %494 = vst [vmem:[%s5 + $0x78] sm:$0xff] %v478
  // Predicated region
  $region22: #{residual_net.13} parent=0 // pred_check
    _
  $region23: #{residual_net.13} parent=0 // pred_check_branch
    %496 = sbr.rel (0) target = $region25
  $region24: #{residual_net.13} parent=0 // pred_region
    _
  $region25: #{residual_net.13} parent=0 // pred_fallthru
    _
  // Predicated region
  $region26: #{residual_net.13} parent=0 // pred_check
    _
  $region27: #{residual_net.13} parent=0 // pred_check_branch
    %498 = sbr.rel (0) target = $region29
  $region28: #{residual_net.13} parent=0 // pred_region
    _
  $region29: #{residual_net.13} parent=0 // pred_fallthru
    _

// kernel: residual_net.14
$region0: #{residual_net.14}
  #allocation0 [shape = 'u32[]', space=smem, size = 0x4, offset = 0x4, fixed_abs, tag = 'smem constant byte address 0x4 - core index']
  #allocation1 [shape = 'u32[144,128]{1,0:T(1,128)}', space=vmem, size = 0x12000, scoped, tag = 'internal scratch']
  %s0 = inlined_call_operand.vmem [shape: bf16[128,384], index: 0, kind: input, shape index: {}]
  %s1 = inlined_call_operand.vmem [shape: bf16[384,128], index: 1, kind: input, shape index: {}]
  %s2 = inlined_call_operand.vmem [shape: f32[1,128], index: 2, kind: input, shape index: {}]
  %s3 = inlined_call_operand.vmem [shape: f32[1,128], index: 3, kind: input, shape index: {}]
  %s4 = inlined_call_operand.vmem [shape: f32[1,128], index: 4, kind: input, shape index: {}]
  %s5 = inlined_call_operand.vmem [shape: f32[128,128], index: 5, kind: output, shape index: {}]
  %s6 = sld [smem:[#allocation0]]
  $region30: #{residual_net.14} parent=0
    _
  %s8 = ssub.s32 1, %s6
  %s9 = scalar_select 0, %s8, %s6
  // Predicated region
  $region2: #{residual_net.14} parent=0 // pred_check
    _
  $region3: #{residual_net.14} parent=0 // pred_check_branch
    %11 = sbr.rel (0) target = $region5
  $region4: #{residual_net.14} parent=0 // pred_region
    _
  $region5: #{residual_net.14} parent=0 // pred_fallthru
    _
  // Predicated region
  $region6: #{residual_net.14} parent=0 // pred_check
    _
  $region7: #{residual_net.14} parent=0 // pred_check_branch
    %13 = sbr.rel (0) target = $region9
  $region8: #{residual_net.14} parent=0 // pred_region
    _
  $region9: #{residual_net.14} parent=0 // pred_fallthru
    _
  // Predicated region
  $region10: #{residual_net.14} parent=0 // pred_check
    _
  $region11: #{residual_net.14} parent=0 // pred_check_branch
    %15 = sbr.rel (0) target = $region13
  $region12: #{residual_net.14} parent=0 // pred_region
    _
  $region13: #{residual_net.14} parent=0 // pred_fallthru
    _
  // Predicated region
  $region14: #{residual_net.14} parent=0 // pred_check
    _
  $region15: #{residual_net.14} parent=0 // pred_check_branch
    %17 = sbr.rel (0) target = $region17
  $region16: #{residual_net.14} parent=0 // pred_region
    _
  $region17: #{residual_net.14} parent=0 // pred_fallthru
    _
  // Predicated region
  $region18: #{residual_net.14} parent=0 // pred_check
    _
  $region19: #{residual_net.14} parent=0 // pred_check_branch
    %19 = sbr.rel (0) target = $region21
  $region20: #{residual_net.14} parent=0 // pred_region
    _
  $region21: #{residual_net.14} parent=0 // pred_fallthru
    _
  %v21 = vld [vmem:[%s0] sm:$0xff]
  %v22 = vld [vmem:[%s0 + $0x8] sm:$0xf]
  %v23 = vld [vmem:[%s0 + $0xc] sm:$0xff]
  %v24 = vld [vmem:[%s0 + $0x14] sm:$0xf]
  %v25 = vld [vmem:[%s0 + $0x18] sm:$0xff]
  %v26 = vld [vmem:[%s0 + $0x20] sm:$0xf]
  %v27 = vld [vmem:[%s0 + $0x24] sm:$0xff]
  %v28 = vld [vmem:[%s0 + $0x2c] sm:$0xf]
  %v29 = vld [vmem:[%s0 + $0x30] sm:$0xff]
  %v30 = vld [vmem:[%s0 + $0x38] sm:$0xf]
  %v31 = vld [vmem:[%s0 + $0x3c] sm:$0xff]
  %v32 = vld [vmem:[%s0 + $0x44] sm:$0xf]
  %v33 = vld [vmem:[%s0 + $0x48] sm:$0xff]
  %v34 = vld [vmem:[%s0 + $0x50] sm:$0xf]
  %v35 = vld [vmem:[%s0 + $0x54] sm:$0xff]
  %v36 = vld [vmem:[%s0 + $0x5c] sm:$0xf]
  %v37 = vld [vmem:[%s0 + $0x60] sm:$0xff]
  %v38 = vld [vmem:[%s0 + $0x68] sm:$0xf]
  %v39 = vld [vmem:[%s0 + $0x6c] sm:$0xff]
  %v40 = vld [vmem:[%s0 + $0x74] sm:$0xf]
  %v41 = vld [vmem:[%s0 + $0x78] sm:$0xff]
  %v42 = vld [vmem:[%s0 + $0x80] sm:$0xf]
  %v43 = vld [vmem:[%s0 + $0x84] sm:$0xff]
  %v44 = vld [vmem:[%s0 + $0x8c] sm:$0xf]
  %v45 = vld [vmem:[%s0 + $0x90] sm:$0xff]
  %v46 = vld [vmem:[%s0 + $0x98] sm:$0xf]
  %v47 = vld [vmem:[%s0 + $0x9c] sm:$0xff]
  %v48 = vld [vmem:[%s0 + $0xa4] sm:$0xf]
  %v49 = vld [vmem:[%s0 + $0xa8] sm:$0xff]
  %v50 = vld [vmem:[%s0 + $0xb0] sm:$0xf]
  %v51 = vld [vmem:[%s0 + $0xb4] sm:$0xff]
  %v52 = vld [vmem:[%s0 + $0xbc] sm:$0xf]
  %v53 = vld [vmem:[%s1] sm:$0xf]
  %v54 = vld [vmem:[%s1 + $0x4] sm:$0xf]
  %v55 = vld [vmem:[%s1 + $0x8] sm:$0xf]
  %v56 = vld [vmem:[%s1 + $0xc] sm:$0xf]
  %v57 = vld [vmem:[%s1 + $0x10] sm:$0xf]
  %v58 = vld [vmem:[%s1 + $0x14] sm:$0xf]
  %v59 = vld [vmem:[%s1 + $0x18] sm:$0xf]
  %v60 = vld [vmem:[%s1 + $0x1c] sm:$0xf]
  %v61 = vld [vmem:[%s1 + $0x20] sm:$0xf]
  %v62 = vld [vmem:[%s1 + $0x24] sm:$0xf]
  %v63 = vld [vmem:[%s1 + $0x28] sm:$0xf]
  %v64 = vld [vmem:[%s1 + $0x2c] sm:$0xf]
  %v65 = vld [vmem:[%s1 + $0x30] sm:$0xf]
  %v66 = vld [vmem:[%s1 + $0x34] sm:$0xf]
  %v67 = vld [vmem:[%s1 + $0x38] sm:$0xf]
  %v68 = vld [vmem:[%s1 + $0x3c] sm:$0xf]
  %v69 = vld [vmem:[%s1 + $0x40] sm:$0xf]
  %v70 = vld [vmem:[%s1 + $0x44] sm:$0xf]
  %v71 = vld [vmem:[%s1 + $0x48] sm:$0xf]
  %v72 = vld [vmem:[%s1 + $0x4c] sm:$0xf]
  %v73 = vld [vmem:[%s1 + $0x50] sm:$0xf]
  %v74 = vld [vmem:[%s1 + $0x54] sm:$0xf]
  %v75 = vld [vmem:[%s1 + $0x58] sm:$0xf]
  %v76 = vld [vmem:[%s1 + $0x5c] sm:$0xf]
  %v77 = vld [vmem:[%s1 + $0x60] sm:$0xf]
  %v78 = vld [vmem:[%s1 + $0x64] sm:$0xf]
  %v79 = vld [vmem:[%s1 + $0x68] sm:$0xf]
  %v80 = vld [vmem:[%s1 + $0x6c] sm:$0xf]
  %v81 = vld [vmem:[%s1 + $0x70] sm:$0xf]
  %v82 = vld [vmem:[%s1 + $0x74] sm:$0xf]
  %v83 = vld [vmem:[%s1 + $0x78] sm:$0xf]
  %v84 = vld [vmem:[%s1 + $0x7c] sm:$0xf]
  %v85 = vld [vmem:[%s1 + $0x80] sm:$0xf]
  %v86 = vld [vmem:[%s1 + $0x84] sm:$0xf]
  %v87 = vld [vmem:[%s1 + $0x88] sm:$0xf]
  %v88 = vld [vmem:[%s1 + $0x8c] sm:$0xf]
  %v89 = vld [vmem:[%s1 + $0x90] sm:$0xf]
  %v90 = vld [vmem:[%s1 + $0x94] sm:$0xf]
  %v91 = vld [vmem:[%s1 + $0x98] sm:$0xf]
  %v92 = vld [vmem:[%s1 + $0x9c] sm:$0xf]
  %v93 = vld [vmem:[%s1 + $0xa0] sm:$0xf]
  %v94 = vld [vmem:[%s1 + $0xa4] sm:$0xf]
  %v95 = vld [vmem:[%s1 + $0xa8] sm:$0xf]
  %v96 = vld [vmem:[%s1 + $0xac] sm:$0xf]
  %v97 = vld [vmem:[%s1 + $0xb0] sm:$0xf]
  %v98 = vld [vmem:[%s1 + $0xb4] sm:$0xf]
  %v99 = vld [vmem:[%s1 + $0xb8] sm:$0xf]
  %v100 = vld [vmem:[%s1 + $0xbc] sm:$0xf]
  %v101 = vld [vmem:[%s2] sm:$0x1]
  %v103 = vlaneseq
  %v104 = vshrl.u32 %v103, 7
  %v105 = vsub.s32 0, %v104
  %v106 = vrot.slane %v101, %v105
  %v140 = vunpack.c.l.b16 %v21
  %v141 = vunpack.c.h.b16 %v21
  %v142 = vunpack.c.l.b16 %v22
  %v143 = vunpack.c.l.b16 %v23
  %v144 = vunpack.c.h.b16 %v23
  %v145 = vunpack.c.l.b16 %v24
  %v146 = vunpack.c.l.b16 %v25
  %v147 = vunpack.c.h.b16 %v25
  %v148 = vunpack.c.l.b16 %v26
  %v149 = vunpack.c.l.b16 %v27
  %v150 = vunpack.c.h.b16 %v27
  %v151 = vunpack.c.l.b16 %v28
  %v152 = vunpack.c.l.b16 %v29
  %v153 = vunpack.c.h.b16 %v29
  %v154 = vunpack.c.l.b16 %v30
  %v155 = vunpack.c.l.b16 %v31
  %v156 = vunpack.c.h.b16 %v31
  %v157 = vunpack.c.l.b16 %v32
  %v158 = vunpack.c.l.b16 %v33
  %v159 = vunpack.c.h.b16 %v33
  %v160 = vunpack.c.l.b16 %v34
  %v161 = vunpack.c.l.b16 %v35
  %v162 = vunpack.c.h.b16 %v35
  %v163 = vunpack.c.l.b16 %v36
  %v164 = vunpack.c.l.b16 %v37
  %v165 = vunpack.c.h.b16 %v37
  %v166 = vunpack.c.l.b16 %v38
  %v167 = vunpack.c.l.b16 %v39
  %v168 = vunpack.c.h.b16 %v39
  %v169 = vunpack.c.l.b16 %v40
  %v170 = vunpack.c.l.b16 %v41
  %v171 = vunpack.c.h.b16 %v41
  %v172 = vunpack.c.l.b16 %v42
  %v173 = vunpack.c.l.b16 %v43
  %v174 = vunpack.c.h.b16 %v43
  %v175 = vunpack.c.l.b16 %v44
  %v176 = vunpack.c.l.b16 %v45
  %v177 = vunpack.c.h.b16 %v45
  %v178 = vunpack.c.l.b16 %v46
  %v179 = vunpack.c.l.b16 %v47
  %v180 = vunpack.c.h.b16 %v47
  %v181 = vunpack.c.l.b16 %v48
  %v182 = vunpack.c.l.b16 %v49
  %v183 = vunpack.c.h.b16 %v49
  %v184 = vunpack.c.l.b16 %v50
  %v185 = vunpack.c.l.b16 %v51
  %v186 = vunpack.c.h.b16 %v51
  %v187 = vunpack.c.l.b16 %v52
  %v188 = vpack.c.b16 %v143, %v140
  %v189 = vpack.c.b16 %v144, %v141
  %v190 = vpack.c.b16 %v145, %v142
  %v191 = vpack.c.b16 %v149, %v146
  %v192 = vpack.c.b16 %v150, %v147
  %v193 = vpack.c.b16 %v151, %v148
  %v194 = vpack.c.b16 %v155, %v152
  %v195 = vpack.c.b16 %v156, %v153
  %v196 = vpack.c.b16 %v157, %v154
  %v197 = vpack.c.b16 %v161, %v158
  %v198 = vpack.c.b16 %v162, %v159
  %v199 = vpack.c.b16 %v163, %v160
  %v200 = vpack.c.b16 %v167, %v164
  %v201 = vpack.c.b16 %v168, %v165
  %v202 = vpack.c.b16 %v169, %v166
  %v203 = vpack.c.b16 %v173, %v170
  %v204 = vpack.c.b16 %v174, %v171
  %v205 = vpack.c.b16 %v175, %v172
  %v206 = vpack.c.b16 %v179, %v176
  %v207 = vpack.c.b16 %v180, %v177
  %v208 = vpack.c.b16 %v181, %v178
  %v209 = vpack.c.b16 %v185, %v182
  %v210 = vpack.c.b16 %v186, %v183
  %v211 = vpack.c.b16 %v187, %v184
  %v284 = vunpack.c.l.b16 %v53
  %v285 = vunpack.c.l.b16 %v54
  %v286 = vunpack.c.l.b16 %v55
  %v287 = vunpack.c.l.b16 %v56
  %v288 = vunpack.c.l.b16 %v57
  %v289 = vunpack.c.l.b16 %v58
  %v290 = vunpack.c.l.b16 %v59
  %v291 = vunpack.c.l.b16 %v60
  %v292 = vunpack.c.l.b16 %v61
  %v293 = vunpack.c.l.b16 %v62
  %v294 = vunpack.c.l.b16 %v63
  %v295 = vunpack.c.l.b16 %v64
  %v296 = vunpack.c.l.b16 %v65
  %v297 = vunpack.c.l.b16 %v66
  %v298 = vunpack.c.l.b16 %v67
  %v299 = vunpack.c.l.b16 %v68
  %v300 = vunpack.c.l.b16 %v69
  %v301 = vunpack.c.l.b16 %v70
  %v302 = vunpack.c.l.b16 %v71
  %v303 = vunpack.c.l.b16 %v72
  %v304 = vunpack.c.l.b16 %v73
  %v305 = vunpack.c.l.b16 %v74
  %v306 = vunpack.c.l.b16 %v75
  %v307 = vunpack.c.l.b16 %v76
  %v308 = vunpack.c.l.b16 %v77
  %v309 = vunpack.c.l.b16 %v78
  %v310 = vunpack.c.l.b16 %v79
  %v311 = vunpack.c.l.b16 %v80
  %v312 = vunpack.c.l.b16 %v81
  %v313 = vunpack.c.l.b16 %v82
  %v314 = vunpack.c.l.b16 %v83
  %v315 = vunpack.c.l.b16 %v84
  %v316 = vunpack.c.l.b16 %v85
  %v317 = vunpack.c.l.b16 %v86
  %v318 = vunpack.c.l.b16 %v87
  %v319 = vunpack.c.l.b16 %v88
  %v320 = vunpack.c.l.b16 %v89
  %v321 = vunpack.c.l.b16 %v90
  %v322 = vunpack.c.l.b16 %v91
  %v323 = vunpack.c.l.b16 %v92
  %v324 = vunpack.c.l.b16 %v93
  %v325 = vunpack.c.l.b16 %v94
  %v326 = vunpack.c.l.b16 %v95
  %v327 = vunpack.c.l.b16 %v96
  %v328 = vunpack.c.l.b16 %v97
  %v329 = vunpack.c.l.b16 %v98
  %v330 = vunpack.c.l.b16 %v99
  %v331 = vunpack.c.l.b16 %v100
  %v332 = vpack.c.b16 %v285, %v284
  %v333 = vpack.c.b16 %v287, %v286
  %v334 = vpack.c.b16 %v289, %v288
  %v335 = vpack.c.b16 %v291, %v290
  %v336 = vpack.c.b16 %v293, %v292
  %v337 = vpack.c.b16 %v295, %v294
  %v338 = vpack.c.b16 %v297, %v296
  %v339 = vpack.c.b16 %v299, %v298
  %v340 = vpack.c.b16 %v301, %v300
  %v341 = vpack.c.b16 %v303, %v302
  %v342 = vpack.c.b16 %v305, %v304
  %v343 = vpack.c.b16 %v307, %v306
  %v344 = vpack.c.b16 %v309, %v308
  %v345 = vpack.c.b16 %v311, %v310
  %v346 = vpack.c.b16 %v313, %v312
  %v347 = vpack.c.b16 %v315, %v314
  %v348 = vpack.c.b16 %v317, %v316
  %v349 = vpack.c.b16 %v319, %v318
  %v350 = vpack.c.b16 %v321, %v320
  %v351 = vpack.c.b16 %v323, %v322
  %v352 = vpack.c.b16 %v325, %v324
  %v353 = vpack.c.b16 %v327, %v326
  %v354 = vpack.c.b16 %v329, %v328
  %v355 = vpack.c.b16 %v331, %v330
  %380 = vmatprep.subr.bf16.mxu0 0
  %381 = vmatpush1.bf16.msra.mxu0 %v339
  %382 = vmatprep.subr.bf16.mxu0 0
  %383 = vmatpush1.bf16.msra.mxu0 %v338
  %384 = vmatprep.subr.bf16.mxu0 0
  %385 = vmatpush1.bf16.msra.mxu0 %v337
  %386 = vmatprep.subr.bf16.mxu0 0
  %387 = vmatpush1.bf16.msra.mxu0 %v336
  %388 = vmatprep.subr.bf16.mxu0 0
  %389 = vmatpush1.bf16.msra.mxu0 %v335
  %390 = vmatprep.subr.bf16.mxu0 0
  %391 = vmatpush1.bf16.msra.mxu0 %v334
  %392 = vmatprep.subr.bf16.mxu0 0
  %393 = vmatpush1.bf16.msra.mxu0 %v333
  %394 = vmatprep.subr.bf16.mxu0 0
  %395 = vmatpush1.bf16.msra.mxu0 %v332
  %396 = vmatprep.subr.bf16.mxu0 0
  %397 = vmatpush2.bf16.msra.mxu0 %v347
  %398 = vmatprep.subr.bf16.mxu0 0
  %399 = vmatpush2.bf16.msra.mxu0 %v346
  %400 = vmatprep.subr.bf16.mxu0 0
  %401 = vmatpush2.bf16.msra.mxu0 %v345
  %402 = vmatprep.subr.bf16.mxu0 0
  %403 = vmatpush2.bf16.msra.mxu0 %v344
  %404 = vmatprep.subr.bf16.mxu0 0
  %405 = vmatpush2.bf16.msra.mxu0 %v343
  %406 = vmatprep.subr.bf16.mxu0 0
  %407 = vmatpush2.bf16.msra.mxu0 %v342
  %408 = vmatprep.subr.bf16.mxu0 0
  %409 = vmatpush2.bf16.msra.mxu0 %v341
  %410 = vmatprep.subr.bf16.mxu0 0
  %411 = vmatpush2.bf16.msra.mxu0 %v340
  %412 = vmatprep.mubr.bf16.mxu0 %v189
  %413 = vmatmul.mubr.bf16.gmra.mxu0 %v188
  %v414 = vpop.f32.mrf.mxu0
  %v415 = vadd.f32 %v106, %v414
  %v416 = vpop.f32.mrf.mxu0
  %v417 = vpop.f32.mrf.mxu0
  %v418 = vadd.f32 %v106, %v417
  %v419 = vpop.f32.mrf.mxu0
  %420 = vmatprep.mubr.bf16.mxu0 %v192
  %421 = vmatmul.mubr.bf16.gmra.mxu0 %v191
  %v422 = vpop.f32.mrf.mxu0
  %v423 = vadd.f32 %v106, %v422
  %v424 = vpop.f32.mrf.mxu0
  %v425 = vpop.f32.mrf.mxu0
  %v426 = vadd.f32 %v106, %v425
  %v427 = vpop.f32.mrf.mxu0
  %428 = vmatprep.mubr.bf16.mxu0 %v195
  %429 = vmatmul.mubr.bf16.gmra.mxu0 %v194
  %v430 = vpop.f32.mrf.mxu0
  %v431 = vadd.f32 %v106, %v430
  %v432 = vpop.f32.mrf.mxu0
  %v433 = vpop.f32.mrf.mxu0
  %v434 = vadd.f32 %v106, %v433
  %v435 = vpop.f32.mrf.mxu0
  %436 = vmatprep.mubr.bf16.mxu0 %v198
  %437 = vmatmul.mubr.bf16.gmra.mxu0 %v197
  %v438 = vpop.f32.mrf.mxu0
  %v439 = vadd.f32 %v106, %v438
  %v440 = vpop.f32.mrf.mxu0
  %v441 = vpop.f32.mrf.mxu0
  %v442 = vadd.f32 %v106, %v441
  %v443 = vpop.f32.mrf.mxu0
  %444 = vmatprep.mubr.bf16.mxu0 %v201
  %445 = vmatmul.mubr.bf16.gmra.mxu0 %v200
  %v446 = vpop.f32.mrf.mxu0
  %v447 = vadd.f32 %v106, %v446
  %v448 = vpop.f32.mrf.mxu0
  %v449 = vpop.f32.mrf.mxu0
  %v450 = vadd.f32 %v106, %v449
  %v451 = vpop.f32.mrf.mxu0
  %452 = vmatprep.mubr.bf16.mxu0 %v204
  %453 = vmatmul.mubr.bf16.gmra.mxu0 %v203
  %v454 = vpop.f32.mrf.mxu0
  %v455 = vadd.f32 %v106, %v454
  %v456 = vpop.f32.mrf.mxu0
  %v457 = vpop.f32.mrf.mxu0
  %v458 = vadd.f32 %v106, %v457
  %v459 = vpop.f32.mrf.mxu0
  %460 = vmatprep.mubr.bf16.mxu0 %v207
  %461 = vmatmul.mubr.bf16.gmra.mxu0 %v206
  %v462 = vpop.f32.mrf.mxu0
  %v463 = vadd.f32 %v106, %v462
  %v464 = vpop.f32.mrf.mxu0
  %v465 = vpop.f32.mrf.mxu0
  %v466 = vadd.f32 %v106, %v465
  %v467 = vpop.f32.mrf.mxu0
  %468 = vmatprep.mubr.bf16.mxu0 %v210
  %469 = vmatmul.mubr.bf16.gmra.mxu0 %v209
  %v470 = vpop.f32.mrf.mxu0
  %v471 = vadd.f32 %v106, %v470
  %v472 = vpop.f32.mrf.mxu0
  %v473 = vpop.f32.mrf.mxu0
  %v474 = vadd.f32 %v106, %v473
  %v475 = vpop.f32.mrf.mxu0
  %476 = vdwg.mxu0
  %477 = vmatprep.subr.bf16.mxu0 0
  %478 = vmatpush1.bf16.msra.mxu0 %v355
  %479 = vmatprep.subr.bf16.mxu0 0
  %480 = vmatpush1.bf16.msra.mxu0 %v354
  %481 = vmatprep.subr.bf16.mxu0 0
  %482 = vmatpush1.bf16.msra.mxu0 %v353
  %483 = vmatprep.subr.bf16.mxu0 0
  %484 = vmatpush1.bf16.msra.mxu0 %v352
  %485 = vmatprep.subr.bf16.mxu0 0
  %486 = vmatpush1.bf16.msra.mxu0 %v351
  %487 = vmatprep.subr.bf16.mxu0 0
  %488 = vmatpush1.bf16.msra.mxu0 %v350
  %489 = vmatprep.subr.bf16.mxu0 0
  %490 = vmatpush1.bf16.msra.mxu0 %v349
  %491 = vmatprep.subr.bf16.mxu0 0
  %492 = vmatpush1.bf16.msra.mxu0 %v348
  %493 = vmatprep.subr.bf16.mxu0 0
  %494 = vmatpush2.bf16.msra.mxu0 0
  %495 = vmatprep.subr.bf16.mxu0 0
  %496 = vmatpush2.bf16.msra.mxu0 0
  %497 = vmatprep.subr.bf16.mxu0 0
  %498 = vmatpush2.bf16.msra.mxu0 0
  %499 = vmatprep.subr.bf16.mxu0 0
  %500 = vmatpush2.bf16.msra.mxu0 0
  %501 = vmatprep.subr.bf16.mxu0 0
  %502 = vmatpush2.bf16.msra.mxu0 0
  %503 = vmatprep.subr.bf16.mxu0 0
  %504 = vmatpush2.bf16.msra.mxu0 0
  %505 = vmatprep.subr.bf16.mxu0 0
  %506 = vmatpush2.bf16.msra.mxu0 0
  %507 = vmatprep.subr.bf16.mxu0 0
  %508 = vmatpush2.bf16.msra.mxu0 0
  %509 = vmatprep.mubr.bf16.mxu0 0
  %510 = vmatmul.mubr.bf16.gmra.mxu0 %v190
  %v511 = vpop.f32.mrf.mxu0
  %v512 = vadd.f32 %v415, %v511
  %v513 = vpop.f32.mrf.mxu0
  %v514 = vpop.f32.mrf.mxu0
  %v515 = vadd.f32 %v418, %v514
  %v516 = vpop.f32.mrf.mxu0
  %517 = vmatprep.mubr.bf16.mxu0 0
  %518 = vmatmul.mubr.bf16.gmra.mxu0 %v193
  %v519 = vpop.f32.mrf.mxu0
  %v520 = vadd.f32 %v423, %v519
  %v521 = vpop.f32.mrf.mxu0
  %v522 = vpop.f32.mrf.mxu0
  %v523 = vadd.f32 %v426, %v522
  %v524 = vpop.f32.mrf.mxu0
  %525 = vmatprep.mubr.bf16.mxu0 0
  %526 = vmatmul.mubr.bf16.gmra.mxu0 %v196
  %v527 = vpop.f32.mrf.mxu0
  %v528 = vadd.f32 %v431, %v527
  %v529 = vpop.f32.mrf.mxu0
  %v530 = vpop.f32.mrf.mxu0
  %v531 = vadd.f32 %v434, %v530
  %v532 = vpop.f32.mrf.mxu0
  %533 = vmatprep.mubr.bf16.mxu0 0
  %534 = vmatmul.mubr.bf16.gmra.mxu0 %v199
  %v535 = vpop.f32.mrf.mxu0
  %v536 = vadd.f32 %v439, %v535
  %v537 = vpop.f32.mrf.mxu0
  %v538 = vpop.f32.mrf.mxu0
  %v539 = vadd.f32 %v442, %v538
  %v540 = vpop.f32.mrf.mxu0
  %541 = vmatprep.mubr.bf16.mxu0 0
  %542 = vmatmul.mubr.bf16.gmra.mxu0 %v202
  %v543 = vpop.f32.mrf.mxu0
  %v544 = vadd.f32 %v447, %v543
  %v545 = vpop.f32.mrf.mxu0
  %v546 = vpop.f32.mrf.mxu0
  %v547 = vadd.f32 %v450, %v546
  %v548 = vpop.f32.mrf.mxu0
  %549 = vmatprep.mubr.bf16.mxu0 0
  %550 = vmatmul.mubr.bf16.gmra.mxu0 %v205
  %v551 = vpop.f32.mrf.mxu0
  %v552 = vadd.f32 %v455, %v551
  %v553 = vpop.f32.mrf.mxu0
  %v554 = vpop.f32.mrf.mxu0
  %v555 = vadd.f32 %v458, %v554
  %v556 = vpop.f32.mrf.mxu0
  %557 = vmatprep.mubr.bf16.mxu0 0
  %558 = vmatmul.mubr.bf16.gmra.mxu0 %v208
  %v559 = vpop.f32.mrf.mxu0
  %v560 = vadd.f32 %v463, %v559
  %v561 = vpop.f32.mrf.mxu0
  %v562 = vpop.f32.mrf.mxu0
  %v563 = vadd.f32 %v466, %v562
  %v564 = vpop.f32.mrf.mxu0
  %565 = vmatprep.mubr.bf16.mxu0 0
  %566 = vmatmul.mubr.bf16.gmra.mxu0 %v211
  %v567 = vpop.f32.mrf.mxu0
  %v568 = vadd.f32 %v471, %v567
  %v569 = vpop.f32.mrf.mxu0
  %v570 = vpop.f32.mrf.mxu0
  %v571 = vadd.f32 %v474, %v570
  %v572 = vpop.f32.mrf.mxu0
  %573 = vdwg.mxu0
  %v574 = vadd.f32 %v512, %v515
  %v575 = vadd.f32 %v574, %v520
  %v576 = vadd.f32 %v575, %v523
  %v577 = vadd.f32 %v576, %v528
  %v578 = vadd.f32 %v577, %v531
  %v579 = vadd.f32 %v578, %v536
  %v580 = vadd.f32 %v579, %v539
  %v581 = vadd.f32 %v580, %v544
  %v582 = vadd.f32 %v581, %v547
  %v583 = vadd.f32 %v582, %v552
  %v584 = vadd.f32 %v583, %v555
  %v585 = vadd.f32 %v584, %v560
  %v586 = vadd.f32 %v585, %v563
  %v587 = vadd.f32 %v586, %v568
  %v588 = vadd.f32 %v587, %v571
  %v589 = vrot.slane %v588, 4
  %v590 = vadd.f32 %v588, %v589
  %v591 = vrot.slane %v590, 2
  %v592 = vadd.f32 %v590, %v591
  %v593 = vrot.slane %v592, 1
  %v594 = vadd.f32 %v592, %v593
  %v595 = vmul.f32 %v594, 0.0078125
  %v596 = vmul.f32 %v512, %v512
  %v597 = vmul.f32 %v515, %v515
  %v598 = vmul.f32 %v520, %v520
  %v599 = vmul.f32 %v523, %v523
  %v600 = vmul.f32 %v528, %v528
  %v601 = vmul.f32 %v531, %v531
  %v602 = vmul.f32 %v536, %v536
  %v603 = vmul.f32 %v539, %v539
  %v604 = vmul.f32 %v544, %v544
  %v605 = vmul.f32 %v547, %v547
  %v606 = vmul.f32 %v552, %v552
  %v607 = vmul.f32 %v555, %v555
  %v608 = vmul.f32 %v560, %v560
  %v609 = vmul.f32 %v563, %v563
  %v610 = vmul.f32 %v568, %v568
  %v611 = vmul.f32 %v571, %v571
  %v612 = vadd.f32 %v596, %v597
  %v613 = vadd.f32 %v612, %v598
  %v614 = vadd.f32 %v613, %v599
  %v615 = vadd.f32 %v614, %v600
  %v616 = vadd.f32 %v615, %v601
  %v617 = vadd.f32 %v616, %v602
  %v618 = vadd.f32 %v617, %v603
  %v619 = vadd.f32 %v618, %v604
  %v620 = vadd.f32 %v619, %v605
  %v621 = vadd.f32 %v620, %v606
  %v622 = vadd.f32 %v621, %v607
  %v623 = vadd.f32 %v622, %v608
  %v624 = vadd.f32 %v623, %v609
  %v625 = vadd.f32 %v624, %v610
  %v626 = vadd.f32 %v625, %v611
  %v627 = vrot.slane %v626, 4
  %v628 = vadd.f32 %v626, %v627
  %v629 = vrot.slane %v628, 2
  %v630 = vadd.f32 %v628, %v629
  %v631 = vrot.slane %v630, 1
  %v632 = vadd.f32 %v630, %v631
  %v633 = vmul.f32 %v632, 0.0078125
  %v634 = vmul.f32 %v595, %v595
  %v635 = vsub.f32 %v633, %v634
  %v636 = vmax.f32 %v635, 0.0
  %v637 = vld [vmem:[%s3] sm:$0x1]
  %v638 = vadd.f32 %v636, 1e-05
  %v639 = vrsqrt.pop %v638
  %v640 = vmul.f32 %v637, %v639
  %v641 = vld [vmem:[%s4] sm:$0x1]
  %v642 = vmul.f32 %v595, %v640
  %v643 = vsub.f32 %v641, %v642
  %v645 = vlaneseq
  %v646 = vshrl.u32 %v645, 7
  %v647 = vsub.s32 0, %v646
  %v648 = vrot.slane %v640, %v647
  %v650 = vmul.f32 %v512, %v648
  %v651 = vmul.f32 %v515, %v648
  %v652 = vmul.f32 %v520, %v648
  %v653 = vmul.f32 %v523, %v648
  %v654 = vmul.f32 %v528, %v648
  %v655 = vmul.f32 %v531, %v648
  %v656 = vmul.f32 %v536, %v648
  %v657 = vmul.f32 %v539, %v648
  %v658 = vmul.f32 %v544, %v648
  %v659 = vmul.f32 %v547, %v648
  %v660 = vmul.f32 %v552, %v648
  %v661 = vmul.f32 %v555, %v648
  %v662 = vmul.f32 %v560, %v648
  %v663 = vmul.f32 %v563, %v648
  %v664 = vmul.f32 %v568, %v648
  %v665 = vmul.f32 %v571, %v648
  %v667 = vlaneseq
  %v668 = vshrl.u32 %v667, 7
  %v669 = vsub.s32 0, %v668
  %v670 = vrot.slane %v643, %v669
  %v672 = vadd.f32 %v650, %v670
  %v673 = vadd.f32 %v651, %v670
  %v674 = vadd.f32 %v652, %v670
  %v675 = vadd.f32 %v653, %v670
  %v676 = vadd.f32 %v654, %v670
  %v677 = vadd.f32 %v655, %v670
  %v678 = vadd.f32 %v656, %v670
  %v679 = vadd.f32 %v657, %v670
  %v680 = vadd.f32 %v658, %v670
  %v681 = vadd.f32 %v659, %v670
  %v682 = vadd.f32 %v660, %v670
  %v683 = vadd.f32 %v661, %v670
  %v684 = vadd.f32 %v662, %v670
  %v685 = vadd.f32 %v663, %v670
  %v686 = vadd.f32 %v664, %v670
  %v687 = vadd.f32 %v665, %v670
  %v688 = vmax.f32 %v672, 0.0
  %v689 = vmax.f32 %v673, 0.0
  %v690 = vmax.f32 %v674, 0.0
  %v691 = vmax.f32 %v675, 0.0
  %v692 = vmax.f32 %v676, 0.0
  %v693 = vmax.f32 %v677, 0.0
  %v694 = vmax.f32 %v678, 0.0
  %v695 = vmax.f32 %v679, 0.0
  %v696 = vmax.f32 %v680, 0.0
  %v697 = vmax.f32 %v681, 0.0
  %v698 = vmax.f32 %v682, 0.0
  %v699 = vmax.f32 %v683, 0.0
  %v700 = vmax.f32 %v684, 0.0
  %v701 = vmax.f32 %v685, 0.0
  %v702 = vmax.f32 %v686, 0.0
  %v703 = vmax.f32 %v687, 0.0
  %704 = vst [vmem:[%s5] sm:$0xff] %v688
  %705 = vst [vmem:[%s5 + $0x8] sm:$0xff] %v689
  %706 = vst [vmem:[%s5 + $0x10] sm:$0xff] %v690
  %707 = vst [vmem:[%s5 + $0x18] sm:$0xff] %v691
  %708 = vst [vmem:[%s5 + $0x20] sm:$0xff] %v692
  %709 = vst [vmem:[%s5 + $0x28] sm:$0xff] %v693
  %710 = vst [vmem:[%s5 + $0x30] sm:$0xff] %v694
  %711 = vst [vmem:[%s5 + $0x38] sm:$0xff] %v695
  %712 = vst [vmem:[%s5 + $0x40] sm:$0xff] %v696
  %713 = vst [vmem:[%s5 + $0x48] sm:$0xff] %v697
  %714 = vst [vmem:[%s5 + $0x50] sm:$0xff] %v698
  %715 = vst [vmem:[%s5 + $0x58] sm:$0xff] %v699
  %716 = vst [vmem:[%s5 + $0x60] sm:$0xff] %v700
  %717 = vst [vmem:[%s5 + $0x68] sm:$0xff] %v701
  %718 = vst [vmem:[%s5 + $0x70] sm:$0xff] %v702
  %719 = vst [vmem:[%s5 + $0x78] sm:$0xff] %v703
  // Predicated region
  $region22: #{residual_net.14} parent=0 // pred_check
    _
  $region23: #{residual_net.14} parent=0 // pred_check_branch
    %721 = sbr.rel (0) target = $region25
  $region24: #{residual_net.14} parent=0 // pred_region
    _
  $region25: #{residual_net.14} parent=0 // pred_fallthru
    _
  // Predicated region
  $region26: #{residual_net.14} parent=0 // pred_check
    _
  $region27: #{residual_net.14} parent=0 // pred_check_branch
    %723 = sbr.rel (0) target = $region29
  $region28: #{residual_net.14} parent=0 // pred_region
    _
  $region29: #{residual_net.14} parent=0 // pred_fallthru
    _

// kernel: residual_net.15
$region0: #{residual_net.15}
  #allocation0 [shape = 'u32[]', space=smem, size = 0x4, offset = 0x4, fixed_abs, tag = 'smem constant byte address 0x4 - core index']
  #allocation1 [shape = 'u32[144,128]{1,0:T(1,128)}', space=vmem, size = 0x12000, scoped, tag = 'internal scratch']
  %s0 = inlined_call_operand.vmem [shape: bf16[128,384], index: 0, kind: input, shape index: {}]
  %s1 = inlined_call_operand.vmem [shape: bf16[384,128], index: 1, kind: input, shape index: {}]
  %s2 = inlined_call_operand.vmem [shape: f32[1,128], index: 2, kind: input, shape index: {}]
  %s3 = inlined_call_operand.vmem [shape: f32[1,128], index: 3, kind: input, shape index: {}]
  %s4 = inlined_call_operand.vmem [shape: f32[1,128], index: 4, kind: input, shape index: {}]
  %s5 = inlined_call_operand.vmem [shape: f32[128,128], index: 5, kind: input, shape index: {}]
  %s6 = inlined_call_operand.vmem [shape: f32[128,128], index: 6, kind: output, shape index: {}]
  %s7 = sld [smem:[#allocation0]]
  $region34: #{residual_net.15} parent=0
    _
  %s9 = ssub.s32 1, %s7
  %s10 = scalar_select 0, %s9, %s7
  // Predicated region
  $region2: #{residual_net.15} parent=0 // pred_check
    _
  $region3: #{residual_net.15} parent=0 // pred_check_branch
    %12 = sbr.rel (0) target = $region5
  $region4: #{residual_net.15} parent=0 // pred_region
    _
  $region5: #{residual_net.15} parent=0 // pred_fallthru
    _
  // Predicated region
  $region6: #{residual_net.15} parent=0 // pred_check
    _
  $region7: #{residual_net.15} parent=0 // pred_check_branch
    %14 = sbr.rel (0) target = $region9
  $region8: #{residual_net.15} parent=0 // pred_region
    _
  $region9: #{residual_net.15} parent=0 // pred_fallthru
    _
  // Predicated region
  $region10: #{residual_net.15} parent=0 // pred_check
    _
  $region11: #{residual_net.15} parent=0 // pred_check_branch
    %16 = sbr.rel (0) target = $region13
  $region12: #{residual_net.15} parent=0 // pred_region
    _
  $region13: #{residual_net.15} parent=0 // pred_fallthru
    _
  // Predicated region
  $region14: #{residual_net.15} parent=0 // pred_check
    _
  $region15: #{residual_net.15} parent=0 // pred_check_branch
    %18 = sbr.rel (0) target = $region17
  $region16: #{residual_net.15} parent=0 // pred_region
    _
  $region17: #{residual_net.15} parent=0 // pred_fallthru
    _
  // Predicated region
  $region18: #{residual_net.15} parent=0 // pred_check
    _
  $region19: #{residual_net.15} parent=0 // pred_check_branch
    %20 = sbr.rel (0) target = $region21
  $region20: #{residual_net.15} parent=0 // pred_region
    _
  $region21: #{residual_net.15} parent=0 // pred_fallthru
    _
  // Predicated region
  $region22: #{residual_net.15} parent=0 // pred_check
    _
  $region23: #{residual_net.15} parent=0 // pred_check_branch
    %22 = sbr.rel (0) target = $region25
  $region24: #{residual_net.15} parent=0 // pred_region
    _
  $region25: #{residual_net.15} parent=0 // pred_fallthru
    _
  %v24 = vld [vmem:[%s0] sm:$0xff]
  %v25 = vld [vmem:[%s0 + $0x8] sm:$0xf]
  %v26 = vld [vmem:[%s0 + $0xc] sm:$0xff]
  %v27 = vld [vmem:[%s0 + $0x14] sm:$0xf]
  %v28 = vld [vmem:[%s0 + $0x18] sm:$0xff]
  %v29 = vld [vmem:[%s0 + $0x20] sm:$0xf]
  %v30 = vld [vmem:[%s0 + $0x24] sm:$0xff]
  %v31 = vld [vmem:[%s0 + $0x2c] sm:$0xf]
  %v32 = vld [vmem:[%s0 + $0x30] sm:$0xff]
  %v33 = vld [vmem:[%s0 + $0x38] sm:$0xf]
  %v34 = vld [vmem:[%s0 + $0x3c] sm:$0xff]
  %v35 = vld [vmem:[%s0 + $0x44] sm:$0xf]
  %v36 = vld [vmem:[%s0 + $0x48] sm:$0xff]
  %v37 = vld [vmem:[%s0 + $0x50] sm:$0xf]
  %v38 = vld [vmem:[%s0 + $0x54] sm:$0xff]
  %v39 = vld [vmem:[%s0 + $0x5c] sm:$0xf]
  %v40 = vld [vmem:[%s0 + $0x60] sm:$0xff]
  %v41 = vld [vmem:[%s0 + $0x68] sm:$0xf]
  %v42 = vld [vmem:[%s0 + $0x6c] sm:$0xff]
  %v43 = vld [vmem:[%s0 + $0x74] sm:$0xf]
  %v44 = vld [vmem:[%s0 + $0x78] sm:$0xff]
  %v45 = vld [vmem:[%s0 + $0x80] sm:$0xf]
  %v46 = vld [vmem:[%s0 + $0x84] sm:$0xff]
  %v47 = vld [vmem:[%s0 + $0x8c] sm:$0xf]
  %v48 = vld [vmem:[%s0 + $0x90] sm:$0xff]
  %v49 = vld [vmem:[%s0 + $0x98] sm:$0xf]
  %v50 = vld [vmem:[%s0 + $0x9c] sm:$0xff]
  %v51 = vld [vmem:[%s0 + $0xa4] sm:$0xf]
  %v52 = vld [vmem:[%s0 + $0xa8] sm:$0xff]
  %v53 = vld [vmem:[%s0 + $0xb0] sm:$0xf]
  %v54 = vld [vmem:[%s0 + $0xb4] sm:$0xff]
  %v55 = vld [vmem:[%s0 + $0xbc] sm:$0xf]
  %v56 = vld [vmem:[%s1] sm:$0xf]
  %v57 = vld [vmem:[%s1 + $0x4] sm:$0xf]
  %v58 = vld [vmem:[%s1 + $0x8] sm:$0xf]
  %v59 = vld [vmem:[%s1 + $0xc] sm:$0xf]
  %v60 = vld [vmem:[%s1 + $0x10] sm:$0xf]
  %v61 = vld [vmem:[%s1 + $0x14] sm:$0xf]
  %v62 = vld [vmem:[%s1 + $0x18] sm:$0xf]
  %v63 = vld [vmem:[%s1 + $0x1c] sm:$0xf]
  %v64 = vld [vmem:[%s1 + $0x20] sm:$0xf]
  %v65 = vld [vmem:[%s1 + $0x24] sm:$0xf]
  %v66 = vld [vmem:[%s1 + $0x28] sm:$0xf]
  %v67 = vld [vmem:[%s1 + $0x2c] sm:$0xf]
  %v68 = vld [vmem:[%s1 + $0x30] sm:$0xf]
  %v69 = vld [vmem:[%s1 + $0x34] sm:$0xf]
  %v70 = vld [vmem:[%s1 + $0x38] sm:$0xf]
  %v71 = vld [vmem:[%s1 + $0x3c] sm:$0xf]
  %v72 = vld [vmem:[%s1 + $0x40] sm:$0xf]
  %v73 = vld [vmem:[%s1 + $0x44] sm:$0xf]
  %v74 = vld [vmem:[%s1 + $0x48] sm:$0xf]
  %v75 = vld [vmem:[%s1 + $0x4c] sm:$0xf]
  %v76 = vld [vmem:[%s1 + $0x50] sm:$0xf]
  %v77 = vld [vmem:[%s1 + $0x54] sm:$0xf]
  %v78 = vld [vmem:[%s1 + $0x58] sm:$0xf]
  %v79 = vld [vmem:[%s1 + $0x5c] sm:$0xf]
  %v80 = vld [vmem:[%s1 + $0x60] sm:$0xf]
  %v81 = vld [vmem:[%s1 + $0x64] sm:$0xf]
  %v82 = vld [vmem:[%s1 + $0x68] sm:$0xf]
  %v83 = vld [vmem:[%s1 + $0x6c] sm:$0xf]
  %v84 = vld [vmem:[%s1 + $0x70] sm:$0xf]
  %v85 = vld [vmem:[%s1 + $0x74] sm:$0xf]
  %v86 = vld [vmem:[%s1 + $0x78] sm:$0xf]
  %v87 = vld [vmem:[%s1 + $0x7c] sm:$0xf]
  %v88 = vld [vmem:[%s1 + $0x80] sm:$0xf]
  %v89 = vld [vmem:[%s1 + $0x84] sm:$0xf]
  %v90 = vld [vmem:[%s1 + $0x88] sm:$0xf]
  %v91 = vld [vmem:[%s1 + $0x8c] sm:$0xf]
  %v92 = vld [vmem:[%s1 + $0x90] sm:$0xf]
  %v93 = vld [vmem:[%s1 + $0x94] sm:$0xf]
  %v94 = vld [vmem:[%s1 + $0x98] sm:$0xf]
  %v95 = vld [vmem:[%s1 + $0x9c] sm:$0xf]
  %v96 = vld [vmem:[%s1 + $0xa0] sm:$0xf]
  %v97 = vld [vmem:[%s1 + $0xa4] sm:$0xf]
  %v98 = vld [vmem:[%s1 + $0xa8] sm:$0xf]
  %v99 = vld [vmem:[%s1 + $0xac] sm:$0xf]
  %v100 = vld [vmem:[%s1 + $0xb0] sm:$0xf]
  %v101 = vld [vmem:[%s1 + $0xb4] sm:$0xf]
  %v102 = vld [vmem:[%s1 + $0xb8] sm:$0xf]
  %v103 = vld [vmem:[%s1 + $0xbc] sm:$0xf]
  %v104 = vld [vmem:[%s2] sm:$0x1]
  %v106 = vlaneseq
  %v107 = vshrl.u32 %v106, 7
  %v108 = vsub.s32 0, %v107
  %v109 = vrot.slane %v104, %v108
  %v143 = vunpack.c.l.b16 %v24
  %v144 = vunpack.c.h.b16 %v24
  %v145 = vunpack.c.l.b16 %v25
  %v146 = vunpack.c.l.b16 %v26
  %v147 = vunpack.c.h.b16 %v26
  %v148 = vunpack.c.l.b16 %v27
  %v149 = vunpack.c.l.b16 %v28
  %v150 = vunpack.c.h.b16 %v28
  %v151 = vunpack.c.l.b16 %v29
  %v152 = vunpack.c.l.b16 %v30
  %v153 = vunpack.c.h.b16 %v30
  %v154 = vunpack.c.l.b16 %v31
  %v155 = vunpack.c.l.b16 %v32
  %v156 = vunpack.c.h.b16 %v32
  %v157 = vunpack.c.l.b16 %v33
  %v158 = vunpack.c.l.b16 %v34
  %v159 = vunpack.c.h.b16 %v34
  %v160 = vunpack.c.l.b16 %v35
  %v161 = vunpack.c.l.b16 %v36
  %v162 = vunpack.c.h.b16 %v36
  %v163 = vunpack.c.l.b16 %v37
  %v164 = vunpack.c.l.b16 %v38
  %v165 = vunpack.c.h.b16 %v38
  %v166 = vunpack.c.l.b16 %v39
  %v167 = vunpack.c.l.b16 %v40
  %v168 = vunpack.c.h.b16 %v40
  %v169 = vunpack.c.l.b16 %v41
  %v170 = vunpack.c.l.b16 %v42
  %v171 = vunpack.c.h.b16 %v42
  %v172 = vunpack.c.l.b16 %v43
  %v173 = vunpack.c.l.b16 %v44
  %v174 = vunpack.c.h.b16 %v44
  %v175 = vunpack.c.l.b16 %v45
  %v176 = vunpack.c.l.b16 %v46
  %v177 = vunpack.c.h.b16 %v46
  %v178 = vunpack.c.l.b16 %v47
  %v179 = vunpack.c.l.b16 %v48
  %v180 = vunpack.c.h.b16 %v48
  %v181 = vunpack.c.l.b16 %v49
  %v182 = vunpack.c.l.b16 %v50
  %v183 = vunpack.c.h.b16 %v50
  %v184 = vunpack.c.l.b16 %v51
  %v185 = vunpack.c.l.b16 %v52
  %v186 = vunpack.c.h.b16 %v52
  %v187 = vunpack.c.l.b16 %v53
  %v188 = vunpack.c.l.b16 %v54
  %v189 = vunpack.c.h.b16 %v54
  %v190 = vunpack.c.l.b16 %v55
  %v191 = vpack.c.b16 %v146, %v143
  %v192 = vpack.c.b16 %v147, %v144
  %v193 = vpack.c.b16 %v148, %v145
  %v194 = vpack.c.b16 %v152, %v149
  %v195 = vpack.c.b16 %v153, %v150
  %v196 = vpack.c.b16 %v154, %v151
  %v197 = vpack.c.b16 %v158, %v155
  %v198 = vpack.c.b16 %v159, %v156
  %v199 = vpack.c.b16 %v160, %v157
  %v200 = vpack.c.b16 %v164, %v161
  %v201 = vpack.c.b16 %v165, %v162
  %v202 = vpack.c.b16 %v166, %v163
  %v203 = vpack.c.b16 %v170, %v167
  %v204 = vpack.c.b16 %v171, %v168
  %v205 = vpack.c.b16 %v172, %v169
  %v206 = vpack.c.b16 %v176, %v173
  %v207 = vpack.c.b16 %v177, %v174
  %v208 = vpack.c.b16 %v178, %v175
  %v209 = vpack.c.b16 %v182, %v179
  %v210 = vpack.c.b16 %v183, %v180
  %v211 = vpack.c.b16 %v184, %v181
  %v212 = vpack.c.b16 %v188, %v185
  %v213 = vpack.c.b16 %v189, %v186
  %v214 = vpack.c.b16 %v190, %v187
  %v287 = vunpack.c.l.b16 %v56
  %v288 = vunpack.c.l.b16 %v57
  %v289 = vunpack.c.l.b16 %v58
  %v290 = vunpack.c.l.b16 %v59
  %v291 = vunpack.c.l.b16 %v60
  %v292 = vunpack.c.l.b16 %v61
  %v293 = vunpack.c.l.b16 %v62
  %v294 = vunpack.c.l.b16 %v63
  %v295 = vunpack.c.l.b16 %v64
  %v296 = vunpack.c.l.b16 %v65
  %v297 = vunpack.c.l.b16 %v66
  %v298 = vunpack.c.l.b16 %v67
  %v299 = vunpack.c.l.b16 %v68
  %v300 = vunpack.c.l.b16 %v69
  %v301 = vunpack.c.l.b16 %v70
  %v302 = vunpack.c.l.b16 %v71
  %v303 = vunpack.c.l.b16 %v72
  %v304 = vunpack.c.l.b16 %v73
  %v305 = vunpack.c.l.b16 %v74
  %v306 = vunpack.c.l.b16 %v75
  %v307 = vunpack.c.l.b16 %v76
  %v308 = vunpack.c.l.b16 %v77
  %v309 = vunpack.c.l.b16 %v78
  %v310 = vunpack.c.l.b16 %v79
  %v311 = vunpack.c.l.b16 %v80
  %v312 = vunpack.c.l.b16 %v81
  %v313 = vunpack.c.l.b16 %v82
  %v314 = vunpack.c.l.b16 %v83
  %v315 = vunpack.c.l.b16 %v84
  %v316 = vunpack.c.l.b16 %v85
  %v317 = vunpack.c.l.b16 %v86
  %v318 = vunpack.c.l.b16 %v87
  %v319 = vunpack.c.l.b16 %v88
  %v320 = vunpack.c.l.b16 %v89
  %v321 = vunpack.c.l.b16 %v90
  %v322 = vunpack.c.l.b16 %v91
  %v323 = vunpack.c.l.b16 %v92
  %v324 = vunpack.c.l.b16 %v93
  %v325 = vunpack.c.l.b16 %v94
  %v326 = vunpack.c.l.b16 %v95
  %v327 = vunpack.c.l.b16 %v96
  %v328 = vunpack.c.l.b16 %v97
  %v329 = vunpack.c.l.b16 %v98
  %v330 = vunpack.c.l.b16 %v99
  %v331 = vunpack.c.l.b16 %v100
  %v332 = vunpack.c.l.b16 %v101
  %v333 = vunpack.c.l.b16 %v102
  %v334 = vunpack.c.l.b16 %v103
  %v335 = vpack.c.b16 %v288, %v287
  %v336 = vpack.c.b16 %v290, %v289
  %v337 = vpack.c.b16 %v292, %v291
  %v338 = vpack.c.b16 %v294, %v293
  %v339 = vpack.c.b16 %v296, %v295
  %v340 = vpack.c.b16 %v298, %v297
  %v341 = vpack.c.b16 %v300, %v299
  %v342 = vpack.c.b16 %v302, %v301
  %v343 = vpack.c.b16 %v304, %v303
  %v344 = vpack.c.b16 %v306, %v305
  %v345 = vpack.c.b16 %v308, %v307
  %v346 = vpack.c.b16 %v310, %v309
  %v347 = vpack.c.b16 %v312, %v311
  %v348 = vpack.c.b16 %v314, %v313
  %v349 = vpack.c.b16 %v316, %v315
  %v350 = vpack.c.b16 %v318, %v317
  %v351 = vpack.c.b16 %v320, %v319
  %v352 = vpack.c.b16 %v322, %v321
  %v353 = vpack.c.b16 %v324, %v323
  %v354 = vpack.c.b16 %v326, %v325
  %v355 = vpack.c.b16 %v328, %v327
  %v356 = vpack.c.b16 %v330, %v329
  %v357 = vpack.c.b16 %v332, %v331
  %v358 = vpack.c.b16 %v334, %v333
  %383 = vmatprep.subr.bf16.mxu0 0
  %384 = vmatpush1.bf16.msra.mxu0 %v342
  %385 = vmatprep.subr.bf16.mxu0 0
  %386 = vmatpush1.bf16.msra.mxu0 %v341
  %387 = vmatprep.subr.bf16.mxu0 0
  %388 = vmatpush1.bf16.msra.mxu0 %v340
  %389 = vmatprep.subr.bf16.mxu0 0
  %390 = vmatpush1.bf16.msra.mxu0 %v339
  %391 = vmatprep.subr.bf16.mxu0 0
  %392 = vmatpush1.bf16.msra.mxu0 %v338
  %393 = vmatprep.subr.bf16.mxu0 0
  %394 = vmatpush1.bf16.msra.mxu0 %v337
  %395 = vmatprep.subr.bf16.mxu0 0
  %396 = vmatpush1.bf16.msra.mxu0 %v336
  %397 = vmatprep.subr.bf16.mxu0 0
  %398 = vmatpush1.bf16.msra.mxu0 %v335
  %399 = vmatprep.subr.bf16.mxu0 0
  %400 = vmatpush2.bf16.msra.mxu0 %v350
  %401 = vmatprep.subr.bf16.mxu0 0
  %402 = vmatpush2.bf16.msra.mxu0 %v349
  %403 = vmatprep.subr.bf16.mxu0 0
  %404 = vmatpush2.bf16.msra.mxu0 %v348
  %405 = vmatprep.subr.bf16.mxu0 0
  %406 = vmatpush2.bf16.msra.mxu0 %v347
  %407 = vmatprep.subr.bf16.mxu0 0
  %408 = vmatpush2.bf16.msra.mxu0 %v346
  %409 = vmatprep.subr.bf16.mxu0 0
  %410 = vmatpush2.bf16.msra.mxu0 %v345
  %411 = vmatprep.subr.bf16.mxu0 0
  %412 = vmatpush2.bf16.msra.mxu0 %v344
  %413 = vmatprep.subr.bf16.mxu0 0
  %414 = vmatpush2.bf16.msra.mxu0 %v343
  %415 = vmatprep.mubr.bf16.mxu0 %v192
  %416 = vmatmul.mubr.bf16.gmra.mxu0 %v191
  %v417 = vpop.f32.mrf.mxu0
  %v418 = vadd.f32 %v109, %v417
  %v419 = vpop.f32.mrf.mxu0
  %v420 = vpop.f32.mrf.mxu0
  %v421 = vadd.f32 %v109, %v420
  %v422 = vpop.f32.mrf.mxu0
  %423 = vmatprep.mubr.bf16.mxu0 %v195
  %424 = vmatmul.mubr.bf16.gmra.mxu0 %v194
  %v425 = vpop.f32.mrf.mxu0
  %v426 = vadd.f32 %v109, %v425
  %v427 = vpop.f32.mrf.mxu0
  %v428 = vpop.f32.mrf.mxu0
  %v429 = vadd.f32 %v109, %v428
  %v430 = vpop.f32.mrf.mxu0
  %431 = vmatprep.mubr.bf16.mxu0 %v198
  %432 = vmatmul.mubr.bf16.gmra.mxu0 %v197
  %v433 = vpop.f32.mrf.mxu0
  %v434 = vadd.f32 %v109, %v433
  %v435 = vpop.f32.mrf.mxu0
  %v436 = vpop.f32.mrf.mxu0
  %v437 = vadd.f32 %v109, %v436
  %v438 = vpop.f32.mrf.mxu0
  %439 = vmatprep.mubr.bf16.mxu0 %v201
  %440 = vmatmul.mubr.bf16.gmra.mxu0 %v200
  %v441 = vpop.f32.mrf.mxu0
  %v442 = vadd.f32 %v109, %v441
  %v443 = vpop.f32.mrf.mxu0
  %v444 = vpop.f32.mrf.mxu0
  %v445 = vadd.f32 %v109, %v444
  %v446 = vpop.f32.mrf.mxu0
  %447 = vmatprep.mubr.bf16.mxu0 %v204
  %448 = vmatmul.mubr.bf16.gmra.mxu0 %v203
  %v449 = vpop.f32.mrf.mxu0
  %v450 = vadd.f32 %v109, %v449
  %v451 = vpop.f32.mrf.mxu0
  %v452 = vpop.f32.mrf.mxu0
  %v453 = vadd.f32 %v109, %v452
  %v454 = vpop.f32.mrf.mxu0
  %455 = vmatprep.mubr.bf16.mxu0 %v207
  %456 = vmatmul.mubr.bf16.gmra.mxu0 %v206
  %v457 = vpop.f32.mrf.mxu0
  %v458 = vadd.f32 %v109, %v457
  %v459 = vpop.f32.mrf.mxu0
  %v460 = vpop.f32.mrf.mxu0
  %v461 = vadd.f32 %v109, %v460
  %v462 = vpop.f32.mrf.mxu0
  %463 = vmatprep.mubr.bf16.mxu0 %v210
  %464 = vmatmul.mubr.bf16.gmra.mxu0 %v209
  %v465 = vpop.f32.mrf.mxu0
  %v466 = vadd.f32 %v109, %v465
  %v467 = vpop.f32.mrf.mxu0
  %v468 = vpop.f32.mrf.mxu0
  %v469 = vadd.f32 %v109, %v468
  %v470 = vpop.f32.mrf.mxu0
  %471 = vmatprep.mubr.bf16.mxu0 %v213
  %472 = vmatmul.mubr.bf16.gmra.mxu0 %v212
  %v473 = vpop.f32.mrf.mxu0
  %v474 = vadd.f32 %v109, %v473
  %v475 = vpop.f32.mrf.mxu0
  %v476 = vpop.f32.mrf.mxu0
  %v477 = vadd.f32 %v109, %v476
  %v478 = vpop.f32.mrf.mxu0
  %479 = vdwg.mxu0
  %480 = vmatprep.subr.bf16.mxu0 0
  %481 = vmatpush1.bf16.msra.mxu0 %v358
  %482 = vmatprep.subr.bf16.mxu0 0
  %483 = vmatpush1.bf16.msra.mxu0 %v357
  %484 = vmatprep.subr.bf16.mxu0 0
  %485 = vmatpush1.bf16.msra.mxu0 %v356
  %486 = vmatprep.subr.bf16.mxu0 0
  %487 = vmatpush1.bf16.msra.mxu0 %v355
  %488 = vmatprep.subr.bf16.mxu0 0
  %489 = vmatpush1.bf16.msra.mxu0 %v354
  %490 = vmatprep.subr.bf16.mxu0 0
  %491 = vmatpush1.bf16.msra.mxu0 %v353
  %492 = vmatprep.subr.bf16.mxu0 0
  %493 = vmatpush1.bf16.msra.mxu0 %v352
  %494 = vmatprep.subr.bf16.mxu0 0
  %495 = vmatpush1.bf16.msra.mxu0 %v351
  %496 = vmatprep.subr.bf16.mxu0 0
  %497 = vmatpush2.bf16.msra.mxu0 0
  %498 = vmatprep.subr.bf16.mxu0 0
  %499 = vmatpush2.bf16.msra.mxu0 0
  %500 = vmatprep.subr.bf16.mxu0 0
  %501 = vmatpush2.bf16.msra.mxu0 0
  %502 = vmatprep.subr.bf16.mxu0 0
  %503 = vmatpush2.bf16.msra.mxu0 0
  %504 = vmatprep.subr.bf16.mxu0 0
  %505 = vmatpush2.bf16.msra.mxu0 0
  %506 = vmatprep.subr.bf16.mxu0 0
  %507 = vmatpush2.bf16.msra.mxu0 0
  %508 = vmatprep.subr.bf16.mxu0 0
  %509 = vmatpush2.bf16.msra.mxu0 0
  %510 = vmatprep.subr.bf16.mxu0 0
  %511 = vmatpush2.bf16.msra.mxu0 0
  %512 = vmatprep.mubr.bf16.mxu0 0
  %513 = vmatmul.mubr.bf16.gmra.mxu0 %v193
  %v514 = vpop.f32.mrf.mxu0
  %v515 = vadd.f32 %v418, %v514
  %v516 = vpop.f32.mrf.mxu0
  %v517 = vpop.f32.mrf.mxu0
  %v518 = vadd.f32 %v421, %v517
  %v519 = vpop.f32.mrf.mxu0
  %520 = vmatprep.mubr.bf16.mxu0 0
  %521 = vmatmul.mubr.bf16.gmra.mxu0 %v196
  %v522 = vpop.f32.mrf.mxu0
  %v523 = vadd.f32 %v426, %v522
  %v524 = vpop.f32.mrf.mxu0
  %v525 = vpop.f32.mrf.mxu0
  %v526 = vadd.f32 %v429, %v525
  %v527 = vpop.f32.mrf.mxu0
  %528 = vmatprep.mubr.bf16.mxu0 0
  %529 = vmatmul.mubr.bf16.gmra.mxu0 %v199
  %v530 = vpop.f32.mrf.mxu0
  %v531 = vadd.f32 %v434, %v530
  %v532 = vpop.f32.mrf.mxu0
  %v533 = vpop.f32.mrf.mxu0
  %v534 = vadd.f32 %v437, %v533
  %v535 = vpop.f32.mrf.mxu0
  %536 = vmatprep.mubr.bf16.mxu0 0
  %537 = vmatmul.mubr.bf16.gmra.mxu0 %v202
  %v538 = vpop.f32.mrf.mxu0
  %v539 = vadd.f32 %v442, %v538
  %v540 = vpop.f32.mrf.mxu0
  %v541 = vpop.f32.mrf.mxu0
  %v542 = vadd.f32 %v445, %v541
  %v543 = vpop.f32.mrf.mxu0
  %544 = vmatprep.mubr.bf16.mxu0 0
  %545 = vmatmul.mubr.bf16.gmra.mxu0 %v205
  %v546 = vpop.f32.mrf.mxu0
  %v547 = vadd.f32 %v450, %v546
  %v548 = vpop.f32.mrf.mxu0
  %v549 = vpop.f32.mrf.mxu0
  %v550 = vadd.f32 %v453, %v549
  %v551 = vpop.f32.mrf.mxu0
  %552 = vmatprep.mubr.bf16.mxu0 0
  %553 = vmatmul.mubr.bf16.gmra.mxu0 %v208
  %v554 = vpop.f32.mrf.mxu0
  %v555 = vadd.f32 %v458, %v554
  %v556 = vpop.f32.mrf.mxu0
  %v557 = vpop.f32.mrf.mxu0
  %v558 = vadd.f32 %v461, %v557
  %v559 = vpop.f32.mrf.mxu0
  %560 = vmatprep.mubr.bf16.mxu0 0
  %561 = vmatmul.mubr.bf16.gmra.mxu0 %v211
  %v562 = vpop.f32.mrf.mxu0
  %v563 = vadd.f32 %v466, %v562
  %v564 = vpop.f32.mrf.mxu0
  %v565 = vpop.f32.mrf.mxu0
  %v566 = vadd.f32 %v469, %v565
  %v567 = vpop.f32.mrf.mxu0
  %568 = vmatprep.mubr.bf16.mxu0 0
  %569 = vmatmul.mubr.bf16.gmra.mxu0 %v214
  %v570 = vpop.f32.mrf.mxu0
  %v571 = vadd.f32 %v474, %v570
  %v572 = vpop.f32.mrf.mxu0
  %v573 = vpop.f32.mrf.mxu0
  %v574 = vadd.f32 %v477, %v573
  %v575 = vpop.f32.mrf.mxu0
  %576 = vdwg.mxu0
  %v577 = vadd.f32 %v515, %v518
  %v578 = vadd.f32 %v577, %v523
  %v579 = vadd.f32 %v578, %v526
  %v580 = vadd.f32 %v579, %v531
  %v581 = vadd.f32 %v580, %v534
  %v582 = vadd.f32 %v581, %v539
  %v583 = vadd.f32 %v582, %v542
  %v584 = vadd.f32 %v583, %v547
  %v585 = vadd.f32 %v584, %v550
  %v586 = vadd.f32 %v585, %v555
  %v587 = vadd.f32 %v586, %v558
  %v588 = vadd.f32 %v587, %v563
  %v589 = vadd.f32 %v588, %v566
  %v590 = vadd.f32 %v589, %v571
  %v591 = vadd.f32 %v590, %v574
  %v592 = vrot.slane %v591, 4
  %v593 = vadd.f32 %v591, %v592
  %v594 = vrot.slane %v593, 2
  %v595 = vadd.f32 %v593, %v594
  %v596 = vrot.slane %v595, 1
  %v597 = vadd.f32 %v595, %v596
  %v598 = vmul.f32 %v597, 0.0078125
  %v599 = vmul.f32 %v515, %v515
  %v600 = vmul.f32 %v518, %v518
  %v601 = vmul.f32 %v523, %v523
  %v602 = vmul.f32 %v526, %v526
  %v603 = vmul.f32 %v531, %v531
  %v604 = vmul.f32 %v534, %v534
  %v605 = vmul.f32 %v539, %v539
  %v606 = vmul.f32 %v542, %v542
  %v607 = vmul.f32 %v547, %v547
  %v608 = vmul.f32 %v550, %v550
  %v609 = vmul.f32 %v555, %v555
  %v610 = vmul.f32 %v558, %v558
  %v611 = vmul.f32 %v563, %v563
  %v612 = vmul.f32 %v566, %v566
  %v613 = vmul.f32 %v571, %v571
  %v614 = vmul.f32 %v574, %v574
  %v615 = vadd.f32 %v599, %v600
  %v616 = vadd.f32 %v615, %v601
  %v617 = vadd.f32 %v616, %v602
  %v618 = vadd.f32 %v617, %v603
  %v619 = vadd.f32 %v618, %v604
  %v620 = vadd.f32 %v619, %v605
  %v621 = vadd.f32 %v620, %v606
  %v622 = vadd.f32 %v621, %v607
  %v623 = vadd.f32 %v622, %v608
  %v624 = vadd.f32 %v623, %v609
  %v625 = vadd.f32 %v624, %v610
  %v626 = vadd.f32 %v625, %v611
  %v627 = vadd.f32 %v626, %v612
  %v628 = vadd.f32 %v627, %v613
  %v629 = vadd.f32 %v628, %v614
  %v630 = vrot.slane %v629, 4
  %v631 = vadd.f32 %v629, %v630
  %v632 = vrot.slane %v631, 2
  %v633 = vadd.f32 %v631, %v632
  %v634 = vrot.slane %v633, 1
  %v635 = vadd.f32 %v633, %v634
  %v636 = vmul.f32 %v635, 0.0078125
  %v637 = vmul.f32 %v598, %v598
  %v638 = vsub.f32 %v636, %v637
  %v639 = vmax.f32 %v638, 0.0
  %v640 = vld [vmem:[%s3] sm:$0x1]
  %v641 = vadd.f32 %v639, 1e-05
  %v642 = vrsqrt.pop %v641
  %v643 = vmul.f32 %v640, %v642
  %v644 = vld [vmem:[%s4] sm:$0x1]
  %v645 = vmul.f32 %v598, %v643
  %v646 = vsub.f32 %v644, %v645
  %v648 = vlaneseq
  %v649 = vshrl.u32 %v648, 7
  %v650 = vsub.s32 0, %v649
  %v651 = vrot.slane %v643, %v650
  %v653 = vmul.f32 %v515, %v651
  %v654 = vmul.f32 %v518, %v651
  %v655 = vmul.f32 %v523, %v651
  %v656 = vmul.f32 %v526, %v651
  %v657 = vmul.f32 %v531, %v651
  %v658 = vmul.f32 %v534, %v651
  %v659 = vmul.f32 %v539, %v651
  %v660 = vmul.f32 %v542, %v651
  %v661 = vmul.f32 %v547, %v651
  %v662 = vmul.f32 %v550, %v651
  %v663 = vmul.f32 %v555, %v651
  %v664 = vmul.f32 %v558, %v651
  %v665 = vmul.f32 %v563, %v651
  %v666 = vmul.f32 %v566, %v651
  %v667 = vmul.f32 %v571, %v651
  %v668 = vmul.f32 %v574, %v651
  %v670 = vlaneseq
  %v671 = vshrl.u32 %v670, 7
  %v672 = vsub.s32 0, %v671
  %v673 = vrot.slane %v646, %v672
  %v675 = vadd.f32 %v653, %v673
  %v676 = vadd.f32 %v654, %v673
  %v677 = vadd.f32 %v655, %v673
  %v678 = vadd.f32 %v656, %v673
  %v679 = vadd.f32 %v657, %v673
  %v680 = vadd.f32 %v658, %v673
  %v681 = vadd.f32 %v659, %v673
  %v682 = vadd.f32 %v660, %v673
  %v683 = vadd.f32 %v661, %v673
  %v684 = vadd.f32 %v662, %v673
  %v685 = vadd.f32 %v663, %v673
  %v686 = vadd.f32 %v664, %v673
  %v687 = vadd.f32 %v665, %v673
  %v688 = vadd.f32 %v666, %v673
  %v689 = vadd.f32 %v667, %v673
  %v690 = vadd.f32 %v668, %v673
  %v691 = vld [vmem:[%s5] sm:$0xff]
  %v692 = vld [vmem:[%s5 + $0x8] sm:$0xff]
  %v693 = vld [vmem:[%s5 + $0x10] sm:$0xff]
  %v694 = vld [vmem:[%s5 + $0x18] sm:$0xff]
  %v695 = vld [vmem:[%s5 + $0x20] sm:$0xff]
  %v696 = vld [vmem:[%s5 + $0x28] sm:$0xff]
  %v697 = vld [vmem:[%s5 + $0x30] sm:$0xff]
  %v698 = vld [vmem:[%s5 + $0x38] sm:$0xff]
  %v699 = vld [vmem:[%s5 + $0x40] sm:$0xff]
  %v700 = vld [vmem:[%s5 + $0x48] sm:$0xff]
  %v701 = vld [vmem:[%s5 + $0x50] sm:$0xff]
  %v702 = vld [vmem:[%s5 + $0x58] sm:$0xff]
  %v703 = vld [vmem:[%s5 + $0x60] sm:$0xff]
  %v704 = vld [vmem:[%s5 + $0x68] sm:$0xff]
  %v705 = vld [vmem:[%s5 + $0x70] sm:$0xff]
  %v706 = vld [vmem:[%s5 + $0x78] sm:$0xff]
  %v707 = vadd.f32 %v675, %v691
  %v708 = vadd.f32 %v676, %v692
  %v709 = vadd.f32 %v677, %v693
  %v710 = vadd.f32 %v678, %v694
  %v711 = vadd.f32 %v679, %v695
  %v712 = vadd.f32 %v680, %v696
  %v713 = vadd.f32 %v681, %v697
  %v714 = vadd.f32 %v682, %v698
  %v715 = vadd.f32 %v683, %v699
  %v716 = vadd.f32 %v684, %v700
  %v717 = vadd.f32 %v685, %v701
  %v718 = vadd.f32 %v686, %v702
  %v719 = vadd.f32 %v687, %v703
  %v720 = vadd.f32 %v688, %v704
  %v721 = vadd.f32 %v689, %v705
  %v722 = vadd.f32 %v690, %v706
  %v723 = vmax.f32 %v707, 0.0
  %v724 = vmax.f32 %v708, 0.0
  %v725 = vmax.f32 %v709, 0.0
  %v726 = vmax.f32 %v710, 0.0
  %v727 = vmax.f32 %v711, 0.0
  %v728 = vmax.f32 %v712, 0.0
  %v729 = vmax.f32 %v713, 0.0
  %v730 = vmax.f32 %v714, 0.0
  %v731 = vmax.f32 %v715, 0.0
  %v732 = vmax.f32 %v716, 0.0
  %v733 = vmax.f32 %v717, 0.0
  %v734 = vmax.f32 %v718, 0.0
  %v735 = vmax.f32 %v719, 0.0
  %v736 = vmax.f32 %v720, 0.0
  %v737 = vmax.f32 %v721, 0.0
  %v738 = vmax.f32 %v722, 0.0
  %739 = vst [vmem:[%s6] sm:$0xff] %v723
  %740 = vst [vmem:[%s6 + $0x8] sm:$0xff] %v724
  %741 = vst [vmem:[%s6 + $0x10] sm:$0xff] %v725
  %742 = vst [vmem:[%s6 + $0x18] sm:$0xff] %v726
  %743 = vst [vmem:[%s6 + $0x20] sm:$0xff] %v727
  %744 = vst [vmem:[%s6 + $0x28] sm:$0xff] %v728
  %745 = vst [vmem:[%s6 + $0x30] sm:$0xff] %v729
  %746 = vst [vmem:[%s6 + $0x38] sm:$0xff] %v730
  %747 = vst [vmem:[%s6 + $0x40] sm:$0xff] %v731
  %748 = vst [vmem:[%s6 + $0x48] sm:$0xff] %v732
  %749 = vst [vmem:[%s6 + $0x50] sm:$0xff] %v733
  %750 = vst [vmem:[%s6 + $0x58] sm:$0xff] %v734
  %751 = vst [vmem:[%s6 + $0x60] sm:$0xff] %v735
  %752 = vst [vmem:[%s6 + $0x68] sm:$0xff] %v736
  %753 = vst [vmem:[%s6 + $0x70] sm:$0xff] %v737
  %754 = vst [vmem:[%s6 + $0x78] sm:$0xff] %v738
  // Predicated region
  $region26: #{residual_net.15} parent=0 // pred_check
    _
  $region27: #{residual_net.15} parent=0 // pred_check_branch
    %756 = sbr.rel (0) target = $region29
  $region28: #{residual_net.15} parent=0 // pred_region
    _
  $region29: #{residual_net.15} parent=0 // pred_fallthru
    _
  // Predicated region
  $region30: #{residual_net.15} parent=0 // pred_check
    _
  $region31: #{residual_net.15} parent=0 // pred_check_branch
    %758 = sbr.rel (0) target = $region33
  $region32: #{residual_net.15} parent=0 // pred_region
    _
  $region33: #{residual_net.15} parent=0 // pred_fallthru
    _

// kernel: residual_net.16
$region0: #{residual_net.16}
  #allocation0 [shape = 'u32[]', space=smem, size = 0x4, offset = 0x4, fixed_abs, tag = 'smem constant byte address 0x4 - core index']
  #allocation1 [shape = 'u32[144,128]{1,0:T(1,128)}', space=vmem, size = 0x12000, scoped, tag = 'internal scratch']
  %s0 = inlined_call_operand.vmem [shape: bf16[32,384], index: 0, kind: input, shape index: {}]
  %s1 = inlined_call_operand.vmem [shape: bf16[384,128], index: 1, kind: input, shape index: {}]
  %s2 = inlined_call_operand.vmem [shape: f32[1,128], index: 2, kind: input, shape index: {}]
  %s3 = inlined_call_operand.vmem [shape: f32[1,128], index: 3, kind: input, shape index: {}]
  %s4 = inlined_call_operand.vmem [shape: f32[1,128], index: 4, kind: input, shape index: {}]
  %s5 = inlined_call_operand.vmem [shape: f32[32,128], index: 5, kind: output, shape index: {}]
  %s6 = sld [smem:[#allocation0]]
  $region30: #{residual_net.16} parent=0
    _
  %s8 = ssub.s32 1, %s6
  %s9 = scalar_select 0, %s8, %s6
  // Predicated region
  $region2: #{residual_net.16} parent=0 // pred_check
    _
  $region3: #{residual_net.16} parent=0 // pred_check_branch
    %11 = sbr.rel (0) target = $region5
  $region4: #{residual_net.16} parent=0 // pred_region
    _
  $region5: #{residual_net.16} parent=0 // pred_fallthru
    _
  // Predicated region
  $region6: #{residual_net.16} parent=0 // pred_check
    _
  $region7: #{residual_net.16} parent=0 // pred_check_branch
    %13 = sbr.rel (0) target = $region9
  $region8: #{residual_net.16} parent=0 // pred_region
    _
  $region9: #{residual_net.16} parent=0 // pred_fallthru
    _
  // Predicated region
  $region10: #{residual_net.16} parent=0 // pred_check
    _
  $region11: #{residual_net.16} parent=0 // pred_check_branch
    %15 = sbr.rel (0) target = $region13
  $region12: #{residual_net.16} parent=0 // pred_region
    _
  $region13: #{residual_net.16} parent=0 // pred_fallthru
    _
  // Predicated region
  $region14: #{residual_net.16} parent=0 // pred_check
    _
  $region15: #{residual_net.16} parent=0 // pred_check_branch
    %17 = sbr.rel (0) target = $region17
  $region16: #{residual_net.16} parent=0 // pred_region
    _
  $region17: #{residual_net.16} parent=0 // pred_fallthru
    _
  // Predicated region
  $region18: #{residual_net.16} parent=0 // pred_check
    _
  $region19: #{residual_net.16} parent=0 // pred_check_branch
    %19 = sbr.rel (0) target = $region21
  $region20: #{residual_net.16} parent=0 // pred_region
    _
  $region21: #{residual_net.16} parent=0 // pred_fallthru
    _
  %v21 = vld [vmem:[%s0] sm:$0xff]
  %v22 = vld [vmem:[%s0 + $0x8] sm:$0xf]
  %v23 = vld [vmem:[%s0 + $0xc] sm:$0xff]
  %v24 = vld [vmem:[%s0 + $0x14] sm:$0xf]
  %v25 = vld [vmem:[%s0 + $0x18] sm:$0xff]
  %v26 = vld [vmem:[%s0 + $0x20] sm:$0xf]
  %v27 = vld [vmem:[%s0 + $0x24] sm:$0xff]
  %v28 = vld [vmem:[%s0 + $0x2c] sm:$0xf]
  %v29 = vld [vmem:[%s1] sm:$0xf]
  %v30 = vld [vmem:[%s1 + $0x4] sm:$0xf]
  %v31 = vld [vmem:[%s1 + $0x8] sm:$0xf]
  %v32 = vld [vmem:[%s1 + $0xc] sm:$0xf]
  %v33 = vld [vmem:[%s1 + $0x10] sm:$0xf]
  %v34 = vld [vmem:[%s1 + $0x14] sm:$0xf]
  %v35 = vld [vmem:[%s1 + $0x18] sm:$0xf]
  %v36 = vld [vmem:[%s1 + $0x1c] sm:$0xf]
  %v37 = vld [vmem:[%s1 + $0x20] sm:$0xf]
  %v38 = vld [vmem:[%s1 + $0x24] sm:$0xf]
  %v39 = vld [vmem:[%s1 + $0x28] sm:$0xf]
  %v40 = vld [vmem:[%s1 + $0x2c] sm:$0xf]
  %v41 = vld [vmem:[%s1 + $0x30] sm:$0xf]
  %v42 = vld [vmem:[%s1 + $0x34] sm:$0xf]
  %v43 = vld [vmem:[%s1 + $0x38] sm:$0xf]
  %v44 = vld [vmem:[%s1 + $0x3c] sm:$0xf]
  %v45 = vld [vmem:[%s1 + $0x40] sm:$0xf]
  %v46 = vld [vmem:[%s1 + $0x44] sm:$0xf]
  %v47 = vld [vmem:[%s1 + $0x48] sm:$0xf]
  %v48 = vld [vmem:[%s1 + $0x4c] sm:$0xf]
  %v49 = vld [vmem:[%s1 + $0x50] sm:$0xf]
  %v50 = vld [vmem:[%s1 + $0x54] sm:$0xf]
  %v51 = vld [vmem:[%s1 + $0x58] sm:$0xf]
  %v52 = vld [vmem:[%s1 + $0x5c] sm:$0xf]
  %v53 = vld [vmem:[%s1 + $0x60] sm:$0xf]
  %v54 = vld [vmem:[%s1 + $0x64] sm:$0xf]
  %v55 = vld [vmem:[%s1 + $0x68] sm:$0xf]
  %v56 = vld [vmem:[%s1 + $0x6c] sm:$0xf]
  %v57 = vld [vmem:[%s1 + $0x70] sm:$0xf]
  %v58 = vld [vmem:[%s1 + $0x74] sm:$0xf]
  %v59 = vld [vmem:[%s1 + $0x78] sm:$0xf]
  %v60 = vld [vmem:[%s1 + $0x7c] sm:$0xf]
  %v61 = vld [vmem:[%s1 + $0x80] sm:$0xf]
  %v62 = vld [vmem:[%s1 + $0x84] sm:$0xf]
  %v63 = vld [vmem:[%s1 + $0x88] sm:$0xf]
  %v64 = vld [vmem:[%s1 + $0x8c] sm:$0xf]
  %v65 = vld [vmem:[%s1 + $0x90] sm:$0xf]
  %v66 = vld [vmem:[%s1 + $0x94] sm:$0xf]
  %v67 = vld [vmem:[%s1 + $0x98] sm:$0xf]
  %v68 = vld [vmem:[%s1 + $0x9c] sm:$0xf]
  %v69 = vld [vmem:[%s1 + $0xa0] sm:$0xf]
  %v70 = vld [vmem:[%s1 + $0xa4] sm:$0xf]
  %v71 = vld [vmem:[%s1 + $0xa8] sm:$0xf]
  %v72 = vld [vmem:[%s1 + $0xac] sm:$0xf]
  %v73 = vld [vmem:[%s1 + $0xb0] sm:$0xf]
  %v74 = vld [vmem:[%s1 + $0xb4] sm:$0xf]
  %v75 = vld [vmem:[%s1 + $0xb8] sm:$0xf]
  %v76 = vld [vmem:[%s1 + $0xbc] sm:$0xf]
  %v77 = vld [vmem:[%s2] sm:$0x1]
  %v79 = vlaneseq
  %v80 = vshrl.u32 %v79, 7
  %v81 = vsub.s32 0, %v80
  %v82 = vrot.slane %v77, %v81
  %v92 = vunpack.c.l.b16 %v21
  %v93 = vunpack.c.h.b16 %v21
  %v94 = vunpack.c.l.b16 %v22
  %v95 = vunpack.c.l.b16 %v23
  %v96 = vunpack.c.h.b16 %v23
  %v97 = vunpack.c.l.b16 %v24
  %v98 = vunpack.c.l.b16 %v25
  %v99 = vunpack.c.h.b16 %v25
  %v100 = vunpack.c.l.b16 %v26
  %v101 = vunpack.c.l.b16 %v27
  %v102 = vunpack.c.h.b16 %v27
  %v103 = vunpack.c.l.b16 %v28
  %v104 = vpack.c.b16 %v95, %v92
  %v105 = vpack.c.b16 %v96, %v93
  %v106 = vpack.c.b16 %v97, %v94
  %v107 = vpack.c.b16 %v101, %v98
  %v108 = vpack.c.b16 %v102, %v99
  %v109 = vpack.c.b16 %v103, %v100
  %v164 = vunpack.c.l.b16 %v29
  %v165 = vunpack.c.l.b16 %v30
  %v166 = vunpack.c.l.b16 %v31
  %v167 = vunpack.c.l.b16 %v32
  %v168 = vunpack.c.l.b16 %v33
  %v169 = vunpack.c.l.b16 %v34
  %v170 = vunpack.c.l.b16 %v35
  %v171 = vunpack.c.l.b16 %v36
  %v172 = vunpack.c.l.b16 %v37
  %v173 = vunpack.c.l.b16 %v38
  %v174 = vunpack.c.l.b16 %v39
  %v175 = vunpack.c.l.b16 %v40
  %v176 = vunpack.c.l.b16 %v41
  %v177 = vunpack.c.l.b16 %v42
  %v178 = vunpack.c.l.b16 %v43
  %v179 = vunpack.c.l.b16 %v44
  %v180 = vunpack.c.l.b16 %v45
  %v181 = vunpack.c.l.b16 %v46
  %v182 = vunpack.c.l.b16 %v47
  %v183 = vunpack.c.l.b16 %v48
  %v184 = vunpack.c.l.b16 %v49
  %v185 = vunpack.c.l.b16 %v50
  %v186 = vunpack.c.l.b16 %v51
  %v187 = vunpack.c.l.b16 %v52
  %v188 = vunpack.c.l.b16 %v53
  %v189 = vunpack.c.l.b16 %v54
  %v190 = vunpack.c.l.b16 %v55
  %v191 = vunpack.c.l.b16 %v56
  %v192 = vunpack.c.l.b16 %v57
  %v193 = vunpack.c.l.b16 %v58
  %v194 = vunpack.c.l.b16 %v59
  %v195 = vunpack.c.l.b16 %v60
  %v196 = vunpack.c.l.b16 %v61
  %v197 = vunpack.c.l.b16 %v62
  %v198 = vunpack.c.l.b16 %v63
  %v199 = vunpack.c.l.b16 %v64
  %v200 = vunpack.c.l.b16 %v65
  %v201 = vunpack.c.l.b16 %v66
  %v202 = vunpack.c.l.b16 %v67
  %v203 = vunpack.c.l.b16 %v68
  %v204 = vunpack.c.l.b16 %v69
  %v205 = vunpack.c.l.b16 %v70
  %v206 = vunpack.c.l.b16 %v71
  %v207 = vunpack.c.l.b16 %v72
  %v208 = vunpack.c.l.b16 %v73
  %v209 = vunpack.c.l.b16 %v74
  %v210 = vunpack.c.l.b16 %v75
  %v211 = vunpack.c.l.b16 %v76
  %v212 = vpack.c.b16 %v165, %v164
  %v213 = vpack.c.b16 %v167, %v166
  %v214 = vpack.c.b16 %v169, %v168
  %v215 = vpack.c.b16 %v171, %v170
  %v216 = vpack.c.b16 %v173, %v172
  %v217 = vpack.c.b16 %v175, %v174
  %v218 = vpack.c.b16 %v177, %v176
  %v219 = vpack.c.b16 %v179, %v178
  %v220 = vpack.c.b16 %v181, %v180
  %v221 = vpack.c.b16 %v183, %v182
  %v222 = vpack.c.b16 %v185, %v184
  %v223 = vpack.c.b16 %v187, %v186
  %v224 = vpack.c.b16 %v189, %v188
  %v225 = vpack.c.b16 %v191, %v190
  %v226 = vpack.c.b16 %v193, %v192
  %v227 = vpack.c.b16 %v195, %v194
  %v228 = vpack.c.b16 %v197, %v196
  %v229 = vpack.c.b16 %v199, %v198
  %v230 = vpack.c.b16 %v201, %v200
  %v231 = vpack.c.b16 %v203, %v202
  %v232 = vpack.c.b16 %v205, %v204
  %v233 = vpack.c.b16 %v207, %v206
  %v234 = vpack.c.b16 %v209, %v208
  %v235 = vpack.c.b16 %v211, %v210
  %260 = vmatprep.subr.bf16.mxu0 0
  %261 = vmatpush1.bf16.msra.mxu0 %v219
  %262 = vmatprep.subr.bf16.mxu0 0
  %263 = vmatpush1.bf16.msra.mxu0 %v218
  %264 = vmatprep.subr.bf16.mxu0 0
  %265 = vmatpush1.bf16.msra.mxu0 %v217
  %266 = vmatprep.subr.bf16.mxu0 0
  %267 = vmatpush1.bf16.msra.mxu0 %v216
  %268 = vmatprep.subr.bf16.mxu0 0
  %269 = vmatpush1.bf16.msra.mxu0 %v215
  %270 = vmatprep.subr.bf16.mxu0 0
  %271 = vmatpush1.bf16.msra.mxu0 %v214
  %272 = vmatprep.subr.bf16.mxu0 0
  %273 = vmatpush1.bf16.msra.mxu0 %v213
  %274 = vmatprep.subr.bf16.mxu0 0
  %275 = vmatpush1.bf16.msra.mxu0 %v212
  %276 = vmatprep.subr.bf16.mxu0 0
  %277 = vmatpush2.bf16.msra.mxu0 %v227
  %278 = vmatprep.subr.bf16.mxu0 0
  %279 = vmatpush2.bf16.msra.mxu0 %v226
  %280 = vmatprep.subr.bf16.mxu0 0
  %281 = vmatpush2.bf16.msra.mxu0 %v225
  %282 = vmatprep.subr.bf16.mxu0 0
  %283 = vmatpush2.bf16.msra.mxu0 %v224
  %284 = vmatprep.subr.bf16.mxu0 0
  %285 = vmatpush2.bf16.msra.mxu0 %v223
  %286 = vmatprep.subr.bf16.mxu0 0
  %287 = vmatpush2.bf16.msra.mxu0 %v222
  %288 = vmatprep.subr.bf16.mxu0 0
  %289 = vmatpush2.bf16.msra.mxu0 %v221
  %290 = vmatprep.subr.bf16.mxu0 0
  %291 = vmatpush2.bf16.msra.mxu0 %v220
  %292 = vmatprep.mubr.bf16.mxu0 %v105
  %293 = vmatmul.mubr.bf16.gmra.mxu0 %v104
  %v294 = vpop.f32.mrf.mxu0
  %v295 = vadd.f32 %v82, %v294
  %v296 = vpop.f32.mrf.mxu0
  %v297 = vpop.f32.mrf.mxu0
  %v298 = vadd.f32 %v82, %v297
  %v299 = vpop.f32.mrf.mxu0
  %300 = vmatprep.mubr.bf16.mxu0 %v108
  %301 = vmatmul.mubr.bf16.gmra.mxu0 %v107
  %v302 = vpop.f32.mrf.mxu0
  %v303 = vadd.f32 %v82, %v302
  %v304 = vpop.f32.mrf.mxu0
  %v305 = vpop.f32.mrf.mxu0
  %v306 = vadd.f32 %v82, %v305
  %v307 = vpop.f32.mrf.mxu0
  %308 = vdwg.mxu0
  %309 = vmatprep.subr.bf16.mxu0 0
  %310 = vmatpush1.bf16.msra.mxu0 %v235
  %311 = vmatprep.subr.bf16.mxu0 0
  %312 = vmatpush1.bf16.msra.mxu0 %v234
  %313 = vmatprep.subr.bf16.mxu0 0
  %314 = vmatpush1.bf16.msra.mxu0 %v233
  %315 = vmatprep.subr.bf16.mxu0 0
  %316 = vmatpush1.bf16.msra.mxu0 %v232
  %317 = vmatprep.subr.bf16.mxu0 0
  %318 = vmatpush1.bf16.msra.mxu0 %v231
  %319 = vmatprep.subr.bf16.mxu0 0
  %320 = vmatpush1.bf16.msra.mxu0 %v230
  %321 = vmatprep.subr.bf16.mxu0 0
  %322 = vmatpush1.bf16.msra.mxu0 %v229
  %323 = vmatprep.subr.bf16.mxu0 0
  %324 = vmatpush1.bf16.msra.mxu0 %v228
  %325 = vmatprep.subr.bf16.mxu0 0
  %326 = vmatpush2.bf16.msra.mxu0 0
  %327 = vmatprep.subr.bf16.mxu0 0
  %328 = vmatpush2.bf16.msra.mxu0 0
  %329 = vmatprep.subr.bf16.mxu0 0
  %330 = vmatpush2.bf16.msra.mxu0 0
  %331 = vmatprep.subr.bf16.mxu0 0
  %332 = vmatpush2.bf16.msra.mxu0 0
  %333 = vmatprep.subr.bf16.mxu0 0
  %334 = vmatpush2.bf16.msra.mxu0 0
  %335 = vmatprep.subr.bf16.mxu0 0
  %336 = vmatpush2.bf16.msra.mxu0 0
  %337 = vmatprep.subr.bf16.mxu0 0
  %338 = vmatpush2.bf16.msra.mxu0 0
  %339 = vmatprep.subr.bf16.mxu0 0
  %340 = vmatpush2.bf16.msra.mxu0 0
  %341 = vmatprep.mubr.bf16.mxu0 0
  %342 = vmatmul.mubr.bf16.gmra.mxu0 %v106
  %v343 = vpop.f32.mrf.mxu0
  %v344 = vadd.f32 %v295, %v343
  %v345 = vpop.f32.mrf.mxu0
  %v346 = vpop.f32.mrf.mxu0
  %v347 = vadd.f32 %v298, %v346
  %v348 = vpop.f32.mrf.mxu0
  %349 = vmatprep.mubr.bf16.mxu0 0
  %350 = vmatmul.mubr.bf16.gmra.mxu0 %v109
  %v351 = vpop.f32.mrf.mxu0
  %v352 = vadd.f32 %v303, %v351
  %v353 = vpop.f32.mrf.mxu0
  %v354 = vpop.f32.mrf.mxu0
  %v355 = vadd.f32 %v306, %v354
  %v356 = vpop.f32.mrf.mxu0
  %357 = vdwg.mxu0
  %v358 = vadd.f32 %v344, %v347
  %v359 = vadd.f32 %v358, %v352
  %v360 = vadd.f32 %v359, %v355
  %v361 = vrot.slane %v360, 4
  %v362 = vadd.f32 %v360, %v361
  %v363 = vrot.slane %v362, 2
  %v364 = vadd.f32 %v362, %v363
  %v365 = vrot.slane %v364, 1
  %v366 = vadd.f32 %v364, %v365
  %v367 = vmul.f32 %v366, 0.03125
  %v368 = vmul.f32 %v344, %v344
  %v369 = vmul.f32 %v347, %v347
  %v370 = vmul.f32 %v352, %v352
  %v371 = vmul.f32 %v355, %v355
  %v372 = vadd.f32 %v368, %v369
  %v373 = vadd.f32 %v372, %v370
  %v374 = vadd.f32 %v373, %v371
  %v375 = vrot.slane %v374, 4
  %v376 = vadd.f32 %v374, %v375
  %v377 = vrot.slane %v376, 2
  %v378 = vadd.f32 %v376, %v377
  %v379 = vrot.slane %v378, 1
  %v380 = vadd.f32 %v378, %v379
  %v381 = vmul.f32 %v380, 0.03125
  %v382 = vmul.f32 %v367, %v367
  %v383 = vsub.f32 %v381, %v382
  %v384 = vmax.f32 %v383, 0.0
  %v385 = vld [vmem:[%s3] sm:$0x1]
  %v386 = vadd.f32 %v384, 1e-05
  %v387 = vrsqrt.pop %v386
  %v388 = vmul.f32 %v385, %v387
  %v389 = vld [vmem:[%s4] sm:$0x1]
  %v390 = vmul.f32 %v367, %v388
  %v391 = vsub.f32 %v389, %v390
  %v393 = vlaneseq
  %v394 = vshrl.u32 %v393, 7
  %v395 = vsub.s32 0, %v394
  %v396 = vrot.slane %v388, %v395
  %v398 = vmul.f32 %v344, %v396
  %v399 = vmul.f32 %v347, %v396
  %v400 = vmul.f32 %v352, %v396
  %v401 = vmul.f32 %v355, %v396
  %v403 = vlaneseq
  %v404 = vshrl.u32 %v403, 7
  %v405 = vsub.s32 0, %v404
  %v406 = vrot.slane %v391, %v405
  %v408 = vadd.f32 %v398, %v406
  %v409 = vadd.f32 %v399, %v406
  %v410 = vadd.f32 %v400, %v406
  %v411 = vadd.f32 %v401, %v406
  %v412 = vmax.f32 %v408, 0.0
  %v413 = vmax.f32 %v409, 0.0
  %v414 = vmax.f32 %v410, 0.0
  %v415 = vmax.f32 %v411, 0.0
  %416 = vst [vmem:[%s5] sm:$0xff] %v412
  %417 = vst [vmem:[%s5 + $0x8] sm:$0xff] %v413
  %418 = vst [vmem:[%s5 + $0x10] sm:$0xff] %v414
  %419 = vst [vmem:[%s5 + $0x18] sm:$0xff] %v415
  // Predicated region
  $region22: #{residual_net.16} parent=0 // pred_check
    _
  $region23: #{residual_net.16} parent=0 // pred_check_branch
    %421 = sbr.rel (0) target = $region25
  $region24: #{residual_net.16} parent=0 // pred_region
    _
  $region25: #{residual_net.16} parent=0 // pred_fallthru
    _
  // Predicated region
  $region26: #{residual_net.16} parent=0 // pred_check
    _
  $region27: #{residual_net.16} parent=0 // pred_check_branch
    %423 = sbr.rel (0) target = $region29
  $region28: #{residual_net.16} parent=0 // pred_region
    _
  $region29: #{residual_net.16} parent=0 // pred_fallthru
    _

// kernel: residual_net.17
$region0: #{residual_net.17}
  #allocation0 [shape = 'u32[]', space=smem, size = 0x4, offset = 0x4, fixed_abs, tag = 'smem constant byte address 0x4 - core index']
  #allocation1 [shape = 'u32[144,128]{1,0:T(1,128)}', space=vmem, size = 0x12000, scoped, tag = 'internal scratch']
  %s0 = inlined_call_operand.vmem [shape: bf16[32,640], index: 0, kind: input, shape index: {}]
  %s1 = inlined_call_operand.vmem [shape: bf16[640,128], index: 1, kind: input, shape index: {}]
  %s2 = inlined_call_operand.vmem [shape: f32[1,128], index: 2, kind: input, shape index: {}]
  %s3 = inlined_call_operand.vmem [shape: f32[1,128], index: 3, kind: input, shape index: {}]
  %s4 = inlined_call_operand.vmem [shape: f32[1,128], index: 4, kind: input, shape index: {}]
  %s5 = inlined_call_operand.vmem [shape: f32[32,128], index: 5, kind: output, shape index: {}]
  %s6 = sld [smem:[#allocation0]]
  $region30: #{residual_net.17} parent=0
    _
  %s8 = ssub.s32 1, %s6
  %s9 = scalar_select 0, %s8, %s6
  // Predicated region
  $region2: #{residual_net.17} parent=0 // pred_check
    _
  $region3: #{residual_net.17} parent=0 // pred_check_branch
    %11 = sbr.rel (0) target = $region5
  $region4: #{residual_net.17} parent=0 // pred_region
    _
  $region5: #{residual_net.17} parent=0 // pred_fallthru
    _
  // Predicated region
  $region6: #{residual_net.17} parent=0 // pred_check
    _
  $region7: #{residual_net.17} parent=0 // pred_check_branch
    %13 = sbr.rel (0) target = $region9
  $region8: #{residual_net.17} parent=0 // pred_region
    _
  $region9: #{residual_net.17} parent=0 // pred_fallthru
    _
  // Predicated region
  $region10: #{residual_net.17} parent=0 // pred_check
    _
  $region11: #{residual_net.17} parent=0 // pred_check_branch
    %15 = sbr.rel (0) target = $region13
  $region12: #{residual_net.17} parent=0 // pred_region
    _
  $region13: #{residual_net.17} parent=0 // pred_fallthru
    _
  // Predicated region
  $region14: #{residual_net.17} parent=0 // pred_check
    _
  $region15: #{residual_net.17} parent=0 // pred_check_branch
    %17 = sbr.rel (0) target = $region17
  $region16: #{residual_net.17} parent=0 // pred_region
    _
  $region17: #{residual_net.17} parent=0 // pred_fallthru
    _
  // Predicated region
  $region18: #{residual_net.17} parent=0 // pred_check
    _
  $region19: #{residual_net.17} parent=0 // pred_check_branch
    %19 = sbr.rel (0) target = $region21
  $region20: #{residual_net.17} parent=0 // pred_region
    _
  $region21: #{residual_net.17} parent=0 // pred_fallthru
    _
  %v21 = vld [vmem:[%s0] sm:$0xff]
  %v22 = vld [vmem:[%s0 + $0x8] sm:$0xff]
  %v23 = vld [vmem:[%s0 + $0x10] sm:$0xf]
  %v24 = vld [vmem:[%s0 + $0x14] sm:$0xff]
  %v25 = vld [vmem:[%s0 + $0x1c] sm:$0xff]
  %v26 = vld [vmem:[%s0 + $0x24] sm:$0xf]
  %v27 = vld [vmem:[%s0 + $0x28] sm:$0xff]
  %v28 = vld [vmem:[%s0 + $0x30] sm:$0xff]
  %v29 = vld [vmem:[%s0 + $0x38] sm:$0xf]
  %v30 = vld [vmem:[%s0 + $0x3c] sm:$0xff]
  %v31 = vld [vmem:[%s0 + $0x44] sm:$0xff]
  %v32 = vld [vmem:[%s0 + $0x4c] sm:$0xf]
  %v33 = vld [vmem:[%s1] sm:$0xf]
  %v34 = vld [vmem:[%s1 + $0x4] sm:$0xf]
  %v35 = vld [vmem:[%s1 + $0x8] sm:$0xf]
  %v36 = vld [vmem:[%s1 + $0xc] sm:$0xf]
  %v37 = vld [vmem:[%s1 + $0x10] sm:$0xf]
  %v38 = vld [vmem:[%s1 + $0x14] sm:$0xf]
  %v39 = vld [vmem:[%s1 + $0x18] sm:$0xf]
  %v40 = vld [vmem:[%s1 + $0x1c] sm:$0xf]
  %v41 = vld [vmem:[%s1 + $0x20] sm:$0xf]
  %v42 = vld [vmem:[%s1 + $0x24] sm:$0xf]
  %v43 = vld [vmem:[%s1 + $0x28] sm:$0xf]
  %v44 = vld [vmem:[%s1 + $0x2c] sm:$0xf]
  %v45 = vld [vmem:[%s1 + $0x30] sm:$0xf]
  %v46 = vld [vmem:[%s1 + $0x34] sm:$0xf]
  %v47 = vld [vmem:[%s1 + $0x38] sm:$0xf]
  %v48 = vld [vmem:[%s1 + $0x3c] sm:$0xf]
  %v49 = vld [vmem:[%s1 + $0x40] sm:$0xf]
  %v50 = vld [vmem:[%s1 + $0x44] sm:$0xf]
  %v51 = vld [vmem:[%s1 + $0x48] sm:$0xf]
  %v52 = vld [vmem:[%s1 + $0x4c] sm:$0xf]
  %v53 = vld [vmem:[%s1 + $0x50] sm:$0xf]
  %v54 = vld [vmem:[%s1 + $0x54] sm:$0xf]
  %v55 = vld [vmem:[%s1 + $0x58] sm:$0xf]
  %v56 = vld [vmem:[%s1 + $0x5c] sm:$0xf]
  %v57 = vld [vmem:[%s1 + $0x60] sm:$0xf]
  %v58 = vld [vmem:[%s1 + $0x64] sm:$0xf]
  %v59 = vld [vmem:[%s1 + $0x68] sm:$0xf]
  %v60 = vld [vmem:[%s1 + $0x6c] sm:$0xf]
  %v61 = vld [vmem:[%s1 + $0x70] sm:$0xf]
  %v62 = vld [vmem:[%s1 + $0x74] sm:$0xf]
  %v63 = vld [vmem:[%s1 + $0x78] sm:$0xf]
  %v64 = vld [vmem:[%s1 + $0x7c] sm:$0xf]
  %v65 = vld [vmem:[%s1 + $0x80] sm:$0xf]
  %v66 = vld [vmem:[%s1 + $0x84] sm:$0xf]
  %v67 = vld [vmem:[%s1 + $0x88] sm:$0xf]
  %v68 = vld [vmem:[%s1 + $0x8c] sm:$0xf]
  %v69 = vld [vmem:[%s1 + $0x90] sm:$0xf]
  %v70 = vld [vmem:[%s1 + $0x94] sm:$0xf]
  %v71 = vld [vmem:[%s1 + $0x98] sm:$0xf]
  %v72 = vld [vmem:[%s1 + $0x9c] sm:$0xf]
  %v73 = vld [vmem:[%s1 + $0xa0] sm:$0xf]
  %v74 = vld [vmem:[%s1 + $0xa4] sm:$0xf]
  %v75 = vld [vmem:[%s1 + $0xa8] sm:$0xf]
  %v76 = vld [vmem:[%s1 + $0xac] sm:$0xf]
  %v77 = vld [vmem:[%s1 + $0xb0] sm:$0xf]
  %v78 = vld [vmem:[%s1 + $0xb4] sm:$0xf]
  %v79 = vld [vmem:[%s1 + $0xb8] sm:$0xf]
  %v80 = vld [vmem:[%s1 + $0xbc] sm:$0xf]
  %v81 = vld [vmem:[%s1 + $0xc0] sm:$0xf]
  %v82 = vld [vmem:[%s1 + $0xc4] sm:$0xf]
  %v83 = vld [vmem:[%s1 + $0xc8] sm:$0xf]
  %v84 = vld [vmem:[%s1 + $0xcc] sm:$0xf]
  %v85 = vld [vmem:[%s1 + $0xd0] sm:$0xf]
  %v86 = vld [vmem:[%s1 + $0xd4] sm:$0xf]
  %v87 = vld [vmem:[%s1 + $0xd8] sm:$0xf]
  %v88 = vld [vmem:[%s1 + $0xdc] sm:$0xf]
  %v89 = vld [vmem:[%s1 + $0xe0] sm:$0xf]
  %v90 = vld [vmem:[%s1 + $0xe4] sm:$0xf]
  %v91 = vld [vmem:[%s1 + $0xe8] sm:$0xf]
  %v92 = vld [vmem:[%s1 + $0xec] sm:$0xf]
  %v93 = vld [vmem:[%s1 + $0xf0] sm:$0xf]
  %v94 = vld [vmem:[%s1 + $0xf4] sm:$0xf]
  %v95 = vld [vmem:[%s1 + $0xf8] sm:$0xf]
  %v96 = vld [vmem:[%s1 + $0xfc] sm:$0xf]
  %v97 = vld [vmem:[%s1 + $0x100] sm:$0xf]
  %v98 = vld [vmem:[%s1 + $0x104] sm:$0xf]
  %v99 = vld [vmem:[%s1 + $0x108] sm:$0xf]
  %v100 = vld [vmem:[%s1 + $0x10c] sm:$0xf]
  %v101 = vld [vmem:[%s1 + $0x110] sm:$0xf]
  %v102 = vld [vmem:[%s1 + $0x114] sm:$0xf]
  %v103 = vld [vmem:[%s1 + $0x118] sm:$0xf]
  %v104 = vld [vmem:[%s1 + $0x11c] sm:$0xf]
  %v105 = vld [vmem:[%s1 + $0x120] sm:$0xf]
  %v106 = vld [vmem:[%s1 + $0x124] sm:$0xf]
  %v107 = vld [vmem:[%s1 + $0x128] sm:$0xf]
  %v108 = vld [vmem:[%s1 + $0x12c] sm:$0xf]
  %v109 = vld [vmem:[%s1 + $0x130] sm:$0xf]
  %v110 = vld [vmem:[%s1 + $0x134] sm:$0xf]
  %v111 = vld [vmem:[%s1 + $0x138] sm:$0xf]
  %v112 = vld [vmem:[%s1 + $0x13c] sm:$0xf]
  %v113 = vld [vmem:[%s2] sm:$0x1]
  %v115 = vlaneseq
  %v116 = vshrl.u32 %v115, 7
  %v117 = vsub.s32 0, %v116
  %v118 = vrot.slane %v113, %v117
  %v132 = vunpack.c.l.b16 %v21
  %v133 = vunpack.c.h.b16 %v21
  %v134 = vunpack.c.l.b16 %v22
  %v135 = vunpack.c.h.b16 %v22
  %v136 = vunpack.c.l.b16 %v23
  %v137 = vunpack.c.l.b16 %v24
  %v138 = vunpack.c.h.b16 %v24
  %v139 = vunpack.c.l.b16 %v25
  %v140 = vunpack.c.h.b16 %v25
  %v141 = vunpack.c.l.b16 %v26
  %v142 = vunpack.c.l.b16 %v27
  %v143 = vunpack.c.h.b16 %v27
  %v144 = vunpack.c.l.b16 %v28
  %v145 = vunpack.c.h.b16 %v28
  %v146 = vunpack.c.l.b16 %v29
  %v147 = vunpack.c.l.b16 %v30
  %v148 = vunpack.c.h.b16 %v30
  %v149 = vunpack.c.l.b16 %v31
  %v150 = vunpack.c.h.b16 %v31
  %v151 = vunpack.c.l.b16 %v32
  %v152 = vpack.c.b16 %v137, %v132
  %v153 = vpack.c.b16 %v138, %v133
  %v154 = vpack.c.b16 %v139, %v134
  %v155 = vpack.c.b16 %v140, %v135
  %v156 = vpack.c.b16 %v141, %v136
  %v157 = vpack.c.b16 %v147, %v142
  %v158 = vpack.c.b16 %v148, %v143
  %v159 = vpack.c.b16 %v149, %v144
  %v160 = vpack.c.b16 %v150, %v145
  %v161 = vpack.c.b16 %v151, %v146
  %v252 = vunpack.c.l.b16 %v33
  %v253 = vunpack.c.l.b16 %v34
  %v254 = vunpack.c.l.b16 %v35
  %v255 = vunpack.c.l.b16 %v36
  %v256 = vunpack.c.l.b16 %v37
  %v257 = vunpack.c.l.b16 %v38
  %v258 = vunpack.c.l.b16 %v39
  %v259 = vunpack.c.l.b16 %v40
  %v260 = vunpack.c.l.b16 %v41
  %v261 = vunpack.c.l.b16 %v42
  %v262 = vunpack.c.l.b16 %v43
  %v263 = vunpack.c.l.b16 %v44
  %v264 = vunpack.c.l.b16 %v45
  %v265 = vunpack.c.l.b16 %v46
  %v266 = vunpack.c.l.b16 %v47
  %v267 = vunpack.c.l.b16 %v48
  %v268 = vunpack.c.l.b16 %v49
  %v269 = vunpack.c.l.b16 %v50
  %v270 = vunpack.c.l.b16 %v51
  %v271 = vunpack.c.l.b16 %v52
  %v272 = vunpack.c.l.b16 %v53
  %v273 = vunpack.c.l.b16 %v54
  %v274 = vunpack.c.l.b16 %v55
  %v275 = vunpack.c.l.b16 %v56
  %v276 = vunpack.c.l.b16 %v57
  %v277 = vunpack.c.l.b16 %v58
  %v278 = vunpack.c.l.b16 %v59
  %v279 = vunpack.c.l.b16 %v60
  %v280 = vunpack.c.l.b16 %v61
  %v281 = vunpack.c.l.b16 %v62
  %v282 = vunpack.c.l.b16 %v63
  %v283 = vunpack.c.l.b16 %v64
  %v284 = vunpack.c.l.b16 %v65
  %v285 = vunpack.c.l.b16 %v66
  %v286 = vunpack.c.l.b16 %v67
  %v287 = vunpack.c.l.b16 %v68
  %v288 = vunpack.c.l.b16 %v69
  %v289 = vunpack.c.l.b16 %v70
  %v290 = vunpack.c.l.b16 %v71
  %v291 = vunpack.c.l.b16 %v72
  %v292 = vunpack.c.l.b16 %v73
  %v293 = vunpack.c.l.b16 %v74
  %v294 = vunpack.c.l.b16 %v75
  %v295 = vunpack.c.l.b16 %v76
  %v296 = vunpack.c.l.b16 %v77
  %v297 = vunpack.c.l.b16 %v78
  %v298 = vunpack.c.l.b16 %v79
  %v299 = vunpack.c.l.b16 %v80
  %v300 = vunpack.c.l.b16 %v81
  %v301 = vunpack.c.l.b16 %v82
  %v302 = vunpack.c.l.b16 %v83
  %v303 = vunpack.c.l.b16 %v84
  %v304 = vunpack.c.l.b16 %v85
  %v305 = vunpack.c.l.b16 %v86
  %v306 = vunpack.c.l.b16 %v87
  %v307 = vunpack.c.l.b16 %v88
  %v308 = vunpack.c.l.b16 %v89
  %v309 = vunpack.c.l.b16 %v90
  %v310 = vunpack.c.l.b16 %v91
  %v311 = vunpack.c.l.b16 %v92
  %v312 = vunpack.c.l.b16 %v93
  %v313 = vunpack.c.l.b16 %v94
  %v314 = vunpack.c.l.b16 %v95
  %v315 = vunpack.c.l.b16 %v96
  %v316 = vunpack.c.l.b16 %v97
  %v317 = vunpack.c.l.b16 %v98
  %v318 = vunpack.c.l.b16 %v99
  %v319 = vunpack.c.l.b16 %v100
  %v320 = vunpack.c.l.b16 %v101
  %v321 = vunpack.c.l.b16 %v102
  %v322 = vunpack.c.l.b16 %v103
  %v323 = vunpack.c.l.b16 %v104
  %v324 = vunpack.c.l.b16 %v105
  %v325 = vunpack.c.l.b16 %v106
  %v326 = vunpack.c.l.b16 %v107
  %v327 = vunpack.c.l.b16 %v108
  %v328 = vunpack.c.l.b16 %v109
  %v329 = vunpack.c.l.b16 %v110
  %v330 = vunpack.c.l.b16 %v111
  %v331 = vunpack.c.l.b16 %v112
  %v332 = vpack.c.b16 %v253, %v252
  %v333 = vpack.c.b16 %v255, %v254
  %v334 = vpack.c.b16 %v257, %v256
  %v335 = vpack.c.b16 %v259, %v258
  %v336 = vpack.c.b16 %v261, %v260
  %v337 = vpack.c.b16 %v263, %v262
  %v338 = vpack.c.b16 %v265, %v264
  %v339 = vpack.c.b16 %v267, %v266
  %v340 = vpack.c.b16 %v269, %v268
  %v341 = vpack.c.b16 %v271, %v270
  %v342 = vpack.c.b16 %v273, %v272
  %v343 = vpack.c.b16 %v275, %v274
  %v344 = vpack.c.b16 %v277, %v276
  %v345 = vpack.c.b16 %v279, %v278
  %v346 = vpack.c.b16 %v281, %v280
  %v347 = vpack.c.b16 %v283, %v282
  %v348 = vpack.c.b16 %v285, %v284
  %v349 = vpack.c.b16 %v287, %v286
  %v350 = vpack.c.b16 %v289, %v288
  %v351 = vpack.c.b16 %v291, %v290
  %v352 = vpack.c.b16 %v293, %v292
  %v353 = vpack.c.b16 %v295, %v294
  %v354 = vpack.c.b16 %v297, %v296
  %v355 = vpack.c.b16 %v299, %v298
  %v356 = vpack.c.b16 %v301, %v300
  %v357 = vpack.c.b16 %v303, %v302
  %v358 = vpack.c.b16 %v305, %v304
  %v359 = vpack.c.b16 %v307, %v306
  %v360 = vpack.c.b16 %v309, %v308
  %v361 = vpack.c.b16 %v311, %v310
  %v362 = vpack.c.b16 %v313, %v312
  %v363 = vpack.c.b16 %v315, %v314
  %v364 = vpack.c.b16 %v317, %v316
  %v365 = vpack.c.b16 %v319, %v318
  %v366 = vpack.c.b16 %v321, %v320
  %v367 = vpack.c.b16 %v323, %v322
  %v368 = vpack.c.b16 %v325, %v324
  %v369 = vpack.c.b16 %v327, %v326
  %v370 = vpack.c.b16 %v329, %v328
  %v371 = vpack.c.b16 %v331, %v330
  %412 = vmatprep.subr.bf16.mxu0 0
  %413 = vmatpush1.bf16.msra.mxu0 %v339
  %414 = vmatprep.subr.bf16.mxu0 0
  %415 = vmatpush1.bf16.msra.mxu0 %v338
  %416 = vmatprep.subr.bf16.mxu0 0
  %417 = vmatpush1.bf16.msra.mxu0 %v337
  %418 = vmatprep.subr.bf16.mxu0 0
  %419 = vmatpush1.bf16.msra.mxu0 %v336
  %420 = vmatprep.subr.bf16.mxu0 0
  %421 = vmatpush1.bf16.msra.mxu0 %v335
  %422 = vmatprep.subr.bf16.mxu0 0
  %423 = vmatpush1.bf16.msra.mxu0 %v334
  %424 = vmatprep.subr.bf16.mxu0 0
  %425 = vmatpush1.bf16.msra.mxu0 %v333
  %426 = vmatprep.subr.bf16.mxu0 0
  %427 = vmatpush1.bf16.msra.mxu0 %v332
  %428 = vmatprep.subr.bf16.mxu0 0
  %429 = vmatpush2.bf16.msra.mxu0 %v347
  %430 = vmatprep.subr.bf16.mxu0 0
  %431 = vmatpush2.bf16.msra.mxu0 %v346
  %432 = vmatprep.subr.bf16.mxu0 0
  %433 = vmatpush2.bf16.msra.mxu0 %v345
  %434 = vmatprep.subr.bf16.mxu0 0
  %435 = vmatpush2.bf16.msra.mxu0 %v344
  %436 = vmatprep.subr.bf16.mxu0 0
  %437 = vmatpush2.bf16.msra.mxu0 %v343
  %438 = vmatprep.subr.bf16.mxu0 0
  %439 = vmatpush2.bf16.msra.mxu0 %v342
  %440 = vmatprep.subr.bf16.mxu0 0
  %441 = vmatpush2.bf16.msra.mxu0 %v341
  %442 = vmatprep.subr.bf16.mxu0 0
  %443 = vmatpush2.bf16.msra.mxu0 %v340
  %444 = vmatprep.mubr.bf16.mxu0 %v153
  %445 = vmatmul.mubr.bf16.gmra.mxu0 %v152
  %v446 = vpop.f32.mrf.mxu0
  %v447 = vadd.f32 %v118, %v446
  %v448 = vpop.f32.mrf.mxu0
  %v449 = vpop.f32.mrf.mxu0
  %v450 = vadd.f32 %v118, %v449
  %v451 = vpop.f32.mrf.mxu0
  %452 = vmatprep.mubr.bf16.mxu0 %v158
  %453 = vmatmul.mubr.bf16.gmra.mxu0 %v157
  %v454 = vpop.f32.mrf.mxu0
  %v455 = vadd.f32 %v118, %v454
  %v456 = vpop.f32.mrf.mxu0
  %v457 = vpop.f32.mrf.mxu0
  %v458 = vadd.f32 %v118, %v457
  %v459 = vpop.f32.mrf.mxu0
  %460 = vdwg.mxu0
  %461 = vmatprep.subr.bf16.mxu0 0
  %462 = vmatpush1.bf16.msra.mxu0 %v355
  %463 = vmatprep.subr.bf16.mxu0 0
  %464 = vmatpush1.bf16.msra.mxu0 %v354
  %465 = vmatprep.subr.bf16.mxu0 0
  %466 = vmatpush1.bf16.msra.mxu0 %v353
  %467 = vmatprep.subr.bf16.mxu0 0
  %468 = vmatpush1.bf16.msra.mxu0 %v352
  %469 = vmatprep.subr.bf16.mxu0 0
  %470 = vmatpush1.bf16.msra.mxu0 %v351
  %471 = vmatprep.subr.bf16.mxu0 0
  %472 = vmatpush1.bf16.msra.mxu0 %v350
  %473 = vmatprep.subr.bf16.mxu0 0
  %474 = vmatpush1.bf16.msra.mxu0 %v349
  %475 = vmatprep.subr.bf16.mxu0 0
  %476 = vmatpush1.bf16.msra.mxu0 %v348
  %477 = vmatprep.subr.bf16.mxu0 0
  %478 = vmatpush2.bf16.msra.mxu0 %v363
  %479 = vmatprep.subr.bf16.mxu0 0
  %480 = vmatpush2.bf16.msra.mxu0 %v362
  %481 = vmatprep.subr.bf16.mxu0 0
  %482 = vmatpush2.bf16.msra.mxu0 %v361
  %483 = vmatprep.subr.bf16.mxu0 0
  %484 = vmatpush2.bf16.msra.mxu0 %v360
  %485 = vmatprep.subr.bf16.mxu0 0
  %486 = vmatpush2.bf16.msra.mxu0 %v359
  %487 = vmatprep.subr.bf16.mxu0 0
  %488 = vmatpush2.bf16.msra.mxu0 %v358
  %489 = vmatprep.subr.bf16.mxu0 0
  %490 = vmatpush2.bf16.msra.mxu0 %v357
  %491 = vmatprep.subr.bf16.mxu0 0
  %492 = vmatpush2.bf16.msra.mxu0 %v356
  %493 = vmatprep.mubr.bf16.mxu0 %v155
  %494 = vmatmul.mubr.bf16.gmra.mxu0 %v154
  %v495 = vpop.f32.mrf.mxu0
  %v496 = vadd.f32 %v447, %v495
  %v497 = vpop.f32.mrf.mxu0
  %v498 = vpop.f32.mrf.mxu0
  %v499 = vadd.f32 %v450, %v498
  %v500 = vpop.f32.mrf.mxu0
  %501 = vmatprep.mubr.bf16.mxu0 %v160
  %502 = vmatmul.mubr.bf16.gmra.mxu0 %v159
  %v503 = vpop.f32.mrf.mxu0
  %v504 = vadd.f32 %v455, %v503
  %v505 = vpop.f32.mrf.mxu0
  %v506 = vpop.f32.mrf.mxu0
  %v507 = vadd.f32 %v458, %v506
  %v508 = vpop.f32.mrf.mxu0
  %509 = vdwg.mxu0
  %510 = vmatprep.subr.bf16.mxu0 0
  %511 = vmatpush1.bf16.msra.mxu0 %v371
  %512 = vmatprep.subr.bf16.mxu0 0
  %513 = vmatpush1.bf16.msra.mxu0 %v370
  %514 = vmatprep.subr.bf16.mxu0 0
  %515 = vmatpush1.bf16.msra.mxu0 %v369
  %516 = vmatprep.subr.bf16.mxu0 0
  %517 = vmatpush1.bf16.msra.mxu0 %v368
  %518 = vmatprep.subr.bf16.mxu0 0
  %519 = vmatpush1.bf16.msra.mxu0 %v367
  %520 = vmatprep.subr.bf16.mxu0 0
  %521 = vmatpush1.bf16.msra.mxu0 %v366
  %522 = vmatprep.subr.bf16.mxu0 0
  %523 = vmatpush1.bf16.msra.mxu0 %v365
  %524 = vmatprep.subr.bf16.mxu0 0
  %525 = vmatpush1.bf16.msra.mxu0 %v364
  %526 = vmatprep.subr.bf16.mxu0 0
  %527 = vmatpush2.bf16.msra.mxu0 0
  %528 = vmatprep.subr.bf16.mxu0 0
  %529 = vmatpush2.bf16.msra.mxu0 0
  %530 = vmatprep.subr.bf16.mxu0 0
  %531 = vmatpush2.bf16.msra.mxu0 0
  %532 = vmatprep.subr.bf16.mxu0 0
  %533 = vmatpush2.bf16.msra.mxu0 0
  %534 = vmatprep.subr.bf16.mxu0 0
  %535 = vmatpush2.bf16.msra.mxu0 0
  %536 = vmatprep.subr.bf16.mxu0 0
  %537 = vmatpush2.bf16.msra.mxu0 0
  %538 = vmatprep.subr.bf16.mxu0 0
  %539 = vmatpush2.bf16.msra.mxu0 0
  %540 = vmatprep.subr.bf16.mxu0 0
  %541 = vmatpush2.bf16.msra.mxu0 0
  %542 = vmatprep.mubr.bf16.mxu0 0
  %543 = vmatmul.mubr.bf16.gmra.mxu0 %v156
  %v544 = vpop.f32.mrf.mxu0
  %v545 = vadd.f32 %v496, %v544
  %v546 = vpop.f32.mrf.mxu0
  %v547 = vpop.f32.mrf.mxu0
  %v548 = vadd.f32 %v499, %v547
  %v549 = vpop.f32.mrf.mxu0
  %550 = vmatprep.mubr.bf16.mxu0 0
  %551 = vmatmul.mubr.bf16.gmra.mxu0 %v161
  %v552 = vpop.f32.mrf.mxu0
  %v553 = vadd.f32 %v504, %v552
  %v554 = vpop.f32.mrf.mxu0
  %v555 = vpop.f32.mrf.mxu0
  %v556 = vadd.f32 %v507, %v555
  %v557 = vpop.f32.mrf.mxu0
  %558 = vdwg.mxu0
  %v559 = vadd.f32 %v545, %v548
  %v560 = vadd.f32 %v559, %v553
  %v561 = vadd.f32 %v560, %v556
  %v562 = vrot.slane %v561, 4
  %v563 = vadd.f32 %v561, %v562
  %v564 = vrot.slane %v563, 2
  %v565 = vadd.f32 %v563, %v564
  %v566 = vrot.slane %v565, 1
  %v567 = vadd.f32 %v565, %v566
  %v568 = vmul.f32 %v567, 0.03125
  %v569 = vmul.f32 %v545, %v545
  %v570 = vmul.f32 %v548, %v548
  %v571 = vmul.f32 %v553, %v553
  %v572 = vmul.f32 %v556, %v556
  %v573 = vadd.f32 %v569, %v570
  %v574 = vadd.f32 %v573, %v571
  %v575 = vadd.f32 %v574, %v572
  %v576 = vrot.slane %v575, 4
  %v577 = vadd.f32 %v575, %v576
  %v578 = vrot.slane %v577, 2
  %v579 = vadd.f32 %v577, %v578
  %v580 = vrot.slane %v579, 1
  %v581 = vadd.f32 %v579, %v580
  %v582 = vmul.f32 %v581, 0.03125
  %v583 = vmul.f32 %v568, %v568
  %v584 = vsub.f32 %v582, %v583
  %v585 = vmax.f32 %v584, 0.0
  %v586 = vld [vmem:[%s3] sm:$0x1]
  %v587 = vadd.f32 %v585, 1e-05
  %v588 = vrsqrt.pop %v587
  %v589 = vmul.f32 %v586, %v588
  %v590 = vld [vmem:[%s4] sm:$0x1]
  %v591 = vmul.f32 %v568, %v589
  %v592 = vsub.f32 %v590, %v591
  %v594 = vlaneseq
  %v595 = vshrl.u32 %v594, 7
  %v596 = vsub.s32 0, %v595
  %v597 = vrot.slane %v589, %v596
  %v599 = vmul.f32 %v545, %v597
  %v600 = vmul.f32 %v548, %v597
  %v601 = vmul.f32 %v553, %v597
  %v602 = vmul.f32 %v556, %v597
  %v604 = vlaneseq
  %v605 = vshrl.u32 %v604, 7
  %v606 = vsub.s32 0, %v605
  %v607 = vrot.slane %v592, %v606
  %v609 = vadd.f32 %v599, %v607
  %v610 = vadd.f32 %v600, %v607
  %v611 = vadd.f32 %v601, %v607
  %v612 = vadd.f32 %v602, %v607
  %v613 = vmax.f32 %v609, 0.0
  %v614 = vmax.f32 %v610, 0.0
  %v615 = vmax.f32 %v611, 0.0
  %v616 = vmax.f32 %v612, 0.0
  %617 = vst [vmem:[%s5] sm:$0xff] %v613
  %618 = vst [vmem:[%s5 + $0x8] sm:$0xff] %v614
  %619 = vst [vmem:[%s5 + $0x10] sm:$0xff] %v615
  %620 = vst [vmem:[%s5 + $0x18] sm:$0xff] %v616
  // Predicated region
  $region22: #{residual_net.17} parent=0 // pred_check
    _
  $region23: #{residual_net.17} parent=0 // pred_check_branch
    %622 = sbr.rel (0) target = $region25
  $region24: #{residual_net.17} parent=0 // pred_region
    _
  $region25: #{residual_net.17} parent=0 // pred_fallthru
    _
  // Predicated region
  $region26: #{residual_net.17} parent=0 // pred_check
    _
  $region27: #{residual_net.17} parent=0 // pred_check_branch
    %624 = sbr.rel (0) target = $region29
  $region28: #{residual_net.17} parent=0 // pred_region
    _
  $region29: #{residual_net.17} parent=0 // pred_fallthru
    _

// kernel: residual_net.18
$region0: #{residual_net.18}
  #allocation0 [shape = 'u32[]', space=smem, size = 0x4, offset = 0x4, fixed_abs, tag = 'smem constant byte address 0x4 - core index']
  #allocation1 [shape = 'u32[144,128]{1,0:T(1,128)}', space=vmem, size = 0x12000, scoped, tag = 'internal scratch']
  %s0 = inlined_call_operand.vmem [shape: bf16[32,640], index: 0, kind: input, shape index: {}]
  %s1 = inlined_call_operand.vmem [shape: bf16[640,128], index: 1, kind: input, shape index: {}]
  %s2 = inlined_call_operand.vmem [shape: f32[1,128], index: 2, kind: input, shape index: {}]
  %s3 = inlined_call_operand.vmem [shape: f32[1,128], index: 3, kind: input, shape index: {}]
  %s4 = inlined_call_operand.vmem [shape: f32[1,128], index: 4, kind: input, shape index: {}]
  %s5 = inlined_call_operand.vmem [shape: f32[32,128], index: 5, kind: input, shape index: {}]
  %s6 = inlined_call_operand.vmem [shape: f32[32,128], index: 6, kind: output, shape index: {}]
  %s7 = sld [smem:[#allocation0]]
  $region34: #{residual_net.18} parent=0
    _
  %s9 = ssub.s32 1, %s7
  %s10 = scalar_select 0, %s9, %s7
  // Predicated region
  $region2: #{residual_net.18} parent=0 // pred_check
    _
  $region3: #{residual_net.18} parent=0 // pred_check_branch
    %12 = sbr.rel (0) target = $region5
  $region4: #{residual_net.18} parent=0 // pred_region
    _
  $region5: #{residual_net.18} parent=0 // pred_fallthru
    _
  // Predicated region
  $region6: #{residual_net.18} parent=0 // pred_check
    _
  $region7: #{residual_net.18} parent=0 // pred_check_branch
    %14 = sbr.rel (0) target = $region9
  $region8: #{residual_net.18} parent=0 // pred_region
    _
  $region9: #{residual_net.18} parent=0 // pred_fallthru
    _
  // Predicated region
  $region10: #{residual_net.18} parent=0 // pred_check
    _
  $region11: #{residual_net.18} parent=0 // pred_check_branch
    %16 = sbr.rel (0) target = $region13
  $region12: #{residual_net.18} parent=0 // pred_region
    _
  $region13: #{residual_net.18} parent=0 // pred_fallthru
    _
  // Predicated region
  $region14: #{residual_net.18} parent=0 // pred_check
    _
  $region15: #{residual_net.18} parent=0 // pred_check_branch
    %18 = sbr.rel (0) target = $region17
  $region16: #{residual_net.18} parent=0 // pred_region
    _
  $region17: #{residual_net.18} parent=0 // pred_fallthru
    _
  // Predicated region
  $region18: #{residual_net.18} parent=0 // pred_check
    _
  $region19: #{residual_net.18} parent=0 // pred_check_branch
    %20 = sbr.rel (0) target = $region21
  $region20: #{residual_net.18} parent=0 // pred_region
    _
  $region21: #{residual_net.18} parent=0 // pred_fallthru
    _
  // Predicated region
  $region22: #{residual_net.18} parent=0 // pred_check
    _
  $region23: #{residual_net.18} parent=0 // pred_check_branch
    %22 = sbr.rel (0) target = $region25
  $region24: #{residual_net.18} parent=0 // pred_region
    _
  $region25: #{residual_net.18} parent=0 // pred_fallthru
    _
  %v24 = vld [vmem:[%s0] sm:$0xff]
  %v25 = vld [vmem:[%s0 + $0x8] sm:$0xff]
  %v26 = vld [vmem:[%s0 + $0x10] sm:$0xf]
  %v27 = vld [vmem:[%s0 + $0x14] sm:$0xff]
  %v28 = vld [vmem:[%s0 + $0x1c] sm:$0xff]
  %v29 = vld [vmem:[%s0 + $0x24] sm:$0xf]
  %v30 = vld [vmem:[%s0 + $0x28] sm:$0xff]
  %v31 = vld [vmem:[%s0 + $0x30] sm:$0xff]
  %v32 = vld [vmem:[%s0 + $0x38] sm:$0xf]
  %v33 = vld [vmem:[%s0 + $0x3c] sm:$0xff]
  %v34 = vld [vmem:[%s0 + $0x44] sm:$0xff]
  %v35 = vld [vmem:[%s0 + $0x4c] sm:$0xf]
  %v36 = vld [vmem:[%s1] sm:$0xf]
  %v37 = vld [vmem:[%s1 + $0x4] sm:$0xf]
  %v38 = vld [vmem:[%s1 + $0x8] sm:$0xf]
  %v39 = vld [vmem:[%s1 + $0xc] sm:$0xf]
  %v40 = vld [vmem:[%s1 + $0x10] sm:$0xf]
  %v41 = vld [vmem:[%s1 + $0x14] sm:$0xf]
  %v42 = vld [vmem:[%s1 + $0x18] sm:$0xf]
  %v43 = vld [vmem:[%s1 + $0x1c] sm:$0xf]
  %v44 = vld [vmem:[%s1 + $0x20] sm:$0xf]
  %v45 = vld [vmem:[%s1 + $0x24] sm:$0xf]
  %v46 = vld [vmem:[%s1 + $0x28] sm:$0xf]
  %v47 = vld [vmem:[%s1 + $0x2c] sm:$0xf]
  %v48 = vld [vmem:[%s1 + $0x30] sm:$0xf]
  %v49 = vld [vmem:[%s1 + $0x34] sm:$0xf]
  %v50 = vld [vmem:[%s1 + $0x38] sm:$0xf]
  %v51 = vld [vmem:[%s1 + $0x3c] sm:$0xf]
  %v52 = vld [vmem:[%s1 + $0x40] sm:$0xf]
  %v53 = vld [vmem:[%s1 + $0x44] sm:$0xf]
  %v54 = vld [vmem:[%s1 + $0x48] sm:$0xf]
  %v55 = vld [vmem:[%s1 + $0x4c] sm:$0xf]
  %v56 = vld [vmem:[%s1 + $0x50] sm:$0xf]
  %v57 = vld [vmem:[%s1 + $0x54] sm:$0xf]
  %v58 = vld [vmem:[%s1 + $0x58] sm:$0xf]
  %v59 = vld [vmem:[%s1 + $0x5c] sm:$0xf]
  %v60 = vld [vmem:[%s1 + $0x60] sm:$0xf]
  %v61 = vld [vmem:[%s1 + $0x64] sm:$0xf]
  %v62 = vld [vmem:[%s1 + $0x68] sm:$0xf]
  %v63 = vld [vmem:[%s1 + $0x6c] sm:$0xf]
  %v64 = vld [vmem:[%s1 + $0x70] sm:$0xf]
  %v65 = vld [vmem:[%s1 + $0x74] sm:$0xf]
  %v66 = vld [vmem:[%s1 + $0x78] sm:$0xf]
  %v67 = vld [vmem:[%s1 + $0x7c] sm:$0xf]
  %v68 = vld [vmem:[%s1 + $0x80] sm:$0xf]
  %v69 = vld [vmem:[%s1 + $0x84] sm:$0xf]
  %v70 = vld [vmem:[%s1 + $0x88] sm:$0xf]
  %v71 = vld [vmem:[%s1 + $0x8c] sm:$0xf]
  %v72 = vld [vmem:[%s1 + $0x90] sm:$0xf]
  %v73 = vld [vmem:[%s1 + $0x94] sm:$0xf]
  %v74 = vld [vmem:[%s1 + $0x98] sm:$0xf]
  %v75 = vld [vmem:[%s1 + $0x9c] sm:$0xf]
  %v76 = vld [vmem:[%s1 + $0xa0] sm:$0xf]
  %v77 = vld [vmem:[%s1 + $0xa4] sm:$0xf]
  %v78 = vld [vmem:[%s1 + $0xa8] sm:$0xf]
  %v79 = vld [vmem:[%s1 + $0xac] sm:$0xf]
  %v80 = vld [vmem:[%s1 + $0xb0] sm:$0xf]
  %v81 = vld [vmem:[%s1 + $0xb4] sm:$0xf]
  %v82 = vld [vmem:[%s1 + $0xb8] sm:$0xf]
  %v83 = vld [vmem:[%s1 + $0xbc] sm:$0xf]
  %v84 = vld [vmem:[%s1 + $0xc0] sm:$0xf]
  %v85 = vld [vmem:[%s1 + $0xc4] sm:$0xf]
  %v86 = vld [vmem:[%s1 + $0xc8] sm:$0xf]
  %v87 = vld [vmem:[%s1 + $0xcc] sm:$0xf]
  %v88 = vld [vmem:[%s1 + $0xd0] sm:$0xf]
  %v89 = vld [vmem:[%s1 + $0xd4] sm:$0xf]
  %v90 = vld [vmem:[%s1 + $0xd8] sm:$0xf]
  %v91 = vld [vmem:[%s1 + $0xdc] sm:$0xf]
  %v92 = vld [vmem:[%s1 + $0xe0] sm:$0xf]
  %v93 = vld [vmem:[%s1 + $0xe4] sm:$0xf]
  %v94 = vld [vmem:[%s1 + $0xe8] sm:$0xf]
  %v95 = vld [vmem:[%s1 + $0xec] sm:$0xf]
  %v96 = vld [vmem:[%s1 + $0xf0] sm:$0xf]
  %v97 = vld [vmem:[%s1 + $0xf4] sm:$0xf]
  %v98 = vld [vmem:[%s1 + $0xf8] sm:$0xf]
  %v99 = vld [vmem:[%s1 + $0xfc] sm:$0xf]
  %v100 = vld [vmem:[%s1 + $0x100] sm:$0xf]
  %v101 = vld [vmem:[%s1 + $0x104] sm:$0xf]
  %v102 = vld [vmem:[%s1 + $0x108] sm:$0xf]
  %v103 = vld [vmem:[%s1 + $0x10c] sm:$0xf]
  %v104 = vld [vmem:[%s1 + $0x110] sm:$0xf]
  %v105 = vld [vmem:[%s1 + $0x114] sm:$0xf]
  %v106 = vld [vmem:[%s1 + $0x118] sm:$0xf]
  %v107 = vld [vmem:[%s1 + $0x11c] sm:$0xf]
  %v108 = vld [vmem:[%s1 + $0x120] sm:$0xf]
  %v109 = vld [vmem:[%s1 + $0x124] sm:$0xf]
  %v110 = vld [vmem:[%s1 + $0x128] sm:$0xf]
  %v111 = vld [vmem:[%s1 + $0x12c] sm:$0xf]
  %v112 = vld [vmem:[%s1 + $0x130] sm:$0xf]
  %v113 = vld [vmem:[%s1 + $0x134] sm:$0xf]
  %v114 = vld [vmem:[%s1 + $0x138] sm:$0xf]
  %v115 = vld [vmem:[%s1 + $0x13c] sm:$0xf]
  %v116 = vld [vmem:[%s2] sm:$0x1]
  %v118 = vlaneseq
  %v119 = vshrl.u32 %v118, 7
  %v120 = vsub.s32 0, %v119
  %v121 = vrot.slane %v116, %v120
  %v135 = vunpack.c.l.b16 %v24
  %v136 = vunpack.c.h.b16 %v24
  %v137 = vunpack.c.l.b16 %v25
  %v138 = vunpack.c.h.b16 %v25
  %v139 = vunpack.c.l.b16 %v26
  %v140 = vunpack.c.l.b16 %v27
  %v141 = vunpack.c.h.b16 %v27
  %v142 = vunpack.c.l.b16 %v28
  %v143 = vunpack.c.h.b16 %v28
  %v144 = vunpack.c.l.b16 %v29
  %v145 = vunpack.c.l.b16 %v30
  %v146 = vunpack.c.h.b16 %v30
  %v147 = vunpack.c.l.b16 %v31
  %v148 = vunpack.c.h.b16 %v31
  %v149 = vunpack.c.l.b16 %v32
  %v150 = vunpack.c.l.b16 %v33
  %v151 = vunpack.c.h.b16 %v33
  %v152 = vunpack.c.l.b16 %v34
  %v153 = vunpack.c.h.b16 %v34
  %v154 = vunpack.c.l.b16 %v35
  %v155 = vpack.c.b16 %v140, %v135
  %v156 = vpack.c.b16 %v141, %v136
  %v157 = vpack.c.b16 %v142, %v137
  %v158 = vpack.c.b16 %v143, %v138
  %v159 = vpack.c.b16 %v144, %v139
  %v160 = vpack.c.b16 %v150, %v145
  %v161 = vpack.c.b16 %v151, %v146
  %v162 = vpack.c.b16 %v152, %v147
  %v163 = vpack.c.b16 %v153, %v148
  %v164 = vpack.c.b16 %v154, %v149
  %v255 = vunpack.c.l.b16 %v36
  %v256 = vunpack.c.l.b16 %v37
  %v257 = vunpack.c.l.b16 %v38
  %v258 = vunpack.c.l.b16 %v39
  %v259 = vunpack.c.l.b16 %v40
  %v260 = vunpack.c.l.b16 %v41
  %v261 = vunpack.c.l.b16 %v42
  %v262 = vunpack.c.l.b16 %v43
  %v263 = vunpack.c.l.b16 %v44
  %v264 = vunpack.c.l.b16 %v45
  %v265 = vunpack.c.l.b16 %v46
  %v266 = vunpack.c.l.b16 %v47
  %v267 = vunpack.c.l.b16 %v48
  %v268 = vunpack.c.l.b16 %v49
  %v269 = vunpack.c.l.b16 %v50
  %v270 = vunpack.c.l.b16 %v51
  %v271 = vunpack.c.l.b16 %v52
  %v272 = vunpack.c.l.b16 %v53
  %v273 = vunpack.c.l.b16 %v54
  %v274 = vunpack.c.l.b16 %v55
  %v275 = vunpack.c.l.b16 %v56
  %v276 = vunpack.c.l.b16 %v57
  %v277 = vunpack.c.l.b16 %v58
  %v278 = vunpack.c.l.b16 %v59
  %v279 = vunpack.c.l.b16 %v60
  %v280 = vunpack.c.l.b16 %v61
  %v281 = vunpack.c.l.b16 %v62
  %v282 = vunpack.c.l.b16 %v63
  %v283 = vunpack.c.l.b16 %v64
  %v284 = vunpack.c.l.b16 %v65
  %v285 = vunpack.c.l.b16 %v66
  %v286 = vunpack.c.l.b16 %v67
  %v287 = vunpack.c.l.b16 %v68
  %v288 = vunpack.c.l.b16 %v69
  %v289 = vunpack.c.l.b16 %v70
  %v290 = vunpack.c.l.b16 %v71
  %v291 = vunpack.c.l.b16 %v72
  %v292 = vunpack.c.l.b16 %v73
  %v293 = vunpack.c.l.b16 %v74
  %v294 = vunpack.c.l.b16 %v75
  %v295 = vunpack.c.l.b16 %v76
  %v296 = vunpack.c.l.b16 %v77
  %v297 = vunpack.c.l.b16 %v78
  %v298 = vunpack.c.l.b16 %v79
  %v299 = vunpack.c.l.b16 %v80
  %v300 = vunpack.c.l.b16 %v81
  %v301 = vunpack.c.l.b16 %v82
  %v302 = vunpack.c.l.b16 %v83
  %v303 = vunpack.c.l.b16 %v84
  %v304 = vunpack.c.l.b16 %v85
  %v305 = vunpack.c.l.b16 %v86
  %v306 = vunpack.c.l.b16 %v87
  %v307 = vunpack.c.l.b16 %v88
  %v308 = vunpack.c.l.b16 %v89
  %v309 = vunpack.c.l.b16 %v90
  %v310 = vunpack.c.l.b16 %v91
  %v311 = vunpack.c.l.b16 %v92
  %v312 = vunpack.c.l.b16 %v93
  %v313 = vunpack.c.l.b16 %v94
  %v314 = vunpack.c.l.b16 %v95
  %v315 = vunpack.c.l.b16 %v96
  %v316 = vunpack.c.l.b16 %v97
  %v317 = vunpack.c.l.b16 %v98
  %v318 = vunpack.c.l.b16 %v99
  %v319 = vunpack.c.l.b16 %v100
  %v320 = vunpack.c.l.b16 %v101
  %v321 = vunpack.c.l.b16 %v102
  %v322 = vunpack.c.l.b16 %v103
  %v323 = vunpack.c.l.b16 %v104
  %v324 = vunpack.c.l.b16 %v105
  %v325 = vunpack.c.l.b16 %v106
  %v326 = vunpack.c.l.b16 %v107
  %v327 = vunpack.c.l.b16 %v108
  %v328 = vunpack.c.l.b16 %v109
  %v329 = vunpack.c.l.b16 %v110
  %v330 = vunpack.c.l.b16 %v111
  %v331 = vunpack.c.l.b16 %v112
  %v332 = vunpack.c.l.b16 %v113
  %v333 = vunpack.c.l.b16 %v114
  %v334 = vunpack.c.l.b16 %v115
  %v335 = vpack.c.b16 %v256, %v255
  %v336 = vpack.c.b16 %v258, %v257
  %v337 = vpack.c.b16 %v260, %v259
  %v338 = vpack.c.b16 %v262, %v261
  %v339 = vpack.c.b16 %v264, %v263
  %v340 = vpack.c.b16 %v266, %v265
  %v341 = vpack.c.b16 %v268, %v267
  %v342 = vpack.c.b16 %v270, %v269
  %v343 = vpack.c.b16 %v272, %v271
  %v344 = vpack.c.b16 %v274, %v273
  %v345 = vpack.c.b16 %v276, %v275
  %v346 = vpack.c.b16 %v278, %v277
  %v347 = vpack.c.b16 %v280, %v279
  %v348 = vpack.c.b16 %v282, %v281
  %v349 = vpack.c.b16 %v284, %v283
  %v350 = vpack.c.b16 %v286, %v285
  %v351 = vpack.c.b16 %v288, %v287
  %v352 = vpack.c.b16 %v290, %v289
  %v353 = vpack.c.b16 %v292, %v291
  %v354 = vpack.c.b16 %v294, %v293
  %v355 = vpack.c.b16 %v296, %v295
  %v356 = vpack.c.b16 %v298, %v297
  %v357 = vpack.c.b16 %v300, %v299
  %v358 = vpack.c.b16 %v302, %v301
  %v359 = vpack.c.b16 %v304, %v303
  %v360 = vpack.c.b16 %v306, %v305
  %v361 = vpack.c.b16 %v308, %v307
  %v362 = vpack.c.b16 %v310, %v309
  %v363 = vpack.c.b16 %v312, %v311
  %v364 = vpack.c.b16 %v314, %v313
  %v365 = vpack.c.b16 %v316, %v315
  %v366 = vpack.c.b16 %v318, %v317
  %v367 = vpack.c.b16 %v320, %v319
  %v368 = vpack.c.b16 %v322, %v321
  %v369 = vpack.c.b16 %v324, %v323
  %v370 = vpack.c.b16 %v326, %v325
  %v371 = vpack.c.b16 %v328, %v327
  %v372 = vpack.c.b16 %v330, %v329
  %v373 = vpack.c.b16 %v332, %v331
  %v374 = vpack.c.b16 %v334, %v333
  %415 = vmatprep.subr.bf16.mxu0 0
  %416 = vmatpush1.bf16.msra.mxu0 %v342
  %417 = vmatprep.subr.bf16.mxu0 0
  %418 = vmatpush1.bf16.msra.mxu0 %v341
  %419 = vmatprep.subr.bf16.mxu0 0
  %420 = vmatpush1.bf16.msra.mxu0 %v340
  %421 = vmatprep.subr.bf16.mxu0 0
  %422 = vmatpush1.bf16.msra.mxu0 %v339
  %423 = vmatprep.subr.bf16.mxu0 0
  %424 = vmatpush1.bf16.msra.mxu0 %v338
  %425 = vmatprep.subr.bf16.mxu0 0
  %426 = vmatpush1.bf16.msra.mxu0 %v337
  %427 = vmatprep.subr.bf16.mxu0 0
  %428 = vmatpush1.bf16.msra.mxu0 %v336
  %429 = vmatprep.subr.bf16.mxu0 0
  %430 = vmatpush1.bf16.msra.mxu0 %v335
  %431 = vmatprep.subr.bf16.mxu0 0
  %432 = vmatpush2.bf16.msra.mxu0 %v350
  %433 = vmatprep.subr.bf16.mxu0 0
  %434 = vmatpush2.bf16.msra.mxu0 %v349
  %435 = vmatprep.subr.bf16.mxu0 0
  %436 = vmatpush2.bf16.msra.mxu0 %v348
  %437 = vmatprep.subr.bf16.mxu0 0
  %438 = vmatpush2.bf16.msra.mxu0 %v347
  %439 = vmatprep.subr.bf16.mxu0 0
  %440 = vmatpush2.bf16.msra.mxu0 %v346
  %441 = vmatprep.subr.bf16.mxu0 0
  %442 = vmatpush2.bf16.msra.mxu0 %v345
  %443 = vmatprep.subr.bf16.mxu0 0
  %444 = vmatpush2.bf16.msra.mxu0 %v344
  %445 = vmatprep.subr.bf16.mxu0 0
  %446 = vmatpush2.bf16.msra.mxu0 %v343
  %447 = vmatprep.mubr.bf16.mxu0 %v156
  %448 = vmatmul.mubr.bf16.gmra.mxu0 %v155
  %v449 = vpop.f32.mrf.mxu0
  %v450 = vadd.f32 %v121, %v449
  %v451 = vpop.f32.mrf.mxu0
  %v452 = vpop.f32.mrf.mxu0
  %v453 = vadd.f32 %v121, %v452
  %v454 = vpop.f32.mrf.mxu0
  %455 = vmatprep.mubr.bf16.mxu0 %v161
  %456 = vmatmul.mubr.bf16.gmra.mxu0 %v160
  %v457 = vpop.f32.mrf.mxu0
  %v458 = vadd.f32 %v121, %v457
  %v459 = vpop.f32.mrf.mxu0
  %v460 = vpop.f32.mrf.mxu0
  %v461 = vadd.f32 %v121, %v460
  %v462 = vpop.f32.mrf.mxu0
  %463 = vdwg.mxu0
  %464 = vmatprep.subr.bf16.mxu0 0
  %465 = vmatpush1.bf16.msra.mxu0 %v358
  %466 = vmatprep.subr.bf16.mxu0 0
  %467 = vmatpush1.bf16.msra.mxu0 %v357
  %468 = vmatprep.subr.bf16.mxu0 0
  %469 = vmatpush1.bf16.msra.mxu0 %v356
  %470 = vmatprep.subr.bf16.mxu0 0
  %471 = vmatpush1.bf16.msra.mxu0 %v355
  %472 = vmatprep.subr.bf16.mxu0 0
  %473 = vmatpush1.bf16.msra.mxu0 %v354
  %474 = vmatprep.subr.bf16.mxu0 0
  %475 = vmatpush1.bf16.msra.mxu0 %v353
  %476 = vmatprep.subr.bf16.mxu0 0
  %477 = vmatpush1.bf16.msra.mxu0 %v352
  %478 = vmatprep.subr.bf16.mxu0 0
  %479 = vmatpush1.bf16.msra.mxu0 %v351
  %480 = vmatprep.subr.bf16.mxu0 0
  %481 = vmatpush2.bf16.msra.mxu0 %v366
  %482 = vmatprep.subr.bf16.mxu0 0
  %483 = vmatpush2.bf16.msra.mxu0 %v365
  %484 = vmatprep.subr.bf16.mxu0 0
  %485 = vmatpush2.bf16.msra.mxu0 %v364
  %486 = vmatprep.subr.bf16.mxu0 0
  %487 = vmatpush2.bf16.msra.mxu0 %v363
  %488 = vmatprep.subr.bf16.mxu0 0
  %489 = vmatpush2.bf16.msra.mxu0 %v362
  %490 = vmatprep.subr.bf16.mxu0 0
  %491 = vmatpush2.bf16.msra.mxu0 %v361
  %492 = vmatprep.subr.bf16.mxu0 0
  %493 = vmatpush2.bf16.msra.mxu0 %v360
  %494 = vmatprep.subr.bf16.mxu0 0
  %495 = vmatpush2.bf16.msra.mxu0 %v359
  %496 = vmatprep.mubr.bf16.mxu0 %v158
  %497 = vmatmul.mubr.bf16.gmra.mxu0 %v157
  %v498 = vpop.f32.mrf.mxu0
  %v499 = vadd.f32 %v450, %v498
  %v500 = vpop.f32.mrf.mxu0
  %v501 = vpop.f32.mrf.mxu0
  %v502 = vadd.f32 %v453, %v501
  %v503 = vpop.f32.mrf.mxu0
  %504 = vmatprep.mubr.bf16.mxu0 %v163
  %505 = vmatmul.mubr.bf16.gmra.mxu0 %v162
  %v506 = vpop.f32.mrf.mxu0
  %v507 = vadd.f32 %v458, %v506
  %v508 = vpop.f32.mrf.mxu0
  %v509 = vpop.f32.mrf.mxu0
  %v510 = vadd.f32 %v461, %v509
  %v511 = vpop.f32.mrf.mxu0
  %512 = vdwg.mxu0
  %513 = vmatprep.subr.bf16.mxu0 0
  %514 = vmatpush1.bf16.msra.mxu0 %v374
  %515 = vmatprep.subr.bf16.mxu0 0
  %516 = vmatpush1.bf16.msra.mxu0 %v373
  %517 = vmatprep.subr.bf16.mxu0 0
  %518 = vmatpush1.bf16.msra.mxu0 %v372
  %519 = vmatprep.subr.bf16.mxu0 0
  %520 = vmatpush1.bf16.msra.mxu0 %v371
  %521 = vmatprep.subr.bf16.mxu0 0
  %522 = vmatpush1.bf16.msra.mxu0 %v370
  %523 = vmatprep.subr.bf16.mxu0 0
  %524 = vmatpush1.bf16.msra.mxu0 %v369
  %525 = vmatprep.subr.bf16.mxu0 0
  %526 = vmatpush1.bf16.msra.mxu0 %v368
  %527 = vmatprep.subr.bf16.mxu0 0
  %528 = vmatpush1.bf16.msra.mxu0 %v367
  %529 = vmatprep.subr.bf16.mxu0 0
  %530 = vmatpush2.bf16.msra.mxu0 0
  %531 = vmatprep.subr.bf16.mxu0 0
  %532 = vmatpush2.bf16.msra.mxu0 0
  %533 = vmatprep.subr.bf16.mxu0 0
  %534 = vmatpush2.bf16.msra.mxu0 0
  %535 = vmatprep.subr.bf16.mxu0 0
  %536 = vmatpush2.bf16.msra.mxu0 0
  %537 = vmatprep.subr.bf16.mxu0 0
  %538 = vmatpush2.bf16.msra.mxu0 0
  %539 = vmatprep.subr.bf16.mxu0 0
  %540 = vmatpush2.bf16.msra.mxu0 0
  %541 = vmatprep.subr.bf16.mxu0 0
  %542 = vmatpush2.bf16.msra.mxu0 0
  %543 = vmatprep.subr.bf16.mxu0 0
  %544 = vmatpush2.bf16.msra.mxu0 0
  %545 = vmatprep.mubr.bf16.mxu0 0
  %546 = vmatmul.mubr.bf16.gmra.mxu0 %v159
  %v547 = vpop.f32.mrf.mxu0
  %v548 = vadd.f32 %v499, %v547
  %v549 = vpop.f32.mrf.mxu0
  %v550 = vpop.f32.mrf.mxu0
  %v551 = vadd.f32 %v502, %v550
  %v552 = vpop.f32.mrf.mxu0
  %553 = vmatprep.mubr.bf16.mxu0 0
  %554 = vmatmul.mubr.bf16.gmra.mxu0 %v164
  %v555 = vpop.f32.mrf.mxu0
  %v556 = vadd.f32 %v507, %v555
  %v557 = vpop.f32.mrf.mxu0
  %v558 = vpop.f32.mrf.mxu0
  %v559 = vadd.f32 %v510, %v558
  %v560 = vpop.f32.mrf.mxu0
  %561 = vdwg.mxu0
  %v562 = vadd.f32 %v548, %v551
  %v563 = vadd.f32 %v562, %v556
  %v564 = vadd.f32 %v563, %v559
  %v565 = vrot.slane %v564, 4
  %v566 = vadd.f32 %v564, %v565
  %v567 = vrot.slane %v566, 2
  %v568 = vadd.f32 %v566, %v567
  %v569 = vrot.slane %v568, 1
  %v570 = vadd.f32 %v568, %v569
  %v571 = vmul.f32 %v570, 0.03125
  %v572 = vmul.f32 %v548, %v548
  %v573 = vmul.f32 %v551, %v551
  %v574 = vmul.f32 %v556, %v556
  %v575 = vmul.f32 %v559, %v559
  %v576 = vadd.f32 %v572, %v573
  %v577 = vadd.f32 %v576, %v574
  %v578 = vadd.f32 %v577, %v575
  %v579 = vrot.slane %v578, 4
  %v580 = vadd.f32 %v578, %v579
  %v581 = vrot.slane %v580, 2
  %v582 = vadd.f32 %v580, %v581
  %v583 = vrot.slane %v582, 1
  %v584 = vadd.f32 %v582, %v583
  %v585 = vmul.f32 %v584, 0.03125
  %v586 = vmul.f32 %v571, %v571
  %v587 = vsub.f32 %v585, %v586
  %v588 = vmax.f32 %v587, 0.0
  %v589 = vld [vmem:[%s3] sm:$0x1]
  %v590 = vadd.f32 %v588, 1e-05
  %v591 = vrsqrt.pop %v590
  %v592 = vmul.f32 %v589, %v591
  %v593 = vld [vmem:[%s4] sm:$0x1]
  %v594 = vmul.f32 %v571, %v592
  %v595 = vsub.f32 %v593, %v594
  %v597 = vlaneseq
  %v598 = vshrl.u32 %v597, 7
  %v599 = vsub.s32 0, %v598
  %v600 = vrot.slane %v592, %v599
  %v602 = vmul.f32 %v548, %v600
  %v603 = vmul.f32 %v551, %v600
  %v604 = vmul.f32 %v556, %v600
  %v605 = vmul.f32 %v559, %v600
  %v607 = vlaneseq
  %v608 = vshrl.u32 %v607, 7
  %v609 = vsub.s32 0, %v608
  %v610 = vrot.slane %v595, %v609
  %v612 = vadd.f32 %v602, %v610
  %v613 = vadd.f32 %v603, %v610
  %v614 = vadd.f32 %v604, %v610
  %v615 = vadd.f32 %v605, %v610
  %v616 = vld [vmem:[%s5] sm:$0xff]
  %v617 = vld [vmem:[%s5 + $0x8] sm:$0xff]
  %v618 = vld [vmem:[%s5 + $0x10] sm:$0xff]
  %v619 = vld [vmem:[%s5 + $0x18] sm:$0xff]
  %v620 = vadd.f32 %v612, %v616
  %v621 = vadd.f32 %v613, %v617
  %v622 = vadd.f32 %v614, %v618
  %v623 = vadd.f32 %v615, %v619
  %v624 = vmax.f32 %v620, 0.0
  %v625 = vmax.f32 %v621, 0.0
  %v626 = vmax.f32 %v622, 0.0
  %v627 = vmax.f32 %v623, 0.0
  %628 = vst [vmem:[%s6] sm:$0xff] %v624
  %629 = vst [vmem:[%s6 + $0x8] sm:$0xff] %v625
  %630 = vst [vmem:[%s6 + $0x10] sm:$0xff] %v626
  %631 = vst [vmem:[%s6 + $0x18] sm:$0xff] %v627
  // Predicated region
  $region26: #{residual_net.18} parent=0 // pred_check
    _
  $region27: #{residual_net.18} parent=0 // pred_check_branch
    %633 = sbr.rel (0) target = $region29
  $region28: #{residual_net.18} parent=0 // pred_region
    _
  $region29: #{residual_net.18} parent=0 // pred_fallthru
    _
  // Predicated region
  $region30: #{residual_net.18} parent=0 // pred_check
    _
  $region31: #{residual_net.18} parent=0 // pred_check_branch
    %635 = sbr.rel (0) target = $region33
  $region32: #{residual_net.18} parent=0 // pred_region
    _
  $region33: #{residual_net.18} parent=0 // pred_fallthru
    _

// kernel: residual_net.19
$region0: #{residual_net.19}
  #allocation0 [shape = 'u32[]', space=smem, size = 0x4, offset = 0x4, fixed_abs, tag = 'smem constant byte address 0x4 - core index']
  #allocation1 [shape = 'u32[144,128]{1,0:T(1,128)}', space=vmem, size = 0x12000, scoped, tag = 'internal scratch']
  %s0 = inlined_call_operand.vmem [shape: bf16[2,2048], index: 0, kind: input, shape index: {}]
  %s1 = inlined_call_operand.vmem [shape: bf16[2048,128], index: 1, kind: input, shape index: {}]
  %s2 = inlined_call_operand.vmem [shape: f32[1,128], index: 2, kind: input, shape index: {}]
  %s3 = inlined_call_operand.hbm [shape: f32[2,128], index: 3, kind: output, shape index: {}]
  %s4 = sld [smem:[#allocation0]]
  $region22: #{residual_net.19} parent=0
    _
  %s6 = ssub.s32 1, %s4
  %s7 = scalar_select 0, %s6, %s4
  $region1: #{residual_net.19} parent=0
    #allocation2 [shape = 'u8[1024]{0}', space=vmem, size = 0x400, scoped, tag = 'output window, operand 0, single buffered']
    #allocation3 [shape = 's32[1]{0}', space=sflag, size = 0x4, scoped, tag = 'scoped memory for residual_net.19']
    %8 = vsyncpa [#allocation3], 0
    // Predicated region
    $region2: #{residual_net.19} parent=1 // pred_check
      _
    $region3: #{residual_net.19} parent=1 // pred_check_branch
      %10 = sbr.rel (0) target = $region5
    $region4: #{residual_net.19} parent=1 // pred_region
      _
    $region5: #{residual_net.19} parent=1 // pred_fallthru
      _
    // Predicated region
    $region6: #{residual_net.19} parent=1 // pred_check
      _
    $region7: #{residual_net.19} parent=1 // pred_check_branch
      %12 = sbr.rel (0) target = $region9
    $region8: #{residual_net.19} parent=1 // pred_region
      _
    $region9: #{residual_net.19} parent=1 // pred_fallthru
      _
    // Predicated region
    $region10: #{residual_net.19} parent=1 // pred_check
      _
    $region11: #{residual_net.19} parent=1 // pred_check_branch
      %14 = sbr.rel (0) target = $region13
    $region12: #{residual_net.19} parent=1 // pred_region
      _
    $region13: #{residual_net.19} parent=1 // pred_fallthru
      _
    %v16 = vld [vmem:[%s0] sm:$0xff]
    %v17 = vld [vmem:[%s0 + $0x8] sm:$0xff]
    %v18 = vld [vmem:[%s1] sm:$0xf]
    %v19 = vld [vmem:[%s1 + $0x4] sm:$0xf]
    %v20 = vld [vmem:[%s1 + $0x8] sm:$0xf]
    %v21 = vld [vmem:[%s1 + $0xc] sm:$0xf]
    %v22 = vld [vmem:[%s1 + $0x10] sm:$0xf]
    %v23 = vld [vmem:[%s1 + $0x14] sm:$0xf]
    %v24 = vld [vmem:[%s1 + $0x18] sm:$0xf]
    %v25 = vld [vmem:[%s1 + $0x1c] sm:$0xf]
    %v26 = vld [vmem:[%s1 + $0x20] sm:$0xf]
    %v27 = vld [vmem:[%s1 + $0x24] sm:$0xf]
    %v28 = vld [vmem:[%s1 + $0x28] sm:$0xf]
    %v29 = vld [vmem:[%s1 + $0x2c] sm:$0xf]
    %v30 = vld [vmem:[%s1 + $0x30] sm:$0xf]
    %v31 = vld [vmem:[%s1 + $0x34] sm:$0xf]
    %v32 = vld [vmem:[%s1 + $0x38] sm:$0xf]
    %v33 = vld [vmem:[%s1 + $0x3c] sm:$0xf]
    %v34 = vld [vmem:[%s1 + $0x40] sm:$0xf]
    %v35 = vld [vmem:[%s1 + $0x44] sm:$0xf]
    %v36 = vld [vmem:[%s1 + $0x48] sm:$0xf]
    %v37 = vld [vmem:[%s1 + $0x4c] sm:$0xf]
    %v38 = vld [vmem:[%s1 + $0x50] sm:$0xf]
    %v39 = vld [vmem:[%s1 + $0x54] sm:$0xf]
    %v40 = vld [vmem:[%s1 + $0x58] sm:$0xf]
    %v41 = vld [vmem:[%s1 + $0x5c] sm:$0xf]
    %v42 = vld [vmem:[%s1 + $0x60] sm:$0xf]
    %v43 = vld [vmem:[%s1 + $0x64] sm:$0xf]
    %v44 = vld [vmem:[%s1 + $0x68] sm:$0xf]
    %v45 = vld [vmem:[%s1 + $0x6c] sm:$0xf]
    %v46 = vld [vmem:[%s1 + $0x70] sm:$0xf]
    %v47 = vld [vmem:[%s1 + $0x74] sm:$0xf]
    %v48 = vld [vmem:[%s1 + $0x78] sm:$0xf]
    %v49 = vld [vmem:[%s1 + $0x7c] sm:$0xf]
    %v50 = vld [vmem:[%s1 + $0x80] sm:$0xf]
    %v51 = vld [vmem:[%s1 + $0x84] sm:$0xf]
    %v52 = vld [vmem:[%s1 + $0x88] sm:$0xf]
    %v53 = vld [vmem:[%s1 + $0x8c] sm:$0xf]
    %v54 = vld [vmem:[%s1 + $0x90] sm:$0xf]
    %v55 = vld [vmem:[%s1 + $0x94] sm:$0xf]
    %v56 = vld [vmem:[%s1 + $0x98] sm:$0xf]
    %v57 = vld [vmem:[%s1 + $0x9c] sm:$0xf]
    %v58 = vld [vmem:[%s1 + $0xa0] sm:$0xf]
    %v59 = vld [vmem:[%s1 + $0xa4] sm:$0xf]
    %v60 = vld [vmem:[%s1 + $0xa8] sm:$0xf]
    %v61 = vld [vmem:[%s1 + $0xac] sm:$0xf]
    %v62 = vld [vmem:[%s1 + $0xb0] sm:$0xf]
    %v63 = vld [vmem:[%s1 + $0xb4] sm:$0xf]
    %v64 = vld [vmem:[%s1 + $0xb8] sm:$0xf]
    %v65 = vld [vmem:[%s1 + $0xbc] sm:$0xf]
    %v66 = vld [vmem:[%s1 + $0xc0] sm:$0xf]
    %v67 = vld [vmem:[%s1 + $0xc4] sm:$0xf]
    %v68 = vld [vmem:[%s1 + $0xc8] sm:$0xf]
    %v69 = vld [vmem:[%s1 + $0xcc] sm:$0xf]
    %v70 = vld [vmem:[%s1 + $0xd0] sm:$0xf]
    %v71 = vld [vmem:[%s1 + $0xd4] sm:$0xf]
    %v72 = vld [vmem:[%s1 + $0xd8] sm:$0xf]
    %v73 = vld [vmem:[%s1 + $0xdc] sm:$0xf]
    %v74 = vld [vmem:[%s1 + $0xe0] sm:$0xf]
    %v75 = vld [vmem:[%s1 + $0xe4] sm:$0xf]
    %v76 = vld [vmem:[%s1 + $0xe8] sm:$0xf]
    %v77 = vld [vmem:[%s1 + $0xec] sm:$0xf]
    %v78 = vld [vmem:[%s1 + $0xf0] sm:$0xf]
    %v79 = vld [vmem:[%s1 + $0xf4] sm:$0xf]
    %v80 = vld [vmem:[%s1 + $0xf8] sm:$0xf]
    %v81 = vld [vmem:[%s1 + $0xfc] sm:$0xf]
    %v82 = vld [vmem:[%s1 + $0x100] sm:$0xf]
    %v83 = vld [vmem:[%s1 + $0x104] sm:$0xf]
    %v84 = vld [vmem:[%s1 + $0x108] sm:$0xf]
    %v85 = vld [vmem:[%s1 + $0x10c] sm:$0xf]
    %v86 = vld [vmem:[%s1 + $0x110] sm:$0xf]
    %v87 = vld [vmem:[%s1 + $0x114] sm:$0xf]
    %v88 = vld [vmem:[%s1 + $0x118] sm:$0xf]
    %v89 = vld [vmem:[%s1 + $0x11c] sm:$0xf]
    %v90 = vld [vmem:[%s1 + $0x120] sm:$0xf]
    %v91 = vld [vmem:[%s1 + $0x124] sm:$0xf]
    %v92 = vld [vmem:[%s1 + $0x128] sm:$0xf]
    %v93 = vld [vmem:[%s1 + $0x12c] sm:$0xf]
    %v94 = vld [vmem:[%s1 + $0x130] sm:$0xf]
    %v95 = vld [vmem:[%s1 + $0x134] sm:$0xf]
    %v96 = vld [vmem:[%s1 + $0x138] sm:$0xf]
    %v97 = vld [vmem:[%s1 + $0x13c] sm:$0xf]
    %v98 = vld [vmem:[%s1 + $0x140] sm:$0xf]
    %v99 = vld [vmem:[%s1 + $0x144] sm:$0xf]
    %v100 = vld [vmem:[%s1 + $0x148] sm:$0xf]
    %v101 = vld [vmem:[%s1 + $0x14c] sm:$0xf]
    %v102 = vld [vmem:[%s1 + $0x150] sm:$0xf]
    %v103 = vld [vmem:[%s1 + $0x154] sm:$0xf]
    %v104 = vld [vmem:[%s1 + $0x158] sm:$0xf]
    %v105 = vld [vmem:[%s1 + $0x15c] sm:$0xf]
    %v106 = vld [vmem:[%s1 + $0x160] sm:$0xf]
    %v107 = vld [vmem:[%s1 + $0x164] sm:$0xf]
    %v108 = vld [vmem:[%s1 + $0x168] sm:$0xf]
    %v109 = vld [vmem:[%s1 + $0x16c] sm:$0xf]
    %v110 = vld [vmem:[%s1 + $0x170] sm:$0xf]
    %v111 = vld [vmem:[%s1 + $0x174] sm:$0xf]
    %v112 = vld [vmem:[%s1 + $0x178] sm:$0xf]
    %v113 = vld [vmem:[%s1 + $0x17c] sm:$0xf]
    %v114 = vld [vmem:[%s1 + $0x180] sm:$0xf]
    %v115 = vld [vmem:[%s1 + $0x184] sm:$0xf]
    %v116 = vld [vmem:[%s1 + $0x188] sm:$0xf]
    %v117 = vld [vmem:[%s1 + $0x18c] sm:$0xf]
    %v118 = vld [vmem:[%s1 + $0x190] sm:$0xf]
    %v119 = vld [vmem:[%s1 + $0x194] sm:$0xf]
    %v120 = vld [vmem:[%s1 + $0x198] sm:$0xf]
    %v121 = vld [vmem:[%s1 + $0x19c] sm:$0xf]
    %v122 = vld [vmem:[%s1 + $0x1a0] sm:$0xf]
    %v123 = vld [vmem:[%s1 + $0x1a4] sm:$0xf]
    %v124 = vld [vmem:[%s1 + $0x1a8] sm:$0xf]
    %v125 = vld [vmem:[%s1 + $0x1ac] sm:$0xf]
    %v126 = vld [vmem:[%s1 + $0x1b0] sm:$0xf]
    %v127 = vld [vmem:[%s1 + $0x1b4] sm:$0xf]
    %v128 = vld [vmem:[%s1 + $0x1b8] sm:$0xf]
    %v129 = vld [vmem:[%s1 + $0x1bc] sm:$0xf]
    %v130 = vld [vmem:[%s1 + $0x1c0] sm:$0xf]
    %v131 = vld [vmem:[%s1 + $0x1c4] sm:$0xf]
    %v132 = vld [vmem:[%s1 + $0x1c8] sm:$0xf]
    %v133 = vld [vmem:[%s1 + $0x1cc] sm:$0xf]
    %v134 = vld [vmem:[%s1 + $0x1d0] sm:$0xf]
    %v135 = vld [vmem:[%s1 + $0x1d4] sm:$0xf]
    %v136 = vld [vmem:[%s1 + $0x1d8] sm:$0xf]
    %v137 = vld [vmem:[%s1 + $0x1dc] sm:$0xf]
    %v138 = vld [vmem:[%s1 + $0x1e0] sm:$0xf]
    %v139 = vld [vmem:[%s1 + $0x1e4] sm:$0xf]
    %v140 = vld [vmem:[%s1 + $0x1e8] sm:$0xf]
    %v141 = vld [vmem:[%s1 + $0x1ec] sm:$0xf]
    %v142 = vld [vmem:[%s1 + $0x1f0] sm:$0xf]
    %v143 = vld [vmem:[%s1 + $0x1f4] sm:$0xf]
    %v144 = vld [vmem:[%s1 + $0x1f8] sm:$0xf]
    %v145 = vld [vmem:[%s1 + $0x1fc] sm:$0xf]
    %v146 = vld [vmem:[%s1 + $0x200] sm:$0xf]
    %v147 = vld [vmem:[%s1 + $0x204] sm:$0xf]
    %v148 = vld [vmem:[%s1 + $0x208] sm:$0xf]
    %v149 = vld [vmem:[%s1 + $0x20c] sm:$0xf]
    %v150 = vld [vmem:[%s1 + $0x210] sm:$0xf]
    %v151 = vld [vmem:[%s1 + $0x214] sm:$0xf]
    %v152 = vld [vmem:[%s1 + $0x218] sm:$0xf]
    %v153 = vld [vmem:[%s1 + $0x21c] sm:$0xf]
    %v154 = vld [vmem:[%s1 + $0x220] sm:$0xf]
    %v155 = vld [vmem:[%s1 + $0x224] sm:$0xf]
    %v156 = vld [vmem:[%s1 + $0x228] sm:$0xf]
    %v157 = vld [vmem:[%s1 + $0x22c] sm:$0xf]
    %v158 = vld [vmem:[%s1 + $0x230] sm:$0xf]
    %v159 = vld [vmem:[%s1 + $0x234] sm:$0xf]
    %v160 = vld [vmem:[%s1 + $0x238] sm:$0xf]
    %v161 = vld [vmem:[%s1 + $0x23c] sm:$0xf]
    %v162 = vld [vmem:[%s1 + $0x240] sm:$0xf]
    %v163 = vld [vmem:[%s1 + $0x244] sm:$0xf]
    %v164 = vld [vmem:[%s1 + $0x248] sm:$0xf]
    %v165 = vld [vmem:[%s1 + $0x24c] sm:$0xf]
    %v166 = vld [vmem:[%s1 + $0x250] sm:$0xf]
    %v167 = vld [vmem:[%s1 + $0x254] sm:$0xf]
    %v168 = vld [vmem:[%s1 + $0x258] sm:$0xf]
    %v169 = vld [vmem:[%s1 + $0x25c] sm:$0xf]
    %v170 = vld [vmem:[%s1 + $0x260] sm:$0xf]
    %v171 = vld [vmem:[%s1 + $0x264] sm:$0xf]
    %v172 = vld [vmem:[%s1 + $0x268] sm:$0xf]
    %v173 = vld [vmem:[%s1 + $0x26c] sm:$0xf]
    %v174 = vld [vmem:[%s1 + $0x270] sm:$0xf]
    %v175 = vld [vmem:[%s1 + $0x274] sm:$0xf]
    %v176 = vld [vmem:[%s1 + $0x278] sm:$0xf]
    %v177 = vld [vmem:[%s1 + $0x27c] sm:$0xf]
    %v178 = vld [vmem:[%s1 + $0x280] sm:$0xf]
    %v179 = vld [vmem:[%s1 + $0x284] sm:$0xf]
    %v180 = vld [vmem:[%s1 + $0x288] sm:$0xf]
    %v181 = vld [vmem:[%s1 + $0x28c] sm:$0xf]
    %v182 = vld [vmem:[%s1 + $0x290] sm:$0xf]
    %v183 = vld [vmem:[%s1 + $0x294] sm:$0xf]
    %v184 = vld [vmem:[%s1 + $0x298] sm:$0xf]
    %v185 = vld [vmem:[%s1 + $0x29c] sm:$0xf]
    %v186 = vld [vmem:[%s1 + $0x2a0] sm:$0xf]
    %v187 = vld [vmem:[%s1 + $0x2a4] sm:$0xf]
    %v188 = vld [vmem:[%s1 + $0x2a8] sm:$0xf]
    %v189 = vld [vmem:[%s1 + $0x2ac] sm:$0xf]
    %v190 = vld [vmem:[%s1 + $0x2b0] sm:$0xf]
    %v191 = vld [vmem:[%s1 + $0x2b4] sm:$0xf]
    %v192 = vld [vmem:[%s1 + $0x2b8] sm:$0xf]
    %v193 = vld [vmem:[%s1 + $0x2bc] sm:$0xf]
    %v194 = vld [vmem:[%s1 + $0x2c0] sm:$0xf]
    %v195 = vld [vmem:[%s1 + $0x2c4] sm:$0xf]
    %v196 = vld [vmem:[%s1 + $0x2c8] sm:$0xf]
    %v197 = vld [vmem:[%s1 + $0x2cc] sm:$0xf]
    %v198 = vld [vmem:[%s1 + $0x2d0] sm:$0xf]
    %v199 = vld [vmem:[%s1 + $0x2d4] sm:$0xf]
    %v200 = vld [vmem:[%s1 + $0x2d8] sm:$0xf]
    %v201 = vld [vmem:[%s1 + $0x2dc] sm:$0xf]
    %v202 = vld [vmem:[%s1 + $0x2e0] sm:$0xf]
    %v203 = vld [vmem:[%s1 + $0x2e4] sm:$0xf]
    %v204 = vld [vmem:[%s1 + $0x2e8] sm:$0xf]
    %v205 = vld [vmem:[%s1 + $0x2ec] sm:$0xf]
    %v206 = vld [vmem:[%s1 + $0x2f0] sm:$0xf]
    %v207 = vld [vmem:[%s1 + $0x2f4] sm:$0xf]
    %v208 = vld [vmem:[%s1 + $0x2f8] sm:$0xf]
    %v209 = vld [vmem:[%s1 + $0x2fc] sm:$0xf]
    %v210 = vld [vmem:[%s1 + $0x300] sm:$0xf]
    %v211 = vld [vmem:[%s1 + $0x304] sm:$0xf]
    %v212 = vld [vmem:[%s1 + $0x308] sm:$0xf]
    %v213 = vld [vmem:[%s1 + $0x30c] sm:$0xf]
    %v214 = vld [vmem:[%s1 + $0x310] sm:$0xf]
    %v215 = vld [vmem:[%s1 + $0x314] sm:$0xf]
    %v216 = vld [vmem:[%s1 + $0x318] sm:$0xf]
    %v217 = vld [vmem:[%s1 + $0x31c] sm:$0xf]
    %v218 = vld [vmem:[%s1 + $0x320] sm:$0xf]
    %v219 = vld [vmem:[%s1 + $0x324] sm:$0xf]
    %v220 = vld [vmem:[%s1 + $0x328] sm:$0xf]
    %v221 = vld [vmem:[%s1 + $0x32c] sm:$0xf]
    %v222 = vld [vmem:[%s1 + $0x330] sm:$0xf]
    %v223 = vld [vmem:[%s1 + $0x334] sm:$0xf]
    %v224 = vld [vmem:[%s1 + $0x338] sm:$0xf]
    %v225 = vld [vmem:[%s1 + $0x33c] sm:$0xf]
    %v226 = vld [vmem:[%s1 + $0x340] sm:$0xf]
    %v227 = vld [vmem:[%s1 + $0x344] sm:$0xf]
    %v228 = vld [vmem:[%s1 + $0x348] sm:$0xf]
    %v229 = vld [vmem:[%s1 + $0x34c] sm:$0xf]
    %v230 = vld [vmem:[%s1 + $0x350] sm:$0xf]
    %v231 = vld [vmem:[%s1 + $0x354] sm:$0xf]
    %v232 = vld [vmem:[%s1 + $0x358] sm:$0xf]
    %v233 = vld [vmem:[%s1 + $0x35c] sm:$0xf]
    %v234 = vld [vmem:[%s1 + $0x360] sm:$0xf]
    %v235 = vld [vmem:[%s1 + $0x364] sm:$0xf]
    %v236 = vld [vmem:[%s1 + $0x368] sm:$0xf]
    %v237 = vld [vmem:[%s1 + $0x36c] sm:$0xf]
    %v238 = vld [vmem:[%s1 + $0x370] sm:$0xf]
    %v239 = vld [vmem:[%s1 + $0x374] sm:$0xf]
    %v240 = vld [vmem:[%s1 + $0x378] sm:$0xf]
    %v241 = vld [vmem:[%s1 + $0x37c] sm:$0xf]
    %v242 = vld [vmem:[%s1 + $0x380] sm:$0xf]
    %v243 = vld [vmem:[%s1 + $0x384] sm:$0xf]
    %v244 = vld [vmem:[%s1 + $0x388] sm:$0xf]
    %v245 = vld [vmem:[%s1 + $0x38c] sm:$0xf]
    %v246 = vld [vmem:[%s1 + $0x390] sm:$0xf]
    %v247 = vld [vmem:[%s1 + $0x394] sm:$0xf]
    %v248 = vld [vmem:[%s1 + $0x398] sm:$0xf]
    %v249 = vld [vmem:[%s1 + $0x39c] sm:$0xf]
    %v250 = vld [vmem:[%s1 + $0x3a0] sm:$0xf]
    %v251 = vld [vmem:[%s1 + $0x3a4] sm:$0xf]
    %v252 = vld [vmem:[%s1 + $0x3a8] sm:$0xf]
    %v253 = vld [vmem:[%s1 + $0x3ac] sm:$0xf]
    %v254 = vld [vmem:[%s1 + $0x3b0] sm:$0xf]
    %v255 = vld [vmem:[%s1 + $0x3b4] sm:$0xf]
    %v256 = vld [vmem:[%s1 + $0x3b8] sm:$0xf]
    %v257 = vld [vmem:[%s1 + $0x3bc] sm:$0xf]
    %v258 = vld [vmem:[%s1 + $0x3c0] sm:$0xf]
    %v259 = vld [vmem:[%s1 + $0x3c4] sm:$0xf]
    %v260 = vld [vmem:[%s1 + $0x3c8] sm:$0xf]
    %v261 = vld [vmem:[%s1 + $0x3cc] sm:$0xf]
    %v262 = vld [vmem:[%s1 + $0x3d0] sm:$0xf]
    %v263 = vld [vmem:[%s1 + $0x3d4] sm:$0xf]
    %v264 = vld [vmem:[%s1 + $0x3d8] sm:$0xf]
    %v265 = vld [vmem:[%s1 + $0x3dc] sm:$0xf]
    %v266 = vld [vmem:[%s1 + $0x3e0] sm:$0xf]
    %v267 = vld [vmem:[%s1 + $0x3e4] sm:$0xf]
    %v268 = vld [vmem:[%s1 + $0x3e8] sm:$0xf]
    %v269 = vld [vmem:[%s1 + $0x3ec] sm:$0xf]
    %v270 = vld [vmem:[%s1 + $0x3f0] sm:$0xf]
    %v271 = vld [vmem:[%s1 + $0x3f4] sm:$0xf]
    %v272 = vld [vmem:[%s1 + $0x3f8] sm:$0xf]
    %v273 = vld [vmem:[%s1 + $0x3fc] sm:$0xf]
    %v274 = vld [vmem:[%s2] sm:$0x1]
    %v276 = vlaneseq
    %v277 = vshrl.u32 %v276, 7
    %v278 = vsub.s32 0, %v277
    %v279 = vrot.slane %v274, %v278
    %v283 = vcombine.high %v16, %v16
    %v285 = vunpack.c.l.s4 1966171168
    %v286 = vunpack.c.0.s8 %v285
    %v287 = vlaneseq
    %v288 = vshrl.u32 %v287, 7
    %v289 = vsub.s32 %v286, %v288
    %v290 = vrot.slane %v16, %v289
    %v292 = vunpack.c.l.s4 1966171168
    %v293 = vunpack.c.0.s8 %v292
    %v294 = vlaneseq
    %v295 = vshrl.u32 %v294, 7
    %v296 = vsub.s32 %v293, %v295
    %v297 = vrot.slane %v283, %v296
    %v298 = vcombine.high %v290, %v290
    %v299 = vcombine.high %v297, %v297
    %v301 = vunpack.c.l.s4 1966171168
    %v302 = vunpack.c.0.s8 %v301
    %v303 = vlaneseq
    %v304 = vshrl.u32 %v303, 7
    %v305 = vsub.s32 %v302, %v304
    %v306 = vrot.slane %v290, %v305
    %v308 = vunpack.c.l.s4 1966171168
    %v309 = vunpack.c.0.s8 %v308
    %v310 = vlaneseq
    %v311 = vshrl.u32 %v310, 7
    %v312 = vsub.s32 %v309, %v311
    %v313 = vrot.slane %v297, %v312
    %v315 = vunpack.c.l.s4 1966171168
    %v316 = vunpack.c.0.s8 %v315
    %v317 = vlaneseq
    %v318 = vshrl.u32 %v317, 7
    %v319 = vsub.s32 %v316, %v318
    %v320 = vrot.slane %v298, %v319
    %v322 = vunpack.c.l.s4 1966171168
    %v323 = vunpack.c.0.s8 %v322
    %v324 = vlaneseq
    %v325 = vshrl.u32 %v324, 7
    %v326 = vsub.s32 %v323, %v325
    %v327 = vrot.slane %v299, %v326
    %v328 = vcombine.high %v306, %v306
    %v329 = vcombine.high %v313, %v313
    %v330 = vcombine.high %v320, %v320
    %v331 = vcombine.high %v327, %v327
    %v332 = vcombine.high %v17, %v17
    %v334 = vunpack.c.l.s4 1966171168
    %v335 = vunpack.c.0.s8 %v334
    %v336 = vlaneseq
    %v337 = vshrl.u32 %v336, 7
    %v338 = vsub.s32 %v335, %v337
    %v339 = vrot.slane %v17, %v338
    %v341 = vunpack.c.l.s4 1966171168
    %v342 = vunpack.c.0.s8 %v341
    %v343 = vlaneseq
    %v344 = vshrl.u32 %v343, 7
    %v345 = vsub.s32 %v342, %v344
    %v346 = vrot.slane %v332, %v345
    %v347 = vcombine.high %v339, %v339
    %v348 = vcombine.high %v346, %v346
    %v350 = vunpack.c.l.s4 1966171168
    %v351 = vunpack.c.0.s8 %v350
    %v352 = vlaneseq
    %v353 = vshrl.u32 %v352, 7
    %v354 = vsub.s32 %v351, %v353
    %v355 = vrot.slane %v339, %v354
    %v357 = vunpack.c.l.s4 1966171168
    %v358 = vunpack.c.0.s8 %v357
    %v359 = vlaneseq
    %v360 = vshrl.u32 %v359, 7
    %v361 = vsub.s32 %v358, %v360
    %v362 = vrot.slane %v346, %v361
    %v364 = vunpack.c.l.s4 1966171168
    %v365 = vunpack.c.0.s8 %v364
    %v366 = vlaneseq
    %v367 = vshrl.u32 %v366, 7
    %v368 = vsub.s32 %v365, %v367
    %v369 = vrot.slane %v347, %v368
    %v371 = vunpack.c.l.s4 1966171168
    %v372 = vunpack.c.0.s8 %v371
    %v373 = vlaneseq
    %v374 = vshrl.u32 %v373, 7
    %v375 = vsub.s32 %v372, %v374
    %v376 = vrot.slane %v348, %v375
    %v377 = vcombine.high %v355, %v355
    %v378 = vcombine.high %v362, %v362
    %v379 = vcombine.high %v369, %v369
    %v380 = vcombine.high %v376, %v376
    %v653 = vunpack.c.l.b16 %v18
    %v654 = vunpack.c.l.b16 %v19
    %v655 = vunpack.c.l.b16 %v20
    %v656 = vunpack.c.l.b16 %v21
    %v657 = vunpack.c.l.b16 %v22
    %v658 = vunpack.c.l.b16 %v23
    %v659 = vunpack.c.l.b16 %v24
    %v660 = vunpack.c.l.b16 %v25
    %v661 = vunpack.c.l.b16 %v26
    %v662 = vunpack.c.l.b16 %v27
    %v663 = vunpack.c.l.b16 %v28
    %v664 = vunpack.c.l.b16 %v29
    %v665 = vunpack.c.l.b16 %v30
    %v666 = vunpack.c.l.b16 %v31
    %v667 = vunpack.c.l.b16 %v32
    %v668 = vunpack.c.l.b16 %v33
    %v669 = vunpack.c.l.b16 %v34
    %v670 = vunpack.c.l.b16 %v35
    %v671 = vunpack.c.l.b16 %v36
    %v672 = vunpack.c.l.b16 %v37
    %v673 = vunpack.c.l.b16 %v38
    %v674 = vunpack.c.l.b16 %v39
    %v675 = vunpack.c.l.b16 %v40
    %v676 = vunpack.c.l.b16 %v41
    %v677 = vunpack.c.l.b16 %v42
    %v678 = vunpack.c.l.b16 %v43
    %v679 = vunpack.c.l.b16 %v44
    %v680 = vunpack.c.l.b16 %v45
    %v681 = vunpack.c.l.b16 %v46
    %v682 = vunpack.c.l.b16 %v47
    %v683 = vunpack.c.l.b16 %v48
    %v684 = vunpack.c.l.b16 %v49
    %v685 = vunpack.c.l.b16 %v50
    %v686 = vunpack.c.l.b16 %v51
    %v687 = vunpack.c.l.b16 %v52
    %v688 = vunpack.c.l.b16 %v53
    %v689 = vunpack.c.l.b16 %v54
    %v690 = vunpack.c.l.b16 %v55
    %v691 = vunpack.c.l.b16 %v56
    %v692 = vunpack.c.l.b16 %v57
    %v693 = vunpack.c.l.b16 %v58
    %v694 = vunpack.c.l.b16 %v59
    %v695 = vunpack.c.l.b16 %v60
    %v696 = vunpack.c.l.b16 %v61
    %v697 = vunpack.c.l.b16 %v62
    %v698 = vunpack.c.l.b16 %v63
    %v699 = vunpack.c.l.b16 %v64
    %v700 = vunpack.c.l.b16 %v65
    %v701 = vunpack.c.l.b16 %v66
    %v702 = vunpack.c.l.b16 %v67
    %v703 = vunpack.c.l.b16 %v68
    %v704 = vunpack.c.l.b16 %v69
    %v705 = vunpack.c.l.b16 %v70
    %v706 = vunpack.c.l.b16 %v71
    %v707 = vunpack.c.l.b16 %v72
    %v708 = vunpack.c.l.b16 %v73
    %v709 = vunpack.c.l.b16 %v74
    %v710 = vunpack.c.l.b16 %v75
    %v711 = vunpack.c.l.b16 %v76
    %v712 = vunpack.c.l.b16 %v77
    %v713 = vunpack.c.l.b16 %v78
    %v714 = vunpack.c.l.b16 %v79
    %v715 = vunpack.c.l.b16 %v80
    %v716 = vunpack.c.l.b16 %v81
    %v717 = vunpack.c.l.b16 %v82
    %v718 = vunpack.c.l.b16 %v83
    %v719 = vunpack.c.l.b16 %v84
    %v720 = vunpack.c.l.b16 %v85
    %v721 = vunpack.c.l.b16 %v86
    %v722 = vunpack.c.l.b16 %v87
    %v723 = vunpack.c.l.b16 %v88
    %v724 = vunpack.c.l.b16 %v89
    %v725 = vunpack.c.l.b16 %v90
    %v726 = vunpack.c.l.b16 %v91
    %v727 = vunpack.c.l.b16 %v92
    %v728 = vunpack.c.l.b16 %v93
    %v729 = vunpack.c.l.b16 %v94
    %v730 = vunpack.c.l.b16 %v95
    %v731 = vunpack.c.l.b16 %v96
    %v732 = vunpack.c.l.b16 %v97
    %v733 = vunpack.c.l.b16 %v98
    %v734 = vunpack.c.l.b16 %v99
    %v735 = vunpack.c.l.b16 %v100
    %v736 = vunpack.c.l.b16 %v101
    %v737 = vunpack.c.l.b16 %v102
    %v738 = vunpack.c.l.b16 %v103
    %v739 = vunpack.c.l.b16 %v104
    %v740 = vunpack.c.l.b16 %v105
    %v741 = vunpack.c.l.b16 %v106
    %v742 = vunpack.c.l.b16 %v107
    %v743 = vunpack.c.l.b16 %v108
    %v744 = vunpack.c.l.b16 %v109
    %v745 = vunpack.c.l.b16 %v110
    %v746 = vunpack.c.l.b16 %v111
    %v747 = vunpack.c.l.b16 %v112
    %v748 = vunpack.c.l.b16 %v113
    %v749 = vunpack.c.l.b16 %v114
    %v750 = vunpack.c.l.b16 %v115
    %v751 = vunpack.c.l.b16 %v116
    %v752 = vunpack.c.l.b16 %v117
    %v753 = vunpack.c.l.b16 %v118
    %v754 = vunpack.c.l.b16 %v119
    %v755 = vunpack.c.l.b16 %v120
    %v756 = vunpack.c.l.b16 %v121
    %v757 = vunpack.c.l.b16 %v122
    %v758 = vunpack.c.l.b16 %v123
    %v759 = vunpack.c.l.b16 %v124
    %v760 = vunpack.c.l.b16 %v125
    %v761 = vunpack.c.l.b16 %v126
    %v762 = vunpack.c.l.b16 %v127
    %v763 = vunpack.c.l.b16 %v128
    %v764 = vunpack.c.l.b16 %v129
    %v765 = vunpack.c.l.b16 %v130
    %v766 = vunpack.c.l.b16 %v131
    %v767 = vunpack.c.l.b16 %v132
    %v768 = vunpack.c.l.b16 %v133
    %v769 = vunpack.c.l.b16 %v134
    %v770 = vunpack.c.l.b16 %v135
    %v771 = vunpack.c.l.b16 %v136
    %v772 = vunpack.c.l.b16 %v137
    %v773 = vunpack.c.l.b16 %v138
    %v774 = vunpack.c.l.b16 %v139
    %v775 = vunpack.c.l.b16 %v140
    %v776 = vunpack.c.l.b16 %v141
    %v777 = vunpack.c.l.b16 %v142
    %v778 = vunpack.c.l.b16 %v143
    %v779 = vunpack.c.l.b16 %v144
    %v780 = vunpack.c.l.b16 %v145
    %v781 = vunpack.c.l.b16 %v146
    %v782 = vunpack.c.l.b16 %v147
    %v783 = vunpack.c.l.b16 %v148
    %v784 = vunpack.c.l.b16 %v149
    %v785 = vunpack.c.l.b16 %v150
    %v786 = vunpack.c.l.b16 %v151
    %v787 = vunpack.c.l.b16 %v152
    %v788 = vunpack.c.l.b16 %v153
    %v789 = vunpack.c.l.b16 %v154
    %v790 = vunpack.c.l.b16 %v155
    %v791 = vunpack.c.l.b16 %v156
    %v792 = vunpack.c.l.b16 %v157
    %v793 = vunpack.c.l.b16 %v158
    %v794 = vunpack.c.l.b16 %v159
    %v795 = vunpack.c.l.b16 %v160
    %v796 = vunpack.c.l.b16 %v161
    %v797 = vunpack.c.l.b16 %v162
    %v798 = vunpack.c.l.b16 %v163
    %v799 = vunpack.c.l.b16 %v164
    %v800 = vunpack.c.l.b16 %v165
    %v801 = vunpack.c.l.b16 %v166
    %v802 = vunpack.c.l.b16 %v167
    %v803 = vunpack.c.l.b16 %v168
    %v804 = vunpack.c.l.b16 %v169
    %v805 = vunpack.c.l.b16 %v170
    %v806 = vunpack.c.l.b16 %v171
    %v807 = vunpack.c.l.b16 %v172
    %v808 = vunpack.c.l.b16 %v173
    %v809 = vunpack.c.l.b16 %v174
    %v810 = vunpack.c.l.b16 %v175
    %v811 = vunpack.c.l.b16 %v176
    %v812 = vunpack.c.l.b16 %v177
    %v813 = vunpack.c.l.b16 %v178
    %v814 = vunpack.c.l.b16 %v179
    %v815 = vunpack.c.l.b16 %v180
    %v816 = vunpack.c.l.b16 %v181
    %v817 = vunpack.c.l.b16 %v182
    %v818 = vunpack.c.l.b16 %v183
    %v819 = vunpack.c.l.b16 %v184
    %v820 = vunpack.c.l.b16 %v185
    %v821 = vunpack.c.l.b16 %v186
    %v822 = vunpack.c.l.b16 %v187
    %v823 = vunpack.c.l.b16 %v188
    %v824 = vunpack.c.l.b16 %v189
    %v825 = vunpack.c.l.b16 %v190
    %v826 = vunpack.c.l.b16 %v191
    %v827 = vunpack.c.l.b16 %v192
    %v828 = vunpack.c.l.b16 %v193
    %v829 = vunpack.c.l.b16 %v194
    %v830 = vunpack.c.l.b16 %v195
    %v831 = vunpack.c.l.b16 %v196
    %v832 = vunpack.c.l.b16 %v197
    %v833 = vunpack.c.l.b16 %v198
    %v834 = vunpack.c.l.b16 %v199
    %v835 = vunpack.c.l.b16 %v200
    %v836 = vunpack.c.l.b16 %v201
    %v837 = vunpack.c.l.b16 %v202
    %v838 = vunpack.c.l.b16 %v203
    %v839 = vunpack.c.l.b16 %v204
    %v840 = vunpack.c.l.b16 %v205
    %v841 = vunpack.c.l.b16 %v206
    %v842 = vunpack.c.l.b16 %v207
    %v843 = vunpack.c.l.b16 %v208
    %v844 = vunpack.c.l.b16 %v209
    %v845 = vunpack.c.l.b16 %v210
    %v846 = vunpack.c.l.b16 %v211
    %v847 = vunpack.c.l.b16 %v212
    %v848 = vunpack.c.l.b16 %v213
    %v849 = vunpack.c.l.b16 %v214
    %v850 = vunpack.c.l.b16 %v215
    %v851 = vunpack.c.l.b16 %v216
    %v852 = vunpack.c.l.b16 %v217
    %v853 = vunpack.c.l.b16 %v218
    %v854 = vunpack.c.l.b16 %v219
    %v855 = vunpack.c.l.b16 %v220
    %v856 = vunpack.c.l.b16 %v221
    %v857 = vunpack.c.l.b16 %v222
    %v858 = vunpack.c.l.b16 %v223
    %v859 = vunpack.c.l.b16 %v224
    %v860 = vunpack.c.l.b16 %v225
    %v861 = vunpack.c.l.b16 %v226
    %v862 = vunpack.c.l.b16 %v227
    %v863 = vunpack.c.l.b16 %v228
    %v864 = vunpack.c.l.b16 %v229
    %v865 = vunpack.c.l.b16 %v230
    %v866 = vunpack.c.l.b16 %v231
    %v867 = vunpack.c.l.b16 %v232
    %v868 = vunpack.c.l.b16 %v233
    %v869 = vunpack.c.l.b16 %v234
    %v870 = vunpack.c.l.b16 %v235
    %v871 = vunpack.c.l.b16 %v236
    %v872 = vunpack.c.l.b16 %v237
    %v873 = vunpack.c.l.b16 %v238
    %v874 = vunpack.c.l.b16 %v239
    %v875 = vunpack.c.l.b16 %v240
    %v876 = vunpack.c.l.b16 %v241
    %v877 = vunpack.c.l.b16 %v242
    %v878 = vunpack.c.l.b16 %v243
    %v879 = vunpack.c.l.b16 %v244
    %v880 = vunpack.c.l.b16 %v245
    %v881 = vunpack.c.l.b16 %v246
    %v882 = vunpack.c.l.b16 %v247
    %v883 = vunpack.c.l.b16 %v248
    %v884 = vunpack.c.l.b16 %v249
    %v885 = vunpack.c.l.b16 %v250
    %v886 = vunpack.c.l.b16 %v251
    %v887 = vunpack.c.l.b16 %v252
    %v888 = vunpack.c.l.b16 %v253
    %v889 = vunpack.c.l.b16 %v254
    %v890 = vunpack.c.l.b16 %v255
    %v891 = vunpack.c.l.b16 %v256
    %v892 = vunpack.c.l.b16 %v257
    %v893 = vunpack.c.l.b16 %v258
    %v894 = vunpack.c.l.b16 %v259
    %v895 = vunpack.c.l.b16 %v260
    %v896 = vunpack.c.l.b16 %v261
    %v897 = vunpack.c.l.b16 %v262
    %v898 = vunpack.c.l.b16 %v263
    %v899 = vunpack.c.l.b16 %v264
    %v900 = vunpack.c.l.b16 %v265
    %v901 = vunpack.c.l.b16 %v266
    %v902 = vunpack.c.l.b16 %v267
    %v903 = vunpack.c.l.b16 %v268
    %v904 = vunpack.c.l.b16 %v269
    %v905 = vunpack.c.l.b16 %v270
    %v906 = vunpack.c.l.b16 %v271
    %v907 = vunpack.c.l.b16 %v272
    %v908 = vunpack.c.l.b16 %v273
    %v909 = vpack.c.b16 %v654, %v653
    %v910 = vpack.c.b16 %v656, %v655
    %v911 = vpack.c.b16 %v658, %v657
    %v912 = vpack.c.b16 %v660, %v659
    %v913 = vpack.c.b16 %v662, %v661
    %v914 = vpack.c.b16 %v664, %v663
    %v915 = vpack.c.b16 %v666, %v665
    %v916 = vpack.c.b16 %v668, %v667
    %v917 = vpack.c.b16 %v670, %v669
    %v918 = vpack.c.b16 %v672, %v671
    %v919 = vpack.c.b16 %v674, %v673
    %v920 = vpack.c.b16 %v676, %v675
    %v921 = vpack.c.b16 %v678, %v677
    %v922 = vpack.c.b16 %v680, %v679
    %v923 = vpack.c.b16 %v682, %v681
    %v924 = vpack.c.b16 %v684, %v683
    %v925 = vpack.c.b16 %v686, %v685
    %v926 = vpack.c.b16 %v688, %v687
    %v927 = vpack.c.b16 %v690, %v689
    %v928 = vpack.c.b16 %v692, %v691
    %v929 = vpack.c.b16 %v694, %v693
    %v930 = vpack.c.b16 %v696, %v695
    %v931 = vpack.c.b16 %v698, %v697
    %v932 = vpack.c.b16 %v700, %v699
    %v933 = vpack.c.b16 %v702, %v701
    %v934 = vpack.c.b16 %v704, %v703
    %v935 = vpack.c.b16 %v706, %v705
    %v936 = vpack.c.b16 %v708, %v707
    %v937 = vpack.c.b16 %v710, %v709
    %v938 = vpack.c.b16 %v712, %v711
    %v939 = vpack.c.b16 %v714, %v713
    %v940 = vpack.c.b16 %v716, %v715
    %v941 = vpack.c.b16 %v718, %v717
    %v942 = vpack.c.b16 %v720, %v719
    %v943 = vpack.c.b16 %v722, %v721
    %v944 = vpack.c.b16 %v724, %v723
    %v945 = vpack.c.b16 %v726, %v725
    %v946 = vpack.c.b16 %v728, %v727
    %v947 = vpack.c.b16 %v730, %v729
    %v948 = vpack.c.b16 %v732, %v731
    %v949 = vpack.c.b16 %v734, %v733
    %v950 = vpack.c.b16 %v736, %v735
    %v951 = vpack.c.b16 %v738, %v737
    %v952 = vpack.c.b16 %v740, %v739
    %v953 = vpack.c.b16 %v742, %v741
    %v954 = vpack.c.b16 %v744, %v743
    %v955 = vpack.c.b16 %v746, %v745
    %v956 = vpack.c.b16 %v748, %v747
    %v957 = vpack.c.b16 %v750, %v749
    %v958 = vpack.c.b16 %v752, %v751
    %v959 = vpack.c.b16 %v754, %v753
    %v960 = vpack.c.b16 %v756, %v755
    %v961 = vpack.c.b16 %v758, %v757
    %v962 = vpack.c.b16 %v760, %v759
    %v963 = vpack.c.b16 %v762, %v761
    %v964 = vpack.c.b16 %v764, %v763
    %v965 = vpack.c.b16 %v766, %v765
    %v966 = vpack.c.b16 %v768, %v767
    %v967 = vpack.c.b16 %v770, %v769
    %v968 = vpack.c.b16 %v772, %v771
    %v969 = vpack.c.b16 %v774, %v773
    %v970 = vpack.c.b16 %v776, %v775
    %v971 = vpack.c.b16 %v778, %v777
    %v972 = vpack.c.b16 %v780, %v779
    %v973 = vpack.c.b16 %v782, %v781
    %v974 = vpack.c.b16 %v784, %v783
    %v975 = vpack.c.b16 %v786, %v785
    %v976 = vpack.c.b16 %v788, %v787
    %v977 = vpack.c.b16 %v790, %v789
    %v978 = vpack.c.b16 %v792, %v791
    %v979 = vpack.c.b16 %v794, %v793
    %v980 = vpack.c.b16 %v796, %v795
    %v981 = vpack.c.b16 %v798, %v797
    %v982 = vpack.c.b16 %v800, %v799
    %v983 = vpack.c.b16 %v802, %v801
    %v984 = vpack.c.b16 %v804, %v803
    %v985 = vpack.c.b16 %v806, %v805
    %v986 = vpack.c.b16 %v808, %v807
    %v987 = vpack.c.b16 %v810, %v809
    %v988 = vpack.c.b16 %v812, %v811
    %v989 = vpack.c.b16 %v814, %v813
    %v990 = vpack.c.b16 %v816, %v815
    %v991 = vpack.c.b16 %v818, %v817
    %v992 = vpack.c.b16 %v820, %v819
    %v993 = vpack.c.b16 %v822, %v821
    %v994 = vpack.c.b16 %v824, %v823
    %v995 = vpack.c.b16 %v826, %v825
    %v996 = vpack.c.b16 %v828, %v827
    %v997 = vpack.c.b16 %v830, %v829
    %v998 = vpack.c.b16 %v832, %v831
    %v999 = vpack.c.b16 %v834, %v833
    %v1000 = vpack.c.b16 %v836, %v835
    %v1001 = vpack.c.b16 %v838, %v837
    %v1002 = vpack.c.b16 %v840, %v839
    %v1003 = vpack.c.b16 %v842, %v841
    %v1004 = vpack.c.b16 %v844, %v843
    %v1005 = vpack.c.b16 %v846, %v845
    %v1006 = vpack.c.b16 %v848, %v847
    %v1007 = vpack.c.b16 %v850, %v849
    %v1008 = vpack.c.b16 %v852, %v851
    %v1009 = vpack.c.b16 %v854, %v853
    %v1010 = vpack.c.b16 %v856, %v855
    %v1011 = vpack.c.b16 %v858, %v857
    %v1012 = vpack.c.b16 %v860, %v859
    %v1013 = vpack.c.b16 %v862, %v861
    %v1014 = vpack.c.b16 %v864, %v863
    %v1015 = vpack.c.b16 %v866, %v865
    %v1016 = vpack.c.b16 %v868, %v867
    %v1017 = vpack.c.b16 %v870, %v869
    %v1018 = vpack.c.b16 %v872, %v871
    %v1019 = vpack.c.b16 %v874, %v873
    %v1020 = vpack.c.b16 %v876, %v875
    %v1021 = vpack.c.b16 %v878, %v877
    %v1022 = vpack.c.b16 %v880, %v879
    %v1023 = vpack.c.b16 %v882, %v881
    %v1024 = vpack.c.b16 %v884, %v883
    %v1025 = vpack.c.b16 %v886, %v885
    %v1026 = vpack.c.b16 %v888, %v887
    %v1027 = vpack.c.b16 %v890, %v889
    %v1028 = vpack.c.b16 %v892, %v891
    %v1029 = vpack.c.b16 %v894, %v893
    %v1030 = vpack.c.b16 %v896, %v895
    %v1031 = vpack.c.b16 %v898, %v897
    %v1032 = vpack.c.b16 %v900, %v899
    %v1033 = vpack.c.b16 %v902, %v901
    %v1034 = vpack.c.b16 %v904, %v903
    %v1035 = vpack.c.b16 %v906, %v905
    %v1036 = vpack.c.b16 %v908, %v907
    %1165 = vmatprep.subr.bf16.mxu0 0
    %1166 = vmatpush1.bf16.msra.mxu0 %v916
    %1167 = vmatprep.subr.bf16.mxu0 0
    %1168 = vmatpush1.bf16.msra.mxu0 %v915
    %1169 = vmatprep.subr.bf16.mxu0 0
    %1170 = vmatpush1.bf16.msra.mxu0 %v914
    %1171 = vmatprep.subr.bf16.mxu0 0
    %1172 = vmatpush1.bf16.msra.mxu0 %v913
    %1173 = vmatprep.subr.bf16.mxu0 0
    %1174 = vmatpush1.bf16.msra.mxu0 %v912
    %1175 = vmatprep.subr.bf16.mxu0 0
    %1176 = vmatpush1.bf16.msra.mxu0 %v911
    %1177 = vmatprep.subr.bf16.mxu0 0
    %1178 = vmatpush1.bf16.msra.mxu0 %v910
    %1179 = vmatprep.subr.bf16.mxu0 0
    %1180 = vmatpush1.bf16.msra.mxu0 %v909
    %1181 = vmatprep.subr.bf16.mxu0 0
    %1182 = vmatpush2.bf16.msra.mxu0 %v924
    %1183 = vmatprep.subr.bf16.mxu0 0
    %1184 = vmatpush2.bf16.msra.mxu0 %v923
    %1185 = vmatprep.subr.bf16.mxu0 0
    %1186 = vmatpush2.bf16.msra.mxu0 %v922
    %1187 = vmatprep.subr.bf16.mxu0 0
    %1188 = vmatpush2.bf16.msra.mxu0 %v921
    %1189 = vmatprep.subr.bf16.mxu0 0
    %1190 = vmatpush2.bf16.msra.mxu0 %v920
    %1191 = vmatprep.subr.bf16.mxu0 0
    %1192 = vmatpush2.bf16.msra.mxu0 %v919
    %1193 = vmatprep.subr.bf16.mxu0 0
    %1194 = vmatpush2.bf16.msra.mxu0 %v918
    %1195 = vmatprep.subr.bf16.mxu0 0
    %1196 = vmatpush2.bf16.msra.mxu0 %v917
    %1197 = vmatprep.mubr.bf16.mxu0 %v320
    %1198 = vmatmul.mubr.bf16.gmra.mxu0 %v306
    %v1199 = vpop.f32.mrf.mxu0
    %v1200 = vadd.f32 %v279, %v1199
    %v1201 = vpop.f32.mrf.mxu0
    %v1202 = vpop.f32.mrf.mxu0
    %v1203 = vpop.f32.mrf.mxu0
    %1204 = vdwg.mxu0
    %1205 = vmatprep.subr.bf16.mxu0 0
    %1206 = vmatpush1.bf16.msra.mxu0 %v932
    %1207 = vmatprep.subr.bf16.mxu0 0
    %1208 = vmatpush1.bf16.msra.mxu0 %v931
    %1209 = vmatprep.subr.bf16.mxu0 0
    %1210 = vmatpush1.bf16.msra.mxu0 %v930
    %1211 = vmatprep.subr.bf16.mxu0 0
    %1212 = vmatpush1.bf16.msra.mxu0 %v929
    %1213 = vmatprep.subr.bf16.mxu0 0
    %1214 = vmatpush1.bf16.msra.mxu0 %v928
    %1215 = vmatprep.subr.bf16.mxu0 0
    %1216 = vmatpush1.bf16.msra.mxu0 %v927
    %1217 = vmatprep.subr.bf16.mxu0 0
    %1218 = vmatpush1.bf16.msra.mxu0 %v926
    %1219 = vmatprep.subr.bf16.mxu0 0
    %1220 = vmatpush1.bf16.msra.mxu0 %v925
    %1221 = vmatprep.subr.bf16.mxu0 0
    %1222 = vmatpush2.bf16.msra.mxu0 %v940
    %1223 = vmatprep.subr.bf16.mxu0 0
    %1224 = vmatpush2.bf16.msra.mxu0 %v939
    %1225 = vmatprep.subr.bf16.mxu0 0
    %1226 = vmatpush2.bf16.msra.mxu0 %v938
    %1227 = vmatprep.subr.bf16.mxu0 0
    %1228 = vmatpush2.bf16.msra.mxu0 %v937
    %1229 = vmatprep.subr.bf16.mxu0 0
    %1230 = vmatpush2.bf16.msra.mxu0 %v936
    %1231 = vmatprep.subr.bf16.mxu0 0
    %1232 = vmatpush2.bf16.msra.mxu0 %v935
    %1233 = vmatprep.subr.bf16.mxu0 0
    %1234 = vmatpush2.bf16.msra.mxu0 %v934
    %1235 = vmatprep.subr.bf16.mxu0 0
    %1236 = vmatpush2.bf16.msra.mxu0 %v933
    %1237 = vmatprep.mubr.bf16.mxu0 %v330
    %1238 = vmatmul.mubr.bf16.gmra.mxu0 %v328
    %v1239 = vpop.f32.mrf.mxu0
    %v1240 = vadd.f32 %v1200, %v1239
    %v1241 = vpop.f32.mrf.mxu0
    %v1242 = vpop.f32.mrf.mxu0
    %v1243 = vpop.f32.mrf.mxu0
    %1244 = vdwg.mxu0
    %1245 = vmatprep.subr.bf16.mxu0 0
    %1246 = vmatpush1.bf16.msra.mxu0 %v948
    %1247 = vmatprep.subr.bf16.mxu0 0
    %1248 = vmatpush1.bf16.msra.mxu0 %v947
    %1249 = vmatprep.subr.bf16.mxu0 0
    %1250 = vmatpush1.bf16.msra.mxu0 %v946
    %1251 = vmatprep.subr.bf16.mxu0 0
    %1252 = vmatpush1.bf16.msra.mxu0 %v945
    %1253 = vmatprep.subr.bf16.mxu0 0
    %1254 = vmatpush1.bf16.msra.mxu0 %v944
    %1255 = vmatprep.subr.bf16.mxu0 0
    %1256 = vmatpush1.bf16.msra.mxu0 %v943
    %1257 = vmatprep.subr.bf16.mxu0 0
    %1258 = vmatpush1.bf16.msra.mxu0 %v942
    %1259 = vmatprep.subr.bf16.mxu0 0
    %1260 = vmatpush1.bf16.msra.mxu0 %v941
    %1261 = vmatprep.subr.bf16.mxu0 0
    %1262 = vmatpush2.bf16.msra.mxu0 %v956
    %1263 = vmatprep.subr.bf16.mxu0 0
    %1264 = vmatpush2.bf16.msra.mxu0 %v955
    %1265 = vmatprep.subr.bf16.mxu0 0
    %1266 = vmatpush2.bf16.msra.mxu0 %v954
    %1267 = vmatprep.subr.bf16.mxu0 0
    %1268 = vmatpush2.bf16.msra.mxu0 %v953
    %1269 = vmatprep.subr.bf16.mxu0 0
    %1270 = vmatpush2.bf16.msra.mxu0 %v952
    %1271 = vmatprep.subr.bf16.mxu0 0
    %1272 = vmatpush2.bf16.msra.mxu0 %v951
    %1273 = vmatprep.subr.bf16.mxu0 0
    %1274 = vmatpush2.bf16.msra.mxu0 %v950
    %1275 = vmatprep.subr.bf16.mxu0 0
    %1276 = vmatpush2.bf16.msra.mxu0 %v949
    %1277 = vmatprep.mubr.bf16.mxu0 %v327
    %1278 = vmatmul.mubr.bf16.gmra.mxu0 %v313
    %v1279 = vpop.f32.mrf.mxu0
    %v1280 = vadd.f32 %v1240, %v1279
    %v1281 = vpop.f32.mrf.mxu0
    %v1282 = vpop.f32.mrf.mxu0
    %v1283 = vpop.f32.mrf.mxu0
    %1284 = vdwg.mxu0
    %1285 = vmatprep.subr.bf16.mxu0 0
    %1286 = vmatpush1.bf16.msra.mxu0 %v964
    %1287 = vmatprep.subr.bf16.mxu0 0
    %1288 = vmatpush1.bf16.msra.mxu0 %v963
    %1289 = vmatprep.subr.bf16.mxu0 0
    %1290 = vmatpush1.bf16.msra.mxu0 %v962
    %1291 = vmatprep.subr.bf16.mxu0 0
    %1292 = vmatpush1.bf16.msra.mxu0 %v961
    %1293 = vmatprep.subr.bf16.mxu0 0
    %1294 = vmatpush1.bf16.msra.mxu0 %v960
    %1295 = vmatprep.subr.bf16.mxu0 0
    %1296 = vmatpush1.bf16.msra.mxu0 %v959
    %1297 = vmatprep.subr.bf16.mxu0 0
    %1298 = vmatpush1.bf16.msra.mxu0 %v958
    %1299 = vmatprep.subr.bf16.mxu0 0
    %1300 = vmatpush1.bf16.msra.mxu0 %v957
    %1301 = vmatprep.subr.bf16.mxu0 0
    %1302 = vmatpush2.bf16.msra.mxu0 %v972
    %1303 = vmatprep.subr.bf16.mxu0 0
    %1304 = vmatpush2.bf16.msra.mxu0 %v971
    %1305 = vmatprep.subr.bf16.mxu0 0
    %1306 = vmatpush2.bf16.msra.mxu0 %v970
    %1307 = vmatprep.subr.bf16.mxu0 0
    %1308 = vmatpush2.bf16.msra.mxu0 %v969
    %1309 = vmatprep.subr.bf16.mxu0 0
    %1310 = vmatpush2.bf16.msra.mxu0 %v968
    %1311 = vmatprep.subr.bf16.mxu0 0
    %1312 = vmatpush2.bf16.msra.mxu0 %v967
    %1313 = vmatprep.subr.bf16.mxu0 0
    %1314 = vmatpush2.bf16.msra.mxu0 %v966
    %1315 = vmatprep.subr.bf16.mxu0 0
    %1316 = vmatpush2.bf16.msra.mxu0 %v965
    %1317 = vmatprep.mubr.bf16.mxu0 %v331
    %1318 = vmatmul.mubr.bf16.gmra.mxu0 %v329
    %v1319 = vpop.f32.mrf.mxu0
    %v1320 = vadd.f32 %v1280, %v1319
    %v1321 = vpop.f32.mrf.mxu0
    %v1322 = vpop.f32.mrf.mxu0
    %v1323 = vpop.f32.mrf.mxu0
    %1324 = vdwg.mxu0
    %1325 = vmatprep.subr.bf16.mxu0 0
    %1326 = vmatpush1.bf16.msra.mxu0 %v980
    %1327 = vmatprep.subr.bf16.mxu0 0
    %1328 = vmatpush1.bf16.msra.mxu0 %v979
    %1329 = vmatprep.subr.bf16.mxu0 0
    %1330 = vmatpush1.bf16.msra.mxu0 %v978
    %1331 = vmatprep.subr.bf16.mxu0 0
    %1332 = vmatpush1.bf16.msra.mxu0 %v977
    %1333 = vmatprep.subr.bf16.mxu0 0
    %1334 = vmatpush1.bf16.msra.mxu0 %v976
    %1335 = vmatprep.subr.bf16.mxu0 0
    %1336 = vmatpush1.bf16.msra.mxu0 %v975
    %1337 = vmatprep.subr.bf16.mxu0 0
    %1338 = vmatpush1.bf16.msra.mxu0 %v974
    %1339 = vmatprep.subr.bf16.mxu0 0
    %1340 = vmatpush1.bf16.msra.mxu0 %v973
    %1341 = vmatprep.subr.bf16.mxu0 0
    %1342 = vmatpush2.bf16.msra.mxu0 %v988
    %1343 = vmatprep.subr.bf16.mxu0 0
    %1344 = vmatpush2.bf16.msra.mxu0 %v987
    %1345 = vmatprep.subr.bf16.mxu0 0
    %1346 = vmatpush2.bf16.msra.mxu0 %v986
    %1347 = vmatprep.subr.bf16.mxu0 0
    %1348 = vmatpush2.bf16.msra.mxu0 %v985
    %1349 = vmatprep.subr.bf16.mxu0 0
    %1350 = vmatpush2.bf16.msra.mxu0 %v984
    %1351 = vmatprep.subr.bf16.mxu0 0
    %1352 = vmatpush2.bf16.msra.mxu0 %v983
    %1353 = vmatprep.subr.bf16.mxu0 0
    %1354 = vmatpush2.bf16.msra.mxu0 %v982
    %1355 = vmatprep.subr.bf16.mxu0 0
    %1356 = vmatpush2.bf16.msra.mxu0 %v981
    %1357 = vmatprep.mubr.bf16.mxu0 %v369
    %1358 = vmatmul.mubr.bf16.gmra.mxu0 %v355
    %v1359 = vpop.f32.mrf.mxu0
    %v1360 = vadd.f32 %v1320, %v1359
    %v1361 = vpop.f32.mrf.mxu0
    %v1362 = vpop.f32.mrf.mxu0
    %v1363 = vpop.f32.mrf.mxu0
    %1364 = vdwg.mxu0
    %1365 = vmatprep.subr.bf16.mxu0 0
    %1366 = vmatpush1.bf16.msra.mxu0 %v996
    %1367 = vmatprep.subr.bf16.mxu0 0
    %1368 = vmatpush1.bf16.msra.mxu0 %v995
    %1369 = vmatprep.subr.bf16.mxu0 0
    %1370 = vmatpush1.bf16.msra.mxu0 %v994
    %1371 = vmatprep.subr.bf16.mxu0 0
    %1372 = vmatpush1.bf16.msra.mxu0 %v993
    %1373 = vmatprep.subr.bf16.mxu0 0
    %1374 = vmatpush1.bf16.msra.mxu0 %v992
    %1375 = vmatprep.subr.bf16.mxu0 0
    %1376 = vmatpush1.bf16.msra.mxu0 %v991
    %1377 = vmatprep.subr.bf16.mxu0 0
    %1378 = vmatpush1.bf16.msra.mxu0 %v990
    %1379 = vmatprep.subr.bf16.mxu0 0
    %1380 = vmatpush1.bf16.msra.mxu0 %v989
    %1381 = vmatprep.subr.bf16.mxu0 0
    %1382 = vmatpush2.bf16.msra.mxu0 %v1004
    %1383 = vmatprep.subr.bf16.mxu0 0
    %1384 = vmatpush2.bf16.msra.mxu0 %v1003
    %1385 = vmatprep.subr.bf16.mxu0 0
    %1386 = vmatpush2.bf16.msra.mxu0 %v1002
    %1387 = vmatprep.subr.bf16.mxu0 0
    %1388 = vmatpush2.bf16.msra.mxu0 %v1001
    %1389 = vmatprep.subr.bf16.mxu0 0
    %1390 = vmatpush2.bf16.msra.mxu0 %v1000
    %1391 = vmatprep.subr.bf16.mxu0 0
    %1392 = vmatpush2.bf16.msra.mxu0 %v999
    %1393 = vmatprep.subr.bf16.mxu0 0
    %1394 = vmatpush2.bf16.msra.mxu0 %v998
    %1395 = vmatprep.subr.bf16.mxu0 0
    %1396 = vmatpush2.bf16.msra.mxu0 %v997
    %1397 = vmatprep.mubr.bf16.mxu0 %v379
    %1398 = vmatmul.mubr.bf16.gmra.mxu0 %v377
    %v1399 = vpop.f32.mrf.mxu0
    %v1400 = vadd.f32 %v1360, %v1399
    %v1401 = vpop.f32.mrf.mxu0
    %v1402 = vpop.f32.mrf.mxu0
    %v1403 = vpop.f32.mrf.mxu0
    %1404 = vdwg.mxu0
    %1405 = vmatprep.subr.bf16.mxu0 0
    %1406 = vmatpush1.bf16.msra.mxu0 %v1012
    %1407 = vmatprep.subr.bf16.mxu0 0
    %1408 = vmatpush1.bf16.msra.mxu0 %v1011
    %1409 = vmatprep.subr.bf16.mxu0 0
    %1410 = vmatpush1.bf16.msra.mxu0 %v1010
    %1411 = vmatprep.subr.bf16.mxu0 0
    %1412 = vmatpush1.bf16.msra.mxu0 %v1009
    %1413 = vmatprep.subr.bf16.mxu0 0
    %1414 = vmatpush1.bf16.msra.mxu0 %v1008
    %1415 = vmatprep.subr.bf16.mxu0 0
    %1416 = vmatpush1.bf16.msra.mxu0 %v1007
    %1417 = vmatprep.subr.bf16.mxu0 0
    %1418 = vmatpush1.bf16.msra.mxu0 %v1006
    %1419 = vmatprep.subr.bf16.mxu0 0
    %1420 = vmatpush1.bf16.msra.mxu0 %v1005
    %1421 = vmatprep.subr.bf16.mxu0 0
    %1422 = vmatpush2.bf16.msra.mxu0 %v1020
    %1423 = vmatprep.subr.bf16.mxu0 0
    %1424 = vmatpush2.bf16.msra.mxu0 %v1019
    %1425 = vmatprep.subr.bf16.mxu0 0
    %1426 = vmatpush2.bf16.msra.mxu0 %v1018
    %1427 = vmatprep.subr.bf16.mxu0 0
    %1428 = vmatpush2.bf16.msra.mxu0 %v1017
    %1429 = vmatprep.subr.bf16.mxu0 0
    %1430 = vmatpush2.bf16.msra.mxu0 %v1016
    %1431 = vmatprep.subr.bf16.mxu0 0
    %1432 = vmatpush2.bf16.msra.mxu0 %v1015
    %1433 = vmatprep.subr.bf16.mxu0 0
    %1434 = vmatpush2.bf16.msra.mxu0 %v1014
    %1435 = vmatprep.subr.bf16.mxu0 0
    %1436 = vmatpush2.bf16.msra.mxu0 %v1013
    %1437 = vmatprep.mubr.bf16.mxu0 %v376
    %1438 = vmatmul.mubr.bf16.gmra.mxu0 %v362
    %v1439 = vpop.f32.mrf.mxu0
    %v1440 = vadd.f32 %v1400, %v1439
    %v1441 = vpop.f32.mrf.mxu0
    %v1442 = vpop.f32.mrf.mxu0
    %v1443 = vpop.f32.mrf.mxu0
    %1444 = vdwg.mxu0
    %1445 = vmatprep.subr.bf16.mxu0 0
    %1446 = vmatpush1.bf16.msra.mxu0 %v1028
    %1447 = vmatprep.subr.bf16.mxu0 0
    %1448 = vmatpush1.bf16.msra.mxu0 %v1027
    %1449 = vmatprep.subr.bf16.mxu0 0
    %1450 = vmatpush1.bf16.msra.mxu0 %v1026
    %1451 = vmatprep.subr.bf16.mxu0 0
    %1452 = vmatpush1.bf16.msra.mxu0 %v1025
    %1453 = vmatprep.subr.bf16.mxu0 0
    %1454 = vmatpush1.bf16.msra.mxu0 %v1024
    %1455 = vmatprep.subr.bf16.mxu0 0
    %1456 = vmatpush1.bf16.msra.mxu0 %v1023
    %1457 = vmatprep.subr.bf16.mxu0 0
    %1458 = vmatpush1.bf16.msra.mxu0 %v1022
    %1459 = vmatprep.subr.bf16.mxu0 0
    %1460 = vmatpush1.bf16.msra.mxu0 %v1021
    %1461 = vmatprep.subr.bf16.mxu0 0
    %1462 = vmatpush2.bf16.msra.mxu0 %v1036
    %1463 = vmatprep.subr.bf16.mxu0 0
    %1464 = vmatpush2.bf16.msra.mxu0 %v1035
    %1465 = vmatprep.subr.bf16.mxu0 0
    %1466 = vmatpush2.bf16.msra.mxu0 %v1034
    %1467 = vmatprep.subr.bf16.mxu0 0
    %1468 = vmatpush2.bf16.msra.mxu0 %v1033
    %1469 = vmatprep.subr.bf16.mxu0 0
    %1470 = vmatpush2.bf16.msra.mxu0 %v1032
    %1471 = vmatprep.subr.bf16.mxu0 0
    %1472 = vmatpush2.bf16.msra.mxu0 %v1031
    %1473 = vmatprep.subr.bf16.mxu0 0
    %1474 = vmatpush2.bf16.msra.mxu0 %v1030
    %1475 = vmatprep.subr.bf16.mxu0 0
    %1476 = vmatpush2.bf16.msra.mxu0 %v1029
    %1477 = vmatprep.mubr.bf16.mxu0 %v380
    %1478 = vmatmul.mubr.bf16.gmra.mxu0 %v378
    %v1479 = vpop.f32.mrf.mxu0
    %v1480 = vadd.f32 %v1440, %v1479
    %v1481 = vpop.f32.mrf.mxu0
    %v1482 = vpop.f32.mrf.mxu0
    %v1483 = vpop.f32.mrf.mxu0
    %1484 = vdwg.mxu0
    %1485 = vst [vmem:[#allocation2] sm:$0x3] %v1480
    // Predicated region
    $region14: #{residual_net.19} parent=1 // pred_check
      _
    $region15: #{residual_net.19} parent=1 // pred_check_branch
      %1487 = sbr.rel (0) target = $region17
    $region16: #{residual_net.19} parent=1 // pred_region
      %s1489 = ssub.s32 32, 32
      %1490 = vsyncadd [#allocation3], %s1489
      %s1492 = sshll.u32 [#allocation2], 4
      %s1493 = int_to_ptr.vmem [resolvable:$true] %s1492
      %1495 = dma.vmem_to_hbm [thread:$0]  %s1493, 32, %s3, [#allocation3]
    $region17: #{residual_net.19} parent=1 // pred_fallthru
      _
    // Predicated region
    $region18: #{residual_net.19} parent=1 // pred_check
      _
    $region19: #{residual_net.19} parent=1 // pred_check_branch
      %1497 = sbr.rel (0) target = $region21
    $region20: #{residual_net.19} parent=1 // pred_region
      %1498 = dma.done [#allocation3], 32
    $region21: #{residual_net.19} parent=1 // pred_fallthru
      _
    %1499 = vsyncpa [#allocation3], 1

</llo_original>
